<compile_context>
chip_gen: v7x
topology: tpu7x:2x2x1
jax: 0.10.0
libtpu: 0.0.40
codegen_flags: <defaults>
</compile_context>

<pallas_src>
import functools

import jax
import jax.numpy as jnp
import numpy as np
from jax.experimental import pallas as pl
from jax.experimental.pallas import tpu as pltpu

CP8 = 8    # padded channel width for the 1- and 4-channel tensors
CP16 = 16  # conv2-output / t_conv1-input channel width


def _plane_len(h, w):
    return (h + 2) * (w + 2)


# ----------------------------------------------------------------------------
# The single fused forward kernel (one grid step == one image).
# ----------------------------------------------------------------------------
def _fused_autoencoder_kernel(
        x_ref,                                      # (1, 1, H*W)
        w1_ref, b1_ref, w2_ref, b2_ref, w3_ref, b3_ref,
        w4_ref, b4_ref, w5_ref, b5_ref,             # (9, Cout_p, Cin_p) / (Cout_p, 1)
        emb_ref,                                    # (H*W, P16)   0/1 border embed
        pool_a_ref, pool_b_ref,                     # (4, Pin, Pout) 0/1 corner gathers
        up_c_ref, up_b_ref,                         # (Pin, Pout)  0/1 2x replication
        ext_ref,                                    # (P16, H*W)   0/1 interior extract
        o_ref,                                      # (1, 1, H*W)
        sA, sB, sC,                                 # VMEM halo scratch
        *, H, W):
    f32 = jnp.float32
    wp16, p16 = W + 2, _plane_len(H, W)
    wp8, p8 = W // 2 + 2, _plane_len(H // 2, W // 2)
    wp4, p4 = W // 4 + 2, _plane_len(H // 4, W // 4)

    # Zero the halo scratch; interiors are overwritten before each use, the
    # margins must stay zero so out-of-image taps read finite zeros.
    sA[...] = jnp.zeros(sA.shape, f32)
    sB[...] = jnp.zeros(sB.shape, f32)
    sC[...] = jnp.zeros(sC.shape, f32)

    def conv3x3(buf, wp, span, w_ref, b_ref, x_val, act):
        # x_val: (Cin_p, span) zero-bordered flattened plane.
        m = wp + 1                                   # halo margin inside `buf`
        buf[:, m:m + span] = x_val
        cout = w_ref.shape[1]
        acc = jnp.zeros((cout, span), f32)
        t = 0
        for oy in (-1, 0, 1):                        # 9 shifted-slab MXU matmuls
            for ox in (-1, 0, 1):
                d = oy * wp + ox
                xs = buf[:, m + d:m + d + span]      # static-offset halo window
                acc = acc + jnp.dot(w_ref[t], xs, preferred_element_type=f32)
                t += 1
        acc = acc + b_ref[...]                       # (Cout_p, 1) lane broadcast
        if act == "relu":
            return jnp.maximum(acc, 0.0)
        # sigmoid: exp + approximate reciprocal, both on the otherwise-idle EUP
        return pl.reciprocal(1.0 + jnp.exp(-acc), approx=True)

    def maxpool2x2(x_val, sel_ref):
        # 2x2/2 max pool: gather the four window corners with 0/1 matmuls on
        # the MXU, then a 4-way elementwise max on the VPU.
        c00 = jnp.dot(x_val, sel_ref[0], preferred_element_type=f32)
        c01 = jnp.dot(x_val, sel_ref[1], preferred_element_type=f32)
        c10 = jnp.dot(x_val, sel_ref[2], preferred_element_type=f32)
        c11 = jnp.dot(x_val, sel_ref[3], preferred_element_type=f32)
        return jnp.maximum(jnp.maximum(c00, c01), jnp.maximum(c10, c11))

    # Embed the raw HxW image into the zero-bordered (H+2)x(W+2) flattened
    # plane; replicate across the 8 padded input-channel rows (w1 only has
    # non-zero entries in input column 0, so the copies are harmless).
    x0 = jnp.broadcast_to(x_ref[0], (CP8, H * W))                  # (8, HW)
    x0 = jnp.dot(x0, emb_ref[...], preferred_element_type=f32)     # (8, P16)

    # -------- encoder --------
    a1 = conv3x3(sA, wp16, p16, w1_ref, b1_ref, x0, "relu")        # (8, P16)
    p1 = maxpool2x2(a1, pool_a_ref)                                # (8, P8)
    a2 = conv3x3(sB, wp8, p8, w2_ref, b2_ref, p1, "relu")          # (16, P8)
    p2 = maxpool2x2(a2, pool_b_ref)                                # (16, P4)

    # -------- decoder --------
    a3 = conv3x3(sC, wp4, p4, w3_ref, b3_ref, p2, "relu")          # (8, P4)
    u3 = jnp.dot(a3, up_c_ref[...], preferred_element_type=f32)    # (8, P8)
    # F.relu(upsample(.)) is a no-op on the already-nonnegative input.
    a4 = conv3x3(sB, wp8, p8, w4_ref, b4_ref, u3, "relu")          # (8, P8)
    u4 = jnp.dot(a4, up_b_ref[...], preferred_element_type=f32)    # (8, P16)
    a5 = conv3x3(sA, wp16, p16, w5_ref, b5_ref, u4, "sigmoid")     # (8, P16)

    out = jnp.dot(a5, ext_ref[...], preferred_element_type=f32)    # (8, HW)
    o_ref[0] = out[0:1, :]


# ----------------------------------------------------------------------------
# Host-side structural constants (0/1 matrices) and weight packing.
# ----------------------------------------------------------------------------
def build_structural_constants(H, W):
    """0/1 matrices implementing border embed/extract, 2x2 pool corner gathers
    and nearest 2x upsample as MXU matmuls on the flattened padded planes."""
    def embed(h, w):
        wp = w + 2
        e = np.zeros((h * w, (h + 2) * wp), np.float32)
        for y in range(h):
            for x in range(w):
                e[y * w + x, (y + 1) * wp + (x + 1)] = 1.0
        return e

    def pool_corners(h, w):
        wpi, ho, wo = w + 2, h // 2, w // 2
        wpo = wo + 2
        s = np.zeros((4, (h + 2) * wpi, (ho + 2) * wpo), np.float32)
        for cy in range(2):
            for cx in range(2):
                for y in range(ho):
                    for x in range(wo):
                        s[cy * 2 + cx,
                          (2 * y + cy + 1) * wpi + (2 * x + cx + 1),
                          (y + 1) * wpo + (x + 1)] = 1.0
        return s

    def upsample2x(h, w):
        wpi, ho, wo = w + 2, 2 * h, 2 * w
        wpo = wo + 2
        u = np.zeros(((h + 2) * wpi, (ho + 2) * wpo), np.float32)
        for y in range(ho):
            for x in range(wo):
                u[(y // 2 + 1) * wpi + (x // 2 + 1), (y + 1) * wpo + (x + 1)] = 1.0
        return u

    e = embed(H, W)
    return {
        "emb": jnp.asarray(e),                                   # (HW, P16)
        "pool_a": jnp.asarray(pool_corners(H, W)),               # 16x16 -> 8x8
        "pool_b": jnp.asarray(pool_corners(H // 2, W // 2)),     # 8x8  -> 4x4
        "up_c": jnp.asarray(upsample2x(H // 4, W // 4)),         # 4x4  -> 8x8
        "up_b": jnp.asarray(upsample2x(H // 2, W // 2)),         # 8x8  -> 16x16
        "ext": jnp.asarray(e.T),                                 # (P16, HW)
    }


def _tconv_as_conv_weight(w_t):
    # ConvTranspose2d(k=3, stride=1, padding=1) == Conv2d(padding=1) with the
    # kernel spatially flipped and the in/out channel axes swapped.
    return jnp.flip(jnp.transpose(w_t, (1, 0, 2, 3)), axis=(2, 3))


def _pack_conv_weight(w, cout_p, cin_p):
    # (Cout, Cin, 3, 3) -> (9, cout_p, cin_p), tap index t = dy*3 + dx,
    # zero-padded channel axes.
    cout, cin = w.shape[0], w.shape[1]
    wt = jnp.transpose(w.reshape(cout, cin, 9), (2, 0, 1)).astype(jnp.float32)
    return jnp.zeros((9, cout_p, cin_p), jnp.float32).at[:, :cout, :cin].set(wt)


def _pack_bias(b, cout_p):
    return jnp.zeros((cout_p, 1), jnp.float32).at[:b.shape[0], 0].set(
        b.astype(jnp.float32))


def pack_params(p):
    """One-time preprocessing of PyTorch-layout parameters into kernel form."""
    return {
        "w1": _pack_conv_weight(p["conv1_w"], CP8, CP8),
        "b1": _pack_bias(p["conv1_b"], CP8),
        "w2": _pack_conv_weight(p["conv2_w"], CP16, CP8),
        "b2": _pack_bias(p["conv2_b"], CP16),
        "w3": _pack_conv_weight(_tconv_as_conv_weight(p["t_conv1_w"]), CP8, CP16),
        "b3": _pack_bias(p["t_conv1_b"], CP8),
        "w4": _pack_conv_weight(_tconv_as_conv_weight(p["t_conv2_w"]), CP8, CP8),
        "b4": _pack_bias(p["t_conv2_b"], CP8),
        "w5": _pack_conv_weight(_tconv_as_conv_weight(p["t_conv3_w"]), CP8, CP8),
        "b5": _pack_bias(p["t_conv3_b"], CP8),
    }


def _const_spec(a):
    zero = (0,) * a.ndim
    return pl.BlockSpec(a.shape, lambda n: zero)


# ----------------------------------------------------------------------------
# Full forward pass: one pallas_call, grid over the batch.
# ----------------------------------------------------------------------------
def conv_autoencoder_forward(x, kp, consts):
    N, C, H, W = x.shape
    assert C == 1 and H % 4 == 0 and W % 4 == 0
    HW = H * W
    p16 = _plane_len(H, W)
    p8 = _plane_len(H // 2, W // 2)
    p4 = _plane_len(H // 4, W // 4)

    const_inputs = [
        kp["w1"], kp["b1"], kp["w2"], kp["b2"], kp["w3"], kp["b3"],
        kp["w4"], kp["b4"], kp["w5"], kp["b5"],
        consts["emb"], consts["pool_a"], consts["pool_b"],
        consts["up_c"], consts["up_b"], consts["ext"],
    ]
    in_specs = [pl.BlockSpec((1, 1, HW), lambda n: (n, 0, 0))]
    in_specs += [_const_spec(a) for a in const_inputs]

    out = pl.pallas_call(
        functools.partial(_fused_autoencoder_kernel, H=H, W=W),
        out_shape=jax.ShapeDtypeStruct((N, 1, HW), jnp.float32),
        grid=(N,),
        in_specs=in_specs,
        out_specs=pl.BlockSpec((1, 1, HW), lambda n: (n, 0, 0)),
        scratch_shapes=[
            pltpu.VMEM((CP8, p16 + 2 * (W + 3)), jnp.float32),        # 18x18 halo
            pltpu.VMEM((CP8, p8 + 2 * (W // 2 + 3)), jnp.float32),    # 10x10 halo
            pltpu.VMEM((CP16, p4 + 2 * (W // 4 + 3)), jnp.float32),   # 6x6 halo
        ],
        # On v7x the batch axis could additionally be split across the two
        # TensorCores (core-parallel); "parallel" is kept for portability.
        compiler_params=pltpu.CompilerParams(
            dimension_semantics=("parallel",)),
    )(x.reshape(N, 1, HW).astype(jnp.float32), *const_inputs)
    return out.reshape(N, 1, H, W)


# ----------------------------------------------------------------------------
# Pure-JAX reference (mirrors ConvAutoencoder.forward) for self-verification.
# ----------------------------------------------------------------------------
def _ref_conv(x, w, b):
    y = jax.lax.conv_general_dilated(
        x, w, window_strides=(1, 1), padding=((1, 1), (1, 1)),
        dimension_numbers=("NCHW", "OIHW", "NCHW"),
        precision=jax.lax.Precision.HIGHEST)
    return y + b.reshape(1, -1, 1, 1)


def _ref_pool(x):
    return jax.lax.reduce_window(x, -jnp.inf, jax.lax.max,
                                 (1, 1, 2, 2), (1, 1, 2, 2), "VALID")


def _ref_upsample(x):
    return jnp.repeat(jnp.repeat(x, 2, axis=2), 2, axis=3)


def reference_forward(x, p):
    x = jax.nn.relu(_ref_conv(x, p["conv1_w"], p["conv1_b"]))
    x = _ref_pool(x)
    x = jax.nn.relu(_ref_conv(x, p["conv2_w"], p["conv2_b"]))
    x = _ref_pool(x)
    x = jax.nn.relu(_ref_conv(x, _tconv_as_conv_weight(p["t_conv1_w"]), p["t_conv1_b"]))
    x = jax.nn.relu(_ref_upsample(x))
    x = jax.nn.relu(_ref_conv(x, _tconv_as_conv_weight(p["t_conv2_w"]), p["t_conv2_b"]))
    x = jax.nn.relu(_ref_upsample(x))
    x = jax.nn.sigmoid(_ref_conv(x, _tconv_as_conv_weight(p["t_conv3_w"]), p["t_conv3_b"]))
    return x


# ----------------------------------------------------------------------------
# Deterministic parameter init (PyTorch-style uniform(-1/sqrt(fan_in), ...))
# ----------------------------------------------------------------------------
def init_params(key):
    def uinit(k, shape, fan_in):
        bound = 1.0 / jnp.sqrt(jnp.float32(fan_in))
        return jax.random.uniform(k, shape, jnp.float32, -bound, bound)

    ks = jax.random.split(key, 10)
    return {
        # nn.Conv2d weights: (Cout, Cin, 3, 3)
        "conv1_w": uinit(ks[0], (4, 1, 3, 3), 1 * 9),
        "conv1_b": uinit(ks[1], (4,), 1 * 9),
        "conv2_w": uinit(ks[2], (16, 4, 3, 3), 4 * 9),
        "conv2_b": uinit(ks[3], (16,), 4 * 9),
        # nn.ConvTranspose2d weights: (Cin, Cout, 3, 3)
        "t_conv1_w": uinit(ks[4], (16, 4, 3, 3), 16 * 9),
        "t_conv1_b": uinit(ks[5], (4,), 16 * 9),
        "t_conv2_w": uinit(ks[6], (4, 1, 3, 3), 4 * 9),
        "t_conv2_b": uinit(ks[7], (1,), 4 * 9),
        "t_conv3_w": uinit(ks[8], (1, 1, 3, 3), 1 * 9),
        "t_conv3_b": uinit(ks[9], (1,), 1 * 9),
    }


if __name__ == "__main__":
    key = jax.random.PRNGKey(0)
    pkey, xkey = jax.random.split(key)
    params = init_params(pkey)

    # MNIST-like but small: batch=2, 1 channel, 16x16 spatial
    x = jax.random.uniform(xkey, (2, 1, 16, 16), jnp.float32)

    consts = build_structural_constants(16, 16)   # built once per image size
    kparams = pack_params(params)                 # built once per checkpoint

    fwd = jax.jit(conv_autoencoder_forward)
    y = jax.block_until_ready(fwd(x, kparams, consts))

    y_ref = reference_forward(x, params)
    assert y.shape == (2, 1, 16, 16), y.shape
    assert bool(jnp.all(jnp.isfinite(y)))
    assert bool(jnp.all((y >= 0.0) & (y <= 1.0)))  # sigmoid output range
    assert bool(jnp.allclose(y, y_ref, atol=5e-3, rtol=5e-3)), float(
        jnp.max(jnp.abs(y - y_ref)))
    print("KERNEL_OK")
</pallas_src>

<mosaic_0001>
module attributes {stable_mosaic.version = 11 : i64} {
  func.func @_fused_autoencoder_kernel(%arg0: i32, %arg1: memref<1x1x256xf32, #tpu.memory_space<vmem>>, %arg2: memref<9x8x8xf32, #tpu.memory_space<vmem>>, %arg3: memref<8x1xf32, #tpu.memory_space<vmem>>, %arg4: memref<9x16x8xf32, #tpu.memory_space<vmem>>, %arg5: memref<16x1xf32, #tpu.memory_space<vmem>>, %arg6: memref<9x8x16xf32, #tpu.memory_space<vmem>>, %arg7: memref<8x1xf32, #tpu.memory_space<vmem>>, %arg8: memref<9x8x8xf32, #tpu.memory_space<vmem>>, %arg9: memref<8x1xf32, #tpu.memory_space<vmem>>, %arg10: memref<9x8x8xf32, #tpu.memory_space<vmem>>, %arg11: memref<8x1xf32, #tpu.memory_space<vmem>>, %arg12: memref<256x324xf32, #tpu.memory_space<vmem>>, %arg13: memref<4x324x100xf32, #tpu.memory_space<vmem>>, %arg14: memref<4x100x36xf32, #tpu.memory_space<vmem>>, %arg15: memref<36x100xf32, #tpu.memory_space<vmem>>, %arg16: memref<100x324xf32, #tpu.memory_space<vmem>>, %arg17: memref<324x256xf32, #tpu.memory_space<vmem>>, %arg18: memref<1x1x256xf32, #tpu.memory_space<vmem>>, %arg19: memref<8x362xf32, #tpu.memory_space<vmem>>, %arg20: memref<8x122xf32, #tpu.memory_space<vmem>>, %arg21: memref<16x50xf32, #tpu.memory_space<vmem>>) attributes {dimension_semantics = [#tpu.dimension_semantics<parallel>], iteration_bounds = array<i64: 2>, scalar_prefetch = 0 : i64, scratch_operands = 3 : i64, tpu.core_type = #tpu.core_type<tc>, window_params = [{transform_indices = @transform_0, window_bounds = array<i64: 1, 1, 256>}, {pipeline_mode = #tpu.pipeline_mode<synchronous>, transform_indices = @transform_1, window_bounds = array<i64: 9, 8, 8>}, {pipeline_mode = #tpu.pipeline_mode<synchronous>, transform_indices = @transform_2, window_bounds = array<i64: 8, 1>}, {pipeline_mode = #tpu.pipeline_mode<synchronous>, transform_indices = @transform_3, window_bounds = array<i64: 9, 16, 8>}, {pipeline_mode = #tpu.pipeline_mode<synchronous>, transform_indices = @transform_4, window_bounds = array<i64: 16, 1>}, {pipeline_mode = #tpu.pipeline_mode<synchronous>, transform_indices = @transform_5, window_bounds = array<i64: 9, 8, 16>}, {pipeline_mode = #tpu.pipeline_mode<synchronous>, transform_indices = @transform_6, window_bounds = array<i64: 8, 1>}, {pipeline_mode = #tpu.pipeline_mode<synchronous>, transform_indices = @transform_7, window_bounds = array<i64: 9, 8, 8>}, {pipeline_mode = #tpu.pipeline_mode<synchronous>, transform_indices = @transform_8, window_bounds = array<i64: 8, 1>}, {pipeline_mode = #tpu.pipeline_mode<synchronous>, transform_indices = @transform_9, window_bounds = array<i64: 9, 8, 8>}, {pipeline_mode = #tpu.pipeline_mode<synchronous>, transform_indices = @transform_10, window_bounds = array<i64: 8, 1>}, {pipeline_mode = #tpu.pipeline_mode<synchronous>, transform_indices = @transform_11, window_bounds = array<i64: 256, 324>}, {pipeline_mode = #tpu.pipeline_mode<synchronous>, transform_indices = @transform_12, window_bounds = array<i64: 4, 324, 100>}, {pipeline_mode = #tpu.pipeline_mode<synchronous>, transform_indices = @transform_13, window_bounds = array<i64: 4, 100, 36>}, {pipeline_mode = #tpu.pipeline_mode<synchronous>, transform_indices = @transform_14, window_bounds = array<i64: 36, 100>}, {pipeline_mode = #tpu.pipeline_mode<synchronous>, transform_indices = @transform_15, window_bounds = array<i64: 100, 324>}, {pipeline_mode = #tpu.pipeline_mode<synchronous>, transform_indices = @transform_16, window_bounds = array<i64: 324, 256>}, {transform_indices = @transform_17, window_bounds = array<i64: 1, 1, 256>}]} {
    %cst = arith.constant 0.000000e+00 : f32
    %0 = vector.broadcast %cst : f32 to vector<8x362xf32>
    %c0 = arith.constant 0 : index
    %c0_0 = arith.constant 0 : index
    %1 = vector.load %arg19[%c0, %c0_0] : memref<8x362xf32, #tpu.memory_space<vmem>>, vector<8x362xf32>
    tpu.vector_store %arg19[%c0, %c0_0], %0 {strides = array<i32>} : memref<8x362xf32, #tpu.memory_space<vmem>>, vector<8x362xf32>,
    %cst_1 = arith.constant 0.000000e+00 : f32
    %2 = vector.broadcast %cst_1 : f32 to vector<8x122xf32>
    %c0_2 = arith.constant 0 : index
    %c0_3 = arith.constant 0 : index
    %3 = vector.load %arg20[%c0_2, %c0_3] : memref<8x122xf32, #tpu.memory_space<vmem>>, vector<8x122xf32>
    tpu.vector_store %arg20[%c0_2, %c0_3], %2 {strides = array<i32>} : memref<8x122xf32, #tpu.memory_space<vmem>>, vector<8x122xf32>,
    %cst_4 = arith.constant 0.000000e+00 : f32
    %4 = vector.broadcast %cst_4 : f32 to vector<16x50xf32>
    %c0_5 = arith.constant 0 : index
    %c0_6 = arith.constant 0 : index
    %5 = vector.load %arg21[%c0_5, %c0_6] : memref<16x50xf32, #tpu.memory_space<vmem>>, vector<16x50xf32>
    tpu.vector_store %arg21[%c0_5, %c0_6], %4 {strides = array<i32>} : memref<16x50xf32, #tpu.memory_space<vmem>>, vector<16x50xf32>,
    %c0_7 = arith.constant 0 : index
    %c0_8 = arith.constant 0 : index
    %c0_9 = arith.constant 0 : index
    %6 = vector.load %arg1[%c0_7, %c0_8, %c0_9] : memref<1x1x256xf32, #tpu.memory_space<vmem>>, vector<1x1x256xf32>
    %7 = vector.shape_cast %6 : vector<1x1x256xf32> to vector<1x256xf32>
    %8 = vector.shape_cast %7 : vector<1x256xf32> to vector<1x256xf32>
    %9 = vector.broadcast %8 : vector<1x256xf32> to vector<8x256xf32>
    %c0_10 = arith.constant 0 : index
    %c0_11 = arith.constant 0 : index
    %10 = vector.load %arg12[%c0_10, %c0_11] : memref<256x324xf32, #tpu.memory_space<vmem>>, vector<256x324xf32>
    %cst_12 = arith.constant dense<0.000000e+00> : vector<8x324xf32>
    %11 = tpu.matmul %9, %10, %cst_12 {dimension_numbers = #tpu.dot_dimension_numbers<[1], [0], [0], [1], [0, 0, 1, 1], [], []>} : vector<8x256xf32>, vector<256x324xf32>, vector<8x324xf32> -> vector<8x324xf32>
    %c0_13 = arith.constant 0 : index
    %c19 = arith.constant 19 : index
    %12 = vector.load %arg19[%c0_13, %c19] : memref<8x362xf32, #tpu.memory_space<vmem>>, vector<8x324xf32>
    tpu.vector_store %arg19[%c0_13, %c19], %11 {strides = array<i32>} : memref<8x362xf32, #tpu.memory_space<vmem>>, vector<8x324xf32>,
    %cst_14 = arith.constant 0.000000e+00 : f32
    %13 = vector.broadcast %cst_14 : f32 to vector<8x324xf32>
    %c0_15 = arith.constant 0 : index
    %c0_16 = arith.constant 0 : index
    %14 = vector.load %arg19[%c0_15, %c0_16] : memref<8x362xf32, #tpu.memory_space<vmem>>, vector<8x324xf32>
    %c0_17 = arith.constant 0 : index
    %c0_18 = arith.constant 0 : index
    %c0_19 = arith.constant 0 : index
    %15 = vector.load %arg2[%c0_17, %c0_18, %c0_19] : memref<9x8x8xf32, #tpu.memory_space<vmem>>, vector<1x8x8xf32>
    %16 = vector.shape_cast %15 : vector<1x8x8xf32> to vector<8x8xf32>
    %cst_20 = arith.constant dense<0.000000e+00> : vector<8x324xf32>
    %17 = tpu.matmul %16, %14, %cst_20 {dimension_numbers = #tpu.dot_dimension_numbers<[1], [0], [0], [1], [0, 0, 1, 1], [], []>} : vector<8x8xf32>, vector<8x324xf32>, vector<8x324xf32> -> vector<8x324xf32>
    %18 = arith.addf %13, %17 : vector<8x324xf32>
    %c0_21 = arith.constant 0 : index
    %c1 = arith.constant 1 : index
    %19 = vector.load %arg19[%c0_21, %c1] : memref<8x362xf32, #tpu.memory_space<vmem>>, vector<8x324xf32>
    %c1_22 = arith.constant 1 : index
    %c0_23 = arith.constant 0 : index
    %c0_24 = arith.constant 0 : index
    %20 = vector.load %arg2[%c1_22, %c0_23, %c0_24] : memref<9x8x8xf32, #tpu.memory_space<vmem>>, vector<1x8x8xf32>
    %21 = vector.shape_cast %20 : vector<1x8x8xf32> to vector<8x8xf32>
    %cst_25 = arith.constant dense<0.000000e+00> : vector<8x324xf32>
    %22 = tpu.matmul %21, %19, %cst_25 {dimension_numbers = #tpu.dot_dimension_numbers<[1], [0], [0], [1], [0, 0, 1, 1], [], []>} : vector<8x8xf32>, vector<8x324xf32>, vector<8x324xf32> -> vector<8x324xf32>
    %23 = arith.addf %18, %22 : vector<8x324xf32>
    %c0_26 = arith.constant 0 : index
    %c2 = arith.constant 2 : index
    %24 = vector.load %arg19[%c0_26, %c2] : memref<8x362xf32, #tpu.memory_space<vmem>>, vector<8x324xf32>
    %c2_27 = arith.constant 2 : index
    %c0_28 = arith.constant 0 : index
    %c0_29 = arith.constant 0 : index
    %25 = vector.load %arg2[%c2_27, %c0_28, %c0_29] : memref<9x8x8xf32, #tpu.memory_space<vmem>>, vector<1x8x8xf32>
    %26 = vector.shape_cast %25 : vector<1x8x8xf32> to vector<8x8xf32>
    %cst_30 = arith.constant dense<0.000000e+00> : vector<8x324xf32>
    %27 = tpu.matmul %26, %24, %cst_30 {dimension_numbers = #tpu.dot_dimension_numbers<[1], [0], [0], [1], [0, 0, 1, 1], [], []>} : vector<8x8xf32>, vector<8x324xf32>, vector<8x324xf32> -> vector<8x324xf32>
    %28 = arith.addf %23, %27 : vector<8x324xf32>
    %c0_31 = arith.constant 0 : index
    %c18 = arith.constant 18 : index
    %29 = vector.load %arg19[%c0_31, %c18] : memref<8x362xf32, #tpu.memory_space<vmem>>, vector<8x324xf32>
    %c3 = arith.constant 3 : index
    %c0_32 = arith.constant 0 : index
    %c0_33 = arith.constant 0 : index
    %30 = vector.load %arg2[%c3, %c0_32, %c0_33] : memref<9x8x8xf32, #tpu.memory_space<vmem>>, vector<1x8x8xf32>
    %31 = vector.shape_cast %30 : vector<1x8x8xf32> to vector<8x8xf32>
    %cst_34 = arith.constant dense<0.000000e+00> : vector<8x324xf32>
    %32 = tpu.matmul %31, %29, %cst_34 {dimension_numbers = #tpu.dot_dimension_numbers<[1], [0], [0], [1], [0, 0, 1, 1], [], []>} : vector<8x8xf32>, vector<8x324xf32>, vector<8x324xf32> -> vector<8x324xf32>
    %33 = arith.addf %28, %32 : vector<8x324xf32>
    %c0_35 = arith.constant 0 : index
    %c19_36 = arith.constant 19 : index
    %34 = vector.load %arg19[%c0_35, %c19_36] : memref<8x362xf32, #tpu.memory_space<vmem>>, vector<8x324xf32>
    %c4 = arith.constant 4 : index
    %c0_37 = arith.constant 0 : index
    %c0_38 = arith.constant 0 : index
    %35 = vector.load %arg2[%c4, %c0_37, %c0_38] : memref<9x8x8xf32, #tpu.memory_space<vmem>>, vector<1x8x8xf32>
    %36 = vector.shape_cast %35 : vector<1x8x8xf32> to vector<8x8xf32>
    %cst_39 = arith.constant dense<0.000000e+00> : vector<8x324xf32>
    %37 = tpu.matmul %36, %34, %cst_39 {dimension_numbers = #tpu.dot_dimension_numbers<[1], [0], [0], [1], [0, 0, 1, 1], [], []>} : vector<8x8xf32>, vector<8x324xf32>, vector<8x324xf32> -> vector<8x324xf32>
    %38 = arith.addf %33, %37 : vector<8x324xf32>
    %c0_40 = arith.constant 0 : index
    %c20 = arith.constant 20 : index
    %39 = vector.load %arg19[%c0_40, %c20] : memref<8x362xf32, #tpu.memory_space<vmem>>, vector<8x324xf32>
    %c5 = arith.constant 5 : index
    %c0_41 = arith.constant 0 : index
    %c0_42 = arith.constant 0 : index
    %40 = vector.load %arg2[%c5, %c0_41, %c0_42] : memref<9x8x8xf32, #tpu.memory_space<vmem>>, vector<1x8x8xf32>
    %41 = vector.shape_cast %40 : vector<1x8x8xf32> to vector<8x8xf32>
    %cst_43 = arith.constant dense<0.000000e+00> : vector<8x324xf32>
    %42 = tpu.matmul %41, %39, %cst_43 {dimension_numbers = #tpu.dot_dimension_numbers<[1], [0], [0], [1], [0, 0, 1, 1], [], []>} : vector<8x8xf32>, vector<8x324xf32>, vector<8x324xf32> -> vector<8x324xf32>
    %43 = arith.addf %38, %42 : vector<8x324xf32>
    %c0_44 = arith.constant 0 : index
    %c36 = arith.constant 36 : index
    %44 = vector.load %arg19[%c0_44, %c36] : memref<8x362xf32, #tpu.memory_space<vmem>>, vector<8x324xf32>
    %c6 = arith.constant 6 : index
    %c0_45 = arith.constant 0 : index
    %c0_46 = arith.constant 0 : index
    %45 = vector.load %arg2[%c6, %c0_45, %c0_46] : memref<9x8x8xf32, #tpu.memory_space<vmem>>, vector<1x8x8xf32>
    %46 = vector.shape_cast %45 : vector<1x8x8xf32> to vector<8x8xf32>
    %cst_47 = arith.constant dense<0.000000e+00> : vector<8x324xf32>
    %47 = tpu.matmul %46, %44, %cst_47 {dimension_numbers = #tpu.dot_dimension_numbers<[1], [0], [0], [1], [0, 0, 1, 1], [], []>} : vector<8x8xf32>, vector<8x324xf32>, vector<8x324xf32> -> vector<8x324xf32>
    %48 = arith.addf %43, %47 : vector<8x324xf32>
    %c0_48 = arith.constant 0 : index
    %c37 = arith.constant 37 : index
    %49 = vector.load %arg19[%c0_48, %c37] : memref<8x362xf32, #tpu.memory_space<vmem>>, vector<8x324xf32>
    %c7 = arith.constant 7 : index
    %c0_49 = arith.constant 0 : index
    %c0_50 = arith.constant 0 : index
    %50 = vector.load %arg2[%c7, %c0_49, %c0_50] : memref<9x8x8xf32, #tpu.memory_space<vmem>>, vector<1x8x8xf32>
    %51 = vector.shape_cast %50 : vector<1x8x8xf32> to vector<8x8xf32>
    %cst_51 = arith.constant dense<0.000000e+00> : vector<8x324xf32>
    %52 = tpu.matmul %51, %49, %cst_51 {dimension_numbers = #tpu.dot_dimension_numbers<[1], [0], [0], [1], [0, 0, 1, 1], [], []>} : vector<8x8xf32>, vector<8x324xf32>, vector<8x324xf32> -> vector<8x324xf32>
    %53 = arith.addf %48, %52 : vector<8x324xf32>
    %c0_52 = arith.constant 0 : index
    %c38 = arith.constant 38 : index
    %54 = vector.load %arg19[%c0_52, %c38] : memref<8x362xf32, #tpu.memory_space<vmem>>, vector<8x324xf32>
    %c8 = arith.constant 8 : index
    %c0_53 = arith.constant 0 : index
    %c0_54 = arith.constant 0 : index
    %55 = vector.load %arg2[%c8, %c0_53, %c0_54] : memref<9x8x8xf32, #tpu.memory_space<vmem>>, vector<1x8x8xf32>
    %56 = vector.shape_cast %55 : vector<1x8x8xf32> to vector<8x8xf32>
    %cst_55 = arith.constant dense<0.000000e+00> : vector<8x324xf32>
    %57 = tpu.matmul %56, %54, %cst_55 {dimension_numbers = #tpu.dot_dimension_numbers<[1], [0], [0], [1], [0, 0, 1, 1], [], []>} : vector<8x8xf32>, vector<8x324xf32>, vector<8x324xf32> -> vector<8x324xf32>
    %58 = arith.addf %53, %57 : vector<8x324xf32>
    %c0_56 = arith.constant 0 : index
    %c0_57 = arith.constant 0 : index
    %59 = vector.load %arg3[%c0_56, %c0_57] : memref<8x1xf32, #tpu.memory_space<vmem>>, vector<8x1xf32>
    %60 = vector.broadcast %59 : vector<8x1xf32> to vector<8x324xf32>
    %61 = arith.addf %58, %60 : vector<8x324xf32>
    %cst_58 = arith.constant 0.000000e+00 : f32
    %62 = vector.broadcast %cst_58 : f32 to vector<8x324xf32>
    %63 = arith.maximumf %61, %62 : vector<8x324xf32>
    %c0_59 = arith.constant 0 : index
    %c0_60 = arith.constant 0 : index
    %c0_61 = arith.constant 0 : index
    %64 = vector.load %arg13[%c0_59, %c0_60, %c0_61] : memref<4x324x100xf32, #tpu.memory_space<vmem>>, vector<1x324x100xf32>
    %65 = vector.shape_cast %64 : vector<1x324x100xf32> to vector<324x100xf32>
    %cst_62 = arith.constant dense<0.000000e+00> : vector<8x100xf32>
    %66 = tpu.matmul %63, %65, %cst_62 {dimension_numbers = #tpu.dot_dimension_numbers<[1], [0], [0], [1], [0, 0, 1, 1], [], []>} : vector<8x324xf32>, vector<324x100xf32>, vector<8x100xf32> -> vector<8x100xf32>
    %c1_63 = arith.constant 1 : index
    %c0_64 = arith.constant 0 : index
    %c0_65 = arith.constant 0 : index
    %67 = vector.load %arg13[%c1_63, %c0_64, %c0_65] : memref<4x324x100xf32, #tpu.memory_space<vmem>>, vector<1x324x100xf32>
    %68 = vector.shape_cast %67 : vector<1x324x100xf32> to vector<324x100xf32>
    %cst_66 = arith.constant dense<0.000000e+00> : vector<8x100xf32>
    %69 = tpu.matmul %63, %68, %cst_66 {dimension_numbers = #tpu.dot_dimension_numbers<[1], [0], [0], [1], [0, 0, 1, 1], [], []>} : vector<8x324xf32>, vector<324x100xf32>, vector<8x100xf32> -> vector<8x100xf32>
    %c2_67 = arith.constant 2 : index
    %c0_68 = arith.constant 0 : index
    %c0_69 = arith.constant 0 : index
    %70 = vector.load %arg13[%c2_67, %c0_68, %c0_69] : memref<4x324x100xf32, #tpu.memory_space<vmem>>, vector<1x324x100xf32>
    %71 = vector.shape_cast %70 : vector<1x324x100xf32> to vector<324x100xf32>
    %cst_70 = arith.constant dense<0.000000e+00> : vector<8x100xf32>
    %72 = tpu.matmul %63, %71, %cst_70 {dimension_numbers = #tpu.dot_dimension_numbers<[1], [0], [0], [1], [0, 0, 1, 1], [], []>} : vector<8x324xf32>, vector<324x100xf32>, vector<8x100xf32> -> vector<8x100xf32>
    %c3_71 = arith.constant 3 : index
    %c0_72 = arith.constant 0 : index
    %c0_73 = arith.constant 0 : index
    %73 = vector.load %arg13[%c3_71, %c0_72, %c0_73] : memref<4x324x100xf32, #tpu.memory_space<vmem>>, vector<1x324x100xf32>
    %74 = vector.shape_cast %73 : vector<1x324x100xf32> to vector<324x100xf32>
    %cst_74 = arith.constant dense<0.000000e+00> : vector<8x100xf32>
    %75 = tpu.matmul %63, %74, %cst_74 {dimension_numbers = #tpu.dot_dimension_numbers<[1], [0], [0], [1], [0, 0, 1, 1], [], []>} : vector<8x324xf32>, vector<324x100xf32>, vector<8x100xf32> -> vector<8x100xf32>
    %76 = arith.maximumf %66, %69 : vector<8x100xf32>
    %77 = arith.maximumf %72, %75 : vector<8x100xf32>
    %78 = arith.maximumf %76, %77 : vector<8x100xf32>
    %c0_75 = arith.constant 0 : index
    %c11 = arith.constant 11 : index
    %79 = vector.load %arg20[%c0_75, %c11] : memref<8x122xf32, #tpu.memory_space<vmem>>, vector<8x100xf32>
    tpu.vector_store %arg20[%c0_75, %c11], %78 {strides = array<i32>} : memref<8x122xf32, #tpu.memory_space<vmem>>, vector<8x100xf32>,
    %cst_76 = arith.constant 0.000000e+00 : f32
    %80 = vector.broadcast %cst_76 : f32 to vector<16x100xf32>
    %c0_77 = arith.constant 0 : index
    %c0_78 = arith.constant 0 : index
    %81 = vector.load %arg20[%c0_77, %c0_78] : memref<8x122xf32, #tpu.memory_space<vmem>>, vector<8x100xf32>
    %c0_79 = arith.constant 0 : index
    %c0_80 = arith.constant 0 : index
    %c0_81 = arith.constant 0 : index
    %82 = vector.load %arg4[%c0_79, %c0_80, %c0_81] : memref<9x16x8xf32, #tpu.memory_space<vmem>>, vector<1x16x8xf32>
    %83 = vector.shape_cast %82 : vector<1x16x8xf32> to vector<16x8xf32>
    %cst_82 = arith.constant dense<0.000000e+00> : vector<16x100xf32>
    %84 = tpu.matmul %83, %81, %cst_82 {dimension_numbers = #tpu.dot_dimension_numbers<[1], [0], [0], [1], [0, 0, 1, 1], [], []>} : vector<16x8xf32>, vector<8x100xf32>, vector<16x100xf32> -> vector<16x100xf32>
    %85 = arith.addf %80, %84 : vector<16x100xf32>
    %c0_83 = arith.constant 0 : index
    %c1_84 = arith.constant 1 : index
    %86 = vector.load %arg20[%c0_83, %c1_84] : memref<8x122xf32, #tpu.memory_space<vmem>>, vector<8x100xf32>
    %c1_85 = arith.constant 1 : index
    %c0_86 = arith.constant 0 : index
    %c0_87 = arith.constant 0 : index
    %87 = vector.load %arg4[%c1_85, %c0_86, %c0_87] : memref<9x16x8xf32, #tpu.memory_space<vmem>>, vector<1x16x8xf32>
    %88 = vector.shape_cast %87 : vector<1x16x8xf32> to vector<16x8xf32>
    %cst_88 = arith.constant dense<0.000000e+00> : vector<16x100xf32>
    %89 = tpu.matmul %88, %86, %cst_88 {dimension_numbers = #tpu.dot_dimension_numbers<[1], [0], [0], [1], [0, 0, 1, 1], [], []>} : vector<16x8xf32>, vector<8x100xf32>, vector<16x100xf32> -> vector<16x100xf32>
    %90 = arith.addf %85, %89 : vector<16x100xf32>
    %c0_89 = arith.constant 0 : index
    %c2_90 = arith.constant 2 : index
    %91 = vector.load %arg20[%c0_89, %c2_90] : memref<8x122xf32, #tpu.memory_space<vmem>>, vector<8x100xf32>
    %c2_91 = arith.constant 2 : index
    %c0_92 = arith.constant 0 : index
    %c0_93 = arith.constant 0 : index
    %92 = vector.load %arg4[%c2_91, %c0_92, %c0_93] : memref<9x16x8xf32, #tpu.memory_space<vmem>>, vector<1x16x8xf32>
    %93 = vector.shape_cast %92 : vector<1x16x8xf32> to vector<16x8xf32>
    %cst_94 = arith.constant dense<0.000000e+00> : vector<16x100xf32>
    %94 = tpu.matmul %93, %91, %cst_94 {dimension_numbers = #tpu.dot_dimension_numbers<[1], [0], [0], [1], [0, 0, 1, 1], [], []>} : vector<16x8xf32>, vector<8x100xf32>, vector<16x100xf32> -> vector<16x100xf32>
    %95 = arith.addf %90, %94 : vector<16x100xf32>
    %c0_95 = arith.constant 0 : index
    %c10 = arith.constant 10 : index
    %96 = vector.load %arg20[%c0_95, %c10] : memref<8x122xf32, #tpu.memory_space<vmem>>, vector<8x100xf32>
    %c3_96 = arith.constant 3 : index
    %c0_97 = arith.constant 0 : index
    %c0_98 = arith.constant 0 : index
    %97 = vector.load %arg4[%c3_96, %c0_97, %c0_98] : memref<9x16x8xf32, #tpu.memory_space<vmem>>, vector<1x16x8xf32>
    %98 = vector.shape_cast %97 : vector<1x16x8xf32> to vector<16x8xf32>
    %cst_99 = arith.constant dense<0.000000e+00> : vector<16x100xf32>
    %99 = tpu.matmul %98, %96, %cst_99 {dimension_numbers = #tpu.dot_dimension_numbers<[1], [0], [0], [1], [0, 0, 1, 1], [], []>} : vector<16x8xf32>, vector<8x100xf32>, vector<16x100xf32> -> vector<16x100xf32>
    %100 = arith.addf %95, %99 : vector<16x100xf32>
    %c0_100 = arith.constant 0 : index
    %c11_101 = arith.constant 11 : index
    %101 = vector.load %arg20[%c0_100, %c11_101] : memref<8x122xf32, #tpu.memory_space<vmem>>, vector<8x100xf32>
    %c4_102 = arith.constant 4 : index
    %c0_103 = arith.constant 0 : index
    %c0_104 = arith.constant 0 : index
    %102 = vector.load %arg4[%c4_102, %c0_103, %c0_104] : memref<9x16x8xf32, #tpu.memory_space<vmem>>, vector<1x16x8xf32>
    %103 = vector.shape_cast %102 : vector<1x16x8xf32> to vector<16x8xf32>
    %cst_105 = arith.constant dense<0.000000e+00> : vector<16x100xf32>
    %104 = tpu.matmul %103, %101, %cst_105 {dimension_numbers = #tpu.dot_dimension_numbers<[1], [0], [0], [1], [0, 0, 1, 1], [], []>} : vector<16x8xf32>, vector<8x100xf32>, vector<16x100xf32> -> vector<16x100xf32>
    %105 = arith.addf %100, %104 : vector<16x100xf32>
    %c0_106 = arith.constant 0 : index
    %c12 = arith.constant 12 : index
    %106 = vector.load %arg20[%c0_106, %c12] : memref<8x122xf32, #tpu.memory_space<vmem>>, vector<8x100xf32>
    %c5_107 = arith.constant 5 : index
    %c0_108 = arith.constant 0 : index
    %c0_109 = arith.constant 0 : index
    %107 = vector.load %arg4[%c5_107, %c0_108, %c0_109] : memref<9x16x8xf32, #tpu.memory_space<vmem>>, vector<1x16x8xf32>
    %108 = vector.shape_cast %107 : vector<1x16x8xf32> to vector<16x8xf32>
    %cst_110 = arith.constant dense<0.000000e+00> : vector<16x100xf32>
    %109 = tpu.matmul %108, %106, %cst_110 {dimension_numbers = #tpu.dot_dimension_numbers<[1], [0], [0], [1], [0, 0, 1, 1], [], []>} : vector<16x8xf32>, vector<8x100xf32>, vector<16x100xf32> -> vector<16x100xf32>
    %110 = arith.addf %105, %109 : vector<16x100xf32>
    %c0_111 = arith.constant 0 : index
    %c20_112 = arith.constant 20 : index
    %111 = vector.load %arg20[%c0_111, %c20_112] : memref<8x122xf32, #tpu.memory_space<vmem>>, vector<8x100xf32>
    %c6_113 = arith.constant 6 : index
    %c0_114 = arith.constant 0 : index
    %c0_115 = arith.constant 0 : index
    %112 = vector.load %arg4[%c6_113, %c0_114, %c0_115] : memref<9x16x8xf32, #tpu.memory_space<vmem>>, vector<1x16x8xf32>
    %113 = vector.shape_cast %112 : vector<1x16x8xf32> to vector<16x8xf32>
    %cst_116 = arith.constant dense<0.000000e+00> : vector<16x100xf32>
    %114 = tpu.matmul %113, %111, %cst_116 {dimension_numbers = #tpu.dot_dimension_numbers<[1], [0], [0], [1], [0, 0, 1, 1], [], []>} : vector<16x8xf32>, vector<8x100xf32>, vector<16x100xf32> -> vector<16x100xf32>
    %115 = arith.addf %110, %114 : vector<16x100xf32>
    %c0_117 = arith.constant 0 : index
    %c21 = arith.constant 21 : index
    %116 = vector.load %arg20[%c0_117, %c21] : memref<8x122xf32, #tpu.memory_space<vmem>>, vector<8x100xf32>
    %c7_118 = arith.constant 7 : index
    %c0_119 = arith.constant 0 : index
    %c0_120 = arith.constant 0 : index
    %117 = vector.load %arg4[%c7_118, %c0_119, %c0_120] : memref<9x16x8xf32, #tpu.memory_space<vmem>>, vector<1x16x8xf32>
    %118 = vector.shape_cast %117 : vector<1x16x8xf32> to vector<16x8xf32>
    %cst_121 = arith.constant dense<0.000000e+00> : vector<16x100xf32>
    %119 = tpu.matmul %118, %116, %cst_121 {dimension_numbers = #tpu.dot_dimension_numbers<[1], [0], [0], [1], [0, 0, 1, 1], [], []>} : vector<16x8xf32>, vector<8x100xf32>, vector<16x100xf32> -> vector<16x100xf32>
    %120 = arith.addf %115, %119 : vector<16x100xf32>
    %c0_122 = arith.constant 0 : index
    %c22 = arith.constant 22 : index
    %121 = vector.load %arg20[%c0_122, %c22] : memref<8x122xf32, #tpu.memory_space<vmem>>, vector<8x100xf32>
    %c8_123 = arith.constant 8 : index
    %c0_124 = arith.constant 0 : index
    %c0_125 = arith.constant 0 : index
    %122 = vector.load %arg4[%c8_123, %c0_124, %c0_125] : memref<9x16x8xf32, #tpu.memory_space<vmem>>, vector<1x16x8xf32>
    %123 = vector.shape_cast %122 : vector<1x16x8xf32> to vector<16x8xf32>
    %cst_126 = arith.constant dense<0.000000e+00> : vector<16x100xf32>
    %124 = tpu.matmul %123, %121, %cst_126 {dimension_numbers = #tpu.dot_dimension_numbers<[1], [0], [0], [1], [0, 0, 1, 1], [], []>} : vector<16x8xf32>, vector<8x100xf32>, vector<16x100xf32> -> vector<16x100xf32>
    %125 = arith.addf %120, %124 : vector<16x100xf32>
    %c0_127 = arith.constant 0 : index
    %c0_128 = arith.constant 0 : index
    %126 = vector.load %arg5[%c0_127, %c0_128] : memref<16x1xf32, #tpu.memory_space<vmem>>, vector<16x1xf32>
    %127 = vector.broadcast %126 : vector<16x1xf32> to vector<16x100xf32>
    %128 = arith.addf %125, %127 : vector<16x100xf32>
    %cst_129 = arith.constant 0.000000e+00 : f32
    %129 = vector.broadcast %cst_129 : f32 to vector<16x100xf32>
    %130 = arith.maximumf %128, %129 : vector<16x100xf32>
    %c0_130 = arith.constant 0 : index
    %c0_131 = arith.constant 0 : index
    %c0_132 = arith.constant 0 : index
    %131 = vector.load %arg14[%c0_130, %c0_131, %c0_132] : memref<4x100x36xf32, #tpu.memory_space<vmem>>, vector<1x100x36xf32>
    %132 = vector.shape_cast %131 : vector<1x100x36xf32> to vector<100x36xf32>
    %cst_133 = arith.constant dense<0.000000e+00> : vector<16x36xf32>
    %133 = tpu.matmul %130, %132, %cst_133 {dimension_numbers = #tpu.dot_dimension_numbers<[1], [0], [0], [1], [0, 0, 1, 1], [], []>} : vector<16x100xf32>, vector<100x36xf32>, vector<16x36xf32> -> vector<16x36xf32>
    %c1_134 = arith.constant 1 : index
    %c0_135 = arith.constant 0 : index
    %c0_136 = arith.constant 0 : index
    %134 = vector.load %arg14[%c1_134, %c0_135, %c0_136] : memref<4x100x36xf32, #tpu.memory_space<vmem>>, vector<1x100x36xf32>
    %135 = vector.shape_cast %134 : vector<1x100x36xf32> to vector<100x36xf32>
    %cst_137 = arith.constant dense<0.000000e+00> : vector<16x36xf32>
    %136 = tpu.matmul %130, %135, %cst_137 {dimension_numbers = #tpu.dot_dimension_numbers<[1], [0], [0], [1], [0, 0, 1, 1], [], []>} : vector<16x100xf32>, vector<100x36xf32>, vector<16x36xf32> -> vector<16x36xf32>
    %c2_138 = arith.constant 2 : index
    %c0_139 = arith.constant 0 : index
    %c0_140 = arith.constant 0 : index
    %137 = vector.load %arg14[%c2_138, %c0_139, %c0_140] : memref<4x100x36xf32, #tpu.memory_space<vmem>>, vector<1x100x36xf32>
    %138 = vector.shape_cast %137 : vector<1x100x36xf32> to vector<100x36xf32>
    %cst_141 = arith.constant dense<0.000000e+00> : vector<16x36xf32>
    %139 = tpu.matmul %130, %138, %cst_141 {dimension_numbers = #tpu.dot_dimension_numbers<[1], [0], [0], [1], [0, 0, 1, 1], [], []>} : vector<16x100xf32>, vector<100x36xf32>, vector<16x36xf32> -> vector<16x36xf32>
    %c3_142 = arith.constant 3 : index
    %c0_143 = arith.constant 0 : index
    %c0_144 = arith.constant 0 : index
    %140 = vector.load %arg14[%c3_142, %c0_143, %c0_144] : memref<4x100x36xf32, #tpu.memory_space<vmem>>, vector<1x100x36xf32>
    %141 = vector.shape_cast %140 : vector<1x100x36xf32> to vector<100x36xf32>
    %cst_145 = arith.constant dense<0.000000e+00> : vector<16x36xf32>
    %142 = tpu.matmul %130, %141, %cst_145 {dimension_numbers = #tpu.dot_dimension_numbers<[1], [0], [0], [1], [0, 0, 1, 1], [], []>} : vector<16x100xf32>, vector<100x36xf32>, vector<16x36xf32> -> vector<16x36xf32>
    %143 = arith.maximumf %133, %136 : vector<16x36xf32>
    %144 = arith.maximumf %139, %142 : vector<16x36xf32>
    %145 = arith.maximumf %143, %144 : vector<16x36xf32>
    %c0_146 = arith.constant 0 : index
    %c7_147 = arith.constant 7 : index
    %146 = vector.load %arg21[%c0_146, %c7_147] : memref<16x50xf32, #tpu.memory_space<vmem>>, vector<16x36xf32>
    tpu.vector_store %arg21[%c0_146, %c7_147], %145 {strides = array<i32>} : memref<16x50xf32, #tpu.memory_space<vmem>>, vector<16x36xf32>,
    %cst_148 = arith.constant 0.000000e+00 : f32
    %147 = vector.broadcast %cst_148 : f32 to vector<8x36xf32>
    %c0_149 = arith.constant 0 : index
    %c0_150 = arith.constant 0 : index
    %148 = vector.load %arg21[%c0_149, %c0_150] : memref<16x50xf32, #tpu.memory_space<vmem>>, vector<16x36xf32>
    %c0_151 = arith.constant 0 : index
    %c0_152 = arith.constant 0 : index
    %c0_153 = arith.constant 0 : index
    %149 = vector.load %arg6[%c0_151, %c0_152, %c0_153] : memref<9x8x16xf32, #tpu.memory_space<vmem>>, vector<1x8x16xf32>
    %150 = vector.shape_cast %149 : vector<1x8x16xf32> to vector<8x16xf32>
    %cst_154 = arith.constant dense<0.000000e+00> : vector<8x36xf32>
    %151 = tpu.matmul %150, %148, %cst_154 {dimension_numbers = #tpu.dot_dimension_numbers<[1], [0], [0], [1], [0, 0, 1, 1], [], []>} : vector<8x16xf32>, vector<16x36xf32>, vector<8x36xf32> -> vector<8x36xf32>
    %152 = arith.addf %147, %151 : vector<8x36xf32>
    %c0_155 = arith.constant 0 : index
    %c1_156 = arith.constant 1 : index
    %153 = vector.load %arg21[%c0_155, %c1_156] : memref<16x50xf32, #tpu.memory_space<vmem>>, vector<16x36xf32>
    %c1_157 = arith.constant 1 : index
    %c0_158 = arith.constant 0 : index
    %c0_159 = arith.constant 0 : index
    %154 = vector.load %arg6[%c1_157, %c0_158, %c0_159] : memref<9x8x16xf32, #tpu.memory_space<vmem>>, vector<1x8x16xf32>
    %155 = vector.shape_cast %154 : vector<1x8x16xf32> to vector<8x16xf32>
    %cst_160 = arith.constant dense<0.000000e+00> : vector<8x36xf32>
    %156 = tpu.matmul %155, %153, %cst_160 {dimension_numbers = #tpu.dot_dimension_numbers<[1], [0], [0], [1], [0, 0, 1, 1], [], []>} : vector<8x16xf32>, vector<16x36xf32>, vector<8x36xf32> -> vector<8x36xf32>
    %157 = arith.addf %152, %156 : vector<8x36xf32>
    %c0_161 = arith.constant 0 : index
    %c2_162 = arith.constant 2 : index
    %158 = vector.load %arg21[%c0_161, %c2_162] : memref<16x50xf32, #tpu.memory_space<vmem>>, vector<16x36xf32>
    %c2_163 = arith.constant 2 : index
    %c0_164 = arith.constant 0 : index
    %c0_165 = arith.constant 0 : index
    %159 = vector.load %arg6[%c2_163, %c0_164, %c0_165] : memref<9x8x16xf32, #tpu.memory_space<vmem>>, vector<1x8x16xf32>
    %160 = vector.shape_cast %159 : vector<1x8x16xf32> to vector<8x16xf32>
    %cst_166 = arith.constant dense<0.000000e+00> : vector<8x36xf32>
    %161 = tpu.matmul %160, %158, %cst_166 {dimension_numbers = #tpu.dot_dimension_numbers<[1], [0], [0], [1], [0, 0, 1, 1], [], []>} : vector<8x16xf32>, vector<16x36xf32>, vector<8x36xf32> -> vector<8x36xf32>
    %162 = arith.addf %157, %161 : vector<8x36xf32>
    %c0_167 = arith.constant 0 : index
    %c6_168 = arith.constant 6 : index
    %163 = vector.load %arg21[%c0_167, %c6_168] : memref<16x50xf32, #tpu.memory_space<vmem>>, vector<16x36xf32>
    %c3_169 = arith.constant 3 : index
    %c0_170 = arith.constant 0 : index
    %c0_171 = arith.constant 0 : index
    %164 = vector.load %arg6[%c3_169, %c0_170, %c0_171] : memref<9x8x16xf32, #tpu.memory_space<vmem>>, vector<1x8x16xf32>
    %165 = vector.shape_cast %164 : vector<1x8x16xf32> to vector<8x16xf32>
    %cst_172 = arith.constant dense<0.000000e+00> : vector<8x36xf32>
    %166 = tpu.matmul %165, %163, %cst_172 {dimension_numbers = #tpu.dot_dimension_numbers<[1], [0], [0], [1], [0, 0, 1, 1], [], []>} : vector<8x16xf32>, vector<16x36xf32>, vector<8x36xf32> -> vector<8x36xf32>
    %167 = arith.addf %162, %166 : vector<8x36xf32>
    %c0_173 = arith.constant 0 : index
    %c7_174 = arith.constant 7 : index
    %168 = vector.load %arg21[%c0_173, %c7_174] : memref<16x50xf32, #tpu.memory_space<vmem>>, vector<16x36xf32>
    %c4_175 = arith.constant 4 : index
    %c0_176 = arith.constant 0 : index
    %c0_177 = arith.constant 0 : index
    %169 = vector.load %arg6[%c4_175, %c0_176, %c0_177] : memref<9x8x16xf32, #tpu.memory_space<vmem>>, vector<1x8x16xf32>
    %170 = vector.shape_cast %169 : vector<1x8x16xf32> to vector<8x16xf32>
    %cst_178 = arith.constant dense<0.000000e+00> : vector<8x36xf32>
    %171 = tpu.matmul %170, %168, %cst_178 {dimension_numbers = #tpu.dot_dimension_numbers<[1], [0], [0], [1], [0, 0, 1, 1], [], []>} : vector<8x16xf32>, vector<16x36xf32>, vector<8x36xf32> -> vector<8x36xf32>
    %172 = arith.addf %167, %171 : vector<8x36xf32>
    %c0_179 = arith.constant 0 : index
    %c8_180 = arith.constant 8 : index
    %173 = vector.load %arg21[%c0_179, %c8_180] : memref<16x50xf32, #tpu.memory_space<vmem>>, vector<16x36xf32>
    %c5_181 = arith.constant 5 : index
    %c0_182 = arith.constant 0 : index
    %c0_183 = arith.constant 0 : index
    %174 = vector.load %arg6[%c5_181, %c0_182, %c0_183] : memref<9x8x16xf32, #tpu.memory_space<vmem>>, vector<1x8x16xf32>
    %175 = vector.shape_cast %174 : vector<1x8x16xf32> to vector<8x16xf32>
    %cst_184 = arith.constant dense<0.000000e+00> : vector<8x36xf32>
    %176 = tpu.matmul %175, %173, %cst_184 {dimension_numbers = #tpu.dot_dimension_numbers<[1], [0], [0], [1], [0, 0, 1, 1], [], []>} : vector<8x16xf32>, vector<16x36xf32>, vector<8x36xf32> -> vector<8x36xf32>
    %177 = arith.addf %172, %176 : vector<8x36xf32>
    %c0_185 = arith.constant 0 : index
    %c12_186 = arith.constant 12 : index
    %178 = vector.load %arg21[%c0_185, %c12_186] : memref<16x50xf32, #tpu.memory_space<vmem>>, vector<16x36xf32>
    %c6_187 = arith.constant 6 : index
    %c0_188 = arith.constant 0 : index
    %c0_189 = arith.constant 0 : index
    %179 = vector.load %arg6[%c6_187, %c0_188, %c0_189] : memref<9x8x16xf32, #tpu.memory_space<vmem>>, vector<1x8x16xf32>
    %180 = vector.shape_cast %179 : vector<1x8x16xf32> to vector<8x16xf32>
    %cst_190 = arith.constant dense<0.000000e+00> : vector<8x36xf32>
    %181 = tpu.matmul %180, %178, %cst_190 {dimension_numbers = #tpu.dot_dimension_numbers<[1], [0], [0], [1], [0, 0, 1, 1], [], []>} : vector<8x16xf32>, vector<16x36xf32>, vector<8x36xf32> -> vector<8x36xf32>
    %182 = arith.addf %177, %181 : vector<8x36xf32>
    %c0_191 = arith.constant 0 : index
    %c13 = arith.constant 13 : index
    %183 = vector.load %arg21[%c0_191, %c13] : memref<16x50xf32, #tpu.memory_space<vmem>>, vector<16x36xf32>
    %c7_192 = arith.constant 7 : index
    %c0_193 = arith.constant 0 : index
    %c0_194 = arith.constant 0 : index
    %184 = vector.load %arg6[%c7_192, %c0_193, %c0_194] : memref<9x8x16xf32, #tpu.memory_space<vmem>>, vector<1x8x16xf32>
    %185 = vector.shape_cast %184 : vector<1x8x16xf32> to vector<8x16xf32>
    %cst_195 = arith.constant dense<0.000000e+00> : vector<8x36xf32>
    %186 = tpu.matmul %185, %183, %cst_195 {dimension_numbers = #tpu.dot_dimension_numbers<[1], [0], [0], [1], [0, 0, 1, 1], [], []>} : vector<8x16xf32>, vector<16x36xf32>, vector<8x36xf32> -> vector<8x36xf32>
    %187 = arith.addf %182, %186 : vector<8x36xf32>
    %c0_196 = arith.constant 0 : index
    %c14 = arith.constant 14 : index
    %188 = vector.load %arg21[%c0_196, %c14] : memref<16x50xf32, #tpu.memory_space<vmem>>, vector<16x36xf32>
    %c8_197 = arith.constant 8 : index
    %c0_198 = arith.constant 0 : index
    %c0_199 = arith.constant 0 : index
    %189 = vector.load %arg6[%c8_197, %c0_198, %c0_199] : memref<9x8x16xf32, #tpu.memory_space<vmem>>, vector<1x8x16xf32>
    %190 = vector.shape_cast %189 : vector<1x8x16xf32> to vector<8x16xf32>
    %cst_200 = arith.constant dense<0.000000e+00> : vector<8x36xf32>
    %191 = tpu.matmul %190, %188, %cst_200 {dimension_numbers = #tpu.dot_dimension_numbers<[1], [0], [0], [1], [0, 0, 1, 1], [], []>} : vector<8x16xf32>, vector<16x36xf32>, vector<8x36xf32> -> vector<8x36xf32>
    %192 = arith.addf %187, %191 : vector<8x36xf32>
    %c0_201 = arith.constant 0 : index
    %c0_202 = arith.constant 0 : index
    %193 = vector.load %arg7[%c0_201, %c0_202] : memref<8x1xf32, #tpu.memory_space<vmem>>, vector<8x1xf32>
    %194 = vector.broadcast %193 : vector<8x1xf32> to vector<8x36xf32>
    %195 = arith.addf %192, %194 : vector<8x36xf32>
    %cst_203 = arith.constant 0.000000e+00 : f32
    %196 = vector.broadcast %cst_203 : f32 to vector<8x36xf32>
    %197 = arith.maximumf %195, %196 : vector<8x36xf32>
    %c0_204 = arith.constant 0 : index
    %c0_205 = arith.constant 0 : index
    %198 = vector.load %arg15[%c0_204, %c0_205] : memref<36x100xf32, #tpu.memory_space<vmem>>, vector<36x100xf32>
    %cst_206 = arith.constant dense<0.000000e+00> : vector<8x100xf32>
    %199 = tpu.matmul %197, %198, %cst_206 {dimension_numbers = #tpu.dot_dimension_numbers<[1], [0], [0], [1], [0, 0, 1, 1], [], []>} : vector<8x36xf32>, vector<36x100xf32>, vector<8x100xf32> -> vector<8x100xf32>
    %c0_207 = arith.constant 0 : index
    %c11_208 = arith.constant 11 : index
    %200 = vector.load %arg20[%c0_207, %c11_208] : memref<8x122xf32, #tpu.memory_space<vmem>>, vector<8x100xf32>
    tpu.vector_store %arg20[%c0_207, %c11_208], %199 {strides = array<i32>} : memref<8x122xf32, #tpu.memory_space<vmem>>, vector<8x100xf32>,
    %cst_209 = arith.constant 0.000000e+00 : f32
    %201 = vector.broadcast %cst_209 : f32 to vector<8x100xf32>
    %c0_210 = arith.constant 0 : index
    %c0_211 = arith.constant 0 : index
    %202 = vector.load %arg20[%c0_210, %c0_211] : memref<8x122xf32, #tpu.memory_space<vmem>>, vector<8x100xf32>
    %c0_212 = arith.constant 0 : index
    %c0_213 = arith.constant 0 : index
    %c0_214 = arith.constant 0 : index
    %203 = vector.load %arg8[%c0_212, %c0_213, %c0_214] : memref<9x8x8xf32, #tpu.memory_space<vmem>>, vector<1x8x8xf32>
    %204 = vector.shape_cast %203 : vector<1x8x8xf32> to vector<8x8xf32>
    %cst_215 = arith.constant dense<0.000000e+00> : vector<8x100xf32>
    %205 = tpu.matmul %204, %202, %cst_215 {dimension_numbers = #tpu.dot_dimension_numbers<[1], [0], [0], [1], [0, 0, 1, 1], [], []>} : vector<8x8xf32>, vector<8x100xf32>, vector<8x100xf32> -> vector<8x100xf32>
    %206 = arith.addf %201, %205 : vector<8x100xf32>
    %c0_216 = arith.constant 0 : index
    %c1_217 = arith.constant 1 : index
    %207 = vector.load %arg20[%c0_216, %c1_217] : memref<8x122xf32, #tpu.memory_space<vmem>>, vector<8x100xf32>
    %c1_218 = arith.constant 1 : index
    %c0_219 = arith.constant 0 : index
    %c0_220 = arith.constant 0 : index
    %208 = vector.load %arg8[%c1_218, %c0_219, %c0_220] : memref<9x8x8xf32, #tpu.memory_space<vmem>>, vector<1x8x8xf32>
    %209 = vector.shape_cast %208 : vector<1x8x8xf32> to vector<8x8xf32>
    %cst_221 = arith.constant dense<0.000000e+00> : vector<8x100xf32>
    %210 = tpu.matmul %209, %207, %cst_221 {dimension_numbers = #tpu.dot_dimension_numbers<[1], [0], [0], [1], [0, 0, 1, 1], [], []>} : vector<8x8xf32>, vector<8x100xf32>, vector<8x100xf32> -> vector<8x100xf32>
    %211 = arith.addf %206, %210 : vector<8x100xf32>
    %c0_222 = arith.constant 0 : index
    %c2_223 = arith.constant 2 : index
    %212 = vector.load %arg20[%c0_222, %c2_223] : memref<8x122xf32, #tpu.memory_space<vmem>>, vector<8x100xf32>
    %c2_224 = arith.constant 2 : index
    %c0_225 = arith.constant 0 : index
    %c0_226 = arith.constant 0 : index
    %213 = vector.load %arg8[%c2_224, %c0_225, %c0_226] : memref<9x8x8xf32, #tpu.memory_space<vmem>>, vector<1x8x8xf32>
    %214 = vector.shape_cast %213 : vector<1x8x8xf32> to vector<8x8xf32>
    %cst_227 = arith.constant dense<0.000000e+00> : vector<8x100xf32>
    %215 = tpu.matmul %214, %212, %cst_227 {dimension_numbers = #tpu.dot_dimension_numbers<[1], [0], [0], [1], [0, 0, 1, 1], [], []>} : vector<8x8xf32>, vector<8x100xf32>, vector<8x100xf32> -> vector<8x100xf32>
    %216 = arith.addf %211, %215 : vector<8x100xf32>
    %c0_228 = arith.constant 0 : index
    %c10_229 = arith.constant 10 : index
    %217 = vector.load %arg20[%c0_228, %c10_229] : memref<8x122xf32, #tpu.memory_space<vmem>>, vector<8x100xf32>
    %c3_230 = arith.constant 3 : index
    %c0_231 = arith.constant 0 : index
    %c0_232 = arith.constant 0 : index
    %218 = vector.load %arg8[%c3_230, %c0_231, %c0_232] : memref<9x8x8xf32, #tpu.memory_space<vmem>>, vector<1x8x8xf32>
    %219 = vector.shape_cast %218 : vector<1x8x8xf32> to vector<8x8xf32>
    %cst_233 = arith.constant dense<0.000000e+00> : vector<8x100xf32>
    %220 = tpu.matmul %219, %217, %cst_233 {dimension_numbers = #tpu.dot_dimension_numbers<[1], [0], [0], [1], [0, 0, 1, 1], [], []>} : vector<8x8xf32>, vector<8x100xf32>, vector<8x100xf32> -> vector<8x100xf32>
    %221 = arith.addf %216, %220 : vector<8x100xf32>
    %c0_234 = arith.constant 0 : index
    %c11_235 = arith.constant 11 : index
    %222 = vector.load %arg20[%c0_234, %c11_235] : memref<8x122xf32, #tpu.memory_space<vmem>>, vector<8x100xf32>
    %c4_236 = arith.constant 4 : index
    %c0_237 = arith.constant 0 : index
    %c0_238 = arith.constant 0 : index
    %223 = vector.load %arg8[%c4_236, %c0_237, %c0_238] : memref<9x8x8xf32, #tpu.memory_space<vmem>>, vector<1x8x8xf32>
    %224 = vector.shape_cast %223 : vector<1x8x8xf32> to vector<8x8xf32>
    %cst_239 = arith.constant dense<0.000000e+00> : vector<8x100xf32>
    %225 = tpu.matmul %224, %222, %cst_239 {dimension_numbers = #tpu.dot_dimension_numbers<[1], [0], [0], [1], [0, 0, 1, 1], [], []>} : vector<8x8xf32>, vector<8x100xf32>, vector<8x100xf32> -> vector<8x100xf32>
    %226 = arith.addf %221, %225 : vector<8x100xf32>
    %c0_240 = arith.constant 0 : index
    %c12_241 = arith.constant 12 : index
    %227 = vector.load %arg20[%c0_240, %c12_241] : memref<8x122xf32, #tpu.memory_space<vmem>>, vector<8x100xf32>
    %c5_242 = arith.constant 5 : index
    %c0_243 = arith.constant 0 : index
    %c0_244 = arith.constant 0 : index
    %228 = vector.load %arg8[%c5_242, %c0_243, %c0_244] : memref<9x8x8xf32, #tpu.memory_space<vmem>>, vector<1x8x8xf32>
    %229 = vector.shape_cast %228 : vector<1x8x8xf32> to vector<8x8xf32>
    %cst_245 = arith.constant dense<0.000000e+00> : vector<8x100xf32>
    %230 = tpu.matmul %229, %227, %cst_245 {dimension_numbers = #tpu.dot_dimension_numbers<[1], [0], [0], [1], [0, 0, 1, 1], [], []>} : vector<8x8xf32>, vector<8x100xf32>, vector<8x100xf32> -> vector<8x100xf32>
    %231 = arith.addf %226, %230 : vector<8x100xf32>
    %c0_246 = arith.constant 0 : index
    %c20_247 = arith.constant 20 : index
    %232 = vector.load %arg20[%c0_246, %c20_247] : memref<8x122xf32, #tpu.memory_space<vmem>>, vector<8x100xf32>
    %c6_248 = arith.constant 6 : index
    %c0_249 = arith.constant 0 : index
    %c0_250 = arith.constant 0 : index
    %233 = vector.load %arg8[%c6_248, %c0_249, %c0_250] : memref<9x8x8xf32, #tpu.memory_space<vmem>>, vector<1x8x8xf32>
    %234 = vector.shape_cast %233 : vector<1x8x8xf32> to vector<8x8xf32>
    %cst_251 = arith.constant dense<0.000000e+00> : vector<8x100xf32>
    %235 = tpu.matmul %234, %232, %cst_251 {dimension_numbers = #tpu.dot_dimension_numbers<[1], [0], [0], [1], [0, 0, 1, 1], [], []>} : vector<8x8xf32>, vector<8x100xf32>, vector<8x100xf32> -> vector<8x100xf32>
    %236 = arith.addf %231, %235 : vector<8x100xf32>
    %c0_252 = arith.constant 0 : index
    %c21_253 = arith.constant 21 : index
    %237 = vector.load %arg20[%c0_252, %c21_253] : memref<8x122xf32, #tpu.memory_space<vmem>>, vector<8x100xf32>
    %c7_254 = arith.constant 7 : index
    %c0_255 = arith.constant 0 : index
    %c0_256 = arith.constant 0 : index
    %238 = vector.load %arg8[%c7_254, %c0_255, %c0_256] : memref<9x8x8xf32, #tpu.memory_space<vmem>>, vector<1x8x8xf32>
    %239 = vector.shape_cast %238 : vector<1x8x8xf32> to vector<8x8xf32>
    %cst_257 = arith.constant dense<0.000000e+00> : vector<8x100xf32>
    %240 = tpu.matmul %239, %237, %cst_257 {dimension_numbers = #tpu.dot_dimension_numbers<[1], [0], [0], [1], [0, 0, 1, 1], [], []>} : vector<8x8xf32>, vector<8x100xf32>, vector<8x100xf32> -> vector<8x100xf32>
    %241 = arith.addf %236, %240 : vector<8x100xf32>
    %c0_258 = arith.constant 0 : index
    %c22_259 = arith.constant 22 : index
    %242 = vector.load %arg20[%c0_258, %c22_259] : memref<8x122xf32, #tpu.memory_space<vmem>>, vector<8x100xf32>
    %c8_260 = arith.constant 8 : index
    %c0_261 = arith.constant 0 : index
    %c0_262 = arith.constant 0 : index
    %243 = vector.load %arg8[%c8_260, %c0_261, %c0_262] : memref<9x8x8xf32, #tpu.memory_space<vmem>>, vector<1x8x8xf32>
    %244 = vector.shape_cast %243 : vector<1x8x8xf32> to vector<8x8xf32>
    %cst_263 = arith.constant dense<0.000000e+00> : vector<8x100xf32>
    %245 = tpu.matmul %244, %242, %cst_263 {dimension_numbers = #tpu.dot_dimension_numbers<[1], [0], [0], [1], [0, 0, 1, 1], [], []>} : vector<8x8xf32>, vector<8x100xf32>, vector<8x100xf32> -> vector<8x100xf32>
    %246 = arith.addf %241, %245 : vector<8x100xf32>
    %c0_264 = arith.constant 0 : index
    %c0_265 = arith.constant 0 : index
    %247 = vector.load %arg9[%c0_264, %c0_265] : memref<8x1xf32, #tpu.memory_space<vmem>>, vector<8x1xf32>
    %248 = vector.broadcast %247 : vector<8x1xf32> to vector<8x100xf32>
    %249 = arith.addf %246, %248 : vector<8x100xf32>
    %cst_266 = arith.constant 0.000000e+00 : f32
    %250 = vector.broadcast %cst_266 : f32 to vector<8x100xf32>
    %251 = arith.maximumf %249, %250 : vector<8x100xf32>
    %c0_267 = arith.constant 0 : index
    %c0_268 = arith.constant 0 : index
    %252 = vector.load %arg16[%c0_267, %c0_268] : memref<100x324xf32, #tpu.memory_space<vmem>>, vector<100x324xf32>
    %cst_269 = arith.constant dense<0.000000e+00> : vector<8x324xf32>
    %253 = tpu.matmul %251, %252, %cst_269 {dimension_numbers = #tpu.dot_dimension_numbers<[1], [0], [0], [1], [0, 0, 1, 1], [], []>} : vector<8x100xf32>, vector<100x324xf32>, vector<8x324xf32> -> vector<8x324xf32>
    %c0_270 = arith.constant 0 : index
    %c19_271 = arith.constant 19 : index
    %254 = vector.load %arg19[%c0_270, %c19_271] : memref<8x362xf32, #tpu.memory_space<vmem>>, vector<8x324xf32>
    tpu.vector_store %arg19[%c0_270, %c19_271], %253 {strides = array<i32>} : memref<8x362xf32, #tpu.memory_space<vmem>>, vector<8x324xf32>,
    %cst_272 = arith.constant 0.000000e+00 : f32
    %255 = vector.broadcast %cst_272 : f32 to vector<8x324xf32>
    %c0_273 = arith.constant 0 : index
    %c0_274 = arith.constant 0 : index
    %256 = vector.load %arg19[%c0_273, %c0_274] : memref<8x362xf32, #tpu.memory_space<vmem>>, vector<8x324xf32>
    %c0_275 = arith.constant 0 : index
    %c0_276 = arith.constant 0 : index
    %c0_277 = arith.constant 0 : index
    %257 = vector.load %arg10[%c0_275, %c0_276, %c0_277] : memref<9x8x8xf32, #tpu.memory_space<vmem>>, vector<1x8x8xf32>
    %258 = vector.shape_cast %257 : vector<1x8x8xf32> to vector<8x8xf32>
    %cst_278 = arith.constant dense<0.000000e+00> : vector<8x324xf32>
    %259 = tpu.matmul %258, %256, %cst_278 {dimension_numbers = #tpu.dot_dimension_numbers<[1], [0], [0], [1], [0, 0, 1, 1], [], []>} : vector<8x8xf32>, vector<8x324xf32>, vector<8x324xf32> -> vector<8x324xf32>
    %260 = arith.addf %255, %259 : vector<8x324xf32>
    %c0_279 = arith.constant 0 : index
    %c1_280 = arith.constant 1 : index
    %261 = vector.load %arg19[%c0_279, %c1_280] : memref<8x362xf32, #tpu.memory_space<vmem>>, vector<8x324xf32>
    %c1_281 = arith.constant 1 : index
    %c0_282 = arith.constant 0 : index
    %c0_283 = arith.constant 0 : index
    %262 = vector.load %arg10[%c1_281, %c0_282, %c0_283] : memref<9x8x8xf32, #tpu.memory_space<vmem>>, vector<1x8x8xf32>
    %263 = vector.shape_cast %262 : vector<1x8x8xf32> to vector<8x8xf32>
    %cst_284 = arith.constant dense<0.000000e+00> : vector<8x324xf32>
    %264 = tpu.matmul %263, %261, %cst_284 {dimension_numbers = #tpu.dot_dimension_numbers<[1], [0], [0], [1], [0, 0, 1, 1], [], []>} : vector<8x8xf32>, vector<8x324xf32>, vector<8x324xf32> -> vector<8x324xf32>
    %265 = arith.addf %260, %264 : vector<8x324xf32>
    %c0_285 = arith.constant 0 : index
    %c2_286 = arith.constant 2 : index
    %266 = vector.load %arg19[%c0_285, %c2_286] : memref<8x362xf32, #tpu.memory_space<vmem>>, vector<8x324xf32>
    %c2_287 = arith.constant 2 : index
    %c0_288 = arith.constant 0 : index
    %c0_289 = arith.constant 0 : index
    %267 = vector.load %arg10[%c2_287, %c0_288, %c0_289] : memref<9x8x8xf32, #tpu.memory_space<vmem>>, vector<1x8x8xf32>
    %268 = vector.shape_cast %267 : vector<1x8x8xf32> to vector<8x8xf32>
    %cst_290 = arith.constant dense<0.000000e+00> : vector<8x324xf32>
    %269 = tpu.matmul %268, %266, %cst_290 {dimension_numbers = #tpu.dot_dimension_numbers<[1], [0], [0], [1], [0, 0, 1, 1], [], []>} : vector<8x8xf32>, vector<8x324xf32>, vector<8x324xf32> -> vector<8x324xf32>
    %270 = arith.addf %265, %269 : vector<8x324xf32>
    %c0_291 = arith.constant 0 : index
    %c18_292 = arith.constant 18 : index
    %271 = vector.load %arg19[%c0_291, %c18_292] : memref<8x362xf32, #tpu.memory_space<vmem>>, vector<8x324xf32>
    %c3_293 = arith.constant 3 : index
    %c0_294 = arith.constant 0 : index
    %c0_295 = arith.constant 0 : index
    %272 = vector.load %arg10[%c3_293, %c0_294, %c0_295] : memref<9x8x8xf32, #tpu.memory_space<vmem>>, vector<1x8x8xf32>
    %273 = vector.shape_cast %272 : vector<1x8x8xf32> to vector<8x8xf32>
    %cst_296 = arith.constant dense<0.000000e+00> : vector<8x324xf32>
    %274 = tpu.matmul %273, %271, %cst_296 {dimension_numbers = #tpu.dot_dimension_numbers<[1], [0], [0], [1], [0, 0, 1, 1], [], []>} : vector<8x8xf32>, vector<8x324xf32>, vector<8x324xf32> -> vector<8x324xf32>
    %275 = arith.addf %270, %274 : vector<8x324xf32>
    %c0_297 = arith.constant 0 : index
    %c19_298 = arith.constant 19 : index
    %276 = vector.load %arg19[%c0_297, %c19_298] : memref<8x362xf32, #tpu.memory_space<vmem>>, vector<8x324xf32>
    %c4_299 = arith.constant 4 : index
    %c0_300 = arith.constant 0 : index
    %c0_301 = arith.constant 0 : index
    %277 = vector.load %arg10[%c4_299, %c0_300, %c0_301] : memref<9x8x8xf32, #tpu.memory_space<vmem>>, vector<1x8x8xf32>
    %278 = vector.shape_cast %277 : vector<1x8x8xf32> to vector<8x8xf32>
    %cst_302 = arith.constant dense<0.000000e+00> : vector<8x324xf32>
    %279 = tpu.matmul %278, %276, %cst_302 {dimension_numbers = #tpu.dot_dimension_numbers<[1], [0], [0], [1], [0, 0, 1, 1], [], []>} : vector<8x8xf32>, vector<8x324xf32>, vector<8x324xf32> -> vector<8x324xf32>
    %280 = arith.addf %275, %279 : vector<8x324xf32>
    %c0_303 = arith.constant 0 : index
    %c20_304 = arith.constant 20 : index
    %281 = vector.load %arg19[%c0_303, %c20_304] : memref<8x362xf32, #tpu.memory_space<vmem>>, vector<8x324xf32>
    %c5_305 = arith.constant 5 : index
    %c0_306 = arith.constant 0 : index
    %c0_307 = arith.constant 0 : index
    %282 = vector.load %arg10[%c5_305, %c0_306, %c0_307] : memref<9x8x8xf32, #tpu.memory_space<vmem>>, vector<1x8x8xf32>
    %283 = vector.shape_cast %282 : vector<1x8x8xf32> to vector<8x8xf32>
    %cst_308 = arith.constant dense<0.000000e+00> : vector<8x324xf32>
    %284 = tpu.matmul %283, %281, %cst_308 {dimension_numbers = #tpu.dot_dimension_numbers<[1], [0], [0], [1], [0, 0, 1, 1], [], []>} : vector<8x8xf32>, vector<8x324xf32>, vector<8x324xf32> -> vector<8x324xf32>
    %285 = arith.addf %280, %284 : vector<8x324xf32>
    %c0_309 = arith.constant 0 : index
    %c36_310 = arith.constant 36 : index
    %286 = vector.load %arg19[%c0_309, %c36_310] : memref<8x362xf32, #tpu.memory_space<vmem>>, vector<8x324xf32>
    %c6_311 = arith.constant 6 : index
    %c0_312 = arith.constant 0 : index
    %c0_313 = arith.constant 0 : index
    %287 = vector.load %arg10[%c6_311, %c0_312, %c0_313] : memref<9x8x8xf32, #tpu.memory_space<vmem>>, vector<1x8x8xf32>
    %288 = vector.shape_cast %287 : vector<1x8x8xf32> to vector<8x8xf32>
    %cst_314 = arith.constant dense<0.000000e+00> : vector<8x324xf32>
    %289 = tpu.matmul %288, %286, %cst_314 {dimension_numbers = #tpu.dot_dimension_numbers<[1], [0], [0], [1], [0, 0, 1, 1], [], []>} : vector<8x8xf32>, vector<8x324xf32>, vector<8x324xf32> -> vector<8x324xf32>
    %290 = arith.addf %285, %289 : vector<8x324xf32>
    %c0_315 = arith.constant 0 : index
    %c37_316 = arith.constant 37 : index
    %291 = vector.load %arg19[%c0_315, %c37_316] : memref<8x362xf32, #tpu.memory_space<vmem>>, vector<8x324xf32>
    %c7_317 = arith.constant 7 : index
    %c0_318 = arith.constant 0 : index
    %c0_319 = arith.constant 0 : index
    %292 = vector.load %arg10[%c7_317, %c0_318, %c0_319] : memref<9x8x8xf32, #tpu.memory_space<vmem>>, vector<1x8x8xf32>
    %293 = vector.shape_cast %292 : vector<1x8x8xf32> to vector<8x8xf32>
    %cst_320 = arith.constant dense<0.000000e+00> : vector<8x324xf32>
    %294 = tpu.matmul %293, %291, %cst_320 {dimension_numbers = #tpu.dot_dimension_numbers<[1], [0], [0], [1], [0, 0, 1, 1], [], []>} : vector<8x8xf32>, vector<8x324xf32>, vector<8x324xf32> -> vector<8x324xf32>
    %295 = arith.addf %290, %294 : vector<8x324xf32>
    %c0_321 = arith.constant 0 : index
    %c38_322 = arith.constant 38 : index
    %296 = vector.load %arg19[%c0_321, %c38_322] : memref<8x362xf32, #tpu.memory_space<vmem>>, vector<8x324xf32>
    %c8_323 = arith.constant 8 : index
    %c0_324 = arith.constant 0 : index
    %c0_325 = arith.constant 0 : index
    %297 = vector.load %arg10[%c8_323, %c0_324, %c0_325] : memref<9x8x8xf32, #tpu.memory_space<vmem>>, vector<1x8x8xf32>
    %298 = vector.shape_cast %297 : vector<1x8x8xf32> to vector<8x8xf32>
    %cst_326 = arith.constant dense<0.000000e+00> : vector<8x324xf32>
    %299 = tpu.matmul %298, %296, %cst_326 {dimension_numbers = #tpu.dot_dimension_numbers<[1], [0], [0], [1], [0, 0, 1, 1], [], []>} : vector<8x8xf32>, vector<8x324xf32>, vector<8x324xf32> -> vector<8x324xf32>
    %300 = arith.addf %295, %299 : vector<8x324xf32>
    %c0_327 = arith.constant 0 : index
    %c0_328 = arith.constant 0 : index
    %301 = vector.load %arg11[%c0_327, %c0_328] : memref<8x1xf32, #tpu.memory_space<vmem>>, vector<8x1xf32>
    %302 = vector.broadcast %301 : vector<8x1xf32> to vector<8x324xf32>
    %303 = arith.addf %300, %302 : vector<8x324xf32>
    %cst_329 = arith.constant 0.000000e+00 : f32
    %304 = vector.broadcast %cst_329 : f32 to vector<8x324xf32>
    %305 = arith.subf %304, %303 : vector<8x324xf32>
    %306 = math.exp %305 : vector<8x324xf32>
    %cst_330 = arith.constant 1.000000e+00 : f32
    %307 = vector.broadcast %cst_330 : f32 to vector<8x324xf32>
    %308 = arith.addf %307, %306 : vector<8x324xf32>
    %309 = tpu.reciprocal %308 {approx = true} : vector<8x324xf32> -> vector<8x324xf32>
    %c0_331 = arith.constant 0 : index
    %c0_332 = arith.constant 0 : index
    %310 = vector.load %arg17[%c0_331, %c0_332] : memref<324x256xf32, #tpu.memory_space<vmem>>, vector<324x256xf32>
    %cst_333 = arith.constant dense<0.000000e+00> : vector<8x256xf32>
    %311 = tpu.matmul %309, %310, %cst_333 {dimension_numbers = #tpu.dot_dimension_numbers<[1], [0], [0], [1], [0, 0, 1, 1], [], []>} : vector<8x324xf32>, vector<324x256xf32>, vector<8x256xf32> -> vector<8x256xf32>
    %312 = vector.extract_strided_slice %311 {offsets = [0, 0], sizes = [1, 256], strides = [1, 1]} : vector<8x256xf32> to vector<1x256xf32>
    %c0_334 = arith.constant 0 : index
    %c0_335 = arith.constant 0 : index
    %c0_336 = arith.constant 0 : index
    %313 = vector.load %arg18[%c0_334, %c0_335, %c0_336] : memref<1x1x256xf32, #tpu.memory_space<vmem>>, vector<1x1x256xf32>
    %314 = vector.shape_cast %313 : vector<1x1x256xf32> to vector<1x256xf32>
    %315 = vector.shape_cast %312 : vector<1x256xf32> to vector<1x1x256xf32>
    tpu.vector_store %arg18[%c0_334, %c0_335, %c0_336], %315 {strides = array<i32>} : memref<1x1x256xf32, #tpu.memory_space<vmem>>, vector<1x1x256xf32>,
    return
  }
  func.func @transform_0(%arg0: i32) -> (i32, i32, i32) {
    %c0_i32 = arith.constant 0 : i32
    %c0_i32_0 = arith.constant 0 : i32
    %c0_i32_1 = arith.constant 0 : i32
    return %arg0, %c0_i32, %c0_i32_0 : i32, i32, i32
  }
  func.func @transform_1(%arg0: i32) -> (i32, i32, i32) {
    %c0_i32 = arith.constant 0 : i32
    %c0_i32_0 = arith.constant 0 : i32
    %c0_i32_1 = arith.constant 0 : i32
    %c0_i32_2 = arith.constant 0 : i32
    return %c0_i32, %c0_i32_0, %c0_i32_1 : i32, i32, i32
  }
  func.func @transform_2(%arg0: i32) -> (i32, i32) {
    %c0_i32 = arith.constant 0 : i32
    %c0_i32_0 = arith.constant 0 : i32
    %c0_i32_1 = arith.constant 0 : i32
    return %c0_i32, %c0_i32_0 : i32, i32
  }
  func.func @transform_3(%arg0: i32) -> (i32, i32, i32) {
    %c0_i32 = arith.constant 0 : i32
    %c0_i32_0 = arith.constant 0 : i32
    %c0_i32_1 = arith.constant 0 : i32
    %c0_i32_2 = arith.constant 0 : i32
    return %c0_i32, %c0_i32_0, %c0_i32_1 : i32, i32, i32
  }
  func.func @transform_4(%arg0: i32) -> (i32, i32) {
    %c0_i32 = arith.constant 0 : i32
    %c0_i32_0 = arith.constant 0 : i32
    %c0_i32_1 = arith.constant 0 : i32
    return %c0_i32, %c0_i32_0 : i32, i32
  }
  func.func @transform_5(%arg0: i32) -> (i32, i32, i32) {
    %c0_i32 = arith.constant 0 : i32
    %c0_i32_0 = arith.constant 0 : i32
    %c0_i32_1 = arith.constant 0 : i32
    %c0_i32_2 = arith.constant 0 : i32
    return %c0_i32, %c0_i32_0, %c0_i32_1 : i32, i32, i32
  }
  func.func @transform_6(%arg0: i32) -> (i32, i32) {
    %c0_i32 = arith.constant 0 : i32
    %c0_i32_0 = arith.constant 0 : i32
    %c0_i32_1 = arith.constant 0 : i32
    return %c0_i32, %c0_i32_0 : i32, i32
  }
  func.func @transform_7(%arg0: i32) -> (i32, i32, i32) {
    %c0_i32 = arith.constant 0 : i32
    %c0_i32_0 = arith.constant 0 : i32
    %c0_i32_1 = arith.constant 0 : i32
    %c0_i32_2 = arith.constant 0 : i32
    return %c0_i32, %c0_i32_0, %c0_i32_1 : i32, i32, i32
  }
  func.func @transform_8(%arg0: i32) -> (i32, i32) {
    %c0_i32 = arith.constant 0 : i32
    %c0_i32_0 = arith.constant 0 : i32
    %c0_i32_1 = arith.constant 0 : i32
    return %c0_i32, %c0_i32_0 : i32, i32
  }
  func.func @transform_9(%arg0: i32) -> (i32, i32, i32) {
    %c0_i32 = arith.constant 0 : i32
    %c0_i32_0 = arith.constant 0 : i32
    %c0_i32_1 = arith.constant 0 : i32
    %c0_i32_2 = arith.constant 0 : i32
    return %c0_i32, %c0_i32_0, %c0_i32_1 : i32, i32, i32
  }
  func.func @transform_10(%arg0: i32) -> (i32, i32) {
    %c0_i32 = arith.constant 0 : i32
    %c0_i32_0 = arith.constant 0 : i32
    %c0_i32_1 = arith.constant 0 : i32
    return %c0_i32, %c0_i32_0 : i32, i32
  }
  func.func @transform_11(%arg0: i32) -> (i32, i32) {
    %c0_i32 = arith.constant 0 : i32
    %c0_i32_0 = arith.constant 0 : i32
    %c0_i32_1 = arith.constant 0 : i32
    return %c0_i32, %c0_i32_0 : i32, i32
  }
  func.func @transform_12(%arg0: i32) -> (i32, i32, i32) {
    %c0_i32 = arith.constant 0 : i32
    %c0_i32_0 = arith.constant 0 : i32
    %c0_i32_1 = arith.constant 0 : i32
    %c0_i32_2 = arith.constant 0 : i32
    return %c0_i32, %c0_i32_0, %c0_i32_1 : i32, i32, i32
  }
  func.func @transform_13(%arg0: i32) -> (i32, i32, i32) {
    %c0_i32 = arith.constant 0 : i32
    %c0_i32_0 = arith.constant 0 : i32
    %c0_i32_1 = arith.constant 0 : i32
    %c0_i32_2 = arith.constant 0 : i32
    return %c0_i32, %c0_i32_0, %c0_i32_1 : i32, i32, i32
  }
  func.func @transform_14(%arg0: i32) -> (i32, i32) {
    %c0_i32 = arith.constant 0 : i32
    %c0_i32_0 = arith.constant 0 : i32
    %c0_i32_1 = arith.constant 0 : i32
    return %c0_i32, %c0_i32_0 : i32, i32
  }
  func.func @transform_15(%arg0: i32) -> (i32, i32) {
    %c0_i32 = arith.constant 0 : i32
    %c0_i32_0 = arith.constant 0 : i32
    %c0_i32_1 = arith.constant 0 : i32
    return %c0_i32, %c0_i32_0 : i32, i32
  }
  func.func @transform_16(%arg0: i32) -> (i32, i32) {
    %c0_i32 = arith.constant 0 : i32
    %c0_i32_0 = arith.constant 0 : i32
    %c0_i32_1 = arith.constant 0 : i32
    return %c0_i32, %c0_i32_0 : i32, i32
  }
  func.func @transform_17(%arg0: i32) -> (i32, i32, i32) {
    %c0_i32 = arith.constant 0 : i32
    %c0_i32_0 = arith.constant 0 : i32
    %c0_i32_1 = arith.constant 0 : i32
    return %arg0, %c0_i32, %c0_i32_0 : i32, i32, i32
  }
}

</mosaic_0001>

<llo_original>
// kernel: conv_autoencoder_forward.1
$region0: #{conv_autoencoder_forward.1}
  #allocation0 [shape = 'u32[]', space=smem, size = 0x4, offset = 0x4, fixed_abs, tag = 'smem constant byte address 0x4 - core index']
  #allocation1 [shape = 'u32[144,128]{1,0:T(1,128)}', space=vmem, size = 0x12000, scoped, tag = 'internal scratch']
  #allocation2 [shape = 'f32[8,362]{1,0:T(8,128)}', space=vmem, size = 0x3000, scoped, tag = 'scratch operand']
  #allocation3 [shape = 'f32[8,122]{1,0:T(8,128)}', space=vmem, size = 0x1000, scoped, tag = 'scratch operand']
  #allocation4 [shape = 'f32[16,50]{1,0:T(8,128)}', space=vmem, size = 0x2000, scoped, tag = 'scratch operand']
  %s0 = inlined_call_operand.vmem [shape: f32[2,1,256], index: 0, kind: input, shape index: {}]
  %s1 = inlined_call_operand.vmem [shape: f32[9,8,8], index: 1, kind: input, shape index: {}]
  %s2 = inlined_call_operand.vmem [shape: f32[8,1], index: 2, kind: input, shape index: {}]
  %s3 = inlined_call_operand.vmem [shape: f32[9,16,8], index: 3, kind: input, shape index: {}]
  %s4 = inlined_call_operand.vmem [shape: f32[16,1], index: 4, kind: input, shape index: {}]
  %s5 = inlined_call_operand.vmem [shape: f32[9,8,16], index: 5, kind: input, shape index: {}]
  %s6 = inlined_call_operand.vmem [shape: f32[8,1], index: 6, kind: input, shape index: {}]
  %s7 = inlined_call_operand.vmem [shape: f32[9,8,8], index: 7, kind: input, shape index: {}]
  %s8 = inlined_call_operand.vmem [shape: f32[8,1], index: 8, kind: input, shape index: {}]
  %s9 = inlined_call_operand.vmem [shape: f32[9,8,8], index: 9, kind: input, shape index: {}]
  %s10 = inlined_call_operand.vmem [shape: f32[8,1], index: 10, kind: input, shape index: {}]
  %s11 = inlined_call_operand.vmem [shape: f32[256,324], index: 11, kind: input, shape index: {}]
  %s12 = inlined_call_operand.vmem [shape: f32[4,324,100], index: 12, kind: input, shape index: {}]
  %s13 = inlined_call_operand.vmem [shape: f32[4,100,36], index: 13, kind: input, shape index: {}]
  %s14 = inlined_call_operand.vmem [shape: f32[36,100], index: 14, kind: input, shape index: {}]
  %s15 = inlined_call_operand.vmem [shape: f32[100,324], index: 15, kind: input, shape index: {}]
  %s16 = inlined_call_operand.vmem [shape: f32[324,256], index: 16, kind: input, shape index: {}]
  %s17 = inlined_call_operand.vmem [shape: f32[2,1,256], index: 17, kind: output, shape index: {}]
  %s18 = sld [smem:[#allocation0]]
  $region101: #{conv_autoencoder_forward.1} parent=0
    _
  %s20 = ssub.s32 1, %s18
  %s21 = scalar_select 0, %s20, %s18
  loop: start=0, step=1, limit=4
  $region2: #{conv_autoencoder_forward.1} parent=0 // loop_pre_header
    _
  $region3: #{conv_autoencoder_forward.1} parent=0 // loop_header
    %s23 = sphi 0, %s27
    %p24 = scmp.ge.s32.totalorder %s23, 4
    %s33 = sphi 0, %s35
    %s36 = sphi 0, %s33
    %s37 = sphi 0, %s36
    %s53 = sphi 0, %s37
    %s57 = sphi 0, %s57
    %s59 = sphi 0, %s57
    %s60 = sphi 0, %s59
    %s74 = sphi 0, %s60
    %s78 = sphi 0, %s78
    %s80 = sphi 0, %s78
    %s81 = sphi 0, %s80
    %s95 = sphi 0, %s81
    %s99 = sphi 0, %s99
    %s101 = sphi 0, %s99
    %s102 = sphi 0, %s101
    %s116 = sphi 0, %s102
    %s120 = sphi 0, %s120
    %s122 = sphi 0, %s120
    %s123 = sphi 0, %s122
    %s137 = sphi 0, %s123
    %s141 = sphi 0, %s141
    %s143 = sphi 0, %s141
    %s144 = sphi 0, %s143
    %s158 = sphi 0, %s144
    %s162 = sphi 0, %s162
    %s164 = sphi 0, %s162
    %s165 = sphi 0, %s164
    %s179 = sphi 0, %s165
    %s183 = sphi 0, %s183
    %s185 = sphi 0, %s183
    %s186 = sphi 0, %s185
    %s200 = sphi 0, %s186
    %s204 = sphi 0, %s204
    %s206 = sphi 0, %s204
    %s207 = sphi 0, %s206
    %s221 = sphi 0, %s207
    %s225 = sphi 0, %s225
    %s227 = sphi 0, %s225
    %s228 = sphi 0, %s227
    %s242 = sphi 0, %s228
    %s246 = sphi 0, %s246
    %s248 = sphi 0, %s246
    %s249 = sphi 0, %s248
    %s263 = sphi 0, %s249
    %s267 = sphi 0, %s267
    %s269 = sphi 0, %s267
    %s270 = sphi 0, %s269
    %s284 = sphi 0, %s270
    %s288 = sphi 0, %s288
    %s290 = sphi 0, %s288
    %s291 = sphi 0, %s290
    %s305 = sphi 0, %s291
    %s309 = sphi 0, %s309
    %s311 = sphi 0, %s309
    %s312 = sphi 0, %s311
    %s326 = sphi 0, %s312
    %s330 = sphi 0, %s330
    %s332 = sphi 0, %s330
    %s333 = sphi 0, %s332
    %s347 = sphi 0, %s333
    %s351 = sphi 0, %s351
    %s353 = sphi 0, %s351
    %s354 = sphi 0, %s353
    %s368 = sphi 0, %s354
    %s372 = sphi 0, %s372
    %s374 = sphi 0, %s372
    %s375 = sphi 0, %s374
    %s389 = sphi 0, %s375
    %s395 = sphi 0, %s397
    %s398 = sphi 0, %s395
    %s399 = sphi 0, %s398
    %s415 = sphi 0, %s399
  $region4: #{conv_autoencoder_forward.1} parent=0 // loop_header_branch
    %26 = sbr.rel (%p24) target = $region8
  $region5: #{conv_autoencoder_forward.1} parent=0 // loop_body
    %s28 = ssub.s32 %s23, 1
    %s29 = ssub.s32 %s23, 2
    %s30 = sadd.s32 %s23, 1
    %s31 = ssub.s32 %s23, %s30
    %p32 = scmp.eq.s32.totalorder %s31, 0
    %s34 = sadd.s32 %s33, 1
    %s35 = scalar_select %p32, %s33, %s34
    %p38 = pneg %p32
    %p39 = scmp.eq.s32.totalorder %s23, 1
    %p40 = por %p38, %p39
    %p41 = scmp.ne.s32.totalorder %s33, %s36
    %p42 = scmp.eq.s32.totalorder %s23, 0
    %p43 = por %p41, %p42
    %p44 = scmp.ne.s32.totalorder %s33, %s36
    %p45 = scmp.eq.s32.totalorder %s28, 1
    %p46 = por %p44, %p45
    %p47 = scmp.ne.s32.totalorder %s36, %s37
    %p48 = scmp.eq.s32.totalorder %s28, 0
    %p49 = por %p47, %p48
    %p50 = scmp.ne.s32.totalorder %s36, %s37
    %p51 = scmp.eq.s32.totalorder %s29, 1
    %p52 = por %p50, %p51
    %p54 = scmp.ne.s32.totalorder %s37, %s53
    %p55 = scmp.eq.s32.totalorder %s29, 0
    %p56 = por %p54, %p55
    %s58 = sadd.s32 %s57, 1
    %p61 = scmp.eq.s32.totalorder %s23, 1
    %p62 = scmp.ne.s32.totalorder %s57, %s59
    %p63 = scmp.eq.s32.totalorder %s23, 0
    %p64 = por %p62, %p63
    %p65 = scmp.ne.s32.totalorder %s57, %s59
    %p66 = scmp.eq.s32.totalorder %s28, 1
    %p67 = por %p65, %p66
    %p68 = scmp.ne.s32.totalorder %s59, %s60
    %p69 = scmp.eq.s32.totalorder %s28, 0
    %p70 = por %p68, %p69
    %p71 = scmp.ne.s32.totalorder %s59, %s60
    %p72 = scmp.eq.s32.totalorder %s29, 1
    %p73 = por %p71, %p72
    %p75 = scmp.ne.s32.totalorder %s60, %s74
    %p76 = scmp.eq.s32.totalorder %s29, 0
    %p77 = por %p75, %p76
    %s79 = sadd.s32 %s78, 1
    %p82 = scmp.eq.s32.totalorder %s23, 1
    %p83 = scmp.ne.s32.totalorder %s78, %s80
    %p84 = scmp.eq.s32.totalorder %s23, 0
    %p85 = por %p83, %p84
    %p86 = scmp.ne.s32.totalorder %s78, %s80
    %p87 = scmp.eq.s32.totalorder %s28, 1
    %p88 = por %p86, %p87
    %p89 = scmp.ne.s32.totalorder %s80, %s81
    %p90 = scmp.eq.s32.totalorder %s28, 0
    %p91 = por %p89, %p90
    %p92 = scmp.ne.s32.totalorder %s80, %s81
    %p93 = scmp.eq.s32.totalorder %s29, 1
    %p94 = por %p92, %p93
    %p96 = scmp.ne.s32.totalorder %s81, %s95
    %p97 = scmp.eq.s32.totalorder %s29, 0
    %p98 = por %p96, %p97
    %s100 = sadd.s32 %s99, 1
    %p103 = scmp.eq.s32.totalorder %s23, 1
    %p104 = scmp.ne.s32.totalorder %s99, %s101
    %p105 = scmp.eq.s32.totalorder %s23, 0
    %p106 = por %p104, %p105
    %p107 = scmp.ne.s32.totalorder %s99, %s101
    %p108 = scmp.eq.s32.totalorder %s28, 1
    %p109 = por %p107, %p108
    %p110 = scmp.ne.s32.totalorder %s101, %s102
    %p111 = scmp.eq.s32.totalorder %s28, 0
    %p112 = por %p110, %p111
    %p113 = scmp.ne.s32.totalorder %s101, %s102
    %p114 = scmp.eq.s32.totalorder %s29, 1
    %p115 = por %p113, %p114
    %p117 = scmp.ne.s32.totalorder %s102, %s116
    %p118 = scmp.eq.s32.totalorder %s29, 0
    %p119 = por %p117, %p118
    %s121 = sadd.s32 %s120, 1
    %p124 = scmp.eq.s32.totalorder %s23, 1
    %p125 = scmp.ne.s32.totalorder %s120, %s122
    %p126 = scmp.eq.s32.totalorder %s23, 0
    %p127 = por %p125, %p126
    %p128 = scmp.ne.s32.totalorder %s120, %s122
    %p129 = scmp.eq.s32.totalorder %s28, 1
    %p130 = por %p128, %p129
    %p131 = scmp.ne.s32.totalorder %s122, %s123
    %p132 = scmp.eq.s32.totalorder %s28, 0
    %p133 = por %p131, %p132
    %p134 = scmp.ne.s32.totalorder %s122, %s123
    %p135 = scmp.eq.s32.totalorder %s29, 1
    %p136 = por %p134, %p135
    %p138 = scmp.ne.s32.totalorder %s123, %s137
    %p139 = scmp.eq.s32.totalorder %s29, 0
    %p140 = por %p138, %p139
    %s142 = sadd.s32 %s141, 1
    %p145 = scmp.eq.s32.totalorder %s23, 1
    %p146 = scmp.ne.s32.totalorder %s141, %s143
    %p147 = scmp.eq.s32.totalorder %s23, 0
    %p148 = por %p146, %p147
    %p149 = scmp.ne.s32.totalorder %s141, %s143
    %p150 = scmp.eq.s32.totalorder %s28, 1
    %p151 = por %p149, %p150
    %p152 = scmp.ne.s32.totalorder %s143, %s144
    %p153 = scmp.eq.s32.totalorder %s28, 0
    %p154 = por %p152, %p153
    %p155 = scmp.ne.s32.totalorder %s143, %s144
    %p156 = scmp.eq.s32.totalorder %s29, 1
    %p157 = por %p155, %p156
    %p159 = scmp.ne.s32.totalorder %s144, %s158
    %p160 = scmp.eq.s32.totalorder %s29, 0
    %p161 = por %p159, %p160
    %s163 = sadd.s32 %s162, 1
    %p166 = scmp.eq.s32.totalorder %s23, 1
    %p167 = scmp.ne.s32.totalorder %s162, %s164
    %p168 = scmp.eq.s32.totalorder %s23, 0
    %p169 = por %p167, %p168
    %p170 = scmp.ne.s32.totalorder %s162, %s164
    %p171 = scmp.eq.s32.totalorder %s28, 1
    %p172 = por %p170, %p171
    %p173 = scmp.ne.s32.totalorder %s164, %s165
    %p174 = scmp.eq.s32.totalorder %s28, 0
    %p175 = por %p173, %p174
    %p176 = scmp.ne.s32.totalorder %s164, %s165
    %p177 = scmp.eq.s32.totalorder %s29, 1
    %p178 = por %p176, %p177
    %p180 = scmp.ne.s32.totalorder %s165, %s179
    %p181 = scmp.eq.s32.totalorder %s29, 0
    %p182 = por %p180, %p181
    %s184 = sadd.s32 %s183, 1
    %p187 = scmp.eq.s32.totalorder %s23, 1
    %p188 = scmp.ne.s32.totalorder %s183, %s185
    %p189 = scmp.eq.s32.totalorder %s23, 0
    %p190 = por %p188, %p189
    %p191 = scmp.ne.s32.totalorder %s183, %s185
    %p192 = scmp.eq.s32.totalorder %s28, 1
    %p193 = por %p191, %p192
    %p194 = scmp.ne.s32.totalorder %s185, %s186
    %p195 = scmp.eq.s32.totalorder %s28, 0
    %p196 = por %p194, %p195
    %p197 = scmp.ne.s32.totalorder %s185, %s186
    %p198 = scmp.eq.s32.totalorder %s29, 1
    %p199 = por %p197, %p198
    %p201 = scmp.ne.s32.totalorder %s186, %s200
    %p202 = scmp.eq.s32.totalorder %s29, 0
    %p203 = por %p201, %p202
    %s205 = sadd.s32 %s204, 1
    %p208 = scmp.eq.s32.totalorder %s23, 1
    %p209 = scmp.ne.s32.totalorder %s204, %s206
    %p210 = scmp.eq.s32.totalorder %s23, 0
    %p211 = por %p209, %p210
    %p212 = scmp.ne.s32.totalorder %s204, %s206
    %p213 = scmp.eq.s32.totalorder %s28, 1
    %p214 = por %p212, %p213
    %p215 = scmp.ne.s32.totalorder %s206, %s207
    %p216 = scmp.eq.s32.totalorder %s28, 0
    %p217 = por %p215, %p216
    %p218 = scmp.ne.s32.totalorder %s206, %s207
    %p219 = scmp.eq.s32.totalorder %s29, 1
    %p220 = por %p218, %p219
    %p222 = scmp.ne.s32.totalorder %s207, %s221
    %p223 = scmp.eq.s32.totalorder %s29, 0
    %p224 = por %p222, %p223
    %s226 = sadd.s32 %s225, 1
    %p229 = scmp.eq.s32.totalorder %s23, 1
    %p230 = scmp.ne.s32.totalorder %s225, %s227
    %p231 = scmp.eq.s32.totalorder %s23, 0
    %p232 = por %p230, %p231
    %p233 = scmp.ne.s32.totalorder %s225, %s227
    %p234 = scmp.eq.s32.totalorder %s28, 1
    %p235 = por %p233, %p234
    %p236 = scmp.ne.s32.totalorder %s227, %s228
    %p237 = scmp.eq.s32.totalorder %s28, 0
    %p238 = por %p236, %p237
    %p239 = scmp.ne.s32.totalorder %s227, %s228
    %p240 = scmp.eq.s32.totalorder %s29, 1
    %p241 = por %p239, %p240
    %p243 = scmp.ne.s32.totalorder %s228, %s242
    %p244 = scmp.eq.s32.totalorder %s29, 0
    %p245 = por %p243, %p244
    %s247 = sadd.s32 %s246, 1
    %p250 = scmp.eq.s32.totalorder %s23, 1
    %p251 = scmp.ne.s32.totalorder %s246, %s248
    %p252 = scmp.eq.s32.totalorder %s23, 0
    %p253 = por %p251, %p252
    %p254 = scmp.ne.s32.totalorder %s246, %s248
    %p255 = scmp.eq.s32.totalorder %s28, 1
    %p256 = por %p254, %p255
    %p257 = scmp.ne.s32.totalorder %s248, %s249
    %p258 = scmp.eq.s32.totalorder %s28, 0
    %p259 = por %p257, %p258
    %p260 = scmp.ne.s32.totalorder %s248, %s249
    %p261 = scmp.eq.s32.totalorder %s29, 1
    %p262 = por %p260, %p261
    %p264 = scmp.ne.s32.totalorder %s249, %s263
    %p265 = scmp.eq.s32.totalorder %s29, 0
    %p266 = por %p264, %p265
    %s268 = sadd.s32 %s267, 1
    %p271 = scmp.eq.s32.totalorder %s23, 1
    %p272 = scmp.ne.s32.totalorder %s267, %s269
    %p273 = scmp.eq.s32.totalorder %s23, 0
    %p274 = por %p272, %p273
    %p275 = scmp.ne.s32.totalorder %s267, %s269
    %p276 = scmp.eq.s32.totalorder %s28, 1
    %p277 = por %p275, %p276
    %p278 = scmp.ne.s32.totalorder %s269, %s270
    %p279 = scmp.eq.s32.totalorder %s28, 0
    %p280 = por %p278, %p279
    %p281 = scmp.ne.s32.totalorder %s269, %s270
    %p282 = scmp.eq.s32.totalorder %s29, 1
    %p283 = por %p281, %p282
    %p285 = scmp.ne.s32.totalorder %s270, %s284
    %p286 = scmp.eq.s32.totalorder %s29, 0
    %p287 = por %p285, %p286
    %s289 = sadd.s32 %s288, 1
    %p292 = scmp.eq.s32.totalorder %s23, 1
    %p293 = scmp.ne.s32.totalorder %s288, %s290
    %p294 = scmp.eq.s32.totalorder %s23, 0
    %p295 = por %p293, %p294
    %p296 = scmp.ne.s32.totalorder %s288, %s290
    %p297 = scmp.eq.s32.totalorder %s28, 1
    %p298 = por %p296, %p297
    %p299 = scmp.ne.s32.totalorder %s290, %s291
    %p300 = scmp.eq.s32.totalorder %s28, 0
    %p301 = por %p299, %p300
    %p302 = scmp.ne.s32.totalorder %s290, %s291
    %p303 = scmp.eq.s32.totalorder %s29, 1
    %p304 = por %p302, %p303
    %p306 = scmp.ne.s32.totalorder %s291, %s305
    %p307 = scmp.eq.s32.totalorder %s29, 0
    %p308 = por %p306, %p307
    %s310 = sadd.s32 %s309, 1
    %p313 = scmp.eq.s32.totalorder %s23, 1
    %p314 = scmp.ne.s32.totalorder %s309, %s311
    %p315 = scmp.eq.s32.totalorder %s23, 0
    %p316 = por %p314, %p315
    %p317 = scmp.ne.s32.totalorder %s309, %s311
    %p318 = scmp.eq.s32.totalorder %s28, 1
    %p319 = por %p317, %p318
    %p320 = scmp.ne.s32.totalorder %s311, %s312
    %p321 = scmp.eq.s32.totalorder %s28, 0
    %p322 = por %p320, %p321
    %p323 = scmp.ne.s32.totalorder %s311, %s312
    %p324 = scmp.eq.s32.totalorder %s29, 1
    %p325 = por %p323, %p324
    %p327 = scmp.ne.s32.totalorder %s312, %s326
    %p328 = scmp.eq.s32.totalorder %s29, 0
    %p329 = por %p327, %p328
    %s331 = sadd.s32 %s330, 1
    %p334 = scmp.eq.s32.totalorder %s23, 1
    %p335 = scmp.ne.s32.totalorder %s330, %s332
    %p336 = scmp.eq.s32.totalorder %s23, 0
    %p337 = por %p335, %p336
    %p338 = scmp.ne.s32.totalorder %s330, %s332
    %p339 = scmp.eq.s32.totalorder %s28, 1
    %p340 = por %p338, %p339
    %p341 = scmp.ne.s32.totalorder %s332, %s333
    %p342 = scmp.eq.s32.totalorder %s28, 0
    %p343 = por %p341, %p342
    %p344 = scmp.ne.s32.totalorder %s332, %s333
    %p345 = scmp.eq.s32.totalorder %s29, 1
    %p346 = por %p344, %p345
    %p348 = scmp.ne.s32.totalorder %s333, %s347
    %p349 = scmp.eq.s32.totalorder %s29, 0
    %p350 = por %p348, %p349
    %s352 = sadd.s32 %s351, 1
    %p355 = scmp.eq.s32.totalorder %s23, 1
    %p356 = scmp.ne.s32.totalorder %s351, %s353
    %p357 = scmp.eq.s32.totalorder %s23, 0
    %p358 = por %p356, %p357
    %p359 = scmp.ne.s32.totalorder %s351, %s353
    %p360 = scmp.eq.s32.totalorder %s28, 1
    %p361 = por %p359, %p360
    %p362 = scmp.ne.s32.totalorder %s353, %s354
    %p363 = scmp.eq.s32.totalorder %s28, 0
    %p364 = por %p362, %p363
    %p365 = scmp.ne.s32.totalorder %s353, %s354
    %p366 = scmp.eq.s32.totalorder %s29, 1
    %p367 = por %p365, %p366
    %p369 = scmp.ne.s32.totalorder %s354, %s368
    %p370 = scmp.eq.s32.totalorder %s29, 0
    %p371 = por %p369, %p370
    %s373 = sadd.s32 %s372, 1
    %p376 = scmp.eq.s32.totalorder %s23, 1
    %p377 = scmp.ne.s32.totalorder %s372, %s374
    %p378 = scmp.eq.s32.totalorder %s23, 0
    %p379 = por %p377, %p378
    %p380 = scmp.ne.s32.totalorder %s372, %s374
    %p381 = scmp.eq.s32.totalorder %s28, 1
    %p382 = por %p380, %p381
    %p383 = scmp.ne.s32.totalorder %s374, %s375
    %p384 = scmp.eq.s32.totalorder %s28, 0
    %p385 = por %p383, %p384
    %p386 = scmp.ne.s32.totalorder %s374, %s375
    %p387 = scmp.eq.s32.totalorder %s29, 1
    %p388 = por %p386, %p387
    %p390 = scmp.ne.s32.totalorder %s375, %s389
    %p391 = scmp.eq.s32.totalorder %s29, 0
    %p392 = por %p390, %p391
    %s393 = ssub.s32 %s23, %s30
    %p394 = scmp.eq.s32.totalorder %s393, 0
    %s396 = sadd.s32 %s395, 1
    %s397 = scalar_select %p394, %s395, %s396
    %p400 = pneg %p394
    %p401 = scmp.eq.s32.totalorder %s23, 1
    %p402 = por %p400, %p401
    %p403 = scmp.ne.s32.totalorder %s395, %s398
    %p404 = scmp.eq.s32.totalorder %s23, 0
    %p405 = por %p403, %p404
    %p406 = scmp.ne.s32.totalorder %s395, %s398
    %p407 = scmp.eq.s32.totalorder %s28, 1
    %p408 = por %p406, %p407
    %p409 = scmp.ne.s32.totalorder %s398, %s399
    %p410 = scmp.eq.s32.totalorder %s28, 0
    %p411 = por %p409, %p410
    %p412 = scmp.ne.s32.totalorder %s398, %s399
    %p413 = scmp.eq.s32.totalorder %s29, 1
    %p414 = por %p412, %p413
    %p416 = scmp.ne.s32.totalorder %s399, %s415
    %p417 = scmp.eq.s32.totalorder %s29, 0
    %p418 = por %p416, %p417
    %p419 = scmp.le.s32.totalorder 1, %s23
    %p420 = scmp.lt.s32.totalorder %s23, 3
    %p421 = pnand %p419, %p420
    %p422 = pneg %p421
    // Predicated region
    $region9: #{conv_autoencoder_forward.1} parent=5 // pred_check
      _
    $region10: #{conv_autoencoder_forward.1} parent=5 // pred_check_branch
      %424 = sbr.rel (%p421) target = $region12
    $region11: #{conv_autoencoder_forward.1} parent=5 // pred_region
      %s425 = ssub.s32 %s23, 1
      // Predicated region
      $region13: #{conv_autoencoder_forward.1} parent=11 // pred_check
        %p426 = pneg %p70
      $region14: #{conv_autoencoder_forward.1} parent=11 // pred_check_branch
        %428 = sbr.rel (%p426) target = $region16
      $region15: #{conv_autoencoder_forward.1} parent=11 // pred_region
        _
      $region16: #{conv_autoencoder_forward.1} parent=11 // pred_fallthru
        _
      // Predicated region
      $region17: #{conv_autoencoder_forward.1} parent=11 // pred_check
        %p429 = pneg %p91
      $region18: #{conv_autoencoder_forward.1} parent=11 // pred_check_branch
        %431 = sbr.rel (%p429) target = $region20
      $region19: #{conv_autoencoder_forward.1} parent=11 // pred_region
        _
      $region20: #{conv_autoencoder_forward.1} parent=11 // pred_fallthru
        _
      // Predicated region
      $region21: #{conv_autoencoder_forward.1} parent=11 // pred_check
        %p432 = pneg %p112
      $region22: #{conv_autoencoder_forward.1} parent=11 // pred_check_branch
        %434 = sbr.rel (%p432) target = $region24
      $region23: #{conv_autoencoder_forward.1} parent=11 // pred_region
        _
      $region24: #{conv_autoencoder_forward.1} parent=11 // pred_fallthru
        _
      // Predicated region
      $region25: #{conv_autoencoder_forward.1} parent=11 // pred_check
        %p435 = pneg %p133
      $region26: #{conv_autoencoder_forward.1} parent=11 // pred_check_branch
        %437 = sbr.rel (%p435) target = $region28
      $region27: #{conv_autoencoder_forward.1} parent=11 // pred_region
        _
      $region28: #{conv_autoencoder_forward.1} parent=11 // pred_fallthru
        _
      // Predicated region
      $region29: #{conv_autoencoder_forward.1} parent=11 // pred_check
        %p438 = pneg %p154
      $region30: #{conv_autoencoder_forward.1} parent=11 // pred_check_branch
        %440 = sbr.rel (%p438) target = $region32
      $region31: #{conv_autoencoder_forward.1} parent=11 // pred_region
        _
      $region32: #{conv_autoencoder_forward.1} parent=11 // pred_fallthru
        _
      // Predicated region
      $region33: #{conv_autoencoder_forward.1} parent=11 // pred_check
        %p441 = pneg %p175
      $region34: #{conv_autoencoder_forward.1} parent=11 // pred_check_branch
        %443 = sbr.rel (%p441) target = $region36
      $region35: #{conv_autoencoder_forward.1} parent=11 // pred_region
        _
      $region36: #{conv_autoencoder_forward.1} parent=11 // pred_fallthru
        _
      // Predicated region
      $region37: #{conv_autoencoder_forward.1} parent=11 // pred_check
        %p444 = pneg %p196
      $region38: #{conv_autoencoder_forward.1} parent=11 // pred_check_branch
        %446 = sbr.rel (%p444) target = $region40
      $region39: #{conv_autoencoder_forward.1} parent=11 // pred_region
        _
      $region40: #{conv_autoencoder_forward.1} parent=11 // pred_fallthru
        _
      // Predicated region
      $region41: #{conv_autoencoder_forward.1} parent=11 // pred_check
        %p447 = pneg %p217
      $region42: #{conv_autoencoder_forward.1} parent=11 // pred_check_branch
        %449 = sbr.rel (%p447) target = $region44
      $region43: #{conv_autoencoder_forward.1} parent=11 // pred_region
        _
      $region44: #{conv_autoencoder_forward.1} parent=11 // pred_fallthru
        _
      // Predicated region
      $region45: #{conv_autoencoder_forward.1} parent=11 // pred_check
        %p450 = pneg %p238
      $region46: #{conv_autoencoder_forward.1} parent=11 // pred_check_branch
        %452 = sbr.rel (%p450) target = $region48
      $region47: #{conv_autoencoder_forward.1} parent=11 // pred_region
        _
      $region48: #{conv_autoencoder_forward.1} parent=11 // pred_fallthru
        _
      // Predicated region
      $region49: #{conv_autoencoder_forward.1} parent=11 // pred_check
        %p453 = pneg %p259
      $region50: #{conv_autoencoder_forward.1} parent=11 // pred_check_branch
        %455 = sbr.rel (%p453) target = $region52
      $region51: #{conv_autoencoder_forward.1} parent=11 // pred_region
        _
      $region52: #{conv_autoencoder_forward.1} parent=11 // pred_fallthru
        _
      // Predicated region
      $region53: #{conv_autoencoder_forward.1} parent=11 // pred_check
        %p456 = pneg %p280
      $region54: #{conv_autoencoder_forward.1} parent=11 // pred_check_branch
        %458 = sbr.rel (%p456) target = $region56
      $region55: #{conv_autoencoder_forward.1} parent=11 // pred_region
        _
      $region56: #{conv_autoencoder_forward.1} parent=11 // pred_fallthru
        _
      // Predicated region
      $region57: #{conv_autoencoder_forward.1} parent=11 // pred_check
        %p459 = pneg %p301
      $region58: #{conv_autoencoder_forward.1} parent=11 // pred_check_branch
        %461 = sbr.rel (%p459) target = $region60
      $region59: #{conv_autoencoder_forward.1} parent=11 // pred_region
        _
      $region60: #{conv_autoencoder_forward.1} parent=11 // pred_fallthru
        _
      // Predicated region
      $region61: #{conv_autoencoder_forward.1} parent=11 // pred_check
        %p462 = pneg %p322
      $region62: #{conv_autoencoder_forward.1} parent=11 // pred_check_branch
        %464 = sbr.rel (%p462) target = $region64
      $region63: #{conv_autoencoder_forward.1} parent=11 // pred_region
        _
      $region64: #{conv_autoencoder_forward.1} parent=11 // pred_fallthru
        _
      // Predicated region
      $region65: #{conv_autoencoder_forward.1} parent=11 // pred_check
        %p465 = pneg %p343
      $region66: #{conv_autoencoder_forward.1} parent=11 // pred_check_branch
        %467 = sbr.rel (%p465) target = $region68
      $region67: #{conv_autoencoder_forward.1} parent=11 // pred_region
        _
      $region68: #{conv_autoencoder_forward.1} parent=11 // pred_fallthru
        _
      // Predicated region
      $region69: #{conv_autoencoder_forward.1} parent=11 // pred_check
        %p468 = pneg %p364
      $region70: #{conv_autoencoder_forward.1} parent=11 // pred_check_branch
        %470 = sbr.rel (%p468) target = $region72
      $region71: #{conv_autoencoder_forward.1} parent=11 // pred_region
        _
      $region72: #{conv_autoencoder_forward.1} parent=11 // pred_fallthru
        _
      // Predicated region
      $region73: #{conv_autoencoder_forward.1} parent=11 // pred_check
        %p471 = pneg %p385
      $region74: #{conv_autoencoder_forward.1} parent=11 // pred_check_branch
        %473 = sbr.rel (%p471) target = $region76
      $region75: #{conv_autoencoder_forward.1} parent=11 // pred_region
        _
      $region76: #{conv_autoencoder_forward.1} parent=11 // pred_fallthru
        _
    $region12: #{conv_autoencoder_forward.1} parent=5 // pred_fallthru
      _
    %p474 = scmp.lt.s32.totalorder %s23, 2
    // Predicated region
    $region77: #{conv_autoencoder_forward.1} parent=5 // pred_check
      %p475 = pneg %p474
    $region78: #{conv_autoencoder_forward.1} parent=5 // pred_check_branch
      %477 = sbr.rel (%p475) target = $region80
    $region79: #{conv_autoencoder_forward.1} parent=5 // pred_region
      // Predicated region
      $region81: #{conv_autoencoder_forward.1} parent=79 // pred_check
        %p478 = pneg %p43
      $region82: #{conv_autoencoder_forward.1} parent=79 // pred_check_branch
        %480 = sbr.rel (%p478) target = $region84
      $region83: #{conv_autoencoder_forward.1} parent=79 // pred_region
        %p481 = scmp.lt.s32.totalorder %s23, 1
        %s482 = scalar_select %p481, %s23, 1
        %s483 = smul.addr %s482, 2
        %s484 = scalar_lea.vmem %s0, %s483
      $region84: #{conv_autoencoder_forward.1} parent=79 // pred_fallthru
        _
    $region80: #{conv_autoencoder_forward.1} parent=5 // pred_fallthru
      _
    %p485 = scmp.le.s32.totalorder 1, %s23
    %p486 = scmp.lt.s32.totalorder %s23, 3
    %p487 = pnand %p485, %p486
    %p488 = pneg %p487
    // Predicated region
    $region85: #{conv_autoencoder_forward.1} parent=5 // pred_check
      _
    $region86: #{conv_autoencoder_forward.1} parent=5 // pred_check_branch
      %490 = sbr.rel (%p487) target = $region88
    $region87: #{conv_autoencoder_forward.1} parent=5 // pred_region
      %s491 = ssub.s32 %s23, 1
      %p492 = scmp.lt.s32.totalorder %s28, 1
      %s493 = scalar_select %p492, %s28, 1
      %s494 = smul.addr %s493, 2
      %s495 = scalar_lea.vmem %s0, %s494
      %p496 = pneg %p49
      %p497 = pneg %p46
      %p498 = pneg %p70
      %p499 = pneg %p67
      %p500 = pneg %p91
      %p501 = pneg %p88
      %p502 = pneg %p112
      %p503 = pneg %p109
      %p504 = pneg %p133
      %p505 = pneg %p130
      %p506 = pneg %p154
      %p507 = pneg %p151
      %p508 = pneg %p175
      %p509 = pneg %p172
      %p510 = pneg %p196
      %p511 = pneg %p193
      %p512 = pneg %p217
      %p513 = pneg %p214
      %p514 = pneg %p238
      %p515 = pneg %p235
      %p516 = pneg %p259
      %p517 = pneg %p256
      %p518 = pneg %p280
      %p519 = pneg %p277
      %p520 = pneg %p301
      %p521 = pneg %p298
      %p522 = pneg %p322
      %p523 = pneg %p319
      %p524 = pneg %p343
      %p525 = pneg %p340
      %p526 = pneg %p364
      %p527 = pneg %p361
      %p528 = pneg %p385
      %p529 = pneg %p382
      %p530 = pneg %p411
      %p531 = pneg %p408
      %p532 = scmp.lt.s32.totalorder %s28, 1
      %s533 = scalar_select %p532, %s28, 1
      %s534 = smul.addr %s533, 2
      %s535 = scalar_lea.vmem %s17, %s534
      %p536 = scmp.lt.s32.totalorder %s28, 1
      %s537 = scalar_select %p536, %s28, 1
      %s538 = smul.addr %s537, 2
      %s539 = scalar_lea.vmem %s0, %s538
      %p540 = scmp.lt.s32.totalorder %s28, 1
      %s541 = scalar_select %p540, %s28, 1
      %s542 = smul.addr %s541, 2
      %s543 = scalar_lea.vmem %s17, %s542
      %544 = vst [vmem:[#allocation2] sm:$0xff] 0.0
      %545 = vst [vmem:[#allocation2 + $0x8] sm:$0xff] 0.0
      %vm546 = vcmask 867328
      %547 = vst.msk [vmem:[#allocation2 + $0x10] sm:$0xff] %vm546, 0.0
      %vm548 = vcmask 998400
      %549 = vst.msk [vmem:[#allocation3] sm:$0xff] %vm548, 0.0
      %vm550 = vcmask 408576
      %551 = vst.msk [vmem:[#allocation4] sm:$0xff] %vm550, 0.0
      %552 = vst.msk [vmem:[#allocation4 + $0x8] sm:$0xff] %vm550, 0.0
      %v553 = vld [vmem:[%s539] sm:$0x3]
      %v555 = vlaneseq
      %v556 = vshrl.u32 %v555, 7
      %v557 = vsub.s32 0, %v556
      %v558 = vrot.slane %v553, %v557
      %v559 = vlaneseq
      %v560 = vshrl.u32 %v559, 7
      %v561 = vsub.s32 1, %v560
      %v562 = vrot.slane %v553, %v561
      %v565 = vld [vmem:[%s11] sm:$0xff]
      %v566 = vld [vmem:[%s11 + $0x8] sm:$0xff]
      %v567 = vld [vmem:[%s11 + $0x10] sm:$0xff]
      %v568 = vld [vmem:[%s11 + $0x18] sm:$0xff]
      %v569 = vld [vmem:[%s11 + $0x20] sm:$0xff]
      %v570 = vld [vmem:[%s11 + $0x28] sm:$0xff]
      %v571 = vld [vmem:[%s11 + $0x30] sm:$0xff]
      %v572 = vld [vmem:[%s11 + $0x38] sm:$0xff]
      %v573 = vld [vmem:[%s11 + $0x40] sm:$0xff]
      %v574 = vld [vmem:[%s11 + $0x48] sm:$0xff]
      %v575 = vld [vmem:[%s11 + $0x50] sm:$0xff]
      %v576 = vld [vmem:[%s11 + $0x58] sm:$0xff]
      %v577 = vld [vmem:[%s11 + $0x60] sm:$0xff]
      %v578 = vld [vmem:[%s11 + $0x68] sm:$0xff]
      %v579 = vld [vmem:[%s11 + $0x70] sm:$0xff]
      %v580 = vld [vmem:[%s11 + $0x78] sm:$0xff]
      %v581 = vld [vmem:[%s11 + $0x80] sm:$0xff]
      %v582 = vld [vmem:[%s11 + $0x88] sm:$0xff]
      %v583 = vld [vmem:[%s11 + $0x90] sm:$0xff]
      %v584 = vld [vmem:[%s11 + $0x98] sm:$0xff]
      %v585 = vld [vmem:[%s11 + $0xa0] sm:$0xff]
      %v586 = vld [vmem:[%s11 + $0xa8] sm:$0xff]
      %v587 = vld [vmem:[%s11 + $0xb0] sm:$0xff]
      %v588 = vld [vmem:[%s11 + $0xb8] sm:$0xff]
      %v589 = vld [vmem:[%s11 + $0xc0] sm:$0xff]
      %v590 = vld [vmem:[%s11 + $0xc8] sm:$0xff]
      %v591 = vld [vmem:[%s11 + $0xd0] sm:$0xff]
      %v592 = vld [vmem:[%s11 + $0xd8] sm:$0xff]
      %v593 = vld [vmem:[%s11 + $0xe0] sm:$0xff]
      %v594 = vld [vmem:[%s11 + $0xe8] sm:$0xff]
      %v595 = vld [vmem:[%s11 + $0xf0] sm:$0xff]
      %v596 = vld [vmem:[%s11 + $0xf8] sm:$0xff]
      %v597 = vld [vmem:[%s11 + $0x100] sm:$0xff]
      %v598 = vld [vmem:[%s11 + $0x108] sm:$0xff]
      %v599 = vld [vmem:[%s11 + $0x110] sm:$0xff]
      %v600 = vld [vmem:[%s11 + $0x118] sm:$0xff]
      %v601 = vld [vmem:[%s11 + $0x120] sm:$0xff]
      %v602 = vld [vmem:[%s11 + $0x128] sm:$0xff]
      %v603 = vld [vmem:[%s11 + $0x130] sm:$0xff]
      %v604 = vld [vmem:[%s11 + $0x138] sm:$0xff]
      %v605 = vld [vmem:[%s11 + $0x140] sm:$0xff]
      %v606 = vld [vmem:[%s11 + $0x148] sm:$0xff]
      %v607 = vld [vmem:[%s11 + $0x150] sm:$0xff]
      %v608 = vld [vmem:[%s11 + $0x158] sm:$0xff]
      %v609 = vld [vmem:[%s11 + $0x160] sm:$0xff]
      %v610 = vld [vmem:[%s11 + $0x168] sm:$0xff]
      %v611 = vld [vmem:[%s11 + $0x170] sm:$0xff]
      %v612 = vld [vmem:[%s11 + $0x178] sm:$0xff]
      %v613 = vld [vmem:[%s11 + $0x180] sm:$0xff]
      %v614 = vld [vmem:[%s11 + $0x188] sm:$0xff]
      %v615 = vld [vmem:[%s11 + $0x190] sm:$0xff]
      %v616 = vld [vmem:[%s11 + $0x198] sm:$0xff]
      %v617 = vld [vmem:[%s11 + $0x1a0] sm:$0xff]
      %v618 = vld [vmem:[%s11 + $0x1a8] sm:$0xff]
      %v619 = vld [vmem:[%s11 + $0x1b0] sm:$0xff]
      %v620 = vld [vmem:[%s11 + $0x1b8] sm:$0xff]
      %v621 = vld [vmem:[%s11 + $0x1c0] sm:$0xff]
      %v622 = vld [vmem:[%s11 + $0x1c8] sm:$0xff]
      %v623 = vld [vmem:[%s11 + $0x1d0] sm:$0xff]
      %v624 = vld [vmem:[%s11 + $0x1d8] sm:$0xff]
      %v625 = vld [vmem:[%s11 + $0x1e0] sm:$0xff]
      %v626 = vld [vmem:[%s11 + $0x1e8] sm:$0xff]
      %v627 = vld [vmem:[%s11 + $0x1f0] sm:$0xff]
      %v628 = vld [vmem:[%s11 + $0x1f8] sm:$0xff]
      %v629 = vld [vmem:[%s11 + $0x200] sm:$0xff]
      %v630 = vld [vmem:[%s11 + $0x208] sm:$0xff]
      %v631 = vld [vmem:[%s11 + $0x210] sm:$0xff]
      %v632 = vld [vmem:[%s11 + $0x218] sm:$0xff]
      %v633 = vld [vmem:[%s11 + $0x220] sm:$0xff]
      %v634 = vld [vmem:[%s11 + $0x228] sm:$0xff]
      %v635 = vld [vmem:[%s11 + $0x230] sm:$0xff]
      %v636 = vld [vmem:[%s11 + $0x238] sm:$0xff]
      %v637 = vld [vmem:[%s11 + $0x240] sm:$0xff]
      %v638 = vld [vmem:[%s11 + $0x248] sm:$0xff]
      %v639 = vld [vmem:[%s11 + $0x250] sm:$0xff]
      %v640 = vld [vmem:[%s11 + $0x258] sm:$0xff]
      %v641 = vld [vmem:[%s11 + $0x260] sm:$0xff]
      %v642 = vld [vmem:[%s11 + $0x268] sm:$0xff]
      %v643 = vld [vmem:[%s11 + $0x270] sm:$0xff]
      %v644 = vld [vmem:[%s11 + $0x278] sm:$0xff]
      %v645 = vld [vmem:[%s11 + $0x280] sm:$0xff]
      %v646 = vld [vmem:[%s11 + $0x288] sm:$0xff]
      %v647 = vld [vmem:[%s11 + $0x290] sm:$0xff]
      %v648 = vld [vmem:[%s11 + $0x298] sm:$0xff]
      %v649 = vld [vmem:[%s11 + $0x2a0] sm:$0xff]
      %v650 = vld [vmem:[%s11 + $0x2a8] sm:$0xff]
      %v651 = vld [vmem:[%s11 + $0x2b0] sm:$0xff]
      %v652 = vld [vmem:[%s11 + $0x2b8] sm:$0xff]
      %v653 = vld [vmem:[%s11 + $0x2c0] sm:$0xff]
      %v654 = vld [vmem:[%s11 + $0x2c8] sm:$0xff]
      %v655 = vld [vmem:[%s11 + $0x2d0] sm:$0xff]
      %v656 = vld [vmem:[%s11 + $0x2d8] sm:$0xff]
      %v657 = vld [vmem:[%s11 + $0x2e0] sm:$0xff]
      %v658 = vld [vmem:[%s11 + $0x2e8] sm:$0xff]
      %v659 = vld [vmem:[%s11 + $0x2f0] sm:$0xff]
      %v660 = vld [vmem:[%s11 + $0x2f8] sm:$0xff]
      %661 = vmatprep.subr.mxu0 %v566
      %662 = vmatpush1.msra.mxu0 %v565
      %663 = vmatprep.subr.mxu0 %v569
      %664 = vmatpush1.msra.mxu0 %v568
      %665 = vmatprep.subr.mxu0 %v572
      %666 = vmatpush1.msra.mxu0 %v571
      %667 = vmatprep.subr.mxu0 %v575
      %668 = vmatpush1.msra.mxu0 %v574
      %669 = vmatprep.subr.mxu0 %v578
      %670 = vmatpush1.msra.mxu0 %v577
      %671 = vmatprep.subr.mxu0 %v581
      %672 = vmatpush1.msra.mxu0 %v580
      %673 = vmatprep.subr.mxu0 %v584
      %674 = vmatpush1.msra.mxu0 %v583
      %675 = vmatprep.subr.mxu0 %v587
      %676 = vmatpush1.msra.mxu0 %v586
      %677 = vmatprep.subr.mxu0 %v590
      %678 = vmatpush1.msra.mxu0 %v589
      %679 = vmatprep.subr.mxu0 %v593
      %680 = vmatpush1.msra.mxu0 %v592
      %681 = vmatprep.subr.mxu0 %v596
      %682 = vmatpush1.msra.mxu0 %v595
      %683 = vmatprep.subr.mxu0 %v599
      %684 = vmatpush1.msra.mxu0 %v598
      %685 = vmatprep.subr.mxu0 %v602
      %686 = vmatpush1.msra.mxu0 %v601
      %687 = vmatprep.subr.mxu0 %v605
      %688 = vmatpush1.msra.mxu0 %v604
      %689 = vmatprep.subr.mxu0 %v608
      %690 = vmatpush1.msra.mxu0 %v607
      %691 = vmatprep.subr.mxu0 %v611
      %692 = vmatpush1.msra.mxu0 %v610
      %693 = vmatprep.subr.mxu0 %v614
      %694 = vmatpush1.msra.mxu0 %v613
      %695 = vmatprep.subr.mxu0 %v617
      %696 = vmatpush1.msra.mxu0 %v616
      %697 = vmatprep.subr.mxu0 %v620
      %698 = vmatpush1.msra.mxu0 %v619
      %699 = vmatprep.subr.mxu0 %v623
      %700 = vmatpush1.msra.mxu0 %v622
      %701 = vmatprep.subr.mxu0 %v626
      %702 = vmatpush1.msra.mxu0 %v625
      %703 = vmatprep.subr.mxu0 %v629
      %704 = vmatpush1.msra.mxu0 %v628
      %705 = vmatprep.subr.mxu0 %v632
      %706 = vmatpush1.msra.mxu0 %v631
      %707 = vmatprep.subr.mxu0 %v635
      %708 = vmatpush1.msra.mxu0 %v634
      %709 = vmatprep.subr.mxu0 %v638
      %710 = vmatpush1.msra.mxu0 %v637
      %711 = vmatprep.subr.mxu0 %v641
      %712 = vmatpush1.msra.mxu0 %v640
      %713 = vmatprep.subr.mxu0 %v644
      %714 = vmatpush1.msra.mxu0 %v643
      %715 = vmatprep.subr.mxu0 %v647
      %716 = vmatpush1.msra.mxu0 %v646
      %717 = vmatprep.subr.mxu0 %v650
      %718 = vmatpush1.msra.mxu0 %v649
      %719 = vmatprep.subr.mxu0 %v653
      %720 = vmatpush1.msra.mxu0 %v652
      %721 = vmatprep.subr.mxu0 %v656
      %722 = vmatpush1.msra.mxu0 %v655
      %723 = vmatprep.subr.mxu0 %v659
      %724 = vmatpush1.msra.mxu0 %v658
      %725 = vmatprep.mubr.f32.mxu0 %v562
      %726 = vmatmul.mubr.f32.gmra.mrb[0].mxu0 %v558
      %v727 = vpop.f32.mrb[0].mxu0
      %v728 = vadd.f32 0.0, %v727
      %v729 = vpop.f32.mrb[0].mxu0
      %v730 = vadd.f32 0.0, %v729
      %731 = vdwg.mxu0
      %732 = vmatprep.subr.mxu0 0.0
      %733 = vmatpush1.msra.mxu0 %v567
      %734 = vmatprep.subr.mxu0 0.0
      %735 = vmatpush1.msra.mxu0 %v570
      %736 = vmatprep.subr.mxu0 0.0
      %737 = vmatpush1.msra.mxu0 %v573
      %738 = vmatprep.subr.mxu0 0.0
      %739 = vmatpush1.msra.mxu0 %v576
      %740 = vmatprep.subr.mxu0 0.0
      %741 = vmatpush1.msra.mxu0 %v579
      %742 = vmatprep.subr.mxu0 0.0
      %743 = vmatpush1.msra.mxu0 %v582
      %744 = vmatprep.subr.mxu0 0.0
      %745 = vmatpush1.msra.mxu0 %v585
      %746 = vmatprep.subr.mxu0 0.0
      %747 = vmatpush1.msra.mxu0 %v588
      %748 = vmatprep.subr.mxu0 0.0
      %749 = vmatpush1.msra.mxu0 %v591
      %750 = vmatprep.subr.mxu0 0.0
      %751 = vmatpush1.msra.mxu0 %v594
      %752 = vmatprep.subr.mxu0 0.0
      %753 = vmatpush1.msra.mxu0 %v597
      %754 = vmatprep.subr.mxu0 0.0
      %755 = vmatpush1.msra.mxu0 %v600
      %756 = vmatprep.subr.mxu0 0.0
      %757 = vmatpush1.msra.mxu0 %v603
      %758 = vmatprep.subr.mxu0 0.0
      %759 = vmatpush1.msra.mxu0 %v606
      %760 = vmatprep.subr.mxu0 0.0
      %761 = vmatpush1.msra.mxu0 %v609
      %762 = vmatprep.subr.mxu0 0.0
      %763 = vmatpush1.msra.mxu0 %v612
      %764 = vmatprep.subr.mxu0 0.0
      %765 = vmatpush1.msra.mxu0 %v615
      %766 = vmatprep.subr.mxu0 0.0
      %767 = vmatpush1.msra.mxu0 %v618
      %768 = vmatprep.subr.mxu0 0.0
      %769 = vmatpush1.msra.mxu0 %v621
      %770 = vmatprep.subr.mxu0 0.0
      %771 = vmatpush1.msra.mxu0 %v624
      %772 = vmatprep.subr.mxu0 0.0
      %773 = vmatpush1.msra.mxu0 %v627
      %774 = vmatprep.subr.mxu0 0.0
      %775 = vmatpush1.msra.mxu0 %v630
      %776 = vmatprep.subr.mxu0 0.0
      %777 = vmatpush1.msra.mxu0 %v633
      %778 = vmatprep.subr.mxu0 0.0
      %779 = vmatpush1.msra.mxu0 %v636
      %780 = vmatprep.subr.mxu0 0.0
      %781 = vmatpush1.msra.mxu0 %v639
      %782 = vmatprep.subr.mxu0 0.0
      %783 = vmatpush1.msra.mxu0 %v642
      %784 = vmatprep.subr.mxu0 0.0
      %785 = vmatpush1.msra.mxu0 %v645
      %786 = vmatprep.subr.mxu0 0.0
      %787 = vmatpush1.msra.mxu0 %v648
      %788 = vmatprep.subr.mxu0 0.0
      %789 = vmatpush1.msra.mxu0 %v651
      %790 = vmatprep.subr.mxu0 0.0
      %791 = vmatpush1.msra.mxu0 %v654
      %792 = vmatprep.subr.mxu0 0.0
      %793 = vmatpush1.msra.mxu0 %v657
      %794 = vmatprep.subr.mxu0 0.0
      %795 = vmatpush1.msra.mxu0 %v660
      %796 = vmatprep.mubr.f32.mxu0 %v562
      %797 = vmatmul.mubr.f32.gmra.mrb[0].mxu0 %v558
      %v798 = vpop.f32.mrb[0].mxu0
      %v799 = vadd.f32 0.0, %v798
      %v800 = vpop.f32.mrb[0].mxu0
      %801 = vdwg.mxu0
      %805 = vrot.lane.b32.xlu0 %v728, 19
      %v806 = vpop.permute.xlu0 %805
      %807 = vrot.lane.b32.xlu0 %v730, 19
      %v808 = vpop.permute.xlu0 %807
      %809 = vrot.lane.b32.xlu0 %v799, 19
      %v810 = vpop.permute.xlu0 %809
      %vm811 = vcmask 154624
      %v812 = vsel %vm811, %v806, %v808
      %v813 = vsel %vm811, %v808, %v810
      %vm817 = vcmask 1047704
      %818 = vst.msk [vmem:[#allocation2] sm:$0xff] %vm817, %v806
      %819 = vst [vmem:[#allocation2 + $0x8] sm:$0xff] %v812
      %vm820 = vcmask 711680
      %821 = vst.msk [vmem:[#allocation2 + $0x10] sm:$0xff] %vm820, %v813
      %v822 = vld [vmem:[#allocation2] sm:$0xff]
      %v823 = vld [vmem:[#allocation2 + $0x8] sm:$0xff]
      %v824 = vld [vmem:[#allocation2 + $0x10] sm:$0xff]
      %v825 = vld [vmem:[%s1] sm:$0xff]
      %s826 = scalar_lea.vmem %s1, 8
      %v827 = vld [vmem:[%s826] sm:$0xff]
      %831 = vrot.lane.b32.xlu0 %v822, 127
      %v832 = vpop.permute.xlu0 %831
      %833 = vrot.lane.b32.xlu0 %v823, 127
      %v834 = vpop.permute.xlu0 %833
      %835 = vrot.lane.b32.xlu0 %v824, 127
      %v836 = vpop.permute.xlu0 %835
      %vm837 = vcmask 1039360
      %v838 = vsel %vm837, %v832, %v834
      %v839 = vsel %vm837, %v834, %v836
      %vm843 = vcmask 64512
      %v845 = vsel %vm843, %v827, 0
      %847 = vmatprep.subr.mxu0 %v839
      %848 = vmatpush1.msra.mxu0 %v838
      %849 = vmatprep.subr.mxu0 0.0
      %850 = vmatpush1.msra.mxu0 0.0
      %851 = vmatprep.subr.mxu0 0.0
      %852 = vmatpush1.msra.mxu0 0.0
      %853 = vmatprep.subr.mxu0 0.0
      %854 = vmatpush1.msra.mxu0 0.0
      %855 = vmatprep.subr.mxu0 0.0
      %856 = vmatpush1.msra.mxu0 0.0
      %857 = vmatprep.subr.mxu0 0.0
      %858 = vmatpush1.msra.mxu0 0.0
      %859 = vmatprep.subr.mxu0 0.0
      %860 = vmatpush1.msra.mxu0 0.0
      %861 = vmatprep.subr.mxu0 0.0
      %862 = vmatpush1.msra.mxu0 0.0
      %863 = vmatprep.subr.mxu0 0.0
      %864 = vmatpush1.msra.mxu0 0.0
      %865 = vmatprep.subr.mxu0 0.0
      %866 = vmatpush1.msra.mxu0 0.0
      %867 = vmatprep.subr.mxu0 0.0
      %868 = vmatpush1.msra.mxu0 0.0
      %869 = vmatprep.subr.mxu0 0.0
      %870 = vmatpush1.msra.mxu0 0.0
      %871 = vmatprep.subr.mxu0 0.0
      %872 = vmatpush1.msra.mxu0 0.0
      %873 = vmatprep.subr.mxu0 0.0
      %874 = vmatpush1.msra.mxu0 0.0
      %875 = vmatprep.subr.mxu0 0.0
      %876 = vmatpush1.msra.mxu0 0.0
      %877 = vmatprep.subr.mxu0 0.0
      %878 = vmatpush1.msra.mxu0 0.0
      %879 = vmatprep.subr.mxu0 0.0
      %880 = vmatpush1.msra.mxu0 0.0
      %881 = vmatprep.subr.mxu0 0.0
      %882 = vmatpush1.msra.mxu0 0.0
      %883 = vmatprep.subr.mxu0 0.0
      %884 = vmatpush1.msra.mxu0 0.0
      %885 = vmatprep.subr.mxu0 0.0
      %886 = vmatpush1.msra.mxu0 0.0
      %887 = vmatprep.subr.mxu0 0.0
      %888 = vmatpush1.msra.mxu0 0.0
      %889 = vmatprep.subr.mxu0 0.0
      %890 = vmatpush1.msra.mxu0 0.0
      %891 = vmatprep.subr.mxu0 0.0
      %892 = vmatpush1.msra.mxu0 0.0
      %893 = vmatprep.subr.mxu0 0.0
      %894 = vmatpush1.msra.mxu0 0.0
      %895 = vmatprep.subr.mxu0 0.0
      %896 = vmatpush1.msra.mxu0 0.0
      %897 = vmatprep.subr.mxu0 0.0
      %898 = vmatpush1.msra.mxu0 0.0
      %899 = vmatprep.subr.mxu0 0.0
      %900 = vmatpush1.msra.mxu0 0.0
      %901 = vmatprep.subr.mxu0 0.0
      %902 = vmatpush1.msra.mxu0 0.0
      %903 = vmatprep.subr.mxu0 0.0
      %904 = vmatpush1.msra.mxu0 0.0
      %905 = vmatprep.subr.mxu0 0.0
      %906 = vmatpush1.msra.mxu0 0.0
      %907 = vmatprep.subr.mxu0 0.0
      %908 = vmatpush1.msra.mxu0 0.0
      %909 = vmatprep.subr.mxu0 0.0
      %910 = vmatpush1.msra.mxu0 0.0
      %911 = vmatprep.mubr.f32.mxu0 0.0
      %912 = vmatmul.mubr.f32.gmra.mrb[0].mxu0 %v845
      %v913 = vpop.f32.mrb[0].mxu0
      %v914 = vadd.f32 0.0, %v913
      %v915 = vpop.f32.mrb[0].mxu0
      %v916 = vadd.f32 0.0, %v915
      %917 = vdwg.mxu0
      %918 = vmatprep.subr.mxu0 0.0
      %919 = vmatpush1.msra.mxu0 %v836
      %920 = vmatprep.subr.mxu0 0.0
      %921 = vmatpush1.msra.mxu0 0.0
      %922 = vmatprep.subr.mxu0 0.0
      %923 = vmatpush1.msra.mxu0 0.0
      %924 = vmatprep.subr.mxu0 0.0
      %925 = vmatpush1.msra.mxu0 0.0
      %926 = vmatprep.subr.mxu0 0.0
      %927 = vmatpush1.msra.mxu0 0.0
      %928 = vmatprep.subr.mxu0 0.0
      %929 = vmatpush1.msra.mxu0 0.0
      %930 = vmatprep.subr.mxu0 0.0
      %931 = vmatpush1.msra.mxu0 0.0
      %932 = vmatprep.subr.mxu0 0.0
      %933 = vmatpush1.msra.mxu0 0.0
      %934 = vmatprep.subr.mxu0 0.0
      %935 = vmatpush1.msra.mxu0 0.0
      %936 = vmatprep.subr.mxu0 0.0
      %937 = vmatpush1.msra.mxu0 0.0
      %938 = vmatprep.subr.mxu0 0.0
      %939 = vmatpush1.msra.mxu0 0.0
      %940 = vmatprep.subr.mxu0 0.0
      %941 = vmatpush1.msra.mxu0 0.0
      %942 = vmatprep.subr.mxu0 0.0
      %943 = vmatpush1.msra.mxu0 0.0
      %944 = vmatprep.subr.mxu0 0.0
      %945 = vmatpush1.msra.mxu0 0.0
      %946 = vmatprep.subr.mxu0 0.0
      %947 = vmatpush1.msra.mxu0 0.0
      %948 = vmatprep.subr.mxu0 0.0
      %949 = vmatpush1.msra.mxu0 0.0
      %950 = vmatprep.subr.mxu0 0.0
      %951 = vmatpush1.msra.mxu0 0.0
      %952 = vmatprep.subr.mxu0 0.0
      %953 = vmatpush1.msra.mxu0 0.0
      %954 = vmatprep.subr.mxu0 0.0
      %955 = vmatpush1.msra.mxu0 0.0
      %956 = vmatprep.subr.mxu0 0.0
      %957 = vmatpush1.msra.mxu0 0.0
      %958 = vmatprep.subr.mxu0 0.0
      %959 = vmatpush1.msra.mxu0 0.0
      %960 = vmatprep.subr.mxu0 0.0
      %961 = vmatpush1.msra.mxu0 0.0
      %962 = vmatprep.subr.mxu0 0.0
      %963 = vmatpush1.msra.mxu0 0.0
      %964 = vmatprep.subr.mxu0 0.0
      %965 = vmatpush1.msra.mxu0 0.0
      %966 = vmatprep.subr.mxu0 0.0
      %967 = vmatpush1.msra.mxu0 0.0
      %968 = vmatprep.subr.mxu0 0.0
      %969 = vmatpush1.msra.mxu0 0.0
      %970 = vmatprep.subr.mxu0 0.0
      %971 = vmatpush1.msra.mxu0 0.0
      %972 = vmatprep.subr.mxu0 0.0
      %973 = vmatpush1.msra.mxu0 0.0
      %974 = vmatprep.subr.mxu0 0.0
      %975 = vmatpush1.msra.mxu0 0.0
      %976 = vmatprep.subr.mxu0 0.0
      %977 = vmatpush1.msra.mxu0 0.0
      %978 = vmatprep.subr.mxu0 0.0
      %979 = vmatpush1.msra.mxu0 0.0
      %980 = vmatprep.subr.mxu0 0.0
      %981 = vmatpush1.msra.mxu0 0.0
      %982 = vmatprep.mubr.f32.mxu0 0.0
      %983 = vmatmul.mubr.f32.gmra.mrb[0].mxu0 %v845
      %v984 = vpop.f32.mrb[0].mxu0
      %v985 = vadd.f32 0.0, %v984
      %v986 = vpop.f32.mrb[0].mxu0
      %987 = vdwg.mxu0
      %v989 = vsel %vm843, %v825, 0
      %991 = vmatprep.subr.mxu0 %v823
      %992 = vmatpush1.msra.mxu0 %v822
      %993 = vmatprep.subr.mxu0 0.0
      %994 = vmatpush1.msra.mxu0 0.0
      %995 = vmatprep.subr.mxu0 0.0
      %996 = vmatpush1.msra.mxu0 0.0
      %997 = vmatprep.subr.mxu0 0.0
      %998 = vmatpush1.msra.mxu0 0.0
      %999 = vmatprep.subr.mxu0 0.0
      %1000 = vmatpush1.msra.mxu0 0.0
      %1001 = vmatprep.subr.mxu0 0.0
      %1002 = vmatpush1.msra.mxu0 0.0
      %1003 = vmatprep.subr.mxu0 0.0
      %1004 = vmatpush1.msra.mxu0 0.0
      %1005 = vmatprep.subr.mxu0 0.0
      %1006 = vmatpush1.msra.mxu0 0.0
      %1007 = vmatprep.subr.mxu0 0.0
      %1008 = vmatpush1.msra.mxu0 0.0
      %1009 = vmatprep.subr.mxu0 0.0
      %1010 = vmatpush1.msra.mxu0 0.0
      %1011 = vmatprep.subr.mxu0 0.0
      %1012 = vmatpush1.msra.mxu0 0.0
      %1013 = vmatprep.subr.mxu0 0.0
      %1014 = vmatpush1.msra.mxu0 0.0
      %1015 = vmatprep.subr.mxu0 0.0
      %1016 = vmatpush1.msra.mxu0 0.0
      %1017 = vmatprep.subr.mxu0 0.0
      %1018 = vmatpush1.msra.mxu0 0.0
      %1019 = vmatprep.subr.mxu0 0.0
      %1020 = vmatpush1.msra.mxu0 0.0
      %1021 = vmatprep.subr.mxu0 0.0
      %1022 = vmatpush1.msra.mxu0 0.0
      %1023 = vmatprep.subr.mxu0 0.0
      %1024 = vmatpush1.msra.mxu0 0.0
      %1025 = vmatprep.subr.mxu0 0.0
      %1026 = vmatpush1.msra.mxu0 0.0
      %1027 = vmatprep.subr.mxu0 0.0
      %1028 = vmatpush1.msra.mxu0 0.0
      %1029 = vmatprep.subr.mxu0 0.0
      %1030 = vmatpush1.msra.mxu0 0.0
      %1031 = vmatprep.subr.mxu0 0.0
      %1032 = vmatpush1.msra.mxu0 0.0
      %1033 = vmatprep.subr.mxu0 0.0
      %1034 = vmatpush1.msra.mxu0 0.0
      %1035 = vmatprep.subr.mxu0 0.0
      %1036 = vmatpush1.msra.mxu0 0.0
      %1037 = vmatprep.subr.mxu0 0.0
      %1038 = vmatpush1.msra.mxu0 0.0
      %1039 = vmatprep.subr.mxu0 0.0
      %1040 = vmatpush1.msra.mxu0 0.0
      %1041 = vmatprep.subr.mxu0 0.0
      %1042 = vmatpush1.msra.mxu0 0.0
      %1043 = vmatprep.subr.mxu0 0.0
      %1044 = vmatpush1.msra.mxu0 0.0
      %1045 = vmatprep.subr.mxu0 0.0
      %1046 = vmatpush1.msra.mxu0 0.0
      %1047 = vmatprep.subr.mxu0 0.0
      %1048 = vmatpush1.msra.mxu0 0.0
      %1049 = vmatprep.subr.mxu0 0.0
      %1050 = vmatpush1.msra.mxu0 0.0
      %1051 = vmatprep.subr.mxu0 0.0
      %1052 = vmatpush1.msra.mxu0 0.0
      %1053 = vmatprep.subr.mxu0 0.0
      %1054 = vmatpush1.msra.mxu0 0.0
      %1055 = vmatprep.mubr.f32.mxu0 0.0
      %1056 = vmatmul.mubr.f32.gmra.mrb[0].mxu0 %v989
      %v1057 = vpop.f32.mrb[0].mxu0
      %v1058 = vadd.f32 %v914, %v1057
      %v1059 = vpop.f32.mrb[0].mxu0
      %v1060 = vadd.f32 %v916, %v1059
      %1061 = vdwg.mxu0
      %1062 = vmatprep.subr.mxu0 0.0
      %1063 = vmatpush1.msra.mxu0 %v824
      %1064 = vmatprep.subr.mxu0 0.0
      %1065 = vmatpush1.msra.mxu0 0.0
      %1066 = vmatprep.subr.mxu0 0.0
      %1067 = vmatpush1.msra.mxu0 0.0
      %1068 = vmatprep.subr.mxu0 0.0
      %1069 = vmatpush1.msra.mxu0 0.0
      %1070 = vmatprep.subr.mxu0 0.0
      %1071 = vmatpush1.msra.mxu0 0.0
      %1072 = vmatprep.subr.mxu0 0.0
      %1073 = vmatpush1.msra.mxu0 0.0
      %1074 = vmatprep.subr.mxu0 0.0
      %1075 = vmatpush1.msra.mxu0 0.0
      %1076 = vmatprep.subr.mxu0 0.0
      %1077 = vmatpush1.msra.mxu0 0.0
      %1078 = vmatprep.subr.mxu0 0.0
      %1079 = vmatpush1.msra.mxu0 0.0
      %1080 = vmatprep.subr.mxu0 0.0
      %1081 = vmatpush1.msra.mxu0 0.0
      %1082 = vmatprep.subr.mxu0 0.0
      %1083 = vmatpush1.msra.mxu0 0.0
      %1084 = vmatprep.subr.mxu0 0.0
      %1085 = vmatpush1.msra.mxu0 0.0
      %1086 = vmatprep.subr.mxu0 0.0
      %1087 = vmatpush1.msra.mxu0 0.0
      %1088 = vmatprep.subr.mxu0 0.0
      %1089 = vmatpush1.msra.mxu0 0.0
      %1090 = vmatprep.subr.mxu0 0.0
      %1091 = vmatpush1.msra.mxu0 0.0
      %1092 = vmatprep.subr.mxu0 0.0
      %1093 = vmatpush1.msra.mxu0 0.0
      %1094 = vmatprep.subr.mxu0 0.0
      %1095 = vmatpush1.msra.mxu0 0.0
      %1096 = vmatprep.subr.mxu0 0.0
      %1097 = vmatpush1.msra.mxu0 0.0
      %1098 = vmatprep.subr.mxu0 0.0
      %1099 = vmatpush1.msra.mxu0 0.0
      %1100 = vmatprep.subr.mxu0 0.0
      %1101 = vmatpush1.msra.mxu0 0.0
      %1102 = vmatprep.subr.mxu0 0.0
      %1103 = vmatpush1.msra.mxu0 0.0
      %1104 = vmatprep.subr.mxu0 0.0
      %1105 = vmatpush1.msra.mxu0 0.0
      %1106 = vmatprep.subr.mxu0 0.0
      %1107 = vmatpush1.msra.mxu0 0.0
      %1108 = vmatprep.subr.mxu0 0.0
      %1109 = vmatpush1.msra.mxu0 0.0
      %1110 = vmatprep.subr.mxu0 0.0
      %1111 = vmatpush1.msra.mxu0 0.0
      %1112 = vmatprep.subr.mxu0 0.0
      %1113 = vmatpush1.msra.mxu0 0.0
      %1114 = vmatprep.subr.mxu0 0.0
      %1115 = vmatpush1.msra.mxu0 0.0
      %1116 = vmatprep.subr.mxu0 0.0
      %1117 = vmatpush1.msra.mxu0 0.0
      %1118 = vmatprep.subr.mxu0 0.0
      %1119 = vmatpush1.msra.mxu0 0.0
      %1120 = vmatprep.subr.mxu0 0.0
      %1121 = vmatpush1.msra.mxu0 0.0
      %1122 = vmatprep.subr.mxu0 0.0
      %1123 = vmatpush1.msra.mxu0 0.0
      %1124 = vmatprep.subr.mxu0 0.0
      %1125 = vmatpush1.msra.mxu0 0.0
      %1126 = vmatprep.mubr.f32.mxu0 0.0
      %1127 = vmatmul.mubr.f32.gmra.mrb[0].mxu0 %v989
      %v1128 = vpop.f32.mrb[0].mxu0
      %v1129 = vadd.f32 %v985, %v1128
      %v1130 = vpop.f32.mrb[0].mxu0
      %1131 = vdwg.mxu0
      %s1132 = scalar_lea.vmem %s1, 16
      %v1133 = vld [vmem:[%s1132] sm:$0xff]
      %1134 = vrot.lane.b32.xlu0 %v822, 126
      %v1135 = vpop.permute.xlu0 %1134
      %1136 = vrot.lane.b32.xlu0 %v823, 126
      %v1137 = vpop.permute.xlu0 %1136
      %1138 = vrot.lane.b32.xlu0 %v824, 126
      %v1139 = vpop.permute.xlu0 %1138
      %vm1140 = vcmask 1031168
      %v1141 = vsel %vm1140, %v1135, %v1137
      %v1142 = vsel %vm1140, %v1137, %v1139
      %v1147 = vsel %vm843, %v1133, 0
      %1149 = vmatprep.subr.mxu0 %v1142
      %1150 = vmatpush1.msra.mxu0 %v1141
      %1151 = vmatprep.subr.mxu0 0.0
      %1152 = vmatpush1.msra.mxu0 0.0
      %1153 = vmatprep.subr.mxu0 0.0
      %1154 = vmatpush1.msra.mxu0 0.0
      %1155 = vmatprep.subr.mxu0 0.0
      %1156 = vmatpush1.msra.mxu0 0.0
      %1157 = vmatprep.subr.mxu0 0.0
      %1158 = vmatpush1.msra.mxu0 0.0
      %1159 = vmatprep.subr.mxu0 0.0
      %1160 = vmatpush1.msra.mxu0 0.0
      %1161 = vmatprep.subr.mxu0 0.0
      %1162 = vmatpush1.msra.mxu0 0.0
      %1163 = vmatprep.subr.mxu0 0.0
      %1164 = vmatpush1.msra.mxu0 0.0
      %1165 = vmatprep.subr.mxu0 0.0
      %1166 = vmatpush1.msra.mxu0 0.0
      %1167 = vmatprep.subr.mxu0 0.0
      %1168 = vmatpush1.msra.mxu0 0.0
      %1169 = vmatprep.subr.mxu0 0.0
      %1170 = vmatpush1.msra.mxu0 0.0
      %1171 = vmatprep.subr.mxu0 0.0
      %1172 = vmatpush1.msra.mxu0 0.0
      %1173 = vmatprep.subr.mxu0 0.0
      %1174 = vmatpush1.msra.mxu0 0.0
      %1175 = vmatprep.subr.mxu0 0.0
      %1176 = vmatpush1.msra.mxu0 0.0
      %1177 = vmatprep.subr.mxu0 0.0
      %1178 = vmatpush1.msra.mxu0 0.0
      %1179 = vmatprep.subr.mxu0 0.0
      %1180 = vmatpush1.msra.mxu0 0.0
      %1181 = vmatprep.subr.mxu0 0.0
      %1182 = vmatpush1.msra.mxu0 0.0
      %1183 = vmatprep.subr.mxu0 0.0
      %1184 = vmatpush1.msra.mxu0 0.0
      %1185 = vmatprep.subr.mxu0 0.0
      %1186 = vmatpush1.msra.mxu0 0.0
      %1187 = vmatprep.subr.mxu0 0.0
      %1188 = vmatpush1.msra.mxu0 0.0
      %1189 = vmatprep.subr.mxu0 0.0
      %1190 = vmatpush1.msra.mxu0 0.0
      %1191 = vmatprep.subr.mxu0 0.0
      %1192 = vmatpush1.msra.mxu0 0.0
      %1193 = vmatprep.subr.mxu0 0.0
      %1194 = vmatpush1.msra.mxu0 0.0
      %1195 = vmatprep.subr.mxu0 0.0
      %1196 = vmatpush1.msra.mxu0 0.0
      %1197 = vmatprep.subr.mxu0 0.0
      %1198 = vmatpush1.msra.mxu0 0.0
      %1199 = vmatprep.subr.mxu0 0.0
      %1200 = vmatpush1.msra.mxu0 0.0
      %1201 = vmatprep.subr.mxu0 0.0
      %1202 = vmatpush1.msra.mxu0 0.0
      %1203 = vmatprep.subr.mxu0 0.0
      %1204 = vmatpush1.msra.mxu0 0.0
      %1205 = vmatprep.subr.mxu0 0.0
      %1206 = vmatpush1.msra.mxu0 0.0
      %1207 = vmatprep.subr.mxu0 0.0
      %1208 = vmatpush1.msra.mxu0 0.0
      %1209 = vmatprep.subr.mxu0 0.0
      %1210 = vmatpush1.msra.mxu0 0.0
      %1211 = vmatprep.subr.mxu0 0.0
      %1212 = vmatpush1.msra.mxu0 0.0
      %1213 = vmatprep.mubr.f32.mxu0 0.0
      %1214 = vmatmul.mubr.f32.gmra.mrb[0].mxu0 %v1147
      %v1215 = vpop.f32.mrb[0].mxu0
      %v1216 = vadd.f32 0.0, %v1215
      %v1217 = vpop.f32.mrb[0].mxu0
      %v1218 = vadd.f32 0.0, %v1217
      %1219 = vdwg.mxu0
      %1220 = vmatprep.subr.mxu0 0.0
      %1221 = vmatpush1.msra.mxu0 %v1139
      %1222 = vmatprep.subr.mxu0 0.0
      %1223 = vmatpush1.msra.mxu0 0.0
      %1224 = vmatprep.subr.mxu0 0.0
      %1225 = vmatpush1.msra.mxu0 0.0
      %1226 = vmatprep.subr.mxu0 0.0
      %1227 = vmatpush1.msra.mxu0 0.0
      %1228 = vmatprep.subr.mxu0 0.0
      %1229 = vmatpush1.msra.mxu0 0.0
      %1230 = vmatprep.subr.mxu0 0.0
      %1231 = vmatpush1.msra.mxu0 0.0
      %1232 = vmatprep.subr.mxu0 0.0
      %1233 = vmatpush1.msra.mxu0 0.0
      %1234 = vmatprep.subr.mxu0 0.0
      %1235 = vmatpush1.msra.mxu0 0.0
      %1236 = vmatprep.subr.mxu0 0.0
      %1237 = vmatpush1.msra.mxu0 0.0
      %1238 = vmatprep.subr.mxu0 0.0
      %1239 = vmatpush1.msra.mxu0 0.0
      %1240 = vmatprep.subr.mxu0 0.0
      %1241 = vmatpush1.msra.mxu0 0.0
      %1242 = vmatprep.subr.mxu0 0.0
      %1243 = vmatpush1.msra.mxu0 0.0
      %1244 = vmatprep.subr.mxu0 0.0
      %1245 = vmatpush1.msra.mxu0 0.0
      %1246 = vmatprep.subr.mxu0 0.0
      %1247 = vmatpush1.msra.mxu0 0.0
      %1248 = vmatprep.subr.mxu0 0.0
      %1249 = vmatpush1.msra.mxu0 0.0
      %1250 = vmatprep.subr.mxu0 0.0
      %1251 = vmatpush1.msra.mxu0 0.0
      %1252 = vmatprep.subr.mxu0 0.0
      %1253 = vmatpush1.msra.mxu0 0.0
      %1254 = vmatprep.subr.mxu0 0.0
      %1255 = vmatpush1.msra.mxu0 0.0
      %1256 = vmatprep.subr.mxu0 0.0
      %1257 = vmatpush1.msra.mxu0 0.0
      %1258 = vmatprep.subr.mxu0 0.0
      %1259 = vmatpush1.msra.mxu0 0.0
      %1260 = vmatprep.subr.mxu0 0.0
      %1261 = vmatpush1.msra.mxu0 0.0
      %1262 = vmatprep.subr.mxu0 0.0
      %1263 = vmatpush1.msra.mxu0 0.0
      %1264 = vmatprep.subr.mxu0 0.0
      %1265 = vmatpush1.msra.mxu0 0.0
      %1266 = vmatprep.subr.mxu0 0.0
      %1267 = vmatpush1.msra.mxu0 0.0
      %1268 = vmatprep.subr.mxu0 0.0
      %1269 = vmatpush1.msra.mxu0 0.0
      %1270 = vmatprep.subr.mxu0 0.0
      %1271 = vmatpush1.msra.mxu0 0.0
      %1272 = vmatprep.subr.mxu0 0.0
      %1273 = vmatpush1.msra.mxu0 0.0
      %1274 = vmatprep.subr.mxu0 0.0
      %1275 = vmatpush1.msra.mxu0 0.0
      %1276 = vmatprep.subr.mxu0 0.0
      %1277 = vmatpush1.msra.mxu0 0.0
      %1278 = vmatprep.subr.mxu0 0.0
      %1279 = vmatpush1.msra.mxu0 0.0
      %1280 = vmatprep.subr.mxu0 0.0
      %1281 = vmatpush1.msra.mxu0 0.0
      %1282 = vmatprep.subr.mxu0 0.0
      %1283 = vmatpush1.msra.mxu0 0.0
      %1284 = vmatprep.mubr.f32.mxu0 0.0
      %1285 = vmatmul.mubr.f32.gmra.mrb[0].mxu0 %v1147
      %v1286 = vpop.f32.mrb[0].mxu0
      %v1287 = vadd.f32 0.0, %v1286
      %v1288 = vpop.f32.mrb[0].mxu0
      %1289 = vdwg.mxu0
      %v1290 = vadd.f32 %v1058, %v1216
      %v1291 = vadd.f32 %v1060, %v1218
      %v1292 = vadd.f32 %v1129, %v1287
      %s1293 = scalar_lea.vmem %s1, 24
      %v1294 = vld [vmem:[%s1293] sm:$0xff]
      %1295 = vrot.lane.b32.xlu0 %v822, 110
      %v1296 = vpop.permute.xlu0 %1295
      %1297 = vrot.lane.b32.xlu0 %v823, 110
      %v1298 = vpop.permute.xlu0 %1297
      %1299 = vrot.lane.b32.xlu0 %v824, 110
      %v1300 = vpop.permute.xlu0 %1299
      %vm1301 = vcmask 900096
      %v1302 = vsel %vm1301, %v1296, %v1298
      %v1303 = vsel %vm1301, %v1298, %v1300
      %v1308 = vsel %vm843, %v1294, 0
      %1310 = vmatprep.subr.mxu0 %v1303
      %1311 = vmatpush1.msra.mxu0 %v1302
      %1312 = vmatprep.subr.mxu0 0.0
      %1313 = vmatpush1.msra.mxu0 0.0
      %1314 = vmatprep.subr.mxu0 0.0
      %1315 = vmatpush1.msra.mxu0 0.0
      %1316 = vmatprep.subr.mxu0 0.0
      %1317 = vmatpush1.msra.mxu0 0.0
      %1318 = vmatprep.subr.mxu0 0.0
      %1319 = vmatpush1.msra.mxu0 0.0
      %1320 = vmatprep.subr.mxu0 0.0
      %1321 = vmatpush1.msra.mxu0 0.0
      %1322 = vmatprep.subr.mxu0 0.0
      %1323 = vmatpush1.msra.mxu0 0.0
      %1324 = vmatprep.subr.mxu0 0.0
      %1325 = vmatpush1.msra.mxu0 0.0
      %1326 = vmatprep.subr.mxu0 0.0
      %1327 = vmatpush1.msra.mxu0 0.0
      %1328 = vmatprep.subr.mxu0 0.0
      %1329 = vmatpush1.msra.mxu0 0.0
      %1330 = vmatprep.subr.mxu0 0.0
      %1331 = vmatpush1.msra.mxu0 0.0
      %1332 = vmatprep.subr.mxu0 0.0
      %1333 = vmatpush1.msra.mxu0 0.0
      %1334 = vmatprep.subr.mxu0 0.0
      %1335 = vmatpush1.msra.mxu0 0.0
      %1336 = vmatprep.subr.mxu0 0.0
      %1337 = vmatpush1.msra.mxu0 0.0
      %1338 = vmatprep.subr.mxu0 0.0
      %1339 = vmatpush1.msra.mxu0 0.0
      %1340 = vmatprep.subr.mxu0 0.0
      %1341 = vmatpush1.msra.mxu0 0.0
      %1342 = vmatprep.subr.mxu0 0.0
      %1343 = vmatpush1.msra.mxu0 0.0
      %1344 = vmatprep.subr.mxu0 0.0
      %1345 = vmatpush1.msra.mxu0 0.0
      %1346 = vmatprep.subr.mxu0 0.0
      %1347 = vmatpush1.msra.mxu0 0.0
      %1348 = vmatprep.subr.mxu0 0.0
      %1349 = vmatpush1.msra.mxu0 0.0
      %1350 = vmatprep.subr.mxu0 0.0
      %1351 = vmatpush1.msra.mxu0 0.0
      %1352 = vmatprep.subr.mxu0 0.0
      %1353 = vmatpush1.msra.mxu0 0.0
      %1354 = vmatprep.subr.mxu0 0.0
      %1355 = vmatpush1.msra.mxu0 0.0
      %1356 = vmatprep.subr.mxu0 0.0
      %1357 = vmatpush1.msra.mxu0 0.0
      %1358 = vmatprep.subr.mxu0 0.0
      %1359 = vmatpush1.msra.mxu0 0.0
      %1360 = vmatprep.subr.mxu0 0.0
      %1361 = vmatpush1.msra.mxu0 0.0
      %1362 = vmatprep.subr.mxu0 0.0
      %1363 = vmatpush1.msra.mxu0 0.0
      %1364 = vmatprep.subr.mxu0 0.0
      %1365 = vmatpush1.msra.mxu0 0.0
      %1366 = vmatprep.subr.mxu0 0.0
      %1367 = vmatpush1.msra.mxu0 0.0
      %1368 = vmatprep.subr.mxu0 0.0
      %1369 = vmatpush1.msra.mxu0 0.0
      %1370 = vmatprep.subr.mxu0 0.0
      %1371 = vmatpush1.msra.mxu0 0.0
      %1372 = vmatprep.subr.mxu0 0.0
      %1373 = vmatpush1.msra.mxu0 0.0
      %1374 = vmatprep.mubr.f32.mxu0 0.0
      %1375 = vmatmul.mubr.f32.gmra.mrb[0].mxu0 %v1308
      %v1376 = vpop.f32.mrb[0].mxu0
      %v1377 = vadd.f32 0.0, %v1376
      %v1378 = vpop.f32.mrb[0].mxu0
      %v1379 = vadd.f32 0.0, %v1378
      %1380 = vdwg.mxu0
      %1381 = vmatprep.subr.mxu0 0.0
      %1382 = vmatpush1.msra.mxu0 %v1300
      %1383 = vmatprep.subr.mxu0 0.0
      %1384 = vmatpush1.msra.mxu0 0.0
      %1385 = vmatprep.subr.mxu0 0.0
      %1386 = vmatpush1.msra.mxu0 0.0
      %1387 = vmatprep.subr.mxu0 0.0
      %1388 = vmatpush1.msra.mxu0 0.0
      %1389 = vmatprep.subr.mxu0 0.0
      %1390 = vmatpush1.msra.mxu0 0.0
      %1391 = vmatprep.subr.mxu0 0.0
      %1392 = vmatpush1.msra.mxu0 0.0
      %1393 = vmatprep.subr.mxu0 0.0
      %1394 = vmatpush1.msra.mxu0 0.0
      %1395 = vmatprep.subr.mxu0 0.0
      %1396 = vmatpush1.msra.mxu0 0.0
      %1397 = vmatprep.subr.mxu0 0.0
      %1398 = vmatpush1.msra.mxu0 0.0
      %1399 = vmatprep.subr.mxu0 0.0
      %1400 = vmatpush1.msra.mxu0 0.0
      %1401 = vmatprep.subr.mxu0 0.0
      %1402 = vmatpush1.msra.mxu0 0.0
      %1403 = vmatprep.subr.mxu0 0.0
      %1404 = vmatpush1.msra.mxu0 0.0
      %1405 = vmatprep.subr.mxu0 0.0
      %1406 = vmatpush1.msra.mxu0 0.0
      %1407 = vmatprep.subr.mxu0 0.0
      %1408 = vmatpush1.msra.mxu0 0.0
      %1409 = vmatprep.subr.mxu0 0.0
      %1410 = vmatpush1.msra.mxu0 0.0
      %1411 = vmatprep.subr.mxu0 0.0
      %1412 = vmatpush1.msra.mxu0 0.0
      %1413 = vmatprep.subr.mxu0 0.0
      %1414 = vmatpush1.msra.mxu0 0.0
      %1415 = vmatprep.subr.mxu0 0.0
      %1416 = vmatpush1.msra.mxu0 0.0
      %1417 = vmatprep.subr.mxu0 0.0
      %1418 = vmatpush1.msra.mxu0 0.0
      %1419 = vmatprep.subr.mxu0 0.0
      %1420 = vmatpush1.msra.mxu0 0.0
      %1421 = vmatprep.subr.mxu0 0.0
      %1422 = vmatpush1.msra.mxu0 0.0
      %1423 = vmatprep.subr.mxu0 0.0
      %1424 = vmatpush1.msra.mxu0 0.0
      %1425 = vmatprep.subr.mxu0 0.0
      %1426 = vmatpush1.msra.mxu0 0.0
      %1427 = vmatprep.subr.mxu0 0.0
      %1428 = vmatpush1.msra.mxu0 0.0
      %1429 = vmatprep.subr.mxu0 0.0
      %1430 = vmatpush1.msra.mxu0 0.0
      %1431 = vmatprep.subr.mxu0 0.0
      %1432 = vmatpush1.msra.mxu0 0.0
      %1433 = vmatprep.subr.mxu0 0.0
      %1434 = vmatpush1.msra.mxu0 0.0
      %1435 = vmatprep.subr.mxu0 0.0
      %1436 = vmatpush1.msra.mxu0 0.0
      %1437 = vmatprep.subr.mxu0 0.0
      %1438 = vmatpush1.msra.mxu0 0.0
      %1439 = vmatprep.subr.mxu0 0.0
      %1440 = vmatpush1.msra.mxu0 0.0
      %1441 = vmatprep.subr.mxu0 0.0
      %1442 = vmatpush1.msra.mxu0 0.0
      %1443 = vmatprep.subr.mxu0 0.0
      %1444 = vmatpush1.msra.mxu0 0.0
      %1445 = vmatprep.mubr.f32.mxu0 0.0
      %1446 = vmatmul.mubr.f32.gmra.mrb[0].mxu0 %v1308
      %v1447 = vpop.f32.mrb[0].mxu0
      %v1448 = vadd.f32 0.0, %v1447
      %v1449 = vpop.f32.mrb[0].mxu0
      %1450 = vdwg.mxu0
      %v1451 = vadd.f32 %v1290, %v1377
      %v1452 = vadd.f32 %v1291, %v1379
      %v1453 = vadd.f32 %v1292, %v1448
      %s1454 = scalar_lea.vmem %s1, 32
      %v1455 = vld [vmem:[%s1454] sm:$0xff]
      %1456 = vrot.lane.b32.xlu0 %v822, 109
      %v1457 = vpop.permute.xlu0 %1456
      %1458 = vrot.lane.b32.xlu0 %v823, 109
      %v1459 = vpop.permute.xlu0 %1458
      %1460 = vrot.lane.b32.xlu0 %v824, 109
      %v1461 = vpop.permute.xlu0 %1460
      %vm1462 = vcmask 891904
      %v1463 = vsel %vm1462, %v1457, %v1459
      %v1464 = vsel %vm1462, %v1459, %v1461
      %v1469 = vsel %vm843, %v1455, 0
      %1471 = vmatprep.subr.mxu0 %v1464
      %1472 = vmatpush1.msra.mxu0 %v1463
      %1473 = vmatprep.subr.mxu0 0.0
      %1474 = vmatpush1.msra.mxu0 0.0
      %1475 = vmatprep.subr.mxu0 0.0
      %1476 = vmatpush1.msra.mxu0 0.0
      %1477 = vmatprep.subr.mxu0 0.0
      %1478 = vmatpush1.msra.mxu0 0.0
      %1479 = vmatprep.subr.mxu0 0.0
      %1480 = vmatpush1.msra.mxu0 0.0
      %1481 = vmatprep.subr.mxu0 0.0
      %1482 = vmatpush1.msra.mxu0 0.0
      %1483 = vmatprep.subr.mxu0 0.0
      %1484 = vmatpush1.msra.mxu0 0.0
      %1485 = vmatprep.subr.mxu0 0.0
      %1486 = vmatpush1.msra.mxu0 0.0
      %1487 = vmatprep.subr.mxu0 0.0
      %1488 = vmatpush1.msra.mxu0 0.0
      %1489 = vmatprep.subr.mxu0 0.0
      %1490 = vmatpush1.msra.mxu0 0.0
      %1491 = vmatprep.subr.mxu0 0.0
      %1492 = vmatpush1.msra.mxu0 0.0
      %1493 = vmatprep.subr.mxu0 0.0
      %1494 = vmatpush1.msra.mxu0 0.0
      %1495 = vmatprep.subr.mxu0 0.0
      %1496 = vmatpush1.msra.mxu0 0.0
      %1497 = vmatprep.subr.mxu0 0.0
      %1498 = vmatpush1.msra.mxu0 0.0
      %1499 = vmatprep.subr.mxu0 0.0
      %1500 = vmatpush1.msra.mxu0 0.0
      %1501 = vmatprep.subr.mxu0 0.0
      %1502 = vmatpush1.msra.mxu0 0.0
      %1503 = vmatprep.subr.mxu0 0.0
      %1504 = vmatpush1.msra.mxu0 0.0
      %1505 = vmatprep.subr.mxu0 0.0
      %1506 = vmatpush1.msra.mxu0 0.0
      %1507 = vmatprep.subr.mxu0 0.0
      %1508 = vmatpush1.msra.mxu0 0.0
      %1509 = vmatprep.subr.mxu0 0.0
      %1510 = vmatpush1.msra.mxu0 0.0
      %1511 = vmatprep.subr.mxu0 0.0
      %1512 = vmatpush1.msra.mxu0 0.0
      %1513 = vmatprep.subr.mxu0 0.0
      %1514 = vmatpush1.msra.mxu0 0.0
      %1515 = vmatprep.subr.mxu0 0.0
      %1516 = vmatpush1.msra.mxu0 0.0
      %1517 = vmatprep.subr.mxu0 0.0
      %1518 = vmatpush1.msra.mxu0 0.0
      %1519 = vmatprep.subr.mxu0 0.0
      %1520 = vmatpush1.msra.mxu0 0.0
      %1521 = vmatprep.subr.mxu0 0.0
      %1522 = vmatpush1.msra.mxu0 0.0
      %1523 = vmatprep.subr.mxu0 0.0
      %1524 = vmatpush1.msra.mxu0 0.0
      %1525 = vmatprep.subr.mxu0 0.0
      %1526 = vmatpush1.msra.mxu0 0.0
      %1527 = vmatprep.subr.mxu0 0.0
      %1528 = vmatpush1.msra.mxu0 0.0
      %1529 = vmatprep.subr.mxu0 0.0
      %1530 = vmatpush1.msra.mxu0 0.0
      %1531 = vmatprep.subr.mxu0 0.0
      %1532 = vmatpush1.msra.mxu0 0.0
      %1533 = vmatprep.subr.mxu0 0.0
      %1534 = vmatpush1.msra.mxu0 0.0
      %1535 = vmatprep.mubr.f32.mxu0 0.0
      %1536 = vmatmul.mubr.f32.gmra.mrb[0].mxu0 %v1469
      %v1537 = vpop.f32.mrb[0].mxu0
      %v1538 = vadd.f32 0.0, %v1537
      %v1539 = vpop.f32.mrb[0].mxu0
      %v1540 = vadd.f32 0.0, %v1539
      %1541 = vdwg.mxu0
      %1542 = vmatprep.subr.mxu0 0.0
      %1543 = vmatpush1.msra.mxu0 %v1461
      %1544 = vmatprep.subr.mxu0 0.0
      %1545 = vmatpush1.msra.mxu0 0.0
      %1546 = vmatprep.subr.mxu0 0.0
      %1547 = vmatpush1.msra.mxu0 0.0
      %1548 = vmatprep.subr.mxu0 0.0
      %1549 = vmatpush1.msra.mxu0 0.0
      %1550 = vmatprep.subr.mxu0 0.0
      %1551 = vmatpush1.msra.mxu0 0.0
      %1552 = vmatprep.subr.mxu0 0.0
      %1553 = vmatpush1.msra.mxu0 0.0
      %1554 = vmatprep.subr.mxu0 0.0
      %1555 = vmatpush1.msra.mxu0 0.0
      %1556 = vmatprep.subr.mxu0 0.0
      %1557 = vmatpush1.msra.mxu0 0.0
      %1558 = vmatprep.subr.mxu0 0.0
      %1559 = vmatpush1.msra.mxu0 0.0
      %1560 = vmatprep.subr.mxu0 0.0
      %1561 = vmatpush1.msra.mxu0 0.0
      %1562 = vmatprep.subr.mxu0 0.0
      %1563 = vmatpush1.msra.mxu0 0.0
      %1564 = vmatprep.subr.mxu0 0.0
      %1565 = vmatpush1.msra.mxu0 0.0
      %1566 = vmatprep.subr.mxu0 0.0
      %1567 = vmatpush1.msra.mxu0 0.0
      %1568 = vmatprep.subr.mxu0 0.0
      %1569 = vmatpush1.msra.mxu0 0.0
      %1570 = vmatprep.subr.mxu0 0.0
      %1571 = vmatpush1.msra.mxu0 0.0
      %1572 = vmatprep.subr.mxu0 0.0
      %1573 = vmatpush1.msra.mxu0 0.0
      %1574 = vmatprep.subr.mxu0 0.0
      %1575 = vmatpush1.msra.mxu0 0.0
      %1576 = vmatprep.subr.mxu0 0.0
      %1577 = vmatpush1.msra.mxu0 0.0
      %1578 = vmatprep.subr.mxu0 0.0
      %1579 = vmatpush1.msra.mxu0 0.0
      %1580 = vmatprep.subr.mxu0 0.0
      %1581 = vmatpush1.msra.mxu0 0.0
      %1582 = vmatprep.subr.mxu0 0.0
      %1583 = vmatpush1.msra.mxu0 0.0
      %1584 = vmatprep.subr.mxu0 0.0
      %1585 = vmatpush1.msra.mxu0 0.0
      %1586 = vmatprep.subr.mxu0 0.0
      %1587 = vmatpush1.msra.mxu0 0.0
      %1588 = vmatprep.subr.mxu0 0.0
      %1589 = vmatpush1.msra.mxu0 0.0
      %1590 = vmatprep.subr.mxu0 0.0
      %1591 = vmatpush1.msra.mxu0 0.0
      %1592 = vmatprep.subr.mxu0 0.0
      %1593 = vmatpush1.msra.mxu0 0.0
      %1594 = vmatprep.subr.mxu0 0.0
      %1595 = vmatpush1.msra.mxu0 0.0
      %1596 = vmatprep.subr.mxu0 0.0
      %1597 = vmatpush1.msra.mxu0 0.0
      %1598 = vmatprep.subr.mxu0 0.0
      %1599 = vmatpush1.msra.mxu0 0.0
      %1600 = vmatprep.subr.mxu0 0.0
      %1601 = vmatpush1.msra.mxu0 0.0
      %1602 = vmatprep.subr.mxu0 0.0
      %1603 = vmatpush1.msra.mxu0 0.0
      %1604 = vmatprep.subr.mxu0 0.0
      %1605 = vmatpush1.msra.mxu0 0.0
      %1606 = vmatprep.mubr.f32.mxu0 0.0
      %1607 = vmatmul.mubr.f32.gmra.mrb[0].mxu0 %v1469
      %v1608 = vpop.f32.mrb[0].mxu0
      %v1609 = vadd.f32 0.0, %v1608
      %v1610 = vpop.f32.mrb[0].mxu0
      %1611 = vdwg.mxu0
      %v1612 = vadd.f32 %v1451, %v1538
      %v1613 = vadd.f32 %v1452, %v1540
      %v1614 = vadd.f32 %v1453, %v1609
      %s1615 = scalar_lea.vmem %s1, 40
      %v1616 = vld [vmem:[%s1615] sm:$0xff]
      %1617 = vrot.lane.b32.xlu0 %v822, 108
      %v1618 = vpop.permute.xlu0 %1617
      %1619 = vrot.lane.b32.xlu0 %v823, 108
      %v1620 = vpop.permute.xlu0 %1619
      %1621 = vrot.lane.b32.xlu0 %v824, 108
      %v1622 = vpop.permute.xlu0 %1621
      %vm1623 = vcmask 883712
      %v1624 = vsel %vm1623, %v1618, %v1620
      %v1625 = vsel %vm1623, %v1620, %v1622
      %v1630 = vsel %vm843, %v1616, 0
      %1632 = vmatprep.subr.mxu0 %v1625
      %1633 = vmatpush1.msra.mxu0 %v1624
      %1634 = vmatprep.subr.mxu0 0.0
      %1635 = vmatpush1.msra.mxu0 0.0
      %1636 = vmatprep.subr.mxu0 0.0
      %1637 = vmatpush1.msra.mxu0 0.0
      %1638 = vmatprep.subr.mxu0 0.0
      %1639 = vmatpush1.msra.mxu0 0.0
      %1640 = vmatprep.subr.mxu0 0.0
      %1641 = vmatpush1.msra.mxu0 0.0
      %1642 = vmatprep.subr.mxu0 0.0
      %1643 = vmatpush1.msra.mxu0 0.0
      %1644 = vmatprep.subr.mxu0 0.0
      %1645 = vmatpush1.msra.mxu0 0.0
      %1646 = vmatprep.subr.mxu0 0.0
      %1647 = vmatpush1.msra.mxu0 0.0
      %1648 = vmatprep.subr.mxu0 0.0
      %1649 = vmatpush1.msra.mxu0 0.0
      %1650 = vmatprep.subr.mxu0 0.0
      %1651 = vmatpush1.msra.mxu0 0.0
      %1652 = vmatprep.subr.mxu0 0.0
      %1653 = vmatpush1.msra.mxu0 0.0
      %1654 = vmatprep.subr.mxu0 0.0
      %1655 = vmatpush1.msra.mxu0 0.0
      %1656 = vmatprep.subr.mxu0 0.0
      %1657 = vmatpush1.msra.mxu0 0.0
      %1658 = vmatprep.subr.mxu0 0.0
      %1659 = vmatpush1.msra.mxu0 0.0
      %1660 = vmatprep.subr.mxu0 0.0
      %1661 = vmatpush1.msra.mxu0 0.0
      %1662 = vmatprep.subr.mxu0 0.0
      %1663 = vmatpush1.msra.mxu0 0.0
      %1664 = vmatprep.subr.mxu0 0.0
      %1665 = vmatpush1.msra.mxu0 0.0
      %1666 = vmatprep.subr.mxu0 0.0
      %1667 = vmatpush1.msra.mxu0 0.0
      %1668 = vmatprep.subr.mxu0 0.0
      %1669 = vmatpush1.msra.mxu0 0.0
      %1670 = vmatprep.subr.mxu0 0.0
      %1671 = vmatpush1.msra.mxu0 0.0
      %1672 = vmatprep.subr.mxu0 0.0
      %1673 = vmatpush1.msra.mxu0 0.0
      %1674 = vmatprep.subr.mxu0 0.0
      %1675 = vmatpush1.msra.mxu0 0.0
      %1676 = vmatprep.subr.mxu0 0.0
      %1677 = vmatpush1.msra.mxu0 0.0
      %1678 = vmatprep.subr.mxu0 0.0
      %1679 = vmatpush1.msra.mxu0 0.0
      %1680 = vmatprep.subr.mxu0 0.0
      %1681 = vmatpush1.msra.mxu0 0.0
      %1682 = vmatprep.subr.mxu0 0.0
      %1683 = vmatpush1.msra.mxu0 0.0
      %1684 = vmatprep.subr.mxu0 0.0
      %1685 = vmatpush1.msra.mxu0 0.0
      %1686 = vmatprep.subr.mxu0 0.0
      %1687 = vmatpush1.msra.mxu0 0.0
      %1688 = vmatprep.subr.mxu0 0.0
      %1689 = vmatpush1.msra.mxu0 0.0
      %1690 = vmatprep.subr.mxu0 0.0
      %1691 = vmatpush1.msra.mxu0 0.0
      %1692 = vmatprep.subr.mxu0 0.0
      %1693 = vmatpush1.msra.mxu0 0.0
      %1694 = vmatprep.subr.mxu0 0.0
      %1695 = vmatpush1.msra.mxu0 0.0
      %1696 = vmatprep.mubr.f32.mxu0 0.0
      %1697 = vmatmul.mubr.f32.gmra.mrb[0].mxu0 %v1630
      %v1698 = vpop.f32.mrb[0].mxu0
      %v1699 = vadd.f32 0.0, %v1698
      %v1700 = vpop.f32.mrb[0].mxu0
      %v1701 = vadd.f32 0.0, %v1700
      %1702 = vdwg.mxu0
      %1703 = vmatprep.subr.mxu0 0.0
      %1704 = vmatpush1.msra.mxu0 %v1622
      %1705 = vmatprep.subr.mxu0 0.0
      %1706 = vmatpush1.msra.mxu0 0.0
      %1707 = vmatprep.subr.mxu0 0.0
      %1708 = vmatpush1.msra.mxu0 0.0
      %1709 = vmatprep.subr.mxu0 0.0
      %1710 = vmatpush1.msra.mxu0 0.0
      %1711 = vmatprep.subr.mxu0 0.0
      %1712 = vmatpush1.msra.mxu0 0.0
      %1713 = vmatprep.subr.mxu0 0.0
      %1714 = vmatpush1.msra.mxu0 0.0
      %1715 = vmatprep.subr.mxu0 0.0
      %1716 = vmatpush1.msra.mxu0 0.0
      %1717 = vmatprep.subr.mxu0 0.0
      %1718 = vmatpush1.msra.mxu0 0.0
      %1719 = vmatprep.subr.mxu0 0.0
      %1720 = vmatpush1.msra.mxu0 0.0
      %1721 = vmatprep.subr.mxu0 0.0
      %1722 = vmatpush1.msra.mxu0 0.0
      %1723 = vmatprep.subr.mxu0 0.0
      %1724 = vmatpush1.msra.mxu0 0.0
      %1725 = vmatprep.subr.mxu0 0.0
      %1726 = vmatpush1.msra.mxu0 0.0
      %1727 = vmatprep.subr.mxu0 0.0
      %1728 = vmatpush1.msra.mxu0 0.0
      %1729 = vmatprep.subr.mxu0 0.0
      %1730 = vmatpush1.msra.mxu0 0.0
      %1731 = vmatprep.subr.mxu0 0.0
      %1732 = vmatpush1.msra.mxu0 0.0
      %1733 = vmatprep.subr.mxu0 0.0
      %1734 = vmatpush1.msra.mxu0 0.0
      %1735 = vmatprep.subr.mxu0 0.0
      %1736 = vmatpush1.msra.mxu0 0.0
      %1737 = vmatprep.subr.mxu0 0.0
      %1738 = vmatpush1.msra.mxu0 0.0
      %1739 = vmatprep.subr.mxu0 0.0
      %1740 = vmatpush1.msra.mxu0 0.0
      %1741 = vmatprep.subr.mxu0 0.0
      %1742 = vmatpush1.msra.mxu0 0.0
      %1743 = vmatprep.subr.mxu0 0.0
      %1744 = vmatpush1.msra.mxu0 0.0
      %1745 = vmatprep.subr.mxu0 0.0
      %1746 = vmatpush1.msra.mxu0 0.0
      %1747 = vmatprep.subr.mxu0 0.0
      %1748 = vmatpush1.msra.mxu0 0.0
      %1749 = vmatprep.subr.mxu0 0.0
      %1750 = vmatpush1.msra.mxu0 0.0
      %1751 = vmatprep.subr.mxu0 0.0
      %1752 = vmatpush1.msra.mxu0 0.0
      %1753 = vmatprep.subr.mxu0 0.0
      %1754 = vmatpush1.msra.mxu0 0.0
      %1755 = vmatprep.subr.mxu0 0.0
      %1756 = vmatpush1.msra.mxu0 0.0
      %1757 = vmatprep.subr.mxu0 0.0
      %1758 = vmatpush1.msra.mxu0 0.0
      %1759 = vmatprep.subr.mxu0 0.0
      %1760 = vmatpush1.msra.mxu0 0.0
      %1761 = vmatprep.subr.mxu0 0.0
      %1762 = vmatpush1.msra.mxu0 0.0
      %1763 = vmatprep.subr.mxu0 0.0
      %1764 = vmatpush1.msra.mxu0 0.0
      %1765 = vmatprep.subr.mxu0 0.0
      %1766 = vmatpush1.msra.mxu0 0.0
      %1767 = vmatprep.mubr.f32.mxu0 0.0
      %1768 = vmatmul.mubr.f32.gmra.mrb[0].mxu0 %v1630
      %v1769 = vpop.f32.mrb[0].mxu0
      %v1770 = vadd.f32 0.0, %v1769
      %v1771 = vpop.f32.mrb[0].mxu0
      %1772 = vdwg.mxu0
      %v1773 = vadd.f32 %v1612, %v1699
      %v1774 = vadd.f32 %v1613, %v1701
      %v1775 = vadd.f32 %v1614, %v1770
      %s1776 = scalar_lea.vmem %s1, 48
      %v1777 = vld [vmem:[%s1776] sm:$0xff]
      %1778 = vrot.lane.b32.xlu0 %v822, 92
      %v1779 = vpop.permute.xlu0 %1778
      %1780 = vrot.lane.b32.xlu0 %v823, 92
      %v1781 = vpop.permute.xlu0 %1780
      %1782 = vrot.lane.b32.xlu0 %v824, 92
      %v1783 = vpop.permute.xlu0 %1782
      %vm1784 = vcmask 752640
      %v1785 = vsel %vm1784, %v1779, %v1781
      %v1786 = vsel %vm1784, %v1781, %v1783
      %v1791 = vsel %vm843, %v1777, 0
      %1793 = vmatprep.subr.mxu0 %v1786
      %1794 = vmatpush1.msra.mxu0 %v1785
      %1795 = vmatprep.subr.mxu0 0.0
      %1796 = vmatpush1.msra.mxu0 0.0
      %1797 = vmatprep.subr.mxu0 0.0
      %1798 = vmatpush1.msra.mxu0 0.0
      %1799 = vmatprep.subr.mxu0 0.0
      %1800 = vmatpush1.msra.mxu0 0.0
      %1801 = vmatprep.subr.mxu0 0.0
      %1802 = vmatpush1.msra.mxu0 0.0
      %1803 = vmatprep.subr.mxu0 0.0
      %1804 = vmatpush1.msra.mxu0 0.0
      %1805 = vmatprep.subr.mxu0 0.0
      %1806 = vmatpush1.msra.mxu0 0.0
      %1807 = vmatprep.subr.mxu0 0.0
      %1808 = vmatpush1.msra.mxu0 0.0
      %1809 = vmatprep.subr.mxu0 0.0
      %1810 = vmatpush1.msra.mxu0 0.0
      %1811 = vmatprep.subr.mxu0 0.0
      %1812 = vmatpush1.msra.mxu0 0.0
      %1813 = vmatprep.subr.mxu0 0.0
      %1814 = vmatpush1.msra.mxu0 0.0
      %1815 = vmatprep.subr.mxu0 0.0
      %1816 = vmatpush1.msra.mxu0 0.0
      %1817 = vmatprep.subr.mxu0 0.0
      %1818 = vmatpush1.msra.mxu0 0.0
      %1819 = vmatprep.subr.mxu0 0.0
      %1820 = vmatpush1.msra.mxu0 0.0
      %1821 = vmatprep.subr.mxu0 0.0
      %1822 = vmatpush1.msra.mxu0 0.0
      %1823 = vmatprep.subr.mxu0 0.0
      %1824 = vmatpush1.msra.mxu0 0.0
      %1825 = vmatprep.subr.mxu0 0.0
      %1826 = vmatpush1.msra.mxu0 0.0
      %1827 = vmatprep.subr.mxu0 0.0
      %1828 = vmatpush1.msra.mxu0 0.0
      %1829 = vmatprep.subr.mxu0 0.0
      %1830 = vmatpush1.msra.mxu0 0.0
      %1831 = vmatprep.subr.mxu0 0.0
      %1832 = vmatpush1.msra.mxu0 0.0
      %1833 = vmatprep.subr.mxu0 0.0
      %1834 = vmatpush1.msra.mxu0 0.0
      %1835 = vmatprep.subr.mxu0 0.0
      %1836 = vmatpush1.msra.mxu0 0.0
      %1837 = vmatprep.subr.mxu0 0.0
      %1838 = vmatpush1.msra.mxu0 0.0
      %1839 = vmatprep.subr.mxu0 0.0
      %1840 = vmatpush1.msra.mxu0 0.0
      %1841 = vmatprep.subr.mxu0 0.0
      %1842 = vmatpush1.msra.mxu0 0.0
      %1843 = vmatprep.subr.mxu0 0.0
      %1844 = vmatpush1.msra.mxu0 0.0
      %1845 = vmatprep.subr.mxu0 0.0
      %1846 = vmatpush1.msra.mxu0 0.0
      %1847 = vmatprep.subr.mxu0 0.0
      %1848 = vmatpush1.msra.mxu0 0.0
      %1849 = vmatprep.subr.mxu0 0.0
      %1850 = vmatpush1.msra.mxu0 0.0
      %1851 = vmatprep.subr.mxu0 0.0
      %1852 = vmatpush1.msra.mxu0 0.0
      %1853 = vmatprep.subr.mxu0 0.0
      %1854 = vmatpush1.msra.mxu0 0.0
      %1855 = vmatprep.subr.mxu0 0.0
      %1856 = vmatpush1.msra.mxu0 0.0
      %1857 = vmatprep.mubr.f32.mxu0 0.0
      %1858 = vmatmul.mubr.f32.gmra.mrb[0].mxu0 %v1791
      %v1859 = vpop.f32.mrb[0].mxu0
      %v1860 = vadd.f32 0.0, %v1859
      %v1861 = vpop.f32.mrb[0].mxu0
      %v1862 = vadd.f32 0.0, %v1861
      %1863 = vdwg.mxu0
      %1864 = vmatprep.subr.mxu0 0.0
      %1865 = vmatpush1.msra.mxu0 %v1783
      %1866 = vmatprep.subr.mxu0 0.0
      %1867 = vmatpush1.msra.mxu0 0.0
      %1868 = vmatprep.subr.mxu0 0.0
      %1869 = vmatpush1.msra.mxu0 0.0
      %1870 = vmatprep.subr.mxu0 0.0
      %1871 = vmatpush1.msra.mxu0 0.0
      %1872 = vmatprep.subr.mxu0 0.0
      %1873 = vmatpush1.msra.mxu0 0.0
      %1874 = vmatprep.subr.mxu0 0.0
      %1875 = vmatpush1.msra.mxu0 0.0
      %1876 = vmatprep.subr.mxu0 0.0
      %1877 = vmatpush1.msra.mxu0 0.0
      %1878 = vmatprep.subr.mxu0 0.0
      %1879 = vmatpush1.msra.mxu0 0.0
      %1880 = vmatprep.subr.mxu0 0.0
      %1881 = vmatpush1.msra.mxu0 0.0
      %1882 = vmatprep.subr.mxu0 0.0
      %1883 = vmatpush1.msra.mxu0 0.0
      %1884 = vmatprep.subr.mxu0 0.0
      %1885 = vmatpush1.msra.mxu0 0.0
      %1886 = vmatprep.subr.mxu0 0.0
      %1887 = vmatpush1.msra.mxu0 0.0
      %1888 = vmatprep.subr.mxu0 0.0
      %1889 = vmatpush1.msra.mxu0 0.0
      %1890 = vmatprep.subr.mxu0 0.0
      %1891 = vmatpush1.msra.mxu0 0.0
      %1892 = vmatprep.subr.mxu0 0.0
      %1893 = vmatpush1.msra.mxu0 0.0
      %1894 = vmatprep.subr.mxu0 0.0
      %1895 = vmatpush1.msra.mxu0 0.0
      %1896 = vmatprep.subr.mxu0 0.0
      %1897 = vmatpush1.msra.mxu0 0.0
      %1898 = vmatprep.subr.mxu0 0.0
      %1899 = vmatpush1.msra.mxu0 0.0
      %1900 = vmatprep.subr.mxu0 0.0
      %1901 = vmatpush1.msra.mxu0 0.0
      %1902 = vmatprep.subr.mxu0 0.0
      %1903 = vmatpush1.msra.mxu0 0.0
      %1904 = vmatprep.subr.mxu0 0.0
      %1905 = vmatpush1.msra.mxu0 0.0
      %1906 = vmatprep.subr.mxu0 0.0
      %1907 = vmatpush1.msra.mxu0 0.0
      %1908 = vmatprep.subr.mxu0 0.0
      %1909 = vmatpush1.msra.mxu0 0.0
      %1910 = vmatprep.subr.mxu0 0.0
      %1911 = vmatpush1.msra.mxu0 0.0
      %1912 = vmatprep.subr.mxu0 0.0
      %1913 = vmatpush1.msra.mxu0 0.0
      %1914 = vmatprep.subr.mxu0 0.0
      %1915 = vmatpush1.msra.mxu0 0.0
      %1916 = vmatprep.subr.mxu0 0.0
      %1917 = vmatpush1.msra.mxu0 0.0
      %1918 = vmatprep.subr.mxu0 0.0
      %1919 = vmatpush1.msra.mxu0 0.0
      %1920 = vmatprep.subr.mxu0 0.0
      %1921 = vmatpush1.msra.mxu0 0.0
      %1922 = vmatprep.subr.mxu0 0.0
      %1923 = vmatpush1.msra.mxu0 0.0
      %1924 = vmatprep.subr.mxu0 0.0
      %1925 = vmatpush1.msra.mxu0 0.0
      %1926 = vmatprep.subr.mxu0 0.0
      %1927 = vmatpush1.msra.mxu0 0.0
      %1928 = vmatprep.mubr.f32.mxu0 0.0
      %1929 = vmatmul.mubr.f32.gmra.mrb[0].mxu0 %v1791
      %v1930 = vpop.f32.mrb[0].mxu0
      %v1931 = vadd.f32 0.0, %v1930
      %v1932 = vpop.f32.mrb[0].mxu0
      %1933 = vdwg.mxu0
      %v1934 = vadd.f32 %v1773, %v1860
      %v1935 = vadd.f32 %v1774, %v1862
      %v1936 = vadd.f32 %v1775, %v1931
      %s1937 = scalar_lea.vmem %s1, 56
      %v1938 = vld [vmem:[%s1937] sm:$0xff]
      %1939 = vrot.lane.b32.xlu0 %v822, 91
      %v1940 = vpop.permute.xlu0 %1939
      %1941 = vrot.lane.b32.xlu0 %v823, 91
      %v1942 = vpop.permute.xlu0 %1941
      %1943 = vrot.lane.b32.xlu0 %v824, 91
      %v1944 = vpop.permute.xlu0 %1943
      %vm1945 = vcmask 744448
      %v1946 = vsel %vm1945, %v1940, %v1942
      %v1947 = vsel %vm1945, %v1942, %v1944
      %v1952 = vsel %vm843, %v1938, 0
      %1954 = vmatprep.subr.mxu0 %v1947
      %1955 = vmatpush1.msra.mxu0 %v1946
      %1956 = vmatprep.subr.mxu0 0.0
      %1957 = vmatpush1.msra.mxu0 0.0
      %1958 = vmatprep.subr.mxu0 0.0
      %1959 = vmatpush1.msra.mxu0 0.0
      %1960 = vmatprep.subr.mxu0 0.0
      %1961 = vmatpush1.msra.mxu0 0.0
      %1962 = vmatprep.subr.mxu0 0.0
      %1963 = vmatpush1.msra.mxu0 0.0
      %1964 = vmatprep.subr.mxu0 0.0
      %1965 = vmatpush1.msra.mxu0 0.0
      %1966 = vmatprep.subr.mxu0 0.0
      %1967 = vmatpush1.msra.mxu0 0.0
      %1968 = vmatprep.subr.mxu0 0.0
      %1969 = vmatpush1.msra.mxu0 0.0
      %1970 = vmatprep.subr.mxu0 0.0
      %1971 = vmatpush1.msra.mxu0 0.0
      %1972 = vmatprep.subr.mxu0 0.0
      %1973 = vmatpush1.msra.mxu0 0.0
      %1974 = vmatprep.subr.mxu0 0.0
      %1975 = vmatpush1.msra.mxu0 0.0
      %1976 = vmatprep.subr.mxu0 0.0
      %1977 = vmatpush1.msra.mxu0 0.0
      %1978 = vmatprep.subr.mxu0 0.0
      %1979 = vmatpush1.msra.mxu0 0.0
      %1980 = vmatprep.subr.mxu0 0.0
      %1981 = vmatpush1.msra.mxu0 0.0
      %1982 = vmatprep.subr.mxu0 0.0
      %1983 = vmatpush1.msra.mxu0 0.0
      %1984 = vmatprep.subr.mxu0 0.0
      %1985 = vmatpush1.msra.mxu0 0.0
      %1986 = vmatprep.subr.mxu0 0.0
      %1987 = vmatpush1.msra.mxu0 0.0
      %1988 = vmatprep.subr.mxu0 0.0
      %1989 = vmatpush1.msra.mxu0 0.0
      %1990 = vmatprep.subr.mxu0 0.0
      %1991 = vmatpush1.msra.mxu0 0.0
      %1992 = vmatprep.subr.mxu0 0.0
      %1993 = vmatpush1.msra.mxu0 0.0
      %1994 = vmatprep.subr.mxu0 0.0
      %1995 = vmatpush1.msra.mxu0 0.0
      %1996 = vmatprep.subr.mxu0 0.0
      %1997 = vmatpush1.msra.mxu0 0.0
      %1998 = vmatprep.subr.mxu0 0.0
      %1999 = vmatpush1.msra.mxu0 0.0
      %2000 = vmatprep.subr.mxu0 0.0
      %2001 = vmatpush1.msra.mxu0 0.0
      %2002 = vmatprep.subr.mxu0 0.0
      %2003 = vmatpush1.msra.mxu0 0.0
      %2004 = vmatprep.subr.mxu0 0.0
      %2005 = vmatpush1.msra.mxu0 0.0
      %2006 = vmatprep.subr.mxu0 0.0
      %2007 = vmatpush1.msra.mxu0 0.0
      %2008 = vmatprep.subr.mxu0 0.0
      %2009 = vmatpush1.msra.mxu0 0.0
      %2010 = vmatprep.subr.mxu0 0.0
      %2011 = vmatpush1.msra.mxu0 0.0
      %2012 = vmatprep.subr.mxu0 0.0
      %2013 = vmatpush1.msra.mxu0 0.0
      %2014 = vmatprep.subr.mxu0 0.0
      %2015 = vmatpush1.msra.mxu0 0.0
      %2016 = vmatprep.subr.mxu0 0.0
      %2017 = vmatpush1.msra.mxu0 0.0
      %2018 = vmatprep.mubr.f32.mxu0 0.0
      %2019 = vmatmul.mubr.f32.gmra.mrb[0].mxu0 %v1952
      %v2020 = vpop.f32.mrb[0].mxu0
      %v2021 = vadd.f32 0.0, %v2020
      %v2022 = vpop.f32.mrb[0].mxu0
      %v2023 = vadd.f32 0.0, %v2022
      %2024 = vdwg.mxu0
      %2025 = vmatprep.subr.mxu0 0.0
      %2026 = vmatpush1.msra.mxu0 %v1944
      %2027 = vmatprep.subr.mxu0 0.0
      %2028 = vmatpush1.msra.mxu0 0.0
      %2029 = vmatprep.subr.mxu0 0.0
      %2030 = vmatpush1.msra.mxu0 0.0
      %2031 = vmatprep.subr.mxu0 0.0
      %2032 = vmatpush1.msra.mxu0 0.0
      %2033 = vmatprep.subr.mxu0 0.0
      %2034 = vmatpush1.msra.mxu0 0.0
      %2035 = vmatprep.subr.mxu0 0.0
      %2036 = vmatpush1.msra.mxu0 0.0
      %2037 = vmatprep.subr.mxu0 0.0
      %2038 = vmatpush1.msra.mxu0 0.0
      %2039 = vmatprep.subr.mxu0 0.0
      %2040 = vmatpush1.msra.mxu0 0.0
      %2041 = vmatprep.subr.mxu0 0.0
      %2042 = vmatpush1.msra.mxu0 0.0
      %2043 = vmatprep.subr.mxu0 0.0
      %2044 = vmatpush1.msra.mxu0 0.0
      %2045 = vmatprep.subr.mxu0 0.0
      %2046 = vmatpush1.msra.mxu0 0.0
      %2047 = vmatprep.subr.mxu0 0.0
      %2048 = vmatpush1.msra.mxu0 0.0
      %2049 = vmatprep.subr.mxu0 0.0
      %2050 = vmatpush1.msra.mxu0 0.0
      %2051 = vmatprep.subr.mxu0 0.0
      %2052 = vmatpush1.msra.mxu0 0.0
      %2053 = vmatprep.subr.mxu0 0.0
      %2054 = vmatpush1.msra.mxu0 0.0
      %2055 = vmatprep.subr.mxu0 0.0
      %2056 = vmatpush1.msra.mxu0 0.0
      %2057 = vmatprep.subr.mxu0 0.0
      %2058 = vmatpush1.msra.mxu0 0.0
      %2059 = vmatprep.subr.mxu0 0.0
      %2060 = vmatpush1.msra.mxu0 0.0
      %2061 = vmatprep.subr.mxu0 0.0
      %2062 = vmatpush1.msra.mxu0 0.0
      %2063 = vmatprep.subr.mxu0 0.0
      %2064 = vmatpush1.msra.mxu0 0.0
      %2065 = vmatprep.subr.mxu0 0.0
      %2066 = vmatpush1.msra.mxu0 0.0
      %2067 = vmatprep.subr.mxu0 0.0
      %2068 = vmatpush1.msra.mxu0 0.0
      %2069 = vmatprep.subr.mxu0 0.0
      %2070 = vmatpush1.msra.mxu0 0.0
      %2071 = vmatprep.subr.mxu0 0.0
      %2072 = vmatpush1.msra.mxu0 0.0
      %2073 = vmatprep.subr.mxu0 0.0
      %2074 = vmatpush1.msra.mxu0 0.0
      %2075 = vmatprep.subr.mxu0 0.0
      %2076 = vmatpush1.msra.mxu0 0.0
      %2077 = vmatprep.subr.mxu0 0.0
      %2078 = vmatpush1.msra.mxu0 0.0
      %2079 = vmatprep.subr.mxu0 0.0
      %2080 = vmatpush1.msra.mxu0 0.0
      %2081 = vmatprep.subr.mxu0 0.0
      %2082 = vmatpush1.msra.mxu0 0.0
      %2083 = vmatprep.subr.mxu0 0.0
      %2084 = vmatpush1.msra.mxu0 0.0
      %2085 = vmatprep.subr.mxu0 0.0
      %2086 = vmatpush1.msra.mxu0 0.0
      %2087 = vmatprep.subr.mxu0 0.0
      %2088 = vmatpush1.msra.mxu0 0.0
      %2089 = vmatprep.mubr.f32.mxu0 0.0
      %2090 = vmatmul.mubr.f32.gmra.mrb[0].mxu0 %v1952
      %v2091 = vpop.f32.mrb[0].mxu0
      %v2092 = vadd.f32 0.0, %v2091
      %v2093 = vpop.f32.mrb[0].mxu0
      %2094 = vdwg.mxu0
      %v2095 = vadd.f32 %v1934, %v2021
      %v2096 = vadd.f32 %v1935, %v2023
      %v2097 = vadd.f32 %v1936, %v2092
      %s2098 = scalar_lea.vmem %s1, 64
      %v2099 = vld [vmem:[%s2098] sm:$0xff]
      %2100 = vrot.lane.b32.xlu0 %v822, 90
      %v2101 = vpop.permute.xlu0 %2100
      %2102 = vrot.lane.b32.xlu0 %v823, 90
      %v2103 = vpop.permute.xlu0 %2102
      %2104 = vrot.lane.b32.xlu0 %v824, 90
      %v2105 = vpop.permute.xlu0 %2104
      %vm2106 = vcmask 736256
      %v2107 = vsel %vm2106, %v2101, %v2103
      %v2108 = vsel %vm2106, %v2103, %v2105
      %v2113 = vsel %vm843, %v2099, 0
      %2115 = vmatprep.subr.mxu0 %v2108
      %2116 = vmatpush1.msra.mxu0 %v2107
      %2117 = vmatprep.subr.mxu0 0.0
      %2118 = vmatpush1.msra.mxu0 0.0
      %2119 = vmatprep.subr.mxu0 0.0
      %2120 = vmatpush1.msra.mxu0 0.0
      %2121 = vmatprep.subr.mxu0 0.0
      %2122 = vmatpush1.msra.mxu0 0.0
      %2123 = vmatprep.subr.mxu0 0.0
      %2124 = vmatpush1.msra.mxu0 0.0
      %2125 = vmatprep.subr.mxu0 0.0
      %2126 = vmatpush1.msra.mxu0 0.0
      %2127 = vmatprep.subr.mxu0 0.0
      %2128 = vmatpush1.msra.mxu0 0.0
      %2129 = vmatprep.subr.mxu0 0.0
      %2130 = vmatpush1.msra.mxu0 0.0
      %2131 = vmatprep.subr.mxu0 0.0
      %2132 = vmatpush1.msra.mxu0 0.0
      %2133 = vmatprep.subr.mxu0 0.0
      %2134 = vmatpush1.msra.mxu0 0.0
      %2135 = vmatprep.subr.mxu0 0.0
      %2136 = vmatpush1.msra.mxu0 0.0
      %2137 = vmatprep.subr.mxu0 0.0
      %2138 = vmatpush1.msra.mxu0 0.0
      %2139 = vmatprep.subr.mxu0 0.0
      %2140 = vmatpush1.msra.mxu0 0.0
      %2141 = vmatprep.subr.mxu0 0.0
      %2142 = vmatpush1.msra.mxu0 0.0
      %2143 = vmatprep.subr.mxu0 0.0
      %2144 = vmatpush1.msra.mxu0 0.0
      %2145 = vmatprep.subr.mxu0 0.0
      %2146 = vmatpush1.msra.mxu0 0.0
      %2147 = vmatprep.subr.mxu0 0.0
      %2148 = vmatpush1.msra.mxu0 0.0
      %2149 = vmatprep.subr.mxu0 0.0
      %2150 = vmatpush1.msra.mxu0 0.0
      %2151 = vmatprep.subr.mxu0 0.0
      %2152 = vmatpush1.msra.mxu0 0.0
      %2153 = vmatprep.subr.mxu0 0.0
      %2154 = vmatpush1.msra.mxu0 0.0
      %2155 = vmatprep.subr.mxu0 0.0
      %2156 = vmatpush1.msra.mxu0 0.0
      %2157 = vmatprep.subr.mxu0 0.0
      %2158 = vmatpush1.msra.mxu0 0.0
      %2159 = vmatprep.subr.mxu0 0.0
      %2160 = vmatpush1.msra.mxu0 0.0
      %2161 = vmatprep.subr.mxu0 0.0
      %2162 = vmatpush1.msra.mxu0 0.0
      %2163 = vmatprep.subr.mxu0 0.0
      %2164 = vmatpush1.msra.mxu0 0.0
      %2165 = vmatprep.subr.mxu0 0.0
      %2166 = vmatpush1.msra.mxu0 0.0
      %2167 = vmatprep.subr.mxu0 0.0
      %2168 = vmatpush1.msra.mxu0 0.0
      %2169 = vmatprep.subr.mxu0 0.0
      %2170 = vmatpush1.msra.mxu0 0.0
      %2171 = vmatprep.subr.mxu0 0.0
      %2172 = vmatpush1.msra.mxu0 0.0
      %2173 = vmatprep.subr.mxu0 0.0
      %2174 = vmatpush1.msra.mxu0 0.0
      %2175 = vmatprep.subr.mxu0 0.0
      %2176 = vmatpush1.msra.mxu0 0.0
      %2177 = vmatprep.subr.mxu0 0.0
      %2178 = vmatpush1.msra.mxu0 0.0
      %2179 = vmatprep.mubr.f32.mxu0 0.0
      %2180 = vmatmul.mubr.f32.gmra.mrb[0].mxu0 %v2113
      %v2181 = vpop.f32.mrb[0].mxu0
      %v2182 = vadd.f32 0.0, %v2181
      %v2183 = vpop.f32.mrb[0].mxu0
      %v2184 = vadd.f32 0.0, %v2183
      %2185 = vdwg.mxu0
      %2186 = vmatprep.subr.mxu0 0.0
      %2187 = vmatpush1.msra.mxu0 %v2105
      %2188 = vmatprep.subr.mxu0 0.0
      %2189 = vmatpush1.msra.mxu0 0.0
      %2190 = vmatprep.subr.mxu0 0.0
      %2191 = vmatpush1.msra.mxu0 0.0
      %2192 = vmatprep.subr.mxu0 0.0
      %2193 = vmatpush1.msra.mxu0 0.0
      %2194 = vmatprep.subr.mxu0 0.0
      %2195 = vmatpush1.msra.mxu0 0.0
      %2196 = vmatprep.subr.mxu0 0.0
      %2197 = vmatpush1.msra.mxu0 0.0
      %2198 = vmatprep.subr.mxu0 0.0
      %2199 = vmatpush1.msra.mxu0 0.0
      %2200 = vmatprep.subr.mxu0 0.0
      %2201 = vmatpush1.msra.mxu0 0.0
      %2202 = vmatprep.subr.mxu0 0.0
      %2203 = vmatpush1.msra.mxu0 0.0
      %2204 = vmatprep.subr.mxu0 0.0
      %2205 = vmatpush1.msra.mxu0 0.0
      %2206 = vmatprep.subr.mxu0 0.0
      %2207 = vmatpush1.msra.mxu0 0.0
      %2208 = vmatprep.subr.mxu0 0.0
      %2209 = vmatpush1.msra.mxu0 0.0
      %2210 = vmatprep.subr.mxu0 0.0
      %2211 = vmatpush1.msra.mxu0 0.0
      %2212 = vmatprep.subr.mxu0 0.0
      %2213 = vmatpush1.msra.mxu0 0.0
      %2214 = vmatprep.subr.mxu0 0.0
      %2215 = vmatpush1.msra.mxu0 0.0
      %2216 = vmatprep.subr.mxu0 0.0
      %2217 = vmatpush1.msra.mxu0 0.0
      %2218 = vmatprep.subr.mxu0 0.0
      %2219 = vmatpush1.msra.mxu0 0.0
      %2220 = vmatprep.subr.mxu0 0.0
      %2221 = vmatpush1.msra.mxu0 0.0
      %2222 = vmatprep.subr.mxu0 0.0
      %2223 = vmatpush1.msra.mxu0 0.0
      %2224 = vmatprep.subr.mxu0 0.0
      %2225 = vmatpush1.msra.mxu0 0.0
      %2226 = vmatprep.subr.mxu0 0.0
      %2227 = vmatpush1.msra.mxu0 0.0
      %2228 = vmatprep.subr.mxu0 0.0
      %2229 = vmatpush1.msra.mxu0 0.0
      %2230 = vmatprep.subr.mxu0 0.0
      %2231 = vmatpush1.msra.mxu0 0.0
      %2232 = vmatprep.subr.mxu0 0.0
      %2233 = vmatpush1.msra.mxu0 0.0
      %2234 = vmatprep.subr.mxu0 0.0
      %2235 = vmatpush1.msra.mxu0 0.0
      %2236 = vmatprep.subr.mxu0 0.0
      %2237 = vmatpush1.msra.mxu0 0.0
      %2238 = vmatprep.subr.mxu0 0.0
      %2239 = vmatpush1.msra.mxu0 0.0
      %2240 = vmatprep.subr.mxu0 0.0
      %2241 = vmatpush1.msra.mxu0 0.0
      %2242 = vmatprep.subr.mxu0 0.0
      %2243 = vmatpush1.msra.mxu0 0.0
      %2244 = vmatprep.subr.mxu0 0.0
      %2245 = vmatpush1.msra.mxu0 0.0
      %2246 = vmatprep.subr.mxu0 0.0
      %2247 = vmatpush1.msra.mxu0 0.0
      %2248 = vmatprep.subr.mxu0 0.0
      %2249 = vmatpush1.msra.mxu0 0.0
      %2250 = vmatprep.mubr.f32.mxu0 0.0
      %2251 = vmatmul.mubr.f32.gmra.mrb[0].mxu0 %v2113
      %v2252 = vpop.f32.mrb[0].mxu0
      %v2253 = vadd.f32 0.0, %v2252
      %v2254 = vpop.f32.mrb[0].mxu0
      %2255 = vdwg.mxu0
      %v2256 = vadd.f32 %v2095, %v2182
      %v2257 = vadd.f32 %v2096, %v2184
      %v2258 = vadd.f32 %v2097, %v2253
      %v2259 = vld [vmem:[%s2] sm:$0xff]
      %2261 = vset.pattern.permute.xlu0 0
      %2262 = vperm.xlu0 %2261, %v2259
      %v2263 = vpop.permute.xlu0 %2262
      %v2265 = vadd.f32 %v2256, %v2263
      %v2266 = vadd.f32 %v2257, %v2263
      %v2267 = vadd.f32 %v2258, %v2263
      %v2268 = vmax.f32 %v2265, 0.0
      %v2269 = vmax.f32 %v2266, 0.0
      %v2270 = vmax.f32 %v2267, 0.0
      %v2271 = vld [vmem:[%s12] sm:$0xff]
      %v2272 = vld [vmem:[%s12 + $0x8] sm:$0xff]
      %v2273 = vld [vmem:[%s12 + $0x10] sm:$0xff]
      %v2274 = vld [vmem:[%s12 + $0x18] sm:$0xff]
      %v2275 = vld [vmem:[%s12 + $0x20] sm:$0xff]
      %v2276 = vld [vmem:[%s12 + $0x28] sm:$0xff]
      %v2277 = vld [vmem:[%s12 + $0x30] sm:$0xff]
      %v2278 = vld [vmem:[%s12 + $0x38] sm:$0xff]
      %v2279 = vld [vmem:[%s12 + $0x40] sm:$0xff]
      %v2280 = vld [vmem:[%s12 + $0x48] sm:$0xff]
      %v2281 = vld [vmem:[%s12 + $0x50] sm:$0xff]
      %v2282 = vld [vmem:[%s12 + $0x58] sm:$0xff]
      %v2283 = vld [vmem:[%s12 + $0x60] sm:$0xff]
      %v2284 = vld [vmem:[%s12 + $0x68] sm:$0xff]
      %v2285 = vld [vmem:[%s12 + $0x70] sm:$0xff]
      %v2286 = vld [vmem:[%s12 + $0x78] sm:$0xff]
      %v2287 = vld [vmem:[%s12 + $0x80] sm:$0xff]
      %v2288 = vld [vmem:[%s12 + $0x88] sm:$0xff]
      %v2289 = vld [vmem:[%s12 + $0x90] sm:$0xff]
      %v2290 = vld [vmem:[%s12 + $0x98] sm:$0xff]
      %v2291 = vld [vmem:[%s12 + $0xa0] sm:$0xff]
      %v2292 = vld [vmem:[%s12 + $0xa8] sm:$0xff]
      %v2293 = vld [vmem:[%s12 + $0xb0] sm:$0xff]
      %v2294 = vld [vmem:[%s12 + $0xb8] sm:$0xff]
      %v2295 = vld [vmem:[%s12 + $0xc0] sm:$0xff]
      %v2296 = vld [vmem:[%s12 + $0xc8] sm:$0xff]
      %v2297 = vld [vmem:[%s12 + $0xd0] sm:$0xff]
      %v2298 = vld [vmem:[%s12 + $0xd8] sm:$0xff]
      %v2299 = vld [vmem:[%s12 + $0xe0] sm:$0xff]
      %v2300 = vld [vmem:[%s12 + $0xe8] sm:$0xff]
      %v2301 = vld [vmem:[%s12 + $0xf0] sm:$0xff]
      %v2302 = vld [vmem:[%s12 + $0xf8] sm:$0xff]
      %v2303 = vld [vmem:[%s12 + $0x100] sm:$0xff]
      %v2304 = vld [vmem:[%s12 + $0x108] sm:$0xff]
      %v2305 = vld [vmem:[%s12 + $0x110] sm:$0xff]
      %v2306 = vld [vmem:[%s12 + $0x118] sm:$0xff]
      %v2307 = vld [vmem:[%s12 + $0x120] sm:$0xff]
      %v2308 = vld [vmem:[%s12 + $0x128] sm:$0xff]
      %v2309 = vld [vmem:[%s12 + $0x130] sm:$0xff]
      %v2310 = vld [vmem:[%s12 + $0x138] sm:$0xff]
      %v2311 = vld [vmem:[%s12 + $0x140] sm:$0xf]
      %vm2312 = vcmask 556032
      %v2314 = vsel %vm2312, %v2270, 0
      %vm2316 = vcmask 1043456
      %v2318 = vsel %vm2316, %v2311, 0
      %2320 = vmatprep.subr.mxu0 0.0
      %2321 = vmatpush1.msra.mxu0 %v2271
      %2322 = vmatprep.subr.mxu0 0.0
      %2323 = vmatpush1.msra.mxu0 %v2272
      %2324 = vmatprep.subr.mxu0 0.0
      %2325 = vmatpush1.msra.mxu0 %v2273
      %2326 = vmatprep.subr.mxu0 0.0
      %2327 = vmatpush1.msra.mxu0 %v2274
      %2328 = vmatprep.subr.mxu0 0.0
      %2329 = vmatpush1.msra.mxu0 %v2275
      %2330 = vmatprep.subr.mxu0 0.0
      %2331 = vmatpush1.msra.mxu0 %v2276
      %2332 = vmatprep.subr.mxu0 0.0
      %2333 = vmatpush1.msra.mxu0 %v2277
      %2334 = vmatprep.subr.mxu0 0.0
      %2335 = vmatpush1.msra.mxu0 %v2278
      %2336 = vmatprep.subr.mxu0 0.0
      %2337 = vmatpush1.msra.mxu0 %v2279
      %2338 = vmatprep.subr.mxu0 0.0
      %2339 = vmatpush1.msra.mxu0 %v2280
      %2340 = vmatprep.subr.mxu0 0.0
      %2341 = vmatpush1.msra.mxu0 %v2281
      %2342 = vmatprep.subr.mxu0 0.0
      %2343 = vmatpush1.msra.mxu0 %v2282
      %2344 = vmatprep.subr.mxu0 0.0
      %2345 = vmatpush1.msra.mxu0 %v2283
      %2346 = vmatprep.subr.mxu0 0.0
      %2347 = vmatpush1.msra.mxu0 %v2284
      %2348 = vmatprep.subr.mxu0 0.0
      %2349 = vmatpush1.msra.mxu0 %v2285
      %2350 = vmatprep.subr.mxu0 0.0
      %2351 = vmatpush1.msra.mxu0 %v2286
      %2352 = vmatprep.subr.mxu0 0.0
      %2353 = vmatpush1.msra.mxu0 %v2287
      %2354 = vmatprep.subr.mxu0 0.0
      %2355 = vmatpush1.msra.mxu0 %v2288
      %2356 = vmatprep.subr.mxu0 0.0
      %2357 = vmatpush1.msra.mxu0 %v2289
      %2358 = vmatprep.subr.mxu0 0.0
      %2359 = vmatpush1.msra.mxu0 %v2290
      %2360 = vmatprep.subr.mxu0 0.0
      %2361 = vmatpush1.msra.mxu0 %v2291
      %2362 = vmatprep.subr.mxu0 0.0
      %2363 = vmatpush1.msra.mxu0 %v2292
      %2364 = vmatprep.subr.mxu0 0.0
      %2365 = vmatpush1.msra.mxu0 %v2293
      %2366 = vmatprep.subr.mxu0 0.0
      %2367 = vmatpush1.msra.mxu0 %v2294
      %2368 = vmatprep.subr.mxu0 0.0
      %2369 = vmatpush1.msra.mxu0 %v2295
      %2370 = vmatprep.subr.mxu0 0.0
      %2371 = vmatpush1.msra.mxu0 %v2296
      %2372 = vmatprep.subr.mxu0 0.0
      %2373 = vmatpush1.msra.mxu0 %v2297
      %2374 = vmatprep.subr.mxu0 0.0
      %2375 = vmatpush1.msra.mxu0 %v2298
      %2376 = vmatprep.subr.mxu0 0.0
      %2377 = vmatpush1.msra.mxu0 %v2299
      %2378 = vmatprep.subr.mxu0 0.0
      %2379 = vmatpush1.msra.mxu0 %v2300
      %2380 = vmatprep.subr.mxu0 0.0
      %2381 = vmatpush1.msra.mxu0 %v2301
      %2382 = vmatprep.subr.mxu0 0.0
      %2383 = vmatpush1.msra.mxu0 %v2302
      %2384 = vmatprep.mubr.f32.mxu0 %v2269
      %2385 = vmatmul.mubr.f32.gmra.mrb[0].mxu0 %v2268
      %v2386 = vpop.f32.mrb[0].mxu0
      %v2387 = vadd.f32 0.0, %v2386
      %v2388 = vpop.f32.mrb[0].mxu0
      %2389 = vdwg.mxu0
      %2390 = vmatprep.subr.mxu0 0.0
      %2391 = vmatpush1.msra.mxu0 %v2303
      %2392 = vmatprep.subr.mxu0 0.0
      %2393 = vmatpush1.msra.mxu0 %v2304
      %2394 = vmatprep.subr.mxu0 0.0
      %2395 = vmatpush1.msra.mxu0 %v2305
      %2396 = vmatprep.subr.mxu0 0.0
      %2397 = vmatpush1.msra.mxu0 %v2306
      %2398 = vmatprep.subr.mxu0 0.0
      %2399 = vmatpush1.msra.mxu0 %v2307
      %2400 = vmatprep.subr.mxu0 0.0
      %2401 = vmatpush1.msra.mxu0 %v2308
      %2402 = vmatprep.subr.mxu0 0.0
      %2403 = vmatpush1.msra.mxu0 %v2309
      %2404 = vmatprep.subr.mxu0 0.0
      %2405 = vmatpush1.msra.mxu0 %v2310
      %2406 = vmatprep.subr.mxu0 0.0
      %2407 = vmatpush1.msra.mxu0 %v2318
      %2408 = vmatprep.subr.mxu0 0.0
      %2409 = vmatpush1.msra.mxu0 0.0
      %2410 = vmatprep.subr.mxu0 0.0
      %2411 = vmatpush1.msra.mxu0 0.0
      %2412 = vmatprep.subr.mxu0 0.0
      %2413 = vmatpush1.msra.mxu0 0.0
      %2414 = vmatprep.subr.mxu0 0.0
      %2415 = vmatpush1.msra.mxu0 0.0
      %2416 = vmatprep.subr.mxu0 0.0
      %2417 = vmatpush1.msra.mxu0 0.0
      %2418 = vmatprep.subr.mxu0 0.0
      %2419 = vmatpush1.msra.mxu0 0.0
      %2420 = vmatprep.subr.mxu0 0.0
      %2421 = vmatpush1.msra.mxu0 0.0
      %2422 = vmatprep.subr.mxu0 0.0
      %2423 = vmatpush1.msra.mxu0 0.0
      %2424 = vmatprep.subr.mxu0 0.0
      %2425 = vmatpush1.msra.mxu0 0.0
      %2426 = vmatprep.subr.mxu0 0.0
      %2427 = vmatpush1.msra.mxu0 0.0
      %2428 = vmatprep.subr.mxu0 0.0
      %2429 = vmatpush1.msra.mxu0 0.0
      %2430 = vmatprep.subr.mxu0 0.0
      %2431 = vmatpush1.msra.mxu0 0.0
      %2432 = vmatprep.subr.mxu0 0.0
      %2433 = vmatpush1.msra.mxu0 0.0
      %2434 = vmatprep.subr.mxu0 0.0
      %2435 = vmatpush1.msra.mxu0 0.0
      %2436 = vmatprep.subr.mxu0 0.0
      %2437 = vmatpush1.msra.mxu0 0.0
      %2438 = vmatprep.subr.mxu0 0.0
      %2439 = vmatpush1.msra.mxu0 0.0
      %2440 = vmatprep.subr.mxu0 0.0
      %2441 = vmatpush1.msra.mxu0 0.0
      %2442 = vmatprep.subr.mxu0 0.0
      %2443 = vmatpush1.msra.mxu0 0.0
      %2444 = vmatprep.subr.mxu0 0.0
      %2445 = vmatpush1.msra.mxu0 0.0
      %2446 = vmatprep.subr.mxu0 0.0
      %2447 = vmatpush1.msra.mxu0 0.0
      %2448 = vmatprep.subr.mxu0 0.0
      %2449 = vmatpush1.msra.mxu0 0.0
      %2450 = vmatprep.subr.mxu0 0.0
      %2451 = vmatpush1.msra.mxu0 0.0
      %2452 = vmatprep.subr.mxu0 0.0
      %2453 = vmatpush1.msra.mxu0 0.0
      %2454 = vmatprep.mubr.f32.mxu0 0.0
      %2455 = vmatmul.mubr.f32.gmra.mrb[0].mxu0 %v2314
      %v2456 = vpop.f32.mrb[0].mxu0
      %v2457 = vadd.f32 %v2387, %v2456
      %v2458 = vpop.f32.mrb[0].mxu0
      %2459 = vdwg.mxu0
      %s2460 = scalar_lea.vmem %s12, 328
      %v2461 = vld [vmem:[%s2460] sm:$0xff]
      %v2462 = vld [vmem:[%s2460 + $0x8] sm:$0xff]
      %v2463 = vld [vmem:[%s2460 + $0x10] sm:$0xff]
      %v2464 = vld [vmem:[%s2460 + $0x18] sm:$0xff]
      %v2465 = vld [vmem:[%s2460 + $0x20] sm:$0xff]
      %v2466 = vld [vmem:[%s2460 + $0x28] sm:$0xff]
      %v2467 = vld [vmem:[%s2460 + $0x30] sm:$0xff]
      %v2468 = vld [vmem:[%s2460 + $0x38] sm:$0xff]
      %v2469 = vld [vmem:[%s2460 + $0x40] sm:$0xff]
      %v2470 = vld [vmem:[%s2460 + $0x48] sm:$0xff]
      %v2471 = vld [vmem:[%s2460 + $0x50] sm:$0xff]
      %v2472 = vld [vmem:[%s2460 + $0x58] sm:$0xff]
      %v2473 = vld [vmem:[%s2460 + $0x60] sm:$0xff]
      %v2474 = vld [vmem:[%s2460 + $0x68] sm:$0xff]
      %v2475 = vld [vmem:[%s2460 + $0x70] sm:$0xff]
      %v2476 = vld [vmem:[%s2460 + $0x78] sm:$0xff]
      %v2477 = vld [vmem:[%s2460 + $0x80] sm:$0xff]
      %v2478 = vld [vmem:[%s2460 + $0x88] sm:$0xff]
      %v2479 = vld [vmem:[%s2460 + $0x90] sm:$0xff]
      %v2480 = vld [vmem:[%s2460 + $0x98] sm:$0xff]
      %v2481 = vld [vmem:[%s2460 + $0xa0] sm:$0xff]
      %v2482 = vld [vmem:[%s2460 + $0xa8] sm:$0xff]
      %v2483 = vld [vmem:[%s2460 + $0xb0] sm:$0xff]
      %v2484 = vld [vmem:[%s2460 + $0xb8] sm:$0xff]
      %v2485 = vld [vmem:[%s2460 + $0xc0] sm:$0xff]
      %v2486 = vld [vmem:[%s2460 + $0xc8] sm:$0xff]
      %v2487 = vld [vmem:[%s2460 + $0xd0] sm:$0xff]
      %v2488 = vld [vmem:[%s2460 + $0xd8] sm:$0xff]
      %v2489 = vld [vmem:[%s2460 + $0xe0] sm:$0xff]
      %v2490 = vld [vmem:[%s2460 + $0xe8] sm:$0xff]
      %v2491 = vld [vmem:[%s2460 + $0xf0] sm:$0xff]
      %v2492 = vld [vmem:[%s2460 + $0xf8] sm:$0xff]
      %v2493 = vld [vmem:[%s2460 + $0x100] sm:$0xff]
      %v2494 = vld [vmem:[%s2460 + $0x108] sm:$0xff]
      %v2495 = vld [vmem:[%s2460 + $0x110] sm:$0xff]
      %v2496 = vld [vmem:[%s2460 + $0x118] sm:$0xff]
      %v2497 = vld [vmem:[%s2460 + $0x120] sm:$0xff]
      %v2498 = vld [vmem:[%s2460 + $0x128] sm:$0xff]
      %v2499 = vld [vmem:[%s2460 + $0x130] sm:$0xff]
      %v2500 = vld [vmem:[%s2460 + $0x138] sm:$0xff]
      %v2501 = vld [vmem:[%s2460 + $0x140] sm:$0xf]
      %v2503 = vsel %vm2316, %v2501, 0
      %2505 = vmatprep.subr.mxu0 0.0
      %2506 = vmatpush1.msra.mxu0 %v2461
      %2507 = vmatprep.subr.mxu0 0.0
      %2508 = vmatpush1.msra.mxu0 %v2462
      %2509 = vmatprep.subr.mxu0 0.0
      %2510 = vmatpush1.msra.mxu0 %v2463
      %2511 = vmatprep.subr.mxu0 0.0
      %2512 = vmatpush1.msra.mxu0 %v2464
      %2513 = vmatprep.subr.mxu0 0.0
      %2514 = vmatpush1.msra.mxu0 %v2465
      %2515 = vmatprep.subr.mxu0 0.0
      %2516 = vmatpush1.msra.mxu0 %v2466
      %2517 = vmatprep.subr.mxu0 0.0
      %2518 = vmatpush1.msra.mxu0 %v2467
      %2519 = vmatprep.subr.mxu0 0.0
      %2520 = vmatpush1.msra.mxu0 %v2468
      %2521 = vmatprep.subr.mxu0 0.0
      %2522 = vmatpush1.msra.mxu0 %v2469
      %2523 = vmatprep.subr.mxu0 0.0
      %2524 = vmatpush1.msra.mxu0 %v2470
      %2525 = vmatprep.subr.mxu0 0.0
      %2526 = vmatpush1.msra.mxu0 %v2471
      %2527 = vmatprep.subr.mxu0 0.0
      %2528 = vmatpush1.msra.mxu0 %v2472
      %2529 = vmatprep.subr.mxu0 0.0
      %2530 = vmatpush1.msra.mxu0 %v2473
      %2531 = vmatprep.subr.mxu0 0.0
      %2532 = vmatpush1.msra.mxu0 %v2474
      %2533 = vmatprep.subr.mxu0 0.0
      %2534 = vmatpush1.msra.mxu0 %v2475
      %2535 = vmatprep.subr.mxu0 0.0
      %2536 = vmatpush1.msra.mxu0 %v2476
      %2537 = vmatprep.subr.mxu0 0.0
      %2538 = vmatpush1.msra.mxu0 %v2477
      %2539 = vmatprep.subr.mxu0 0.0
      %2540 = vmatpush1.msra.mxu0 %v2478
      %2541 = vmatprep.subr.mxu0 0.0
      %2542 = vmatpush1.msra.mxu0 %v2479
      %2543 = vmatprep.subr.mxu0 0.0
      %2544 = vmatpush1.msra.mxu0 %v2480
      %2545 = vmatprep.subr.mxu0 0.0
      %2546 = vmatpush1.msra.mxu0 %v2481
      %2547 = vmatprep.subr.mxu0 0.0
      %2548 = vmatpush1.msra.mxu0 %v2482
      %2549 = vmatprep.subr.mxu0 0.0
      %2550 = vmatpush1.msra.mxu0 %v2483
      %2551 = vmatprep.subr.mxu0 0.0
      %2552 = vmatpush1.msra.mxu0 %v2484
      %2553 = vmatprep.subr.mxu0 0.0
      %2554 = vmatpush1.msra.mxu0 %v2485
      %2555 = vmatprep.subr.mxu0 0.0
      %2556 = vmatpush1.msra.mxu0 %v2486
      %2557 = vmatprep.subr.mxu0 0.0
      %2558 = vmatpush1.msra.mxu0 %v2487
      %2559 = vmatprep.subr.mxu0 0.0
      %2560 = vmatpush1.msra.mxu0 %v2488
      %2561 = vmatprep.subr.mxu0 0.0
      %2562 = vmatpush1.msra.mxu0 %v2489
      %2563 = vmatprep.subr.mxu0 0.0
      %2564 = vmatpush1.msra.mxu0 %v2490
      %2565 = vmatprep.subr.mxu0 0.0
      %2566 = vmatpush1.msra.mxu0 %v2491
      %2567 = vmatprep.subr.mxu0 0.0
      %2568 = vmatpush1.msra.mxu0 %v2492
      %2569 = vmatprep.mubr.f32.mxu0 %v2269
      %2570 = vmatmul.mubr.f32.gmra.mrb[0].mxu0 %v2268
      %v2571 = vpop.f32.mrb[0].mxu0
      %v2572 = vadd.f32 0.0, %v2571
      %v2573 = vpop.f32.mrb[0].mxu0
      %2574 = vdwg.mxu0
      %2575 = vmatprep.subr.mxu0 0.0
      %2576 = vmatpush1.msra.mxu0 %v2493
      %2577 = vmatprep.subr.mxu0 0.0
      %2578 = vmatpush1.msra.mxu0 %v2494
      %2579 = vmatprep.subr.mxu0 0.0
      %2580 = vmatpush1.msra.mxu0 %v2495
      %2581 = vmatprep.subr.mxu0 0.0
      %2582 = vmatpush1.msra.mxu0 %v2496
      %2583 = vmatprep.subr.mxu0 0.0
      %2584 = vmatpush1.msra.mxu0 %v2497
      %2585 = vmatprep.subr.mxu0 0.0
      %2586 = vmatpush1.msra.mxu0 %v2498
      %2587 = vmatprep.subr.mxu0 0.0
      %2588 = vmatpush1.msra.mxu0 %v2499
      %2589 = vmatprep.subr.mxu0 0.0
      %2590 = vmatpush1.msra.mxu0 %v2500
      %2591 = vmatprep.subr.mxu0 0.0
      %2592 = vmatpush1.msra.mxu0 %v2503
      %2593 = vmatprep.subr.mxu0 0.0
      %2594 = vmatpush1.msra.mxu0 0.0
      %2595 = vmatprep.subr.mxu0 0.0
      %2596 = vmatpush1.msra.mxu0 0.0
      %2597 = vmatprep.subr.mxu0 0.0
      %2598 = vmatpush1.msra.mxu0 0.0
      %2599 = vmatprep.subr.mxu0 0.0
      %2600 = vmatpush1.msra.mxu0 0.0
      %2601 = vmatprep.subr.mxu0 0.0
      %2602 = vmatpush1.msra.mxu0 0.0
      %2603 = vmatprep.subr.mxu0 0.0
      %2604 = vmatpush1.msra.mxu0 0.0
      %2605 = vmatprep.subr.mxu0 0.0
      %2606 = vmatpush1.msra.mxu0 0.0
      %2607 = vmatprep.subr.mxu0 0.0
      %2608 = vmatpush1.msra.mxu0 0.0
      %2609 = vmatprep.subr.mxu0 0.0
      %2610 = vmatpush1.msra.mxu0 0.0
      %2611 = vmatprep.subr.mxu0 0.0
      %2612 = vmatpush1.msra.mxu0 0.0
      %2613 = vmatprep.subr.mxu0 0.0
      %2614 = vmatpush1.msra.mxu0 0.0
      %2615 = vmatprep.subr.mxu0 0.0
      %2616 = vmatpush1.msra.mxu0 0.0
      %2617 = vmatprep.subr.mxu0 0.0
      %2618 = vmatpush1.msra.mxu0 0.0
      %2619 = vmatprep.subr.mxu0 0.0
      %2620 = vmatpush1.msra.mxu0 0.0
      %2621 = vmatprep.subr.mxu0 0.0
      %2622 = vmatpush1.msra.mxu0 0.0
      %2623 = vmatprep.subr.mxu0 0.0
      %2624 = vmatpush1.msra.mxu0 0.0
      %2625 = vmatprep.subr.mxu0 0.0
      %2626 = vmatpush1.msra.mxu0 0.0
      %2627 = vmatprep.subr.mxu0 0.0
      %2628 = vmatpush1.msra.mxu0 0.0
      %2629 = vmatprep.subr.mxu0 0.0
      %2630 = vmatpush1.msra.mxu0 0.0
      %2631 = vmatprep.subr.mxu0 0.0
      %2632 = vmatpush1.msra.mxu0 0.0
      %2633 = vmatprep.subr.mxu0 0.0
      %2634 = vmatpush1.msra.mxu0 0.0
      %2635 = vmatprep.subr.mxu0 0.0
      %2636 = vmatpush1.msra.mxu0 0.0
      %2637 = vmatprep.subr.mxu0 0.0
      %2638 = vmatpush1.msra.mxu0 0.0
      %2639 = vmatprep.mubr.f32.mxu0 0.0
      %2640 = vmatmul.mubr.f32.gmra.mrb[0].mxu0 %v2314
      %v2641 = vpop.f32.mrb[0].mxu0
      %v2642 = vadd.f32 %v2572, %v2641
      %v2643 = vpop.f32.mrb[0].mxu0
      %2644 = vdwg.mxu0
      %s2645 = scalar_lea.vmem %s12, 656
      %v2646 = vld [vmem:[%s2645] sm:$0xff]
      %v2647 = vld [vmem:[%s2645 + $0x8] sm:$0xff]
      %v2648 = vld [vmem:[%s2645 + $0x10] sm:$0xff]
      %v2649 = vld [vmem:[%s2645 + $0x18] sm:$0xff]
      %v2650 = vld [vmem:[%s2645 + $0x20] sm:$0xff]
      %v2651 = vld [vmem:[%s2645 + $0x28] sm:$0xff]
      %v2652 = vld [vmem:[%s2645 + $0x30] sm:$0xff]
      %v2653 = vld [vmem:[%s2645 + $0x38] sm:$0xff]
      %v2654 = vld [vmem:[%s2645 + $0x40] sm:$0xff]
      %v2655 = vld [vmem:[%s2645 + $0x48] sm:$0xff]
      %v2656 = vld [vmem:[%s2645 + $0x50] sm:$0xff]
      %v2657 = vld [vmem:[%s2645 + $0x58] sm:$0xff]
      %v2658 = vld [vmem:[%s2645 + $0x60] sm:$0xff]
      %v2659 = vld [vmem:[%s2645 + $0x68] sm:$0xff]
      %v2660 = vld [vmem:[%s2645 + $0x70] sm:$0xff]
      %v2661 = vld [vmem:[%s2645 + $0x78] sm:$0xff]
      %v2662 = vld [vmem:[%s2645 + $0x80] sm:$0xff]
      %v2663 = vld [vmem:[%s2645 + $0x88] sm:$0xff]
      %v2664 = vld [vmem:[%s2645 + $0x90] sm:$0xff]
      %v2665 = vld [vmem:[%s2645 + $0x98] sm:$0xff]
      %v2666 = vld [vmem:[%s2645 + $0xa0] sm:$0xff]
      %v2667 = vld [vmem:[%s2645 + $0xa8] sm:$0xff]
      %v2668 = vld [vmem:[%s2645 + $0xb0] sm:$0xff]
      %v2669 = vld [vmem:[%s2645 + $0xb8] sm:$0xff]
      %v2670 = vld [vmem:[%s2645 + $0xc0] sm:$0xff]
      %v2671 = vld [vmem:[%s2645 + $0xc8] sm:$0xff]
      %v2672 = vld [vmem:[%s2645 + $0xd0] sm:$0xff]
      %v2673 = vld [vmem:[%s2645 + $0xd8] sm:$0xff]
      %v2674 = vld [vmem:[%s2645 + $0xe0] sm:$0xff]
      %v2675 = vld [vmem:[%s2645 + $0xe8] sm:$0xff]
      %v2676 = vld [vmem:[%s2645 + $0xf0] sm:$0xff]
      %v2677 = vld [vmem:[%s2645 + $0xf8] sm:$0xff]
      %v2678 = vld [vmem:[%s2645 + $0x100] sm:$0xff]
      %v2679 = vld [vmem:[%s2645 + $0x108] sm:$0xff]
      %v2680 = vld [vmem:[%s2645 + $0x110] sm:$0xff]
      %v2681 = vld [vmem:[%s2645 + $0x118] sm:$0xff]
      %v2682 = vld [vmem:[%s2645 + $0x120] sm:$0xff]
      %v2683 = vld [vmem:[%s2645 + $0x128] sm:$0xff]
      %v2684 = vld [vmem:[%s2645 + $0x130] sm:$0xff]
      %v2685 = vld [vmem:[%s2645 + $0x138] sm:$0xff]
      %v2686 = vld [vmem:[%s2645 + $0x140] sm:$0xf]
      %v2688 = vsel %vm2316, %v2686, 0
      %2690 = vmatprep.subr.mxu0 0.0
      %2691 = vmatpush1.msra.mxu0 %v2646
      %2692 = vmatprep.subr.mxu0 0.0
      %2693 = vmatpush1.msra.mxu0 %v2647
      %2694 = vmatprep.subr.mxu0 0.0
      %2695 = vmatpush1.msra.mxu0 %v2648
      %2696 = vmatprep.subr.mxu0 0.0
      %2697 = vmatpush1.msra.mxu0 %v2649
      %2698 = vmatprep.subr.mxu0 0.0
      %2699 = vmatpush1.msra.mxu0 %v2650
      %2700 = vmatprep.subr.mxu0 0.0
      %2701 = vmatpush1.msra.mxu0 %v2651
      %2702 = vmatprep.subr.mxu0 0.0
      %2703 = vmatpush1.msra.mxu0 %v2652
      %2704 = vmatprep.subr.mxu0 0.0
      %2705 = vmatpush1.msra.mxu0 %v2653
      %2706 = vmatprep.subr.mxu0 0.0
      %2707 = vmatpush1.msra.mxu0 %v2654
      %2708 = vmatprep.subr.mxu0 0.0
      %2709 = vmatpush1.msra.mxu0 %v2655
      %2710 = vmatprep.subr.mxu0 0.0
      %2711 = vmatpush1.msra.mxu0 %v2656
      %2712 = vmatprep.subr.mxu0 0.0
      %2713 = vmatpush1.msra.mxu0 %v2657
      %2714 = vmatprep.subr.mxu0 0.0
      %2715 = vmatpush1.msra.mxu0 %v2658
      %2716 = vmatprep.subr.mxu0 0.0
      %2717 = vmatpush1.msra.mxu0 %v2659
      %2718 = vmatprep.subr.mxu0 0.0
      %2719 = vmatpush1.msra.mxu0 %v2660
      %2720 = vmatprep.subr.mxu0 0.0
      %2721 = vmatpush1.msra.mxu0 %v2661
      %2722 = vmatprep.subr.mxu0 0.0
      %2723 = vmatpush1.msra.mxu0 %v2662
      %2724 = vmatprep.subr.mxu0 0.0
      %2725 = vmatpush1.msra.mxu0 %v2663
      %2726 = vmatprep.subr.mxu0 0.0
      %2727 = vmatpush1.msra.mxu0 %v2664
      %2728 = vmatprep.subr.mxu0 0.0
      %2729 = vmatpush1.msra.mxu0 %v2665
      %2730 = vmatprep.subr.mxu0 0.0
      %2731 = vmatpush1.msra.mxu0 %v2666
      %2732 = vmatprep.subr.mxu0 0.0
      %2733 = vmatpush1.msra.mxu0 %v2667
      %2734 = vmatprep.subr.mxu0 0.0
      %2735 = vmatpush1.msra.mxu0 %v2668
      %2736 = vmatprep.subr.mxu0 0.0
      %2737 = vmatpush1.msra.mxu0 %v2669
      %2738 = vmatprep.subr.mxu0 0.0
      %2739 = vmatpush1.msra.mxu0 %v2670
      %2740 = vmatprep.subr.mxu0 0.0
      %2741 = vmatpush1.msra.mxu0 %v2671
      %2742 = vmatprep.subr.mxu0 0.0
      %2743 = vmatpush1.msra.mxu0 %v2672
      %2744 = vmatprep.subr.mxu0 0.0
      %2745 = vmatpush1.msra.mxu0 %v2673
      %2746 = vmatprep.subr.mxu0 0.0
      %2747 = vmatpush1.msra.mxu0 %v2674
      %2748 = vmatprep.subr.mxu0 0.0
      %2749 = vmatpush1.msra.mxu0 %v2675
      %2750 = vmatprep.subr.mxu0 0.0
      %2751 = vmatpush1.msra.mxu0 %v2676
      %2752 = vmatprep.subr.mxu0 0.0
      %2753 = vmatpush1.msra.mxu0 %v2677
      %2754 = vmatprep.mubr.f32.mxu0 %v2269
      %2755 = vmatmul.mubr.f32.gmra.mrb[0].mxu0 %v2268
      %v2756 = vpop.f32.mrb[0].mxu0
      %v2757 = vadd.f32 0.0, %v2756
      %v2758 = vpop.f32.mrb[0].mxu0
      %2759 = vdwg.mxu0
      %2760 = vmatprep.subr.mxu0 0.0
      %2761 = vmatpush1.msra.mxu0 %v2678
      %2762 = vmatprep.subr.mxu0 0.0
      %2763 = vmatpush1.msra.mxu0 %v2679
      %2764 = vmatprep.subr.mxu0 0.0
      %2765 = vmatpush1.msra.mxu0 %v2680
      %2766 = vmatprep.subr.mxu0 0.0
      %2767 = vmatpush1.msra.mxu0 %v2681
      %2768 = vmatprep.subr.mxu0 0.0
      %2769 = vmatpush1.msra.mxu0 %v2682
      %2770 = vmatprep.subr.mxu0 0.0
      %2771 = vmatpush1.msra.mxu0 %v2683
      %2772 = vmatprep.subr.mxu0 0.0
      %2773 = vmatpush1.msra.mxu0 %v2684
      %2774 = vmatprep.subr.mxu0 0.0
      %2775 = vmatpush1.msra.mxu0 %v2685
      %2776 = vmatprep.subr.mxu0 0.0
      %2777 = vmatpush1.msra.mxu0 %v2688
      %2778 = vmatprep.subr.mxu0 0.0
      %2779 = vmatpush1.msra.mxu0 0.0
      %2780 = vmatprep.subr.mxu0 0.0
      %2781 = vmatpush1.msra.mxu0 0.0
      %2782 = vmatprep.subr.mxu0 0.0
      %2783 = vmatpush1.msra.mxu0 0.0
      %2784 = vmatprep.subr.mxu0 0.0
      %2785 = vmatpush1.msra.mxu0 0.0
      %2786 = vmatprep.subr.mxu0 0.0
      %2787 = vmatpush1.msra.mxu0 0.0
      %2788 = vmatprep.subr.mxu0 0.0
      %2789 = vmatpush1.msra.mxu0 0.0
      %2790 = vmatprep.subr.mxu0 0.0
      %2791 = vmatpush1.msra.mxu0 0.0
      %2792 = vmatprep.subr.mxu0 0.0
      %2793 = vmatpush1.msra.mxu0 0.0
      %2794 = vmatprep.subr.mxu0 0.0
      %2795 = vmatpush1.msra.mxu0 0.0
      %2796 = vmatprep.subr.mxu0 0.0
      %2797 = vmatpush1.msra.mxu0 0.0
      %2798 = vmatprep.subr.mxu0 0.0
      %2799 = vmatpush1.msra.mxu0 0.0
      %2800 = vmatprep.subr.mxu0 0.0
      %2801 = vmatpush1.msra.mxu0 0.0
      %2802 = vmatprep.subr.mxu0 0.0
      %2803 = vmatpush1.msra.mxu0 0.0
      %2804 = vmatprep.subr.mxu0 0.0
      %2805 = vmatpush1.msra.mxu0 0.0
      %2806 = vmatprep.subr.mxu0 0.0
      %2807 = vmatpush1.msra.mxu0 0.0
      %2808 = vmatprep.subr.mxu0 0.0
      %2809 = vmatpush1.msra.mxu0 0.0
      %2810 = vmatprep.subr.mxu0 0.0
      %2811 = vmatpush1.msra.mxu0 0.0
      %2812 = vmatprep.subr.mxu0 0.0
      %2813 = vmatpush1.msra.mxu0 0.0
      %2814 = vmatprep.subr.mxu0 0.0
      %2815 = vmatpush1.msra.mxu0 0.0
      %2816 = vmatprep.subr.mxu0 0.0
      %2817 = vmatpush1.msra.mxu0 0.0
      %2818 = vmatprep.subr.mxu0 0.0
      %2819 = vmatpush1.msra.mxu0 0.0
      %2820 = vmatprep.subr.mxu0 0.0
      %2821 = vmatpush1.msra.mxu0 0.0
      %2822 = vmatprep.subr.mxu0 0.0
      %2823 = vmatpush1.msra.mxu0 0.0
      %2824 = vmatprep.mubr.f32.mxu0 0.0
      %2825 = vmatmul.mubr.f32.gmra.mrb[0].mxu0 %v2314
      %v2826 = vpop.f32.mrb[0].mxu0
      %v2827 = vadd.f32 %v2757, %v2826
      %v2828 = vpop.f32.mrb[0].mxu0
      %2829 = vdwg.mxu0
      %s2830 = scalar_lea.vmem %s12, 984
      %v2831 = vld [vmem:[%s2830] sm:$0xff]
      %v2832 = vld [vmem:[%s2830 + $0x8] sm:$0xff]
      %v2833 = vld [vmem:[%s2830 + $0x10] sm:$0xff]
      %v2834 = vld [vmem:[%s2830 + $0x18] sm:$0xff]
      %v2835 = vld [vmem:[%s2830 + $0x20] sm:$0xff]
      %v2836 = vld [vmem:[%s2830 + $0x28] sm:$0xff]
      %v2837 = vld [vmem:[%s2830 + $0x30] sm:$0xff]
      %v2838 = vld [vmem:[%s2830 + $0x38] sm:$0xff]
      %v2839 = vld [vmem:[%s2830 + $0x40] sm:$0xff]
      %v2840 = vld [vmem:[%s2830 + $0x48] sm:$0xff]
      %v2841 = vld [vmem:[%s2830 + $0x50] sm:$0xff]
      %v2842 = vld [vmem:[%s2830 + $0x58] sm:$0xff]
      %v2843 = vld [vmem:[%s2830 + $0x60] sm:$0xff]
      %v2844 = vld [vmem:[%s2830 + $0x68] sm:$0xff]
      %v2845 = vld [vmem:[%s2830 + $0x70] sm:$0xff]
      %v2846 = vld [vmem:[%s2830 + $0x78] sm:$0xff]
      %v2847 = vld [vmem:[%s2830 + $0x80] sm:$0xff]
      %v2848 = vld [vmem:[%s2830 + $0x88] sm:$0xff]
      %v2849 = vld [vmem:[%s2830 + $0x90] sm:$0xff]
      %v2850 = vld [vmem:[%s2830 + $0x98] sm:$0xff]
      %v2851 = vld [vmem:[%s2830 + $0xa0] sm:$0xff]
      %v2852 = vld [vmem:[%s2830 + $0xa8] sm:$0xff]
      %v2853 = vld [vmem:[%s2830 + $0xb0] sm:$0xff]
      %v2854 = vld [vmem:[%s2830 + $0xb8] sm:$0xff]
      %v2855 = vld [vmem:[%s2830 + $0xc0] sm:$0xff]
      %v2856 = vld [vmem:[%s2830 + $0xc8] sm:$0xff]
      %v2857 = vld [vmem:[%s2830 + $0xd0] sm:$0xff]
      %v2858 = vld [vmem:[%s2830 + $0xd8] sm:$0xff]
      %v2859 = vld [vmem:[%s2830 + $0xe0] sm:$0xff]
      %v2860 = vld [vmem:[%s2830 + $0xe8] sm:$0xff]
      %v2861 = vld [vmem:[%s2830 + $0xf0] sm:$0xff]
      %v2862 = vld [vmem:[%s2830 + $0xf8] sm:$0xff]
      %v2863 = vld [vmem:[%s2830 + $0x100] sm:$0xff]
      %v2864 = vld [vmem:[%s2830 + $0x108] sm:$0xff]
      %v2865 = vld [vmem:[%s2830 + $0x110] sm:$0xff]
      %v2866 = vld [vmem:[%s2830 + $0x118] sm:$0xff]
      %v2867 = vld [vmem:[%s2830 + $0x120] sm:$0xff]
      %v2868 = vld [vmem:[%s2830 + $0x128] sm:$0xff]
      %v2869 = vld [vmem:[%s2830 + $0x130] sm:$0xff]
      %v2870 = vld [vmem:[%s2830 + $0x138] sm:$0xff]
      %v2871 = vld [vmem:[%s2830 + $0x140] sm:$0xf]
      %v2873 = vsel %vm2316, %v2871, 0
      %2875 = vmatprep.subr.mxu0 0.0
      %2876 = vmatpush1.msra.mxu0 %v2831
      %2877 = vmatprep.subr.mxu0 0.0
      %2878 = vmatpush1.msra.mxu0 %v2832
      %2879 = vmatprep.subr.mxu0 0.0
      %2880 = vmatpush1.msra.mxu0 %v2833
      %2881 = vmatprep.subr.mxu0 0.0
      %2882 = vmatpush1.msra.mxu0 %v2834
      %2883 = vmatprep.subr.mxu0 0.0
      %2884 = vmatpush1.msra.mxu0 %v2835
      %2885 = vmatprep.subr.mxu0 0.0
      %2886 = vmatpush1.msra.mxu0 %v2836
      %2887 = vmatprep.subr.mxu0 0.0
      %2888 = vmatpush1.msra.mxu0 %v2837
      %2889 = vmatprep.subr.mxu0 0.0
      %2890 = vmatpush1.msra.mxu0 %v2838
      %2891 = vmatprep.subr.mxu0 0.0
      %2892 = vmatpush1.msra.mxu0 %v2839
      %2893 = vmatprep.subr.mxu0 0.0
      %2894 = vmatpush1.msra.mxu0 %v2840
      %2895 = vmatprep.subr.mxu0 0.0
      %2896 = vmatpush1.msra.mxu0 %v2841
      %2897 = vmatprep.subr.mxu0 0.0
      %2898 = vmatpush1.msra.mxu0 %v2842
      %2899 = vmatprep.subr.mxu0 0.0
      %2900 = vmatpush1.msra.mxu0 %v2843
      %2901 = vmatprep.subr.mxu0 0.0
      %2902 = vmatpush1.msra.mxu0 %v2844
      %2903 = vmatprep.subr.mxu0 0.0
      %2904 = vmatpush1.msra.mxu0 %v2845
      %2905 = vmatprep.subr.mxu0 0.0
      %2906 = vmatpush1.msra.mxu0 %v2846
      %2907 = vmatprep.subr.mxu0 0.0
      %2908 = vmatpush1.msra.mxu0 %v2847
      %2909 = vmatprep.subr.mxu0 0.0
      %2910 = vmatpush1.msra.mxu0 %v2848
      %2911 = vmatprep.subr.mxu0 0.0
      %2912 = vmatpush1.msra.mxu0 %v2849
      %2913 = vmatprep.subr.mxu0 0.0
      %2914 = vmatpush1.msra.mxu0 %v2850
      %2915 = vmatprep.subr.mxu0 0.0
      %2916 = vmatpush1.msra.mxu0 %v2851
      %2917 = vmatprep.subr.mxu0 0.0
      %2918 = vmatpush1.msra.mxu0 %v2852
      %2919 = vmatprep.subr.mxu0 0.0
      %2920 = vmatpush1.msra.mxu0 %v2853
      %2921 = vmatprep.subr.mxu0 0.0
      %2922 = vmatpush1.msra.mxu0 %v2854
      %2923 = vmatprep.subr.mxu0 0.0
      %2924 = vmatpush1.msra.mxu0 %v2855
      %2925 = vmatprep.subr.mxu0 0.0
      %2926 = vmatpush1.msra.mxu0 %v2856
      %2927 = vmatprep.subr.mxu0 0.0
      %2928 = vmatpush1.msra.mxu0 %v2857
      %2929 = vmatprep.subr.mxu0 0.0
      %2930 = vmatpush1.msra.mxu0 %v2858
      %2931 = vmatprep.subr.mxu0 0.0
      %2932 = vmatpush1.msra.mxu0 %v2859
      %2933 = vmatprep.subr.mxu0 0.0
      %2934 = vmatpush1.msra.mxu0 %v2860
      %2935 = vmatprep.subr.mxu0 0.0
      %2936 = vmatpush1.msra.mxu0 %v2861
      %2937 = vmatprep.subr.mxu0 0.0
      %2938 = vmatpush1.msra.mxu0 %v2862
      %2939 = vmatprep.mubr.f32.mxu0 %v2269
      %2940 = vmatmul.mubr.f32.gmra.mrb[0].mxu0 %v2268
      %v2941 = vpop.f32.mrb[0].mxu0
      %v2942 = vadd.f32 0.0, %v2941
      %v2943 = vpop.f32.mrb[0].mxu0
      %2944 = vdwg.mxu0
      %2945 = vmatprep.subr.mxu0 0.0
      %2946 = vmatpush1.msra.mxu0 %v2863
      %2947 = vmatprep.subr.mxu0 0.0
      %2948 = vmatpush1.msra.mxu0 %v2864
      %2949 = vmatprep.subr.mxu0 0.0
      %2950 = vmatpush1.msra.mxu0 %v2865
      %2951 = vmatprep.subr.mxu0 0.0
      %2952 = vmatpush1.msra.mxu0 %v2866
      %2953 = vmatprep.subr.mxu0 0.0
      %2954 = vmatpush1.msra.mxu0 %v2867
      %2955 = vmatprep.subr.mxu0 0.0
      %2956 = vmatpush1.msra.mxu0 %v2868
      %2957 = vmatprep.subr.mxu0 0.0
      %2958 = vmatpush1.msra.mxu0 %v2869
      %2959 = vmatprep.subr.mxu0 0.0
      %2960 = vmatpush1.msra.mxu0 %v2870
      %2961 = vmatprep.subr.mxu0 0.0
      %2962 = vmatpush1.msra.mxu0 %v2873
      %2963 = vmatprep.subr.mxu0 0.0
      %2964 = vmatpush1.msra.mxu0 0.0
      %2965 = vmatprep.subr.mxu0 0.0
      %2966 = vmatpush1.msra.mxu0 0.0
      %2967 = vmatprep.subr.mxu0 0.0
      %2968 = vmatpush1.msra.mxu0 0.0
      %2969 = vmatprep.subr.mxu0 0.0
      %2970 = vmatpush1.msra.mxu0 0.0
      %2971 = vmatprep.subr.mxu0 0.0
      %2972 = vmatpush1.msra.mxu0 0.0
      %2973 = vmatprep.subr.mxu0 0.0
      %2974 = vmatpush1.msra.mxu0 0.0
      %2975 = vmatprep.subr.mxu0 0.0
      %2976 = vmatpush1.msra.mxu0 0.0
      %2977 = vmatprep.subr.mxu0 0.0
      %2978 = vmatpush1.msra.mxu0 0.0
      %2979 = vmatprep.subr.mxu0 0.0
      %2980 = vmatpush1.msra.mxu0 0.0
      %2981 = vmatprep.subr.mxu0 0.0
      %2982 = vmatpush1.msra.mxu0 0.0
      %2983 = vmatprep.subr.mxu0 0.0
      %2984 = vmatpush1.msra.mxu0 0.0
      %2985 = vmatprep.subr.mxu0 0.0
      %2986 = vmatpush1.msra.mxu0 0.0
      %2987 = vmatprep.subr.mxu0 0.0
      %2988 = vmatpush1.msra.mxu0 0.0
      %2989 = vmatprep.subr.mxu0 0.0
      %2990 = vmatpush1.msra.mxu0 0.0
      %2991 = vmatprep.subr.mxu0 0.0
      %2992 = vmatpush1.msra.mxu0 0.0
      %2993 = vmatprep.subr.mxu0 0.0
      %2994 = vmatpush1.msra.mxu0 0.0
      %2995 = vmatprep.subr.mxu0 0.0
      %2996 = vmatpush1.msra.mxu0 0.0
      %2997 = vmatprep.subr.mxu0 0.0
      %2998 = vmatpush1.msra.mxu0 0.0
      %2999 = vmatprep.subr.mxu0 0.0
      %3000 = vmatpush1.msra.mxu0 0.0
      %3001 = vmatprep.subr.mxu0 0.0
      %3002 = vmatpush1.msra.mxu0 0.0
      %3003 = vmatprep.subr.mxu0 0.0
      %3004 = vmatpush1.msra.mxu0 0.0
      %3005 = vmatprep.subr.mxu0 0.0
      %3006 = vmatpush1.msra.mxu0 0.0
      %3007 = vmatprep.subr.mxu0 0.0
      %3008 = vmatpush1.msra.mxu0 0.0
      %3009 = vmatprep.mubr.f32.mxu0 0.0
      %3010 = vmatmul.mubr.f32.gmra.mrb[0].mxu0 %v2314
      %v3011 = vpop.f32.mrb[0].mxu0
      %v3012 = vadd.f32 %v2942, %v3011
      %v3013 = vpop.f32.mrb[0].mxu0
      %3014 = vdwg.mxu0
      %v3015 = vmax.f32 %v2457, %v2642
      %v3016 = vmax.f32 %v2827, %v3012
      %v3017 = vmax.f32 %v3015, %v3016
      %3019 = vrot.lane.b32.xlu0 %v3017, 11
      %v3020 = vpop.permute.xlu0 %3019
      %vm3022 = vcmask 908376
      %3023 = vst.msk [vmem:[#allocation3] sm:$0xff] %vm3022, %v3020
      %v3024 = vld [vmem:[#allocation3] sm:$0xff]
      %v3025 = vld [vmem:[%s3] sm:$0xff]
      %v3026 = vld [vmem:[%s3 + $0x8] sm:$0xff]
      %s3027 = scalar_lea.vmem %s3, 16
      %v3028 = vld [vmem:[%s3027] sm:$0xff]
      %v3029 = vld [vmem:[%s3027 + $0x8] sm:$0xff]
      %3031 = vrot.lane.b32.xlu0 %v3024, 127
      %v3032 = vpop.permute.xlu0 %3031
      %v3035 = vsel %vm843, %v3028, 0
      %v3038 = vsel %vm843, %v3029, 0
      %3040 = vmatprep.subr.mxu0 0.0
      %3041 = vmatpush1.msra.mxu0 %v3032
      %3042 = vmatprep.subr.mxu0 0.0
      %3043 = vmatpush1.msra.mxu0 0.0
      %3044 = vmatprep.subr.mxu0 0.0
      %3045 = vmatpush1.msra.mxu0 0.0
      %3046 = vmatprep.subr.mxu0 0.0
      %3047 = vmatpush1.msra.mxu0 0.0
      %3048 = vmatprep.subr.mxu0 0.0
      %3049 = vmatpush1.msra.mxu0 0.0
      %3050 = vmatprep.subr.mxu0 0.0
      %3051 = vmatpush1.msra.mxu0 0.0
      %3052 = vmatprep.subr.mxu0 0.0
      %3053 = vmatpush1.msra.mxu0 0.0
      %3054 = vmatprep.subr.mxu0 0.0
      %3055 = vmatpush1.msra.mxu0 0.0
      %3056 = vmatprep.subr.mxu0 0.0
      %3057 = vmatpush1.msra.mxu0 0.0
      %3058 = vmatprep.subr.mxu0 0.0
      %3059 = vmatpush1.msra.mxu0 0.0
      %3060 = vmatprep.subr.mxu0 0.0
      %3061 = vmatpush1.msra.mxu0 0.0
      %3062 = vmatprep.subr.mxu0 0.0
      %3063 = vmatpush1.msra.mxu0 0.0
      %3064 = vmatprep.subr.mxu0 0.0
      %3065 = vmatpush1.msra.mxu0 0.0
      %3066 = vmatprep.subr.mxu0 0.0
      %3067 = vmatpush1.msra.mxu0 0.0
      %3068 = vmatprep.subr.mxu0 0.0
      %3069 = vmatpush1.msra.mxu0 0.0
      %3070 = vmatprep.subr.mxu0 0.0
      %3071 = vmatpush1.msra.mxu0 0.0
      %3072 = vmatprep.subr.mxu0 0.0
      %3073 = vmatpush1.msra.mxu0 0.0
      %3074 = vmatprep.subr.mxu0 0.0
      %3075 = vmatpush1.msra.mxu0 0.0
      %3076 = vmatprep.subr.mxu0 0.0
      %3077 = vmatpush1.msra.mxu0 0.0
      %3078 = vmatprep.subr.mxu0 0.0
      %3079 = vmatpush1.msra.mxu0 0.0
      %3080 = vmatprep.subr.mxu0 0.0
      %3081 = vmatpush1.msra.mxu0 0.0
      %3082 = vmatprep.subr.mxu0 0.0
      %3083 = vmatpush1.msra.mxu0 0.0
      %3084 = vmatprep.subr.mxu0 0.0
      %3085 = vmatpush1.msra.mxu0 0.0
      %3086 = vmatprep.subr.mxu0 0.0
      %3087 = vmatpush1.msra.mxu0 0.0
      %3088 = vmatprep.subr.mxu0 0.0
      %3089 = vmatpush1.msra.mxu0 0.0
      %3090 = vmatprep.subr.mxu0 0.0
      %3091 = vmatpush1.msra.mxu0 0.0
      %3092 = vmatprep.subr.mxu0 0.0
      %3093 = vmatpush1.msra.mxu0 0.0
      %3094 = vmatprep.subr.mxu0 0.0
      %3095 = vmatpush1.msra.mxu0 0.0
      %3096 = vmatprep.subr.mxu0 0.0
      %3097 = vmatpush1.msra.mxu0 0.0
      %3098 = vmatprep.subr.mxu0 0.0
      %3099 = vmatpush1.msra.mxu0 0.0
      %3100 = vmatprep.subr.mxu0 0.0
      %3101 = vmatpush1.msra.mxu0 0.0
      %3102 = vmatprep.subr.mxu0 0.0
      %3103 = vmatpush1.msra.mxu0 0.0
      %3104 = vmatprep.mubr.f32.mxu0 0.0
      %3105 = vmatmul.mubr.f32.gmra.mrb[0].mxu0 %v3035
      %v3106 = vpop.f32.mrb[0].mxu0
      %v3107 = vadd.f32 0.0, %v3106
      %v3108 = vpop.f32.mrb[0].mxu0
      %3109 = vmatprep.mubr.f32.mxu0 0.0
      %3110 = vmatmul.mubr.f32.gmra.mrb[0].mxu0 %v3038
      %v3111 = vpop.f32.mrb[0].mxu0
      %v3112 = vadd.f32 0.0, %v3111
      %v3113 = vpop.f32.mrb[0].mxu0
      %3114 = vdwg.mxu0
      %v3116 = vsel %vm843, %v3025, 0
      %v3119 = vsel %vm843, %v3026, 0
      %3121 = vmatprep.subr.mxu0 0.0
      %3122 = vmatpush1.msra.mxu0 %v3024
      %3123 = vmatprep.subr.mxu0 0.0
      %3124 = vmatpush1.msra.mxu0 0.0
      %3125 = vmatprep.subr.mxu0 0.0
      %3126 = vmatpush1.msra.mxu0 0.0
      %3127 = vmatprep.subr.mxu0 0.0
      %3128 = vmatpush1.msra.mxu0 0.0
      %3129 = vmatprep.subr.mxu0 0.0
      %3130 = vmatpush1.msra.mxu0 0.0
      %3131 = vmatprep.subr.mxu0 0.0
      %3132 = vmatpush1.msra.mxu0 0.0
      %3133 = vmatprep.subr.mxu0 0.0
      %3134 = vmatpush1.msra.mxu0 0.0
      %3135 = vmatprep.subr.mxu0 0.0
      %3136 = vmatpush1.msra.mxu0 0.0
      %3137 = vmatprep.subr.mxu0 0.0
      %3138 = vmatpush1.msra.mxu0 0.0
      %3139 = vmatprep.subr.mxu0 0.0
      %3140 = vmatpush1.msra.mxu0 0.0
      %3141 = vmatprep.subr.mxu0 0.0
      %3142 = vmatpush1.msra.mxu0 0.0
      %3143 = vmatprep.subr.mxu0 0.0
      %3144 = vmatpush1.msra.mxu0 0.0
      %3145 = vmatprep.subr.mxu0 0.0
      %3146 = vmatpush1.msra.mxu0 0.0
      %3147 = vmatprep.subr.mxu0 0.0
      %3148 = vmatpush1.msra.mxu0 0.0
      %3149 = vmatprep.subr.mxu0 0.0
      %3150 = vmatpush1.msra.mxu0 0.0
      %3151 = vmatprep.subr.mxu0 0.0
      %3152 = vmatpush1.msra.mxu0 0.0
      %3153 = vmatprep.subr.mxu0 0.0
      %3154 = vmatpush1.msra.mxu0 0.0
      %3155 = vmatprep.subr.mxu0 0.0
      %3156 = vmatpush1.msra.mxu0 0.0
      %3157 = vmatprep.subr.mxu0 0.0
      %3158 = vmatpush1.msra.mxu0 0.0
      %3159 = vmatprep.subr.mxu0 0.0
      %3160 = vmatpush1.msra.mxu0 0.0
      %3161 = vmatprep.subr.mxu0 0.0
      %3162 = vmatpush1.msra.mxu0 0.0
      %3163 = vmatprep.subr.mxu0 0.0
      %3164 = vmatpush1.msra.mxu0 0.0
      %3165 = vmatprep.subr.mxu0 0.0
      %3166 = vmatpush1.msra.mxu0 0.0
      %3167 = vmatprep.subr.mxu0 0.0
      %3168 = vmatpush1.msra.mxu0 0.0
      %3169 = vmatprep.subr.mxu0 0.0
      %3170 = vmatpush1.msra.mxu0 0.0
      %3171 = vmatprep.subr.mxu0 0.0
      %3172 = vmatpush1.msra.mxu0 0.0
      %3173 = vmatprep.subr.mxu0 0.0
      %3174 = vmatpush1.msra.mxu0 0.0
      %3175 = vmatprep.subr.mxu0 0.0
      %3176 = vmatpush1.msra.mxu0 0.0
      %3177 = vmatprep.subr.mxu0 0.0
      %3178 = vmatpush1.msra.mxu0 0.0
      %3179 = vmatprep.subr.mxu0 0.0
      %3180 = vmatpush1.msra.mxu0 0.0
      %3181 = vmatprep.subr.mxu0 0.0
      %3182 = vmatpush1.msra.mxu0 0.0
      %3183 = vmatprep.subr.mxu0 0.0
      %3184 = vmatpush1.msra.mxu0 0.0
      %3185 = vmatprep.mubr.f32.mxu0 0.0
      %3186 = vmatmul.mubr.f32.gmra.mrb[0].mxu0 %v3116
      %v3187 = vpop.f32.mrb[0].mxu0
      %v3188 = vadd.f32 %v3107, %v3187
      %v3189 = vpop.f32.mrb[0].mxu0
      %3190 = vmatprep.mubr.f32.mxu0 0.0
      %3191 = vmatmul.mubr.f32.gmra.mrb[0].mxu0 %v3119
      %v3192 = vpop.f32.mrb[0].mxu0
      %v3193 = vadd.f32 %v3112, %v3192
      %v3194 = vpop.f32.mrb[0].mxu0
      %3195 = vdwg.mxu0
      %s3196 = scalar_lea.vmem %s3, 32
      %v3197 = vld [vmem:[%s3196] sm:$0xff]
      %v3198 = vld [vmem:[%s3196 + $0x8] sm:$0xff]
      %3199 = vrot.lane.b32.xlu0 %v3024, 126
      %v3200 = vpop.permute.xlu0 %3199
      %v3203 = vsel %vm843, %v3197, 0
      %v3206 = vsel %vm843, %v3198, 0
      %3208 = vmatprep.subr.mxu0 0.0
      %3209 = vmatpush1.msra.mxu0 %v3200
      %3210 = vmatprep.subr.mxu0 0.0
      %3211 = vmatpush1.msra.mxu0 0.0
      %3212 = vmatprep.subr.mxu0 0.0
      %3213 = vmatpush1.msra.mxu0 0.0
      %3214 = vmatprep.subr.mxu0 0.0
      %3215 = vmatpush1.msra.mxu0 0.0
      %3216 = vmatprep.subr.mxu0 0.0
      %3217 = vmatpush1.msra.mxu0 0.0
      %3218 = vmatprep.subr.mxu0 0.0
      %3219 = vmatpush1.msra.mxu0 0.0
      %3220 = vmatprep.subr.mxu0 0.0
      %3221 = vmatpush1.msra.mxu0 0.0
      %3222 = vmatprep.subr.mxu0 0.0
      %3223 = vmatpush1.msra.mxu0 0.0
      %3224 = vmatprep.subr.mxu0 0.0
      %3225 = vmatpush1.msra.mxu0 0.0
      %3226 = vmatprep.subr.mxu0 0.0
      %3227 = vmatpush1.msra.mxu0 0.0
      %3228 = vmatprep.subr.mxu0 0.0
      %3229 = vmatpush1.msra.mxu0 0.0
      %3230 = vmatprep.subr.mxu0 0.0
      %3231 = vmatpush1.msra.mxu0 0.0
      %3232 = vmatprep.subr.mxu0 0.0
      %3233 = vmatpush1.msra.mxu0 0.0
      %3234 = vmatprep.subr.mxu0 0.0
      %3235 = vmatpush1.msra.mxu0 0.0
      %3236 = vmatprep.subr.mxu0 0.0
      %3237 = vmatpush1.msra.mxu0 0.0
      %3238 = vmatprep.subr.mxu0 0.0
      %3239 = vmatpush1.msra.mxu0 0.0
      %3240 = vmatprep.subr.mxu0 0.0
      %3241 = vmatpush1.msra.mxu0 0.0
      %3242 = vmatprep.subr.mxu0 0.0
      %3243 = vmatpush1.msra.mxu0 0.0
      %3244 = vmatprep.subr.mxu0 0.0
      %3245 = vmatpush1.msra.mxu0 0.0
      %3246 = vmatprep.subr.mxu0 0.0
      %3247 = vmatpush1.msra.mxu0 0.0
      %3248 = vmatprep.subr.mxu0 0.0
      %3249 = vmatpush1.msra.mxu0 0.0
      %3250 = vmatprep.subr.mxu0 0.0
      %3251 = vmatpush1.msra.mxu0 0.0
      %3252 = vmatprep.subr.mxu0 0.0
      %3253 = vmatpush1.msra.mxu0 0.0
      %3254 = vmatprep.subr.mxu0 0.0
      %3255 = vmatpush1.msra.mxu0 0.0
      %3256 = vmatprep.subr.mxu0 0.0
      %3257 = vmatpush1.msra.mxu0 0.0
      %3258 = vmatprep.subr.mxu0 0.0
      %3259 = vmatpush1.msra.mxu0 0.0
      %3260 = vmatprep.subr.mxu0 0.0
      %3261 = vmatpush1.msra.mxu0 0.0
      %3262 = vmatprep.subr.mxu0 0.0
      %3263 = vmatpush1.msra.mxu0 0.0
      %3264 = vmatprep.subr.mxu0 0.0
      %3265 = vmatpush1.msra.mxu0 0.0
      %3266 = vmatprep.subr.mxu0 0.0
      %3267 = vmatpush1.msra.mxu0 0.0
      %3268 = vmatprep.subr.mxu0 0.0
      %3269 = vmatpush1.msra.mxu0 0.0
      %3270 = vmatprep.subr.mxu0 0.0
      %3271 = vmatpush1.msra.mxu0 0.0
      %3272 = vmatprep.mubr.f32.mxu0 0.0
      %3273 = vmatmul.mubr.f32.gmra.mrb[0].mxu0 %v3203
      %v3274 = vpop.f32.mrb[0].mxu0
      %v3275 = vadd.f32 0.0, %v3274
      %v3276 = vpop.f32.mrb[0].mxu0
      %3277 = vmatprep.mubr.f32.mxu0 0.0
      %3278 = vmatmul.mubr.f32.gmra.mrb[0].mxu0 %v3206
      %v3279 = vpop.f32.mrb[0].mxu0
      %v3280 = vadd.f32 0.0, %v3279
      %v3281 = vpop.f32.mrb[0].mxu0
      %3282 = vdwg.mxu0
      %v3283 = vadd.f32 %v3188, %v3275
      %v3284 = vadd.f32 %v3193, %v3280
      %s3285 = scalar_lea.vmem %s3, 48
      %v3286 = vld [vmem:[%s3285] sm:$0xff]
      %v3287 = vld [vmem:[%s3285 + $0x8] sm:$0xff]
      %3288 = vrot.lane.b32.xlu0 %v3024, 118
      %v3289 = vpop.permute.xlu0 %3288
      %v3292 = vsel %vm843, %v3286, 0
      %v3295 = vsel %vm843, %v3287, 0
      %3297 = vmatprep.subr.mxu0 0.0
      %3298 = vmatpush1.msra.mxu0 %v3289
      %3299 = vmatprep.subr.mxu0 0.0
      %3300 = vmatpush1.msra.mxu0 0.0
      %3301 = vmatprep.subr.mxu0 0.0
      %3302 = vmatpush1.msra.mxu0 0.0
      %3303 = vmatprep.subr.mxu0 0.0
      %3304 = vmatpush1.msra.mxu0 0.0
      %3305 = vmatprep.subr.mxu0 0.0
      %3306 = vmatpush1.msra.mxu0 0.0
      %3307 = vmatprep.subr.mxu0 0.0
      %3308 = vmatpush1.msra.mxu0 0.0
      %3309 = vmatprep.subr.mxu0 0.0
      %3310 = vmatpush1.msra.mxu0 0.0
      %3311 = vmatprep.subr.mxu0 0.0
      %3312 = vmatpush1.msra.mxu0 0.0
      %3313 = vmatprep.subr.mxu0 0.0
      %3314 = vmatpush1.msra.mxu0 0.0
      %3315 = vmatprep.subr.mxu0 0.0
      %3316 = vmatpush1.msra.mxu0 0.0
      %3317 = vmatprep.subr.mxu0 0.0
      %3318 = vmatpush1.msra.mxu0 0.0
      %3319 = vmatprep.subr.mxu0 0.0
      %3320 = vmatpush1.msra.mxu0 0.0
      %3321 = vmatprep.subr.mxu0 0.0
      %3322 = vmatpush1.msra.mxu0 0.0
      %3323 = vmatprep.subr.mxu0 0.0
      %3324 = vmatpush1.msra.mxu0 0.0
      %3325 = vmatprep.subr.mxu0 0.0
      %3326 = vmatpush1.msra.mxu0 0.0
      %3327 = vmatprep.subr.mxu0 0.0
      %3328 = vmatpush1.msra.mxu0 0.0
      %3329 = vmatprep.subr.mxu0 0.0
      %3330 = vmatpush1.msra.mxu0 0.0
      %3331 = vmatprep.subr.mxu0 0.0
      %3332 = vmatpush1.msra.mxu0 0.0
      %3333 = vmatprep.subr.mxu0 0.0
      %3334 = vmatpush1.msra.mxu0 0.0
      %3335 = vmatprep.subr.mxu0 0.0
      %3336 = vmatpush1.msra.mxu0 0.0
      %3337 = vmatprep.subr.mxu0 0.0
      %3338 = vmatpush1.msra.mxu0 0.0
      %3339 = vmatprep.subr.mxu0 0.0
      %3340 = vmatpush1.msra.mxu0 0.0
      %3341 = vmatprep.subr.mxu0 0.0
      %3342 = vmatpush1.msra.mxu0 0.0
      %3343 = vmatprep.subr.mxu0 0.0
      %3344 = vmatpush1.msra.mxu0 0.0
      %3345 = vmatprep.subr.mxu0 0.0
      %3346 = vmatpush1.msra.mxu0 0.0
      %3347 = vmatprep.subr.mxu0 0.0
      %3348 = vmatpush1.msra.mxu0 0.0
      %3349 = vmatprep.subr.mxu0 0.0
      %3350 = vmatpush1.msra.mxu0 0.0
      %3351 = vmatprep.subr.mxu0 0.0
      %3352 = vmatpush1.msra.mxu0 0.0
      %3353 = vmatprep.subr.mxu0 0.0
      %3354 = vmatpush1.msra.mxu0 0.0
      %3355 = vmatprep.subr.mxu0 0.0
      %3356 = vmatpush1.msra.mxu0 0.0
      %3357 = vmatprep.subr.mxu0 0.0
      %3358 = vmatpush1.msra.mxu0 0.0
      %3359 = vmatprep.subr.mxu0 0.0
      %3360 = vmatpush1.msra.mxu0 0.0
      %3361 = vmatprep.mubr.f32.mxu0 0.0
      %3362 = vmatmul.mubr.f32.gmra.mrb[0].mxu0 %v3292
      %v3363 = vpop.f32.mrb[0].mxu0
      %v3364 = vadd.f32 0.0, %v3363
      %v3365 = vpop.f32.mrb[0].mxu0
      %3366 = vmatprep.mubr.f32.mxu0 0.0
      %3367 = vmatmul.mubr.f32.gmra.mrb[0].mxu0 %v3295
      %v3368 = vpop.f32.mrb[0].mxu0
      %v3369 = vadd.f32 0.0, %v3368
      %v3370 = vpop.f32.mrb[0].mxu0
      %3371 = vdwg.mxu0
      %v3372 = vadd.f32 %v3283, %v3364
      %v3373 = vadd.f32 %v3284, %v3369
      %s3374 = scalar_lea.vmem %s3, 64
      %v3375 = vld [vmem:[%s3374] sm:$0xff]
      %v3376 = vld [vmem:[%s3374 + $0x8] sm:$0xff]
      %3377 = vrot.lane.b32.xlu0 %v3024, 117
      %v3378 = vpop.permute.xlu0 %3377
      %v3381 = vsel %vm843, %v3375, 0
      %v3384 = vsel %vm843, %v3376, 0
      %3386 = vmatprep.subr.mxu0 0.0
      %3387 = vmatpush1.msra.mxu0 %v3378
      %3388 = vmatprep.subr.mxu0 0.0
      %3389 = vmatpush1.msra.mxu0 0.0
      %3390 = vmatprep.subr.mxu0 0.0
      %3391 = vmatpush1.msra.mxu0 0.0
      %3392 = vmatprep.subr.mxu0 0.0
      %3393 = vmatpush1.msra.mxu0 0.0
      %3394 = vmatprep.subr.mxu0 0.0
      %3395 = vmatpush1.msra.mxu0 0.0
      %3396 = vmatprep.subr.mxu0 0.0
      %3397 = vmatpush1.msra.mxu0 0.0
      %3398 = vmatprep.subr.mxu0 0.0
      %3399 = vmatpush1.msra.mxu0 0.0
      %3400 = vmatprep.subr.mxu0 0.0
      %3401 = vmatpush1.msra.mxu0 0.0
      %3402 = vmatprep.subr.mxu0 0.0
      %3403 = vmatpush1.msra.mxu0 0.0
      %3404 = vmatprep.subr.mxu0 0.0
      %3405 = vmatpush1.msra.mxu0 0.0
      %3406 = vmatprep.subr.mxu0 0.0
      %3407 = vmatpush1.msra.mxu0 0.0
      %3408 = vmatprep.subr.mxu0 0.0
      %3409 = vmatpush1.msra.mxu0 0.0
      %3410 = vmatprep.subr.mxu0 0.0
      %3411 = vmatpush1.msra.mxu0 0.0
      %3412 = vmatprep.subr.mxu0 0.0
      %3413 = vmatpush1.msra.mxu0 0.0
      %3414 = vmatprep.subr.mxu0 0.0
      %3415 = vmatpush1.msra.mxu0 0.0
      %3416 = vmatprep.subr.mxu0 0.0
      %3417 = vmatpush1.msra.mxu0 0.0
      %3418 = vmatprep.subr.mxu0 0.0
      %3419 = vmatpush1.msra.mxu0 0.0
      %3420 = vmatprep.subr.mxu0 0.0
      %3421 = vmatpush1.msra.mxu0 0.0
      %3422 = vmatprep.subr.mxu0 0.0
      %3423 = vmatpush1.msra.mxu0 0.0
      %3424 = vmatprep.subr.mxu0 0.0
      %3425 = vmatpush1.msra.mxu0 0.0
      %3426 = vmatprep.subr.mxu0 0.0
      %3427 = vmatpush1.msra.mxu0 0.0
      %3428 = vmatprep.subr.mxu0 0.0
      %3429 = vmatpush1.msra.mxu0 0.0
      %3430 = vmatprep.subr.mxu0 0.0
      %3431 = vmatpush1.msra.mxu0 0.0
      %3432 = vmatprep.subr.mxu0 0.0
      %3433 = vmatpush1.msra.mxu0 0.0
      %3434 = vmatprep.subr.mxu0 0.0
      %3435 = vmatpush1.msra.mxu0 0.0
      %3436 = vmatprep.subr.mxu0 0.0
      %3437 = vmatpush1.msra.mxu0 0.0
      %3438 = vmatprep.subr.mxu0 0.0
      %3439 = vmatpush1.msra.mxu0 0.0
      %3440 = vmatprep.subr.mxu0 0.0
      %3441 = vmatpush1.msra.mxu0 0.0
      %3442 = vmatprep.subr.mxu0 0.0
      %3443 = vmatpush1.msra.mxu0 0.0
      %3444 = vmatprep.subr.mxu0 0.0
      %3445 = vmatpush1.msra.mxu0 0.0
      %3446 = vmatprep.subr.mxu0 0.0
      %3447 = vmatpush1.msra.mxu0 0.0
      %3448 = vmatprep.subr.mxu0 0.0
      %3449 = vmatpush1.msra.mxu0 0.0
      %3450 = vmatprep.mubr.f32.mxu0 0.0
      %3451 = vmatmul.mubr.f32.gmra.mrb[0].mxu0 %v3381
      %v3452 = vpop.f32.mrb[0].mxu0
      %v3453 = vadd.f32 0.0, %v3452
      %v3454 = vpop.f32.mrb[0].mxu0
      %3455 = vmatprep.mubr.f32.mxu0 0.0
      %3456 = vmatmul.mubr.f32.gmra.mrb[0].mxu0 %v3384
      %v3457 = vpop.f32.mrb[0].mxu0
      %v3458 = vadd.f32 0.0, %v3457
      %v3459 = vpop.f32.mrb[0].mxu0
      %3460 = vdwg.mxu0
      %v3461 = vadd.f32 %v3372, %v3453
      %v3462 = vadd.f32 %v3373, %v3458
      %s3463 = scalar_lea.vmem %s3, 80
      %v3464 = vld [vmem:[%s3463] sm:$0xff]
      %v3465 = vld [vmem:[%s3463 + $0x8] sm:$0xff]
      %3466 = vrot.lane.b32.xlu0 %v3024, 116
      %v3467 = vpop.permute.xlu0 %3466
      %v3470 = vsel %vm843, %v3464, 0
      %v3473 = vsel %vm843, %v3465, 0
      %3475 = vmatprep.subr.mxu0 0.0
      %3476 = vmatpush1.msra.mxu0 %v3467
      %3477 = vmatprep.subr.mxu0 0.0
      %3478 = vmatpush1.msra.mxu0 0.0
      %3479 = vmatprep.subr.mxu0 0.0
      %3480 = vmatpush1.msra.mxu0 0.0
      %3481 = vmatprep.subr.mxu0 0.0
      %3482 = vmatpush1.msra.mxu0 0.0
      %3483 = vmatprep.subr.mxu0 0.0
      %3484 = vmatpush1.msra.mxu0 0.0
      %3485 = vmatprep.subr.mxu0 0.0
      %3486 = vmatpush1.msra.mxu0 0.0
      %3487 = vmatprep.subr.mxu0 0.0
      %3488 = vmatpush1.msra.mxu0 0.0
      %3489 = vmatprep.subr.mxu0 0.0
      %3490 = vmatpush1.msra.mxu0 0.0
      %3491 = vmatprep.subr.mxu0 0.0
      %3492 = vmatpush1.msra.mxu0 0.0
      %3493 = vmatprep.subr.mxu0 0.0
      %3494 = vmatpush1.msra.mxu0 0.0
      %3495 = vmatprep.subr.mxu0 0.0
      %3496 = vmatpush1.msra.mxu0 0.0
      %3497 = vmatprep.subr.mxu0 0.0
      %3498 = vmatpush1.msra.mxu0 0.0
      %3499 = vmatprep.subr.mxu0 0.0
      %3500 = vmatpush1.msra.mxu0 0.0
      %3501 = vmatprep.subr.mxu0 0.0
      %3502 = vmatpush1.msra.mxu0 0.0
      %3503 = vmatprep.subr.mxu0 0.0
      %3504 = vmatpush1.msra.mxu0 0.0
      %3505 = vmatprep.subr.mxu0 0.0
      %3506 = vmatpush1.msra.mxu0 0.0
      %3507 = vmatprep.subr.mxu0 0.0
      %3508 = vmatpush1.msra.mxu0 0.0
      %3509 = vmatprep.subr.mxu0 0.0
      %3510 = vmatpush1.msra.mxu0 0.0
      %3511 = vmatprep.subr.mxu0 0.0
      %3512 = vmatpush1.msra.mxu0 0.0
      %3513 = vmatprep.subr.mxu0 0.0
      %3514 = vmatpush1.msra.mxu0 0.0
      %3515 = vmatprep.subr.mxu0 0.0
      %3516 = vmatpush1.msra.mxu0 0.0
      %3517 = vmatprep.subr.mxu0 0.0
      %3518 = vmatpush1.msra.mxu0 0.0
      %3519 = vmatprep.subr.mxu0 0.0
      %3520 = vmatpush1.msra.mxu0 0.0
      %3521 = vmatprep.subr.mxu0 0.0
      %3522 = vmatpush1.msra.mxu0 0.0
      %3523 = vmatprep.subr.mxu0 0.0
      %3524 = vmatpush1.msra.mxu0 0.0
      %3525 = vmatprep.subr.mxu0 0.0
      %3526 = vmatpush1.msra.mxu0 0.0
      %3527 = vmatprep.subr.mxu0 0.0
      %3528 = vmatpush1.msra.mxu0 0.0
      %3529 = vmatprep.subr.mxu0 0.0
      %3530 = vmatpush1.msra.mxu0 0.0
      %3531 = vmatprep.subr.mxu0 0.0
      %3532 = vmatpush1.msra.mxu0 0.0
      %3533 = vmatprep.subr.mxu0 0.0
      %3534 = vmatpush1.msra.mxu0 0.0
      %3535 = vmatprep.subr.mxu0 0.0
      %3536 = vmatpush1.msra.mxu0 0.0
      %3537 = vmatprep.subr.mxu0 0.0
      %3538 = vmatpush1.msra.mxu0 0.0
      %3539 = vmatprep.mubr.f32.mxu0 0.0
      %3540 = vmatmul.mubr.f32.gmra.mrb[0].mxu0 %v3470
      %v3541 = vpop.f32.mrb[0].mxu0
      %v3542 = vadd.f32 0.0, %v3541
      %v3543 = vpop.f32.mrb[0].mxu0
      %3544 = vmatprep.mubr.f32.mxu0 0.0
      %3545 = vmatmul.mubr.f32.gmra.mrb[0].mxu0 %v3473
      %v3546 = vpop.f32.mrb[0].mxu0
      %v3547 = vadd.f32 0.0, %v3546
      %v3548 = vpop.f32.mrb[0].mxu0
      %3549 = vdwg.mxu0
      %v3550 = vadd.f32 %v3461, %v3542
      %v3551 = vadd.f32 %v3462, %v3547
      %s3552 = scalar_lea.vmem %s3, 96
      %v3553 = vld [vmem:[%s3552] sm:$0xff]
      %v3554 = vld [vmem:[%s3552 + $0x8] sm:$0xff]
      %3555 = vrot.lane.b32.xlu0 %v3024, 108
      %v3556 = vpop.permute.xlu0 %3555
      %v3559 = vsel %vm843, %v3553, 0
      %v3562 = vsel %vm843, %v3554, 0
      %3564 = vmatprep.subr.mxu0 0.0
      %3565 = vmatpush1.msra.mxu0 %v3556
      %3566 = vmatprep.subr.mxu0 0.0
      %3567 = vmatpush1.msra.mxu0 0.0
      %3568 = vmatprep.subr.mxu0 0.0
      %3569 = vmatpush1.msra.mxu0 0.0
      %3570 = vmatprep.subr.mxu0 0.0
      %3571 = vmatpush1.msra.mxu0 0.0
      %3572 = vmatprep.subr.mxu0 0.0
      %3573 = vmatpush1.msra.mxu0 0.0
      %3574 = vmatprep.subr.mxu0 0.0
      %3575 = vmatpush1.msra.mxu0 0.0
      %3576 = vmatprep.subr.mxu0 0.0
      %3577 = vmatpush1.msra.mxu0 0.0
      %3578 = vmatprep.subr.mxu0 0.0
      %3579 = vmatpush1.msra.mxu0 0.0
      %3580 = vmatprep.subr.mxu0 0.0
      %3581 = vmatpush1.msra.mxu0 0.0
      %3582 = vmatprep.subr.mxu0 0.0
      %3583 = vmatpush1.msra.mxu0 0.0
      %3584 = vmatprep.subr.mxu0 0.0
      %3585 = vmatpush1.msra.mxu0 0.0
      %3586 = vmatprep.subr.mxu0 0.0
      %3587 = vmatpush1.msra.mxu0 0.0
      %3588 = vmatprep.subr.mxu0 0.0
      %3589 = vmatpush1.msra.mxu0 0.0
      %3590 = vmatprep.subr.mxu0 0.0
      %3591 = vmatpush1.msra.mxu0 0.0
      %3592 = vmatprep.subr.mxu0 0.0
      %3593 = vmatpush1.msra.mxu0 0.0
      %3594 = vmatprep.subr.mxu0 0.0
      %3595 = vmatpush1.msra.mxu0 0.0
      %3596 = vmatprep.subr.mxu0 0.0
      %3597 = vmatpush1.msra.mxu0 0.0
      %3598 = vmatprep.subr.mxu0 0.0
      %3599 = vmatpush1.msra.mxu0 0.0
      %3600 = vmatprep.subr.mxu0 0.0
      %3601 = vmatpush1.msra.mxu0 0.0
      %3602 = vmatprep.subr.mxu0 0.0
      %3603 = vmatpush1.msra.mxu0 0.0
      %3604 = vmatprep.subr.mxu0 0.0
      %3605 = vmatpush1.msra.mxu0 0.0
      %3606 = vmatprep.subr.mxu0 0.0
      %3607 = vmatpush1.msra.mxu0 0.0
      %3608 = vmatprep.subr.mxu0 0.0
      %3609 = vmatpush1.msra.mxu0 0.0
      %3610 = vmatprep.subr.mxu0 0.0
      %3611 = vmatpush1.msra.mxu0 0.0
      %3612 = vmatprep.subr.mxu0 0.0
      %3613 = vmatpush1.msra.mxu0 0.0
      %3614 = vmatprep.subr.mxu0 0.0
      %3615 = vmatpush1.msra.mxu0 0.0
      %3616 = vmatprep.subr.mxu0 0.0
      %3617 = vmatpush1.msra.mxu0 0.0
      %3618 = vmatprep.subr.mxu0 0.0
      %3619 = vmatpush1.msra.mxu0 0.0
      %3620 = vmatprep.subr.mxu0 0.0
      %3621 = vmatpush1.msra.mxu0 0.0
      %3622 = vmatprep.subr.mxu0 0.0
      %3623 = vmatpush1.msra.mxu0 0.0
      %3624 = vmatprep.subr.mxu0 0.0
      %3625 = vmatpush1.msra.mxu0 0.0
      %3626 = vmatprep.subr.mxu0 0.0
      %3627 = vmatpush1.msra.mxu0 0.0
      %3628 = vmatprep.mubr.f32.mxu0 0.0
      %3629 = vmatmul.mubr.f32.gmra.mrb[0].mxu0 %v3559
      %v3630 = vpop.f32.mrb[0].mxu0
      %v3631 = vadd.f32 0.0, %v3630
      %v3632 = vpop.f32.mrb[0].mxu0
      %3633 = vmatprep.mubr.f32.mxu0 0.0
      %3634 = vmatmul.mubr.f32.gmra.mrb[0].mxu0 %v3562
      %v3635 = vpop.f32.mrb[0].mxu0
      %v3636 = vadd.f32 0.0, %v3635
      %v3637 = vpop.f32.mrb[0].mxu0
      %3638 = vdwg.mxu0
      %v3639 = vadd.f32 %v3550, %v3631
      %v3640 = vadd.f32 %v3551, %v3636
      %s3641 = scalar_lea.vmem %s3, 112
      %v3642 = vld [vmem:[%s3641] sm:$0xff]
      %v3643 = vld [vmem:[%s3641 + $0x8] sm:$0xff]
      %3644 = vrot.lane.b32.xlu0 %v3024, 107
      %v3645 = vpop.permute.xlu0 %3644
      %v3648 = vsel %vm843, %v3642, 0
      %v3651 = vsel %vm843, %v3643, 0
      %3653 = vmatprep.subr.mxu0 0.0
      %3654 = vmatpush1.msra.mxu0 %v3645
      %3655 = vmatprep.subr.mxu0 0.0
      %3656 = vmatpush1.msra.mxu0 0.0
      %3657 = vmatprep.subr.mxu0 0.0
      %3658 = vmatpush1.msra.mxu0 0.0
      %3659 = vmatprep.subr.mxu0 0.0
      %3660 = vmatpush1.msra.mxu0 0.0
      %3661 = vmatprep.subr.mxu0 0.0
      %3662 = vmatpush1.msra.mxu0 0.0
      %3663 = vmatprep.subr.mxu0 0.0
      %3664 = vmatpush1.msra.mxu0 0.0
      %3665 = vmatprep.subr.mxu0 0.0
      %3666 = vmatpush1.msra.mxu0 0.0
      %3667 = vmatprep.subr.mxu0 0.0
      %3668 = vmatpush1.msra.mxu0 0.0
      %3669 = vmatprep.subr.mxu0 0.0
      %3670 = vmatpush1.msra.mxu0 0.0
      %3671 = vmatprep.subr.mxu0 0.0
      %3672 = vmatpush1.msra.mxu0 0.0
      %3673 = vmatprep.subr.mxu0 0.0
      %3674 = vmatpush1.msra.mxu0 0.0
      %3675 = vmatprep.subr.mxu0 0.0
      %3676 = vmatpush1.msra.mxu0 0.0
      %3677 = vmatprep.subr.mxu0 0.0
      %3678 = vmatpush1.msra.mxu0 0.0
      %3679 = vmatprep.subr.mxu0 0.0
      %3680 = vmatpush1.msra.mxu0 0.0
      %3681 = vmatprep.subr.mxu0 0.0
      %3682 = vmatpush1.msra.mxu0 0.0
      %3683 = vmatprep.subr.mxu0 0.0
      %3684 = vmatpush1.msra.mxu0 0.0
      %3685 = vmatprep.subr.mxu0 0.0
      %3686 = vmatpush1.msra.mxu0 0.0
      %3687 = vmatprep.subr.mxu0 0.0
      %3688 = vmatpush1.msra.mxu0 0.0
      %3689 = vmatprep.subr.mxu0 0.0
      %3690 = vmatpush1.msra.mxu0 0.0
      %3691 = vmatprep.subr.mxu0 0.0
      %3692 = vmatpush1.msra.mxu0 0.0
      %3693 = vmatprep.subr.mxu0 0.0
      %3694 = vmatpush1.msra.mxu0 0.0
      %3695 = vmatprep.subr.mxu0 0.0
      %3696 = vmatpush1.msra.mxu0 0.0
      %3697 = vmatprep.subr.mxu0 0.0
      %3698 = vmatpush1.msra.mxu0 0.0
      %3699 = vmatprep.subr.mxu0 0.0
      %3700 = vmatpush1.msra.mxu0 0.0
      %3701 = vmatprep.subr.mxu0 0.0
      %3702 = vmatpush1.msra.mxu0 0.0
      %3703 = vmatprep.subr.mxu0 0.0
      %3704 = vmatpush1.msra.mxu0 0.0
      %3705 = vmatprep.subr.mxu0 0.0
      %3706 = vmatpush1.msra.mxu0 0.0
      %3707 = vmatprep.subr.mxu0 0.0
      %3708 = vmatpush1.msra.mxu0 0.0
      %3709 = vmatprep.subr.mxu0 0.0
      %3710 = vmatpush1.msra.mxu0 0.0
      %3711 = vmatprep.subr.mxu0 0.0
      %3712 = vmatpush1.msra.mxu0 0.0
      %3713 = vmatprep.subr.mxu0 0.0
      %3714 = vmatpush1.msra.mxu0 0.0
      %3715 = vmatprep.subr.mxu0 0.0
      %3716 = vmatpush1.msra.mxu0 0.0
      %3717 = vmatprep.mubr.f32.mxu0 0.0
      %3718 = vmatmul.mubr.f32.gmra.mrb[0].mxu0 %v3648
      %v3719 = vpop.f32.mrb[0].mxu0
      %v3720 = vadd.f32 0.0, %v3719
      %v3721 = vpop.f32.mrb[0].mxu0
      %3722 = vmatprep.mubr.f32.mxu0 0.0
      %3723 = vmatmul.mubr.f32.gmra.mrb[0].mxu0 %v3651
      %v3724 = vpop.f32.mrb[0].mxu0
      %v3725 = vadd.f32 0.0, %v3724
      %v3726 = vpop.f32.mrb[0].mxu0
      %3727 = vdwg.mxu0
      %v3728 = vadd.f32 %v3639, %v3720
      %v3729 = vadd.f32 %v3640, %v3725
      %s3730 = scalar_lea.vmem %s3, 128
      %v3731 = vld [vmem:[%s3730] sm:$0xff]
      %v3732 = vld [vmem:[%s3730 + $0x8] sm:$0xff]
      %3733 = vrot.lane.b32.xlu0 %v3024, 106
      %v3734 = vpop.permute.xlu0 %3733
      %v3737 = vsel %vm843, %v3731, 0
      %v3740 = vsel %vm843, %v3732, 0
      %3742 = vmatprep.subr.mxu0 0.0
      %3743 = vmatpush1.msra.mxu0 %v3734
      %3744 = vmatprep.subr.mxu0 0.0
      %3745 = vmatpush1.msra.mxu0 0.0
      %3746 = vmatprep.subr.mxu0 0.0
      %3747 = vmatpush1.msra.mxu0 0.0
      %3748 = vmatprep.subr.mxu0 0.0
      %3749 = vmatpush1.msra.mxu0 0.0
      %3750 = vmatprep.subr.mxu0 0.0
      %3751 = vmatpush1.msra.mxu0 0.0
      %3752 = vmatprep.subr.mxu0 0.0
      %3753 = vmatpush1.msra.mxu0 0.0
      %3754 = vmatprep.subr.mxu0 0.0
      %3755 = vmatpush1.msra.mxu0 0.0
      %3756 = vmatprep.subr.mxu0 0.0
      %3757 = vmatpush1.msra.mxu0 0.0
      %3758 = vmatprep.subr.mxu0 0.0
      %3759 = vmatpush1.msra.mxu0 0.0
      %3760 = vmatprep.subr.mxu0 0.0
      %3761 = vmatpush1.msra.mxu0 0.0
      %3762 = vmatprep.subr.mxu0 0.0
      %3763 = vmatpush1.msra.mxu0 0.0
      %3764 = vmatprep.subr.mxu0 0.0
      %3765 = vmatpush1.msra.mxu0 0.0
      %3766 = vmatprep.subr.mxu0 0.0
      %3767 = vmatpush1.msra.mxu0 0.0
      %3768 = vmatprep.subr.mxu0 0.0
      %3769 = vmatpush1.msra.mxu0 0.0
      %3770 = vmatprep.subr.mxu0 0.0
      %3771 = vmatpush1.msra.mxu0 0.0
      %3772 = vmatprep.subr.mxu0 0.0
      %3773 = vmatpush1.msra.mxu0 0.0
      %3774 = vmatprep.subr.mxu0 0.0
      %3775 = vmatpush1.msra.mxu0 0.0
      %3776 = vmatprep.subr.mxu0 0.0
      %3777 = vmatpush1.msra.mxu0 0.0
      %3778 = vmatprep.subr.mxu0 0.0
      %3779 = vmatpush1.msra.mxu0 0.0
      %3780 = vmatprep.subr.mxu0 0.0
      %3781 = vmatpush1.msra.mxu0 0.0
      %3782 = vmatprep.subr.mxu0 0.0
      %3783 = vmatpush1.msra.mxu0 0.0
      %3784 = vmatprep.subr.mxu0 0.0
      %3785 = vmatpush1.msra.mxu0 0.0
      %3786 = vmatprep.subr.mxu0 0.0
      %3787 = vmatpush1.msra.mxu0 0.0
      %3788 = vmatprep.subr.mxu0 0.0
      %3789 = vmatpush1.msra.mxu0 0.0
      %3790 = vmatprep.subr.mxu0 0.0
      %3791 = vmatpush1.msra.mxu0 0.0
      %3792 = vmatprep.subr.mxu0 0.0
      %3793 = vmatpush1.msra.mxu0 0.0
      %3794 = vmatprep.subr.mxu0 0.0
      %3795 = vmatpush1.msra.mxu0 0.0
      %3796 = vmatprep.subr.mxu0 0.0
      %3797 = vmatpush1.msra.mxu0 0.0
      %3798 = vmatprep.subr.mxu0 0.0
      %3799 = vmatpush1.msra.mxu0 0.0
      %3800 = vmatprep.subr.mxu0 0.0
      %3801 = vmatpush1.msra.mxu0 0.0
      %3802 = vmatprep.subr.mxu0 0.0
      %3803 = vmatpush1.msra.mxu0 0.0
      %3804 = vmatprep.subr.mxu0 0.0
      %3805 = vmatpush1.msra.mxu0 0.0
      %3806 = vmatprep.mubr.f32.mxu0 0.0
      %3807 = vmatmul.mubr.f32.gmra.mrb[0].mxu0 %v3737
      %v3808 = vpop.f32.mrb[0].mxu0
      %v3809 = vadd.f32 0.0, %v3808
      %v3810 = vpop.f32.mrb[0].mxu0
      %3811 = vmatprep.mubr.f32.mxu0 0.0
      %3812 = vmatmul.mubr.f32.gmra.mrb[0].mxu0 %v3740
      %v3813 = vpop.f32.mrb[0].mxu0
      %v3814 = vadd.f32 0.0, %v3813
      %v3815 = vpop.f32.mrb[0].mxu0
      %3816 = vdwg.mxu0
      %v3817 = vadd.f32 %v3728, %v3809
      %v3818 = vadd.f32 %v3729, %v3814
      %v3819 = vld [vmem:[%s4] sm:$0xff]
      %v3820 = vld [vmem:[%s4 + $0x8] sm:$0xff]
      %3822 = vset.pattern.permute.xlu0 0
      %3823 = vperm.xlu0 %3822, %v3819
      %v3824 = vpop.permute.xlu0 %3823
      %3827 = vset.pattern.permute.xlu0 0
      %3828 = vperm.xlu0 %3827, %v3820
      %v3829 = vpop.permute.xlu0 %3828
      %v3831 = vadd.f32 %v3817, %v3824
      %v3832 = vadd.f32 %v3818, %v3829
      %v3833 = vmax.f32 %v3831, 0.0
      %v3834 = vmax.f32 %v3832, 0.0
      %v3835 = vld [vmem:[%s13] sm:$0xff]
      %v3836 = vld [vmem:[%s13 + $0x8] sm:$0xff]
      %v3837 = vld [vmem:[%s13 + $0x10] sm:$0xff]
      %v3838 = vld [vmem:[%s13 + $0x18] sm:$0xff]
      %v3839 = vld [vmem:[%s13 + $0x20] sm:$0xff]
      %v3840 = vld [vmem:[%s13 + $0x28] sm:$0xff]
      %v3841 = vld [vmem:[%s13 + $0x30] sm:$0xff]
      %v3842 = vld [vmem:[%s13 + $0x38] sm:$0xff]
      %v3843 = vld [vmem:[%s13 + $0x40] sm:$0xff]
      %v3844 = vld [vmem:[%s13 + $0x48] sm:$0xff]
      %v3845 = vld [vmem:[%s13 + $0x50] sm:$0xff]
      %v3846 = vld [vmem:[%s13 + $0x58] sm:$0xff]
      %v3847 = vld [vmem:[%s13 + $0x60] sm:$0xf]
      %vm3848 = vcmask 818176
      %v3850 = vsel %vm3848, %v3833, 0
      %v3853 = vsel %vm3848, %v3834, 0
      %v3856 = vsel %vm2316, %v3847, 0
      %3858 = vmatprep.subr.mxu0 0.0
      %3859 = vmatpush1.msra.mxu0 %v3835
      %3860 = vmatprep.subr.mxu0 0.0
      %3861 = vmatpush1.msra.mxu0 %v3836
      %3862 = vmatprep.subr.mxu0 0.0
      %3863 = vmatpush1.msra.mxu0 %v3837
      %3864 = vmatprep.subr.mxu0 0.0
      %3865 = vmatpush1.msra.mxu0 %v3838
      %3866 = vmatprep.subr.mxu0 0.0
      %3867 = vmatpush1.msra.mxu0 %v3839
      %3868 = vmatprep.subr.mxu0 0.0
      %3869 = vmatpush1.msra.mxu0 %v3840
      %3870 = vmatprep.subr.mxu0 0.0
      %3871 = vmatpush1.msra.mxu0 %v3841
      %3872 = vmatprep.subr.mxu0 0.0
      %3873 = vmatpush1.msra.mxu0 %v3842
      %3874 = vmatprep.subr.mxu0 0.0
      %3875 = vmatpush1.msra.mxu0 %v3843
      %3876 = vmatprep.subr.mxu0 0.0
      %3877 = vmatpush1.msra.mxu0 %v3844
      %3878 = vmatprep.subr.mxu0 0.0
      %3879 = vmatpush1.msra.mxu0 %v3845
      %3880 = vmatprep.subr.mxu0 0.0
      %3881 = vmatpush1.msra.mxu0 %v3846
      %3882 = vmatprep.subr.mxu0 0.0
      %3883 = vmatpush1.msra.mxu0 %v3856
      %3884 = vmatprep.subr.mxu0 0.0
      %3885 = vmatpush1.msra.mxu0 0.0
      %3886 = vmatprep.subr.mxu0 0.0
      %3887 = vmatpush1.msra.mxu0 0.0
      %3888 = vmatprep.subr.mxu0 0.0
      %3889 = vmatpush1.msra.mxu0 0.0
      %3890 = vmatprep.subr.mxu0 0.0
      %3891 = vmatpush1.msra.mxu0 0.0
      %3892 = vmatprep.subr.mxu0 0.0
      %3893 = vmatpush1.msra.mxu0 0.0
      %3894 = vmatprep.subr.mxu0 0.0
      %3895 = vmatpush1.msra.mxu0 0.0
      %3896 = vmatprep.subr.mxu0 0.0
      %3897 = vmatpush1.msra.mxu0 0.0
      %3898 = vmatprep.subr.mxu0 0.0
      %3899 = vmatpush1.msra.mxu0 0.0
      %3900 = vmatprep.subr.mxu0 0.0
      %3901 = vmatpush1.msra.mxu0 0.0
      %3902 = vmatprep.subr.mxu0 0.0
      %3903 = vmatpush1.msra.mxu0 0.0
      %3904 = vmatprep.subr.mxu0 0.0
      %3905 = vmatpush1.msra.mxu0 0.0
      %3906 = vmatprep.subr.mxu0 0.0
      %3907 = vmatpush1.msra.mxu0 0.0
      %3908 = vmatprep.subr.mxu0 0.0
      %3909 = vmatpush1.msra.mxu0 0.0
      %3910 = vmatprep.subr.mxu0 0.0
      %3911 = vmatpush1.msra.mxu0 0.0
      %3912 = vmatprep.subr.mxu0 0.0
      %3913 = vmatpush1.msra.mxu0 0.0
      %3914 = vmatprep.subr.mxu0 0.0
      %3915 = vmatpush1.msra.mxu0 0.0
      %3916 = vmatprep.subr.mxu0 0.0
      %3917 = vmatpush1.msra.mxu0 0.0
      %3918 = vmatprep.subr.mxu0 0.0
      %3919 = vmatpush1.msra.mxu0 0.0
      %3920 = vmatprep.subr.mxu0 0.0
      %3921 = vmatpush1.msra.mxu0 0.0
      %3922 = vmatprep.mubr.f32.mxu0 0.0
      %3923 = vmatmul.mubr.f32.gmra.mrb[0].mxu0 %v3850
      %v3924 = vpop.f32.mrb[0].mxu0
      %v3925 = vadd.f32 0.0, %v3924
      %v3926 = vpop.f32.mrb[0].mxu0
      %3927 = vmatprep.mubr.f32.mxu0 0.0
      %3928 = vmatmul.mubr.f32.gmra.mrb[0].mxu0 %v3853
      %v3929 = vpop.f32.mrb[0].mxu0
      %v3930 = vadd.f32 0.0, %v3929
      %v3931 = vpop.f32.mrb[0].mxu0
      %3932 = vdwg.mxu0
      %s3933 = scalar_lea.vmem %s13, 104
      %v3934 = vld [vmem:[%s3933] sm:$0xff]
      %v3935 = vld [vmem:[%s3933 + $0x8] sm:$0xff]
      %v3936 = vld [vmem:[%s3933 + $0x10] sm:$0xff]
      %v3937 = vld [vmem:[%s3933 + $0x18] sm:$0xff]
      %v3938 = vld [vmem:[%s3933 + $0x20] sm:$0xff]
      %v3939 = vld [vmem:[%s3933 + $0x28] sm:$0xff]
      %v3940 = vld [vmem:[%s3933 + $0x30] sm:$0xff]
      %v3941 = vld [vmem:[%s3933 + $0x38] sm:$0xff]
      %v3942 = vld [vmem:[%s3933 + $0x40] sm:$0xff]
      %v3943 = vld [vmem:[%s3933 + $0x48] sm:$0xff]
      %v3944 = vld [vmem:[%s3933 + $0x50] sm:$0xff]
      %v3945 = vld [vmem:[%s3933 + $0x58] sm:$0xff]
      %v3946 = vld [vmem:[%s3933 + $0x60] sm:$0xf]
      %v3948 = vsel %vm2316, %v3946, 0
      %3950 = vmatprep.subr.mxu0 0.0
      %3951 = vmatpush1.msra.mxu0 %v3934
      %3952 = vmatprep.subr.mxu0 0.0
      %3953 = vmatpush1.msra.mxu0 %v3935
      %3954 = vmatprep.subr.mxu0 0.0
      %3955 = vmatpush1.msra.mxu0 %v3936
      %3956 = vmatprep.subr.mxu0 0.0
      %3957 = vmatpush1.msra.mxu0 %v3937
      %3958 = vmatprep.subr.mxu0 0.0
      %3959 = vmatpush1.msra.mxu0 %v3938
      %3960 = vmatprep.subr.mxu0 0.0
      %3961 = vmatpush1.msra.mxu0 %v3939
      %3962 = vmatprep.subr.mxu0 0.0
      %3963 = vmatpush1.msra.mxu0 %v3940
      %3964 = vmatprep.subr.mxu0 0.0
      %3965 = vmatpush1.msra.mxu0 %v3941
      %3966 = vmatprep.subr.mxu0 0.0
      %3967 = vmatpush1.msra.mxu0 %v3942
      %3968 = vmatprep.subr.mxu0 0.0
      %3969 = vmatpush1.msra.mxu0 %v3943
      %3970 = vmatprep.subr.mxu0 0.0
      %3971 = vmatpush1.msra.mxu0 %v3944
      %3972 = vmatprep.subr.mxu0 0.0
      %3973 = vmatpush1.msra.mxu0 %v3945
      %3974 = vmatprep.subr.mxu0 0.0
      %3975 = vmatpush1.msra.mxu0 %v3948
      %3976 = vmatprep.subr.mxu0 0.0
      %3977 = vmatpush1.msra.mxu0 0.0
      %3978 = vmatprep.subr.mxu0 0.0
      %3979 = vmatpush1.msra.mxu0 0.0
      %3980 = vmatprep.subr.mxu0 0.0
      %3981 = vmatpush1.msra.mxu0 0.0
      %3982 = vmatprep.subr.mxu0 0.0
      %3983 = vmatpush1.msra.mxu0 0.0
      %3984 = vmatprep.subr.mxu0 0.0
      %3985 = vmatpush1.msra.mxu0 0.0
      %3986 = vmatprep.subr.mxu0 0.0
      %3987 = vmatpush1.msra.mxu0 0.0
      %3988 = vmatprep.subr.mxu0 0.0
      %3989 = vmatpush1.msra.mxu0 0.0
      %3990 = vmatprep.subr.mxu0 0.0
      %3991 = vmatpush1.msra.mxu0 0.0
      %3992 = vmatprep.subr.mxu0 0.0
      %3993 = vmatpush1.msra.mxu0 0.0
      %3994 = vmatprep.subr.mxu0 0.0
      %3995 = vmatpush1.msra.mxu0 0.0
      %3996 = vmatprep.subr.mxu0 0.0
      %3997 = vmatpush1.msra.mxu0 0.0
      %3998 = vmatprep.subr.mxu0 0.0
      %3999 = vmatpush1.msra.mxu0 0.0
      %4000 = vmatprep.subr.mxu0 0.0
      %4001 = vmatpush1.msra.mxu0 0.0
      %4002 = vmatprep.subr.mxu0 0.0
      %4003 = vmatpush1.msra.mxu0 0.0
      %4004 = vmatprep.subr.mxu0 0.0
      %4005 = vmatpush1.msra.mxu0 0.0
      %4006 = vmatprep.subr.mxu0 0.0
      %4007 = vmatpush1.msra.mxu0 0.0
      %4008 = vmatprep.subr.mxu0 0.0
      %4009 = vmatpush1.msra.mxu0 0.0
      %4010 = vmatprep.subr.mxu0 0.0
      %4011 = vmatpush1.msra.mxu0 0.0
      %4012 = vmatprep.subr.mxu0 0.0
      %4013 = vmatpush1.msra.mxu0 0.0
      %4014 = vmatprep.mubr.f32.mxu0 0.0
      %4015 = vmatmul.mubr.f32.gmra.mrb[0].mxu0 %v3850
      %v4016 = vpop.f32.mrb[0].mxu0
      %v4017 = vadd.f32 0.0, %v4016
      %v4018 = vpop.f32.mrb[0].mxu0
      %4019 = vmatprep.mubr.f32.mxu0 0.0
      %4020 = vmatmul.mubr.f32.gmra.mrb[0].mxu0 %v3853
      %v4021 = vpop.f32.mrb[0].mxu0
      %v4022 = vadd.f32 0.0, %v4021
      %v4023 = vpop.f32.mrb[0].mxu0
      %4024 = vdwg.mxu0
      %s4025 = scalar_lea.vmem %s13, 208
      %v4026 = vld [vmem:[%s4025] sm:$0xff]
      %v4027 = vld [vmem:[%s4025 + $0x8] sm:$0xff]
      %v4028 = vld [vmem:[%s4025 + $0x10] sm:$0xff]
      %v4029 = vld [vmem:[%s4025 + $0x18] sm:$0xff]
      %v4030 = vld [vmem:[%s4025 + $0x20] sm:$0xff]
      %v4031 = vld [vmem:[%s4025 + $0x28] sm:$0xff]
      %v4032 = vld [vmem:[%s4025 + $0x30] sm:$0xff]
      %v4033 = vld [vmem:[%s4025 + $0x38] sm:$0xff]
      %v4034 = vld [vmem:[%s4025 + $0x40] sm:$0xff]
      %v4035 = vld [vmem:[%s4025 + $0x48] sm:$0xff]
      %v4036 = vld [vmem:[%s4025 + $0x50] sm:$0xff]
      %v4037 = vld [vmem:[%s4025 + $0x58] sm:$0xff]
      %v4038 = vld [vmem:[%s4025 + $0x60] sm:$0xf]
      %v4040 = vsel %vm2316, %v4038, 0
      %4042 = vmatprep.subr.mxu0 0.0
      %4043 = vmatpush1.msra.mxu0 %v4026
      %4044 = vmatprep.subr.mxu0 0.0
      %4045 = vmatpush1.msra.mxu0 %v4027
      %4046 = vmatprep.subr.mxu0 0.0
      %4047 = vmatpush1.msra.mxu0 %v4028
      %4048 = vmatprep.subr.mxu0 0.0
      %4049 = vmatpush1.msra.mxu0 %v4029
      %4050 = vmatprep.subr.mxu0 0.0
      %4051 = vmatpush1.msra.mxu0 %v4030
      %4052 = vmatprep.subr.mxu0 0.0
      %4053 = vmatpush1.msra.mxu0 %v4031
      %4054 = vmatprep.subr.mxu0 0.0
      %4055 = vmatpush1.msra.mxu0 %v4032
      %4056 = vmatprep.subr.mxu0 0.0
      %4057 = vmatpush1.msra.mxu0 %v4033
      %4058 = vmatprep.subr.mxu0 0.0
      %4059 = vmatpush1.msra.mxu0 %v4034
      %4060 = vmatprep.subr.mxu0 0.0
      %4061 = vmatpush1.msra.mxu0 %v4035
      %4062 = vmatprep.subr.mxu0 0.0
      %4063 = vmatpush1.msra.mxu0 %v4036
      %4064 = vmatprep.subr.mxu0 0.0
      %4065 = vmatpush1.msra.mxu0 %v4037
      %4066 = vmatprep.subr.mxu0 0.0
      %4067 = vmatpush1.msra.mxu0 %v4040
      %4068 = vmatprep.subr.mxu0 0.0
      %4069 = vmatpush1.msra.mxu0 0.0
      %4070 = vmatprep.subr.mxu0 0.0
      %4071 = vmatpush1.msra.mxu0 0.0
      %4072 = vmatprep.subr.mxu0 0.0
      %4073 = vmatpush1.msra.mxu0 0.0
      %4074 = vmatprep.subr.mxu0 0.0
      %4075 = vmatpush1.msra.mxu0 0.0
      %4076 = vmatprep.subr.mxu0 0.0
      %4077 = vmatpush1.msra.mxu0 0.0
      %4078 = vmatprep.subr.mxu0 0.0
      %4079 = vmatpush1.msra.mxu0 0.0
      %4080 = vmatprep.subr.mxu0 0.0
      %4081 = vmatpush1.msra.mxu0 0.0
      %4082 = vmatprep.subr.mxu0 0.0
      %4083 = vmatpush1.msra.mxu0 0.0
      %4084 = vmatprep.subr.mxu0 0.0
      %4085 = vmatpush1.msra.mxu0 0.0
      %4086 = vmatprep.subr.mxu0 0.0
      %4087 = vmatpush1.msra.mxu0 0.0
      %4088 = vmatprep.subr.mxu0 0.0
      %4089 = vmatpush1.msra.mxu0 0.0
      %4090 = vmatprep.subr.mxu0 0.0
      %4091 = vmatpush1.msra.mxu0 0.0
      %4092 = vmatprep.subr.mxu0 0.0
      %4093 = vmatpush1.msra.mxu0 0.0
      %4094 = vmatprep.subr.mxu0 0.0
      %4095 = vmatpush1.msra.mxu0 0.0
      %4096 = vmatprep.subr.mxu0 0.0
      %4097 = vmatpush1.msra.mxu0 0.0
      %4098 = vmatprep.subr.mxu0 0.0
      %4099 = vmatpush1.msra.mxu0 0.0
      %4100 = vmatprep.subr.mxu0 0.0
      %4101 = vmatpush1.msra.mxu0 0.0
      %4102 = vmatprep.subr.mxu0 0.0
      %4103 = vmatpush1.msra.mxu0 0.0
      %4104 = vmatprep.subr.mxu0 0.0
      %4105 = vmatpush1.msra.mxu0 0.0
      %4106 = vmatprep.mubr.f32.mxu0 0.0
      %4107 = vmatmul.mubr.f32.gmra.mrb[0].mxu0 %v3850
      %v4108 = vpop.f32.mrb[0].mxu0
      %v4109 = vadd.f32 0.0, %v4108
      %v4110 = vpop.f32.mrb[0].mxu0
      %4111 = vmatprep.mubr.f32.mxu0 0.0
      %4112 = vmatmul.mubr.f32.gmra.mrb[0].mxu0 %v3853
      %v4113 = vpop.f32.mrb[0].mxu0
      %v4114 = vadd.f32 0.0, %v4113
      %v4115 = vpop.f32.mrb[0].mxu0
      %4116 = vdwg.mxu0
      %s4117 = scalar_lea.vmem %s13, 312
      %v4118 = vld [vmem:[%s4117] sm:$0xff]
      %v4119 = vld [vmem:[%s4117 + $0x8] sm:$0xff]
      %v4120 = vld [vmem:[%s4117 + $0x10] sm:$0xff]
      %v4121 = vld [vmem:[%s4117 + $0x18] sm:$0xff]
      %v4122 = vld [vmem:[%s4117 + $0x20] sm:$0xff]
      %v4123 = vld [vmem:[%s4117 + $0x28] sm:$0xff]
      %v4124 = vld [vmem:[%s4117 + $0x30] sm:$0xff]
      %v4125 = vld [vmem:[%s4117 + $0x38] sm:$0xff]
      %v4126 = vld [vmem:[%s4117 + $0x40] sm:$0xff]
      %v4127 = vld [vmem:[%s4117 + $0x48] sm:$0xff]
      %v4128 = vld [vmem:[%s4117 + $0x50] sm:$0xff]
      %v4129 = vld [vmem:[%s4117 + $0x58] sm:$0xff]
      %v4130 = vld [vmem:[%s4117 + $0x60] sm:$0xf]
      %v4132 = vsel %vm2316, %v4130, 0
      %4134 = vmatprep.subr.mxu0 0.0
      %4135 = vmatpush1.msra.mxu0 %v4118
      %4136 = vmatprep.subr.mxu0 0.0
      %4137 = vmatpush1.msra.mxu0 %v4119
      %4138 = vmatprep.subr.mxu0 0.0
      %4139 = vmatpush1.msra.mxu0 %v4120
      %4140 = vmatprep.subr.mxu0 0.0
      %4141 = vmatpush1.msra.mxu0 %v4121
      %4142 = vmatprep.subr.mxu0 0.0
      %4143 = vmatpush1.msra.mxu0 %v4122
      %4144 = vmatprep.subr.mxu0 0.0
      %4145 = vmatpush1.msra.mxu0 %v4123
      %4146 = vmatprep.subr.mxu0 0.0
      %4147 = vmatpush1.msra.mxu0 %v4124
      %4148 = vmatprep.subr.mxu0 0.0
      %4149 = vmatpush1.msra.mxu0 %v4125
      %4150 = vmatprep.subr.mxu0 0.0
      %4151 = vmatpush1.msra.mxu0 %v4126
      %4152 = vmatprep.subr.mxu0 0.0
      %4153 = vmatpush1.msra.mxu0 %v4127
      %4154 = vmatprep.subr.mxu0 0.0
      %4155 = vmatpush1.msra.mxu0 %v4128
      %4156 = vmatprep.subr.mxu0 0.0
      %4157 = vmatpush1.msra.mxu0 %v4129
      %4158 = vmatprep.subr.mxu0 0.0
      %4159 = vmatpush1.msra.mxu0 %v4132
      %4160 = vmatprep.subr.mxu0 0.0
      %4161 = vmatpush1.msra.mxu0 0.0
      %4162 = vmatprep.subr.mxu0 0.0
      %4163 = vmatpush1.msra.mxu0 0.0
      %4164 = vmatprep.subr.mxu0 0.0
      %4165 = vmatpush1.msra.mxu0 0.0
      %4166 = vmatprep.subr.mxu0 0.0
      %4167 = vmatpush1.msra.mxu0 0.0
      %4168 = vmatprep.subr.mxu0 0.0
      %4169 = vmatpush1.msra.mxu0 0.0
      %4170 = vmatprep.subr.mxu0 0.0
      %4171 = vmatpush1.msra.mxu0 0.0
      %4172 = vmatprep.subr.mxu0 0.0
      %4173 = vmatpush1.msra.mxu0 0.0
      %4174 = vmatprep.subr.mxu0 0.0
      %4175 = vmatpush1.msra.mxu0 0.0
      %4176 = vmatprep.subr.mxu0 0.0
      %4177 = vmatpush1.msra.mxu0 0.0
      %4178 = vmatprep.subr.mxu0 0.0
      %4179 = vmatpush1.msra.mxu0 0.0
      %4180 = vmatprep.subr.mxu0 0.0
      %4181 = vmatpush1.msra.mxu0 0.0
      %4182 = vmatprep.subr.mxu0 0.0
      %4183 = vmatpush1.msra.mxu0 0.0
      %4184 = vmatprep.subr.mxu0 0.0
      %4185 = vmatpush1.msra.mxu0 0.0
      %4186 = vmatprep.subr.mxu0 0.0
      %4187 = vmatpush1.msra.mxu0 0.0
      %4188 = vmatprep.subr.mxu0 0.0
      %4189 = vmatpush1.msra.mxu0 0.0
      %4190 = vmatprep.subr.mxu0 0.0
      %4191 = vmatpush1.msra.mxu0 0.0
      %4192 = vmatprep.subr.mxu0 0.0
      %4193 = vmatpush1.msra.mxu0 0.0
      %4194 = vmatprep.subr.mxu0 0.0
      %4195 = vmatpush1.msra.mxu0 0.0
      %4196 = vmatprep.subr.mxu0 0.0
      %4197 = vmatpush1.msra.mxu0 0.0
      %4198 = vmatprep.mubr.f32.mxu0 0.0
      %4199 = vmatmul.mubr.f32.gmra.mrb[0].mxu0 %v3850
      %v4200 = vpop.f32.mrb[0].mxu0
      %v4201 = vadd.f32 0.0, %v4200
      %v4202 = vpop.f32.mrb[0].mxu0
      %4203 = vmatprep.mubr.f32.mxu0 0.0
      %4204 = vmatmul.mubr.f32.gmra.mrb[0].mxu0 %v3853
      %v4205 = vpop.f32.mrb[0].mxu0
      %v4206 = vadd.f32 0.0, %v4205
      %v4207 = vpop.f32.mrb[0].mxu0
      %4208 = vdwg.mxu0
      %v4209 = vmax.f32 %v3925, %v4017
      %v4210 = vmax.f32 %v3930, %v4022
      %v4211 = vmax.f32 %v4109, %v4201
      %v4212 = vmax.f32 %v4114, %v4206
      %v4213 = vmax.f32 %v4209, %v4211
      %v4214 = vmax.f32 %v4210, %v4212
      %4217 = vrot.lane.b32.xlu0 %v4213, 7
      %v4218 = vpop.permute.xlu0 %4217
      %4219 = vrot.lane.b32.xlu0 %v4214, 7
      %v4220 = vpop.permute.xlu0 %4219
      %vm4223 = vcmask 351288
      %4224 = vst.msk [vmem:[#allocation4] sm:$0xff] %vm4223, %v4218
      %4225 = vst.msk [vmem:[#allocation4 + $0x8] sm:$0xff] %vm4223, %v4220
      %v4226 = vld [vmem:[#allocation4] sm:$0xff]
      %v4227 = vld [vmem:[#allocation4 + $0x8] sm:$0xff]
      %v4228 = vld [vmem:[%s5] sm:$0xff]
      %s4229 = scalar_lea.vmem %s5, 8
      %v4230 = vld [vmem:[%s4229] sm:$0xff]
      %4233 = vrot.lane.b32.xlu0 %v4226, 127
      %v4234 = vpop.permute.xlu0 %4233
      %4235 = vrot.lane.b32.xlu0 %v4227, 127
      %v4236 = vpop.permute.xlu0 %4235
      %vm4239 = vcmask 130048
      %v4241 = vsel %vm4239, %v4230, 0
      %4243 = vmatprep.subr.mxu0 0.0
      %4244 = vmatpush1.msra.mxu0 %v4234
      %4245 = vmatprep.subr.mxu0 0.0
      %4246 = vmatpush1.msra.mxu0 %v4236
      %4247 = vmatprep.subr.mxu0 0.0
      %4248 = vmatpush1.msra.mxu0 0.0
      %4249 = vmatprep.subr.mxu0 0.0
      %4250 = vmatpush1.msra.mxu0 0.0
      %4251 = vmatprep.subr.mxu0 0.0
      %4252 = vmatpush1.msra.mxu0 0.0
      %4253 = vmatprep.subr.mxu0 0.0
      %4254 = vmatpush1.msra.mxu0 0.0
      %4255 = vmatprep.subr.mxu0 0.0
      %4256 = vmatpush1.msra.mxu0 0.0
      %4257 = vmatprep.subr.mxu0 0.0
      %4258 = vmatpush1.msra.mxu0 0.0
      %4259 = vmatprep.subr.mxu0 0.0
      %4260 = vmatpush1.msra.mxu0 0.0
      %4261 = vmatprep.subr.mxu0 0.0
      %4262 = vmatpush1.msra.mxu0 0.0
      %4263 = vmatprep.subr.mxu0 0.0
      %4264 = vmatpush1.msra.mxu0 0.0
      %4265 = vmatprep.subr.mxu0 0.0
      %4266 = vmatpush1.msra.mxu0 0.0
      %4267 = vmatprep.subr.mxu0 0.0
      %4268 = vmatpush1.msra.mxu0 0.0
      %4269 = vmatprep.subr.mxu0 0.0
      %4270 = vmatpush1.msra.mxu0 0.0
      %4271 = vmatprep.subr.mxu0 0.0
      %4272 = vmatpush1.msra.mxu0 0.0
      %4273 = vmatprep.subr.mxu0 0.0
      %4274 = vmatpush1.msra.mxu0 0.0
      %4275 = vmatprep.subr.mxu0 0.0
      %4276 = vmatpush1.msra.mxu0 0.0
      %4277 = vmatprep.subr.mxu0 0.0
      %4278 = vmatpush1.msra.mxu0 0.0
      %4279 = vmatprep.subr.mxu0 0.0
      %4280 = vmatpush1.msra.mxu0 0.0
      %4281 = vmatprep.subr.mxu0 0.0
      %4282 = vmatpush1.msra.mxu0 0.0
      %4283 = vmatprep.subr.mxu0 0.0
      %4284 = vmatpush1.msra.mxu0 0.0
      %4285 = vmatprep.subr.mxu0 0.0
      %4286 = vmatpush1.msra.mxu0 0.0
      %4287 = vmatprep.subr.mxu0 0.0
      %4288 = vmatpush1.msra.mxu0 0.0
      %4289 = vmatprep.subr.mxu0 0.0
      %4290 = vmatpush1.msra.mxu0 0.0
      %4291 = vmatprep.subr.mxu0 0.0
      %4292 = vmatpush1.msra.mxu0 0.0
      %4293 = vmatprep.subr.mxu0 0.0
      %4294 = vmatpush1.msra.mxu0 0.0
      %4295 = vmatprep.subr.mxu0 0.0
      %4296 = vmatpush1.msra.mxu0 0.0
      %4297 = vmatprep.subr.mxu0 0.0
      %4298 = vmatpush1.msra.mxu0 0.0
      %4299 = vmatprep.subr.mxu0 0.0
      %4300 = vmatpush1.msra.mxu0 0.0
      %4301 = vmatprep.subr.mxu0 0.0
      %4302 = vmatpush1.msra.mxu0 0.0
      %4303 = vmatprep.subr.mxu0 0.0
      %4304 = vmatpush1.msra.mxu0 0.0
      %4305 = vmatprep.subr.mxu0 0.0
      %4306 = vmatpush1.msra.mxu0 0.0
      %4307 = vmatprep.mubr.f32.mxu0 0.0
      %4308 = vmatmul.mubr.f32.gmra.mrb[0].mxu0 %v4241
      %v4309 = vpop.f32.mrb[0].mxu0
      %v4310 = vadd.f32 0.0, %v4309
      %v4311 = vpop.f32.mrb[0].mxu0
      %4312 = vdwg.mxu0
      %v4314 = vsel %vm4239, %v4228, 0
      %4316 = vmatprep.subr.mxu0 0.0
      %4317 = vmatpush1.msra.mxu0 %v4226
      %4318 = vmatprep.subr.mxu0 0.0
      %4319 = vmatpush1.msra.mxu0 %v4227
      %4320 = vmatprep.subr.mxu0 0.0
      %4321 = vmatpush1.msra.mxu0 0.0
      %4322 = vmatprep.subr.mxu0 0.0
      %4323 = vmatpush1.msra.mxu0 0.0
      %4324 = vmatprep.subr.mxu0 0.0
      %4325 = vmatpush1.msra.mxu0 0.0
      %4326 = vmatprep.subr.mxu0 0.0
      %4327 = vmatpush1.msra.mxu0 0.0
      %4328 = vmatprep.subr.mxu0 0.0
      %4329 = vmatpush1.msra.mxu0 0.0
      %4330 = vmatprep.subr.mxu0 0.0
      %4331 = vmatpush1.msra.mxu0 0.0
      %4332 = vmatprep.subr.mxu0 0.0
      %4333 = vmatpush1.msra.mxu0 0.0
      %4334 = vmatprep.subr.mxu0 0.0
      %4335 = vmatpush1.msra.mxu0 0.0
      %4336 = vmatprep.subr.mxu0 0.0
      %4337 = vmatpush1.msra.mxu0 0.0
      %4338 = vmatprep.subr.mxu0 0.0
      %4339 = vmatpush1.msra.mxu0 0.0
      %4340 = vmatprep.subr.mxu0 0.0
      %4341 = vmatpush1.msra.mxu0 0.0
      %4342 = vmatprep.subr.mxu0 0.0
      %4343 = vmatpush1.msra.mxu0 0.0
      %4344 = vmatprep.subr.mxu0 0.0
      %4345 = vmatpush1.msra.mxu0 0.0
      %4346 = vmatprep.subr.mxu0 0.0
      %4347 = vmatpush1.msra.mxu0 0.0
      %4348 = vmatprep.subr.mxu0 0.0
      %4349 = vmatpush1.msra.mxu0 0.0
      %4350 = vmatprep.subr.mxu0 0.0
      %4351 = vmatpush1.msra.mxu0 0.0
      %4352 = vmatprep.subr.mxu0 0.0
      %4353 = vmatpush1.msra.mxu0 0.0
      %4354 = vmatprep.subr.mxu0 0.0
      %4355 = vmatpush1.msra.mxu0 0.0
      %4356 = vmatprep.subr.mxu0 0.0
      %4357 = vmatpush1.msra.mxu0 0.0
      %4358 = vmatprep.subr.mxu0 0.0
      %4359 = vmatpush1.msra.mxu0 0.0
      %4360 = vmatprep.subr.mxu0 0.0
      %4361 = vmatpush1.msra.mxu0 0.0
      %4362 = vmatprep.subr.mxu0 0.0
      %4363 = vmatpush1.msra.mxu0 0.0
      %4364 = vmatprep.subr.mxu0 0.0
      %4365 = vmatpush1.msra.mxu0 0.0
      %4366 = vmatprep.subr.mxu0 0.0
      %4367 = vmatpush1.msra.mxu0 0.0
      %4368 = vmatprep.subr.mxu0 0.0
      %4369 = vmatpush1.msra.mxu0 0.0
      %4370 = vmatprep.subr.mxu0 0.0
      %4371 = vmatpush1.msra.mxu0 0.0
      %4372 = vmatprep.subr.mxu0 0.0
      %4373 = vmatpush1.msra.mxu0 0.0
      %4374 = vmatprep.subr.mxu0 0.0
      %4375 = vmatpush1.msra.mxu0 0.0
      %4376 = vmatprep.subr.mxu0 0.0
      %4377 = vmatpush1.msra.mxu0 0.0
      %4378 = vmatprep.subr.mxu0 0.0
      %4379 = vmatpush1.msra.mxu0 0.0
      %4380 = vmatprep.mubr.f32.mxu0 0.0
      %4381 = vmatmul.mubr.f32.gmra.mrb[0].mxu0 %v4314
      %v4382 = vpop.f32.mrb[0].mxu0
      %v4383 = vadd.f32 %v4310, %v4382
      %v4384 = vpop.f32.mrb[0].mxu0
      %4385 = vdwg.mxu0
      %s4386 = scalar_lea.vmem %s5, 16
      %v4387 = vld [vmem:[%s4386] sm:$0xff]
      %4388 = vrot.lane.b32.xlu0 %v4226, 126
      %v4389 = vpop.permute.xlu0 %4388
      %4390 = vrot.lane.b32.xlu0 %v4227, 126
      %v4391 = vpop.permute.xlu0 %4390
      %v4395 = vsel %vm4239, %v4387, 0
      %4397 = vmatprep.subr.mxu0 0.0
      %4398 = vmatpush1.msra.mxu0 %v4389
      %4399 = vmatprep.subr.mxu0 0.0
      %4400 = vmatpush1.msra.mxu0 %v4391
      %4401 = vmatprep.subr.mxu0 0.0
      %4402 = vmatpush1.msra.mxu0 0.0
      %4403 = vmatprep.subr.mxu0 0.0
      %4404 = vmatpush1.msra.mxu0 0.0
      %4405 = vmatprep.subr.mxu0 0.0
      %4406 = vmatpush1.msra.mxu0 0.0
      %4407 = vmatprep.subr.mxu0 0.0
      %4408 = vmatpush1.msra.mxu0 0.0
      %4409 = vmatprep.subr.mxu0 0.0
      %4410 = vmatpush1.msra.mxu0 0.0
      %4411 = vmatprep.subr.mxu0 0.0
      %4412 = vmatpush1.msra.mxu0 0.0
      %4413 = vmatprep.subr.mxu0 0.0
      %4414 = vmatpush1.msra.mxu0 0.0
      %4415 = vmatprep.subr.mxu0 0.0
      %4416 = vmatpush1.msra.mxu0 0.0
      %4417 = vmatprep.subr.mxu0 0.0
      %4418 = vmatpush1.msra.mxu0 0.0
      %4419 = vmatprep.subr.mxu0 0.0
      %4420 = vmatpush1.msra.mxu0 0.0
      %4421 = vmatprep.subr.mxu0 0.0
      %4422 = vmatpush1.msra.mxu0 0.0
      %4423 = vmatprep.subr.mxu0 0.0
      %4424 = vmatpush1.msra.mxu0 0.0
      %4425 = vmatprep.subr.mxu0 0.0
      %4426 = vmatpush1.msra.mxu0 0.0
      %4427 = vmatprep.subr.mxu0 0.0
      %4428 = vmatpush1.msra.mxu0 0.0
      %4429 = vmatprep.subr.mxu0 0.0
      %4430 = vmatpush1.msra.mxu0 0.0
      %4431 = vmatprep.subr.mxu0 0.0
      %4432 = vmatpush1.msra.mxu0 0.0
      %4433 = vmatprep.subr.mxu0 0.0
      %4434 = vmatpush1.msra.mxu0 0.0
      %4435 = vmatprep.subr.mxu0 0.0
      %4436 = vmatpush1.msra.mxu0 0.0
      %4437 = vmatprep.subr.mxu0 0.0
      %4438 = vmatpush1.msra.mxu0 0.0
      %4439 = vmatprep.subr.mxu0 0.0
      %4440 = vmatpush1.msra.mxu0 0.0
      %4441 = vmatprep.subr.mxu0 0.0
      %4442 = vmatpush1.msra.mxu0 0.0
      %4443 = vmatprep.subr.mxu0 0.0
      %4444 = vmatpush1.msra.mxu0 0.0
      %4445 = vmatprep.subr.mxu0 0.0
      %4446 = vmatpush1.msra.mxu0 0.0
      %4447 = vmatprep.subr.mxu0 0.0
      %4448 = vmatpush1.msra.mxu0 0.0
      %4449 = vmatprep.subr.mxu0 0.0
      %4450 = vmatpush1.msra.mxu0 0.0
      %4451 = vmatprep.subr.mxu0 0.0
      %4452 = vmatpush1.msra.mxu0 0.0
      %4453 = vmatprep.subr.mxu0 0.0
      %4454 = vmatpush1.msra.mxu0 0.0
      %4455 = vmatprep.subr.mxu0 0.0
      %4456 = vmatpush1.msra.mxu0 0.0
      %4457 = vmatprep.subr.mxu0 0.0
      %4458 = vmatpush1.msra.mxu0 0.0
      %4459 = vmatprep.subr.mxu0 0.0
      %4460 = vmatpush1.msra.mxu0 0.0
      %4461 = vmatprep.mubr.f32.mxu0 0.0
      %4462 = vmatmul.mubr.f32.gmra.mrb[0].mxu0 %v4395
      %v4463 = vpop.f32.mrb[0].mxu0
      %v4464 = vadd.f32 0.0, %v4463
      %v4465 = vpop.f32.mrb[0].mxu0
      %4466 = vdwg.mxu0
      %v4467 = vadd.f32 %v4383, %v4464
      %s4468 = scalar_lea.vmem %s5, 24
      %v4469 = vld [vmem:[%s4468] sm:$0xff]
      %4470 = vrot.lane.b32.xlu0 %v4226, 122
      %v4471 = vpop.permute.xlu0 %4470
      %4472 = vrot.lane.b32.xlu0 %v4227, 122
      %v4473 = vpop.permute.xlu0 %4472
      %v4477 = vsel %vm4239, %v4469, 0
      %4479 = vmatprep.subr.mxu0 0.0
      %4480 = vmatpush1.msra.mxu0 %v4471
      %4481 = vmatprep.subr.mxu0 0.0
      %4482 = vmatpush1.msra.mxu0 %v4473
      %4483 = vmatprep.subr.mxu0 0.0
      %4484 = vmatpush1.msra.mxu0 0.0
      %4485 = vmatprep.subr.mxu0 0.0
      %4486 = vmatpush1.msra.mxu0 0.0
      %4487 = vmatprep.subr.mxu0 0.0
      %4488 = vmatpush1.msra.mxu0 0.0
      %4489 = vmatprep.subr.mxu0 0.0
      %4490 = vmatpush1.msra.mxu0 0.0
      %4491 = vmatprep.subr.mxu0 0.0
      %4492 = vmatpush1.msra.mxu0 0.0
      %4493 = vmatprep.subr.mxu0 0.0
      %4494 = vmatpush1.msra.mxu0 0.0
      %4495 = vmatprep.subr.mxu0 0.0
      %4496 = vmatpush1.msra.mxu0 0.0
      %4497 = vmatprep.subr.mxu0 0.0
      %4498 = vmatpush1.msra.mxu0 0.0
      %4499 = vmatprep.subr.mxu0 0.0
      %4500 = vmatpush1.msra.mxu0 0.0
      %4501 = vmatprep.subr.mxu0 0.0
      %4502 = vmatpush1.msra.mxu0 0.0
      %4503 = vmatprep.subr.mxu0 0.0
      %4504 = vmatpush1.msra.mxu0 0.0
      %4505 = vmatprep.subr.mxu0 0.0
      %4506 = vmatpush1.msra.mxu0 0.0
      %4507 = vmatprep.subr.mxu0 0.0
      %4508 = vmatpush1.msra.mxu0 0.0
      %4509 = vmatprep.subr.mxu0 0.0
      %4510 = vmatpush1.msra.mxu0 0.0
      %4511 = vmatprep.subr.mxu0 0.0
      %4512 = vmatpush1.msra.mxu0 0.0
      %4513 = vmatprep.subr.mxu0 0.0
      %4514 = vmatpush1.msra.mxu0 0.0
      %4515 = vmatprep.subr.mxu0 0.0
      %4516 = vmatpush1.msra.mxu0 0.0
      %4517 = vmatprep.subr.mxu0 0.0
      %4518 = vmatpush1.msra.mxu0 0.0
      %4519 = vmatprep.subr.mxu0 0.0
      %4520 = vmatpush1.msra.mxu0 0.0
      %4521 = vmatprep.subr.mxu0 0.0
      %4522 = vmatpush1.msra.mxu0 0.0
      %4523 = vmatprep.subr.mxu0 0.0
      %4524 = vmatpush1.msra.mxu0 0.0
      %4525 = vmatprep.subr.mxu0 0.0
      %4526 = vmatpush1.msra.mxu0 0.0
      %4527 = vmatprep.subr.mxu0 0.0
      %4528 = vmatpush1.msra.mxu0 0.0
      %4529 = vmatprep.subr.mxu0 0.0
      %4530 = vmatpush1.msra.mxu0 0.0
      %4531 = vmatprep.subr.mxu0 0.0
      %4532 = vmatpush1.msra.mxu0 0.0
      %4533 = vmatprep.subr.mxu0 0.0
      %4534 = vmatpush1.msra.mxu0 0.0
      %4535 = vmatprep.subr.mxu0 0.0
      %4536 = vmatpush1.msra.mxu0 0.0
      %4537 = vmatprep.subr.mxu0 0.0
      %4538 = vmatpush1.msra.mxu0 0.0
      %4539 = vmatprep.subr.mxu0 0.0
      %4540 = vmatpush1.msra.mxu0 0.0
      %4541 = vmatprep.subr.mxu0 0.0
      %4542 = vmatpush1.msra.mxu0 0.0
      %4543 = vmatprep.mubr.f32.mxu0 0.0
      %4544 = vmatmul.mubr.f32.gmra.mrb[0].mxu0 %v4477
      %v4545 = vpop.f32.mrb[0].mxu0
      %v4546 = vadd.f32 0.0, %v4545
      %v4547 = vpop.f32.mrb[0].mxu0
      %4548 = vdwg.mxu0
      %v4549 = vadd.f32 %v4467, %v4546
      %s4550 = scalar_lea.vmem %s5, 32
      %v4551 = vld [vmem:[%s4550] sm:$0xff]
      %4552 = vrot.lane.b32.xlu0 %v4226, 121
      %v4553 = vpop.permute.xlu0 %4552
      %4554 = vrot.lane.b32.xlu0 %v4227, 121
      %v4555 = vpop.permute.xlu0 %4554
      %v4559 = vsel %vm4239, %v4551, 0
      %4561 = vmatprep.subr.mxu0 0.0
      %4562 = vmatpush1.msra.mxu0 %v4553
      %4563 = vmatprep.subr.mxu0 0.0
      %4564 = vmatpush1.msra.mxu0 %v4555
      %4565 = vmatprep.subr.mxu0 0.0
      %4566 = vmatpush1.msra.mxu0 0.0
      %4567 = vmatprep.subr.mxu0 0.0
      %4568 = vmatpush1.msra.mxu0 0.0
      %4569 = vmatprep.subr.mxu0 0.0
      %4570 = vmatpush1.msra.mxu0 0.0
      %4571 = vmatprep.subr.mxu0 0.0
      %4572 = vmatpush1.msra.mxu0 0.0
      %4573 = vmatprep.subr.mxu0 0.0
      %4574 = vmatpush1.msra.mxu0 0.0
      %4575 = vmatprep.subr.mxu0 0.0
      %4576 = vmatpush1.msra.mxu0 0.0
      %4577 = vmatprep.subr.mxu0 0.0
      %4578 = vmatpush1.msra.mxu0 0.0
      %4579 = vmatprep.subr.mxu0 0.0
      %4580 = vmatpush1.msra.mxu0 0.0
      %4581 = vmatprep.subr.mxu0 0.0
      %4582 = vmatpush1.msra.mxu0 0.0
      %4583 = vmatprep.subr.mxu0 0.0
      %4584 = vmatpush1.msra.mxu0 0.0
      %4585 = vmatprep.subr.mxu0 0.0
      %4586 = vmatpush1.msra.mxu0 0.0
      %4587 = vmatprep.subr.mxu0 0.0
      %4588 = vmatpush1.msra.mxu0 0.0
      %4589 = vmatprep.subr.mxu0 0.0
      %4590 = vmatpush1.msra.mxu0 0.0
      %4591 = vmatprep.subr.mxu0 0.0
      %4592 = vmatpush1.msra.mxu0 0.0
      %4593 = vmatprep.subr.mxu0 0.0
      %4594 = vmatpush1.msra.mxu0 0.0
      %4595 = vmatprep.subr.mxu0 0.0
      %4596 = vmatpush1.msra.mxu0 0.0
      %4597 = vmatprep.subr.mxu0 0.0
      %4598 = vmatpush1.msra.mxu0 0.0
      %4599 = vmatprep.subr.mxu0 0.0
      %4600 = vmatpush1.msra.mxu0 0.0
      %4601 = vmatprep.subr.mxu0 0.0
      %4602 = vmatpush1.msra.mxu0 0.0
      %4603 = vmatprep.subr.mxu0 0.0
      %4604 = vmatpush1.msra.mxu0 0.0
      %4605 = vmatprep.subr.mxu0 0.0
      %4606 = vmatpush1.msra.mxu0 0.0
      %4607 = vmatprep.subr.mxu0 0.0
      %4608 = vmatpush1.msra.mxu0 0.0
      %4609 = vmatprep.subr.mxu0 0.0
      %4610 = vmatpush1.msra.mxu0 0.0
      %4611 = vmatprep.subr.mxu0 0.0
      %4612 = vmatpush1.msra.mxu0 0.0
      %4613 = vmatprep.subr.mxu0 0.0
      %4614 = vmatpush1.msra.mxu0 0.0
      %4615 = vmatprep.subr.mxu0 0.0
      %4616 = vmatpush1.msra.mxu0 0.0
      %4617 = vmatprep.subr.mxu0 0.0
      %4618 = vmatpush1.msra.mxu0 0.0
      %4619 = vmatprep.subr.mxu0 0.0
      %4620 = vmatpush1.msra.mxu0 0.0
      %4621 = vmatprep.subr.mxu0 0.0
      %4622 = vmatpush1.msra.mxu0 0.0
      %4623 = vmatprep.subr.mxu0 0.0
      %4624 = vmatpush1.msra.mxu0 0.0
      %4625 = vmatprep.mubr.f32.mxu0 0.0
      %4626 = vmatmul.mubr.f32.gmra.mrb[0].mxu0 %v4559
      %v4627 = vpop.f32.mrb[0].mxu0
      %v4628 = vadd.f32 0.0, %v4627
      %v4629 = vpop.f32.mrb[0].mxu0
      %4630 = vdwg.mxu0
      %v4631 = vadd.f32 %v4549, %v4628
      %s4632 = scalar_lea.vmem %s5, 40
      %v4633 = vld [vmem:[%s4632] sm:$0xff]
      %4634 = vrot.lane.b32.xlu0 %v4226, 120
      %v4635 = vpop.permute.xlu0 %4634
      %4636 = vrot.lane.b32.xlu0 %v4227, 120
      %v4637 = vpop.permute.xlu0 %4636
      %v4641 = vsel %vm4239, %v4633, 0
      %4643 = vmatprep.subr.mxu0 0.0
      %4644 = vmatpush1.msra.mxu0 %v4635
      %4645 = vmatprep.subr.mxu0 0.0
      %4646 = vmatpush1.msra.mxu0 %v4637
      %4647 = vmatprep.subr.mxu0 0.0
      %4648 = vmatpush1.msra.mxu0 0.0
      %4649 = vmatprep.subr.mxu0 0.0
      %4650 = vmatpush1.msra.mxu0 0.0
      %4651 = vmatprep.subr.mxu0 0.0
      %4652 = vmatpush1.msra.mxu0 0.0
      %4653 = vmatprep.subr.mxu0 0.0
      %4654 = vmatpush1.msra.mxu0 0.0
      %4655 = vmatprep.subr.mxu0 0.0
      %4656 = vmatpush1.msra.mxu0 0.0
      %4657 = vmatprep.subr.mxu0 0.0
      %4658 = vmatpush1.msra.mxu0 0.0
      %4659 = vmatprep.subr.mxu0 0.0
      %4660 = vmatpush1.msra.mxu0 0.0
      %4661 = vmatprep.subr.mxu0 0.0
      %4662 = vmatpush1.msra.mxu0 0.0
      %4663 = vmatprep.subr.mxu0 0.0
      %4664 = vmatpush1.msra.mxu0 0.0
      %4665 = vmatprep.subr.mxu0 0.0
      %4666 = vmatpush1.msra.mxu0 0.0
      %4667 = vmatprep.subr.mxu0 0.0
      %4668 = vmatpush1.msra.mxu0 0.0
      %4669 = vmatprep.subr.mxu0 0.0
      %4670 = vmatpush1.msra.mxu0 0.0
      %4671 = vmatprep.subr.mxu0 0.0
      %4672 = vmatpush1.msra.mxu0 0.0
      %4673 = vmatprep.subr.mxu0 0.0
      %4674 = vmatpush1.msra.mxu0 0.0
      %4675 = vmatprep.subr.mxu0 0.0
      %4676 = vmatpush1.msra.mxu0 0.0
      %4677 = vmatprep.subr.mxu0 0.0
      %4678 = vmatpush1.msra.mxu0 0.0
      %4679 = vmatprep.subr.mxu0 0.0
      %4680 = vmatpush1.msra.mxu0 0.0
      %4681 = vmatprep.subr.mxu0 0.0
      %4682 = vmatpush1.msra.mxu0 0.0
      %4683 = vmatprep.subr.mxu0 0.0
      %4684 = vmatpush1.msra.mxu0 0.0
      %4685 = vmatprep.subr.mxu0 0.0
      %4686 = vmatpush1.msra.mxu0 0.0
      %4687 = vmatprep.subr.mxu0 0.0
      %4688 = vmatpush1.msra.mxu0 0.0
      %4689 = vmatprep.subr.mxu0 0.0
      %4690 = vmatpush1.msra.mxu0 0.0
      %4691 = vmatprep.subr.mxu0 0.0
      %4692 = vmatpush1.msra.mxu0 0.0
      %4693 = vmatprep.subr.mxu0 0.0
      %4694 = vmatpush1.msra.mxu0 0.0
      %4695 = vmatprep.subr.mxu0 0.0
      %4696 = vmatpush1.msra.mxu0 0.0
      %4697 = vmatprep.subr.mxu0 0.0
      %4698 = vmatpush1.msra.mxu0 0.0
      %4699 = vmatprep.subr.mxu0 0.0
      %4700 = vmatpush1.msra.mxu0 0.0
      %4701 = vmatprep.subr.mxu0 0.0
      %4702 = vmatpush1.msra.mxu0 0.0
      %4703 = vmatprep.subr.mxu0 0.0
      %4704 = vmatpush1.msra.mxu0 0.0
      %4705 = vmatprep.subr.mxu0 0.0
      %4706 = vmatpush1.msra.mxu0 0.0
      %4707 = vmatprep.mubr.f32.mxu0 0.0
      %4708 = vmatmul.mubr.f32.gmra.mrb[0].mxu0 %v4641
      %v4709 = vpop.f32.mrb[0].mxu0
      %v4710 = vadd.f32 0.0, %v4709
      %v4711 = vpop.f32.mrb[0].mxu0
      %4712 = vdwg.mxu0
      %v4713 = vadd.f32 %v4631, %v4710
      %s4714 = scalar_lea.vmem %s5, 48
      %v4715 = vld [vmem:[%s4714] sm:$0xff]
      %4716 = vrot.lane.b32.xlu0 %v4226, 116
      %v4717 = vpop.permute.xlu0 %4716
      %4718 = vrot.lane.b32.xlu0 %v4227, 116
      %v4719 = vpop.permute.xlu0 %4718
      %v4723 = vsel %vm4239, %v4715, 0
      %4725 = vmatprep.subr.mxu0 0.0
      %4726 = vmatpush1.msra.mxu0 %v4717
      %4727 = vmatprep.subr.mxu0 0.0
      %4728 = vmatpush1.msra.mxu0 %v4719
      %4729 = vmatprep.subr.mxu0 0.0
      %4730 = vmatpush1.msra.mxu0 0.0
      %4731 = vmatprep.subr.mxu0 0.0
      %4732 = vmatpush1.msra.mxu0 0.0
      %4733 = vmatprep.subr.mxu0 0.0
      %4734 = vmatpush1.msra.mxu0 0.0
      %4735 = vmatprep.subr.mxu0 0.0
      %4736 = vmatpush1.msra.mxu0 0.0
      %4737 = vmatprep.subr.mxu0 0.0
      %4738 = vmatpush1.msra.mxu0 0.0
      %4739 = vmatprep.subr.mxu0 0.0
      %4740 = vmatpush1.msra.mxu0 0.0
      %4741 = vmatprep.subr.mxu0 0.0
      %4742 = vmatpush1.msra.mxu0 0.0
      %4743 = vmatprep.subr.mxu0 0.0
      %4744 = vmatpush1.msra.mxu0 0.0
      %4745 = vmatprep.subr.mxu0 0.0
      %4746 = vmatpush1.msra.mxu0 0.0
      %4747 = vmatprep.subr.mxu0 0.0
      %4748 = vmatpush1.msra.mxu0 0.0
      %4749 = vmatprep.subr.mxu0 0.0
      %4750 = vmatpush1.msra.mxu0 0.0
      %4751 = vmatprep.subr.mxu0 0.0
      %4752 = vmatpush1.msra.mxu0 0.0
      %4753 = vmatprep.subr.mxu0 0.0
      %4754 = vmatpush1.msra.mxu0 0.0
      %4755 = vmatprep.subr.mxu0 0.0
      %4756 = vmatpush1.msra.mxu0 0.0
      %4757 = vmatprep.subr.mxu0 0.0
      %4758 = vmatpush1.msra.mxu0 0.0
      %4759 = vmatprep.subr.mxu0 0.0
      %4760 = vmatpush1.msra.mxu0 0.0
      %4761 = vmatprep.subr.mxu0 0.0
      %4762 = vmatpush1.msra.mxu0 0.0
      %4763 = vmatprep.subr.mxu0 0.0
      %4764 = vmatpush1.msra.mxu0 0.0
      %4765 = vmatprep.subr.mxu0 0.0
      %4766 = vmatpush1.msra.mxu0 0.0
      %4767 = vmatprep.subr.mxu0 0.0
      %4768 = vmatpush1.msra.mxu0 0.0
      %4769 = vmatprep.subr.mxu0 0.0
      %4770 = vmatpush1.msra.mxu0 0.0
      %4771 = vmatprep.subr.mxu0 0.0
      %4772 = vmatpush1.msra.mxu0 0.0
      %4773 = vmatprep.subr.mxu0 0.0
      %4774 = vmatpush1.msra.mxu0 0.0
      %4775 = vmatprep.subr.mxu0 0.0
      %4776 = vmatpush1.msra.mxu0 0.0
      %4777 = vmatprep.subr.mxu0 0.0
      %4778 = vmatpush1.msra.mxu0 0.0
      %4779 = vmatprep.subr.mxu0 0.0
      %4780 = vmatpush1.msra.mxu0 0.0
      %4781 = vmatprep.subr.mxu0 0.0
      %4782 = vmatpush1.msra.mxu0 0.0
      %4783 = vmatprep.subr.mxu0 0.0
      %4784 = vmatpush1.msra.mxu0 0.0
      %4785 = vmatprep.subr.mxu0 0.0
      %4786 = vmatpush1.msra.mxu0 0.0
      %4787 = vmatprep.subr.mxu0 0.0
      %4788 = vmatpush1.msra.mxu0 0.0
      %4789 = vmatprep.mubr.f32.mxu0 0.0
      %4790 = vmatmul.mubr.f32.gmra.mrb[0].mxu0 %v4723
      %v4791 = vpop.f32.mrb[0].mxu0
      %v4792 = vadd.f32 0.0, %v4791
      %v4793 = vpop.f32.mrb[0].mxu0
      %4794 = vdwg.mxu0
      %v4795 = vadd.f32 %v4713, %v4792
      %s4796 = scalar_lea.vmem %s5, 56
      %v4797 = vld [vmem:[%s4796] sm:$0xff]
      %4798 = vrot.lane.b32.xlu0 %v4226, 115
      %v4799 = vpop.permute.xlu0 %4798
      %4800 = vrot.lane.b32.xlu0 %v4227, 115
      %v4801 = vpop.permute.xlu0 %4800
      %v4805 = vsel %vm4239, %v4797, 0
      %4807 = vmatprep.subr.mxu0 0.0
      %4808 = vmatpush1.msra.mxu0 %v4799
      %4809 = vmatprep.subr.mxu0 0.0
      %4810 = vmatpush1.msra.mxu0 %v4801
      %4811 = vmatprep.subr.mxu0 0.0
      %4812 = vmatpush1.msra.mxu0 0.0
      %4813 = vmatprep.subr.mxu0 0.0
      %4814 = vmatpush1.msra.mxu0 0.0
      %4815 = vmatprep.subr.mxu0 0.0
      %4816 = vmatpush1.msra.mxu0 0.0
      %4817 = vmatprep.subr.mxu0 0.0
      %4818 = vmatpush1.msra.mxu0 0.0
      %4819 = vmatprep.subr.mxu0 0.0
      %4820 = vmatpush1.msra.mxu0 0.0
      %4821 = vmatprep.subr.mxu0 0.0
      %4822 = vmatpush1.msra.mxu0 0.0
      %4823 = vmatprep.subr.mxu0 0.0
      %4824 = vmatpush1.msra.mxu0 0.0
      %4825 = vmatprep.subr.mxu0 0.0
      %4826 = vmatpush1.msra.mxu0 0.0
      %4827 = vmatprep.subr.mxu0 0.0
      %4828 = vmatpush1.msra.mxu0 0.0
      %4829 = vmatprep.subr.mxu0 0.0
      %4830 = vmatpush1.msra.mxu0 0.0
      %4831 = vmatprep.subr.mxu0 0.0
      %4832 = vmatpush1.msra.mxu0 0.0
      %4833 = vmatprep.subr.mxu0 0.0
      %4834 = vmatpush1.msra.mxu0 0.0
      %4835 = vmatprep.subr.mxu0 0.0
      %4836 = vmatpush1.msra.mxu0 0.0
      %4837 = vmatprep.subr.mxu0 0.0
      %4838 = vmatpush1.msra.mxu0 0.0
      %4839 = vmatprep.subr.mxu0 0.0
      %4840 = vmatpush1.msra.mxu0 0.0
      %4841 = vmatprep.subr.mxu0 0.0
      %4842 = vmatpush1.msra.mxu0 0.0
      %4843 = vmatprep.subr.mxu0 0.0
      %4844 = vmatpush1.msra.mxu0 0.0
      %4845 = vmatprep.subr.mxu0 0.0
      %4846 = vmatpush1.msra.mxu0 0.0
      %4847 = vmatprep.subr.mxu0 0.0
      %4848 = vmatpush1.msra.mxu0 0.0
      %4849 = vmatprep.subr.mxu0 0.0
      %4850 = vmatpush1.msra.mxu0 0.0
      %4851 = vmatprep.subr.mxu0 0.0
      %4852 = vmatpush1.msra.mxu0 0.0
      %4853 = vmatprep.subr.mxu0 0.0
      %4854 = vmatpush1.msra.mxu0 0.0
      %4855 = vmatprep.subr.mxu0 0.0
      %4856 = vmatpush1.msra.mxu0 0.0
      %4857 = vmatprep.subr.mxu0 0.0
      %4858 = vmatpush1.msra.mxu0 0.0
      %4859 = vmatprep.subr.mxu0 0.0
      %4860 = vmatpush1.msra.mxu0 0.0
      %4861 = vmatprep.subr.mxu0 0.0
      %4862 = vmatpush1.msra.mxu0 0.0
      %4863 = vmatprep.subr.mxu0 0.0
      %4864 = vmatpush1.msra.mxu0 0.0
      %4865 = vmatprep.subr.mxu0 0.0
      %4866 = vmatpush1.msra.mxu0 0.0
      %4867 = vmatprep.subr.mxu0 0.0
      %4868 = vmatpush1.msra.mxu0 0.0
      %4869 = vmatprep.subr.mxu0 0.0
      %4870 = vmatpush1.msra.mxu0 0.0
      %4871 = vmatprep.mubr.f32.mxu0 0.0
      %4872 = vmatmul.mubr.f32.gmra.mrb[0].mxu0 %v4805
      %v4873 = vpop.f32.mrb[0].mxu0
      %v4874 = vadd.f32 0.0, %v4873
      %v4875 = vpop.f32.mrb[0].mxu0
      %4876 = vdwg.mxu0
      %v4877 = vadd.f32 %v4795, %v4874
      %s4878 = scalar_lea.vmem %s5, 64
      %v4879 = vld [vmem:[%s4878] sm:$0xff]
      %4880 = vrot.lane.b32.xlu0 %v4226, 114
      %v4881 = vpop.permute.xlu0 %4880
      %4882 = vrot.lane.b32.xlu0 %v4227, 114
      %v4883 = vpop.permute.xlu0 %4882
      %v4887 = vsel %vm4239, %v4879, 0
      %4889 = vmatprep.subr.mxu0 0.0
      %4890 = vmatpush1.msra.mxu0 %v4881
      %4891 = vmatprep.subr.mxu0 0.0
      %4892 = vmatpush1.msra.mxu0 %v4883
      %4893 = vmatprep.subr.mxu0 0.0
      %4894 = vmatpush1.msra.mxu0 0.0
      %4895 = vmatprep.subr.mxu0 0.0
      %4896 = vmatpush1.msra.mxu0 0.0
      %4897 = vmatprep.subr.mxu0 0.0
      %4898 = vmatpush1.msra.mxu0 0.0
      %4899 = vmatprep.subr.mxu0 0.0
      %4900 = vmatpush1.msra.mxu0 0.0
      %4901 = vmatprep.subr.mxu0 0.0
      %4902 = vmatpush1.msra.mxu0 0.0
      %4903 = vmatprep.subr.mxu0 0.0
      %4904 = vmatpush1.msra.mxu0 0.0
      %4905 = vmatprep.subr.mxu0 0.0
      %4906 = vmatpush1.msra.mxu0 0.0
      %4907 = vmatprep.subr.mxu0 0.0
      %4908 = vmatpush1.msra.mxu0 0.0
      %4909 = vmatprep.subr.mxu0 0.0
      %4910 = vmatpush1.msra.mxu0 0.0
      %4911 = vmatprep.subr.mxu0 0.0
      %4912 = vmatpush1.msra.mxu0 0.0
      %4913 = vmatprep.subr.mxu0 0.0
      %4914 = vmatpush1.msra.mxu0 0.0
      %4915 = vmatprep.subr.mxu0 0.0
      %4916 = vmatpush1.msra.mxu0 0.0
      %4917 = vmatprep.subr.mxu0 0.0
      %4918 = vmatpush1.msra.mxu0 0.0
      %4919 = vmatprep.subr.mxu0 0.0
      %4920 = vmatpush1.msra.mxu0 0.0
      %4921 = vmatprep.subr.mxu0 0.0
      %4922 = vmatpush1.msra.mxu0 0.0
      %4923 = vmatprep.subr.mxu0 0.0
      %4924 = vmatpush1.msra.mxu0 0.0
      %4925 = vmatprep.subr.mxu0 0.0
      %4926 = vmatpush1.msra.mxu0 0.0
      %4927 = vmatprep.subr.mxu0 0.0
      %4928 = vmatpush1.msra.mxu0 0.0
      %4929 = vmatprep.subr.mxu0 0.0
      %4930 = vmatpush1.msra.mxu0 0.0
      %4931 = vmatprep.subr.mxu0 0.0
      %4932 = vmatpush1.msra.mxu0 0.0
      %4933 = vmatprep.subr.mxu0 0.0
      %4934 = vmatpush1.msra.mxu0 0.0
      %4935 = vmatprep.subr.mxu0 0.0
      %4936 = vmatpush1.msra.mxu0 0.0
      %4937 = vmatprep.subr.mxu0 0.0
      %4938 = vmatpush1.msra.mxu0 0.0
      %4939 = vmatprep.subr.mxu0 0.0
      %4940 = vmatpush1.msra.mxu0 0.0
      %4941 = vmatprep.subr.mxu0 0.0
      %4942 = vmatpush1.msra.mxu0 0.0
      %4943 = vmatprep.subr.mxu0 0.0
      %4944 = vmatpush1.msra.mxu0 0.0
      %4945 = vmatprep.subr.mxu0 0.0
      %4946 = vmatpush1.msra.mxu0 0.0
      %4947 = vmatprep.subr.mxu0 0.0
      %4948 = vmatpush1.msra.mxu0 0.0
      %4949 = vmatprep.subr.mxu0 0.0
      %4950 = vmatpush1.msra.mxu0 0.0
      %4951 = vmatprep.subr.mxu0 0.0
      %4952 = vmatpush1.msra.mxu0 0.0
      %4953 = vmatprep.mubr.f32.mxu0 0.0
      %4954 = vmatmul.mubr.f32.gmra.mrb[0].mxu0 %v4887
      %v4955 = vpop.f32.mrb[0].mxu0
      %v4956 = vadd.f32 0.0, %v4955
      %v4957 = vpop.f32.mrb[0].mxu0
      %4958 = vdwg.mxu0
      %v4959 = vadd.f32 %v4877, %v4956
      %v4960 = vld [vmem:[%s6] sm:$0xff]
      %4962 = vset.pattern.permute.xlu0 0
      %4963 = vperm.xlu0 %4962, %v4960
      %v4964 = vpop.permute.xlu0 %4963
      %v4966 = vadd.f32 %v4959, %v4964
      %v4967 = vmax.f32 %v4966, 0.0
      %v4968 = vld [vmem:[%s14] sm:$0xff]
      %v4969 = vld [vmem:[%s14 + $0x8] sm:$0xff]
      %v4970 = vld [vmem:[%s14 + $0x10] sm:$0xff]
      %v4971 = vld [vmem:[%s14 + $0x18] sm:$0xff]
      %v4972 = vld [vmem:[%s14 + $0x20] sm:$0xf]
      %vm4973 = vcmask 293888
      %v4975 = vsel %vm4973, %v4967, 0
      %v4978 = vsel %vm2316, %v4972, 0
      %4980 = vmatprep.subr.mxu0 0.0
      %4981 = vmatpush1.msra.mxu0 %v4968
      %4982 = vmatprep.subr.mxu0 0.0
      %4983 = vmatpush1.msra.mxu0 %v4969
      %4984 = vmatprep.subr.mxu0 0.0
      %4985 = vmatpush1.msra.mxu0 %v4970
      %4986 = vmatprep.subr.mxu0 0.0
      %4987 = vmatpush1.msra.mxu0 %v4971
      %4988 = vmatprep.subr.mxu0 0.0
      %4989 = vmatpush1.msra.mxu0 %v4978
      %4990 = vmatprep.subr.mxu0 0.0
      %4991 = vmatpush1.msra.mxu0 0.0
      %4992 = vmatprep.subr.mxu0 0.0
      %4993 = vmatpush1.msra.mxu0 0.0
      %4994 = vmatprep.subr.mxu0 0.0
      %4995 = vmatpush1.msra.mxu0 0.0
      %4996 = vmatprep.subr.mxu0 0.0
      %4997 = vmatpush1.msra.mxu0 0.0
      %4998 = vmatprep.subr.mxu0 0.0
      %4999 = vmatpush1.msra.mxu0 0.0
      %5000 = vmatprep.subr.mxu0 0.0
      %5001 = vmatpush1.msra.mxu0 0.0
      %5002 = vmatprep.subr.mxu0 0.0
      %5003 = vmatpush1.msra.mxu0 0.0
      %5004 = vmatprep.subr.mxu0 0.0
      %5005 = vmatpush1.msra.mxu0 0.0
      %5006 = vmatprep.subr.mxu0 0.0
      %5007 = vmatpush1.msra.mxu0 0.0
      %5008 = vmatprep.subr.mxu0 0.0
      %5009 = vmatpush1.msra.mxu0 0.0
      %5010 = vmatprep.subr.mxu0 0.0
      %5011 = vmatpush1.msra.mxu0 0.0
      %5012 = vmatprep.subr.mxu0 0.0
      %5013 = vmatpush1.msra.mxu0 0.0
      %5014 = vmatprep.subr.mxu0 0.0
      %5015 = vmatpush1.msra.mxu0 0.0
      %5016 = vmatprep.subr.mxu0 0.0
      %5017 = vmatpush1.msra.mxu0 0.0
      %5018 = vmatprep.subr.mxu0 0.0
      %5019 = vmatpush1.msra.mxu0 0.0
      %5020 = vmatprep.subr.mxu0 0.0
      %5021 = vmatpush1.msra.mxu0 0.0
      %5022 = vmatprep.subr.mxu0 0.0
      %5023 = vmatpush1.msra.mxu0 0.0
      %5024 = vmatprep.subr.mxu0 0.0
      %5025 = vmatpush1.msra.mxu0 0.0
      %5026 = vmatprep.subr.mxu0 0.0
      %5027 = vmatpush1.msra.mxu0 0.0
      %5028 = vmatprep.subr.mxu0 0.0
      %5029 = vmatpush1.msra.mxu0 0.0
      %5030 = vmatprep.subr.mxu0 0.0
      %5031 = vmatpush1.msra.mxu0 0.0
      %5032 = vmatprep.subr.mxu0 0.0
      %5033 = vmatpush1.msra.mxu0 0.0
      %5034 = vmatprep.subr.mxu0 0.0
      %5035 = vmatpush1.msra.mxu0 0.0
      %5036 = vmatprep.subr.mxu0 0.0
      %5037 = vmatpush1.msra.mxu0 0.0
      %5038 = vmatprep.subr.mxu0 0.0
      %5039 = vmatpush1.msra.mxu0 0.0
      %5040 = vmatprep.subr.mxu0 0.0
      %5041 = vmatpush1.msra.mxu0 0.0
      %5042 = vmatprep.subr.mxu0 0.0
      %5043 = vmatpush1.msra.mxu0 0.0
      %5044 = vmatprep.mubr.f32.mxu0 0.0
      %5045 = vmatmul.mubr.f32.gmra.mrb[0].mxu0 %v4975
      %v5046 = vpop.f32.mrb[0].mxu0
      %v5047 = vadd.f32 0.0, %v5046
      %v5048 = vpop.f32.mrb[0].mxu0
      %5049 = vdwg.mxu0
      %5051 = vrot.lane.b32.xlu0 %v5047, 11
      %v5052 = vpop.permute.xlu0 %5051
      %5054 = vst.msk [vmem:[#allocation3] sm:$0xff] %vm3022, %v5052
      %v5055 = vld [vmem:[#allocation3] sm:$0xff]
      %v5056 = vld [vmem:[%s7] sm:$0xff]
      %s5057 = scalar_lea.vmem %s7, 8
      %v5058 = vld [vmem:[%s5057] sm:$0xff]
      %5060 = vrot.lane.b32.xlu0 %v5055, 127
      %v5061 = vpop.permute.xlu0 %5060
      %v5064 = vsel %vm843, %v5058, 0
      %5066 = vmatprep.subr.mxu0 0.0
      %5067 = vmatpush1.msra.mxu0 %v5061
      %5068 = vmatprep.subr.mxu0 0.0
      %5069 = vmatpush1.msra.mxu0 0.0
      %5070 = vmatprep.subr.mxu0 0.0
      %5071 = vmatpush1.msra.mxu0 0.0
      %5072 = vmatprep.subr.mxu0 0.0
      %5073 = vmatpush1.msra.mxu0 0.0
      %5074 = vmatprep.subr.mxu0 0.0
      %5075 = vmatpush1.msra.mxu0 0.0
      %5076 = vmatprep.subr.mxu0 0.0
      %5077 = vmatpush1.msra.mxu0 0.0
      %5078 = vmatprep.subr.mxu0 0.0
      %5079 = vmatpush1.msra.mxu0 0.0
      %5080 = vmatprep.subr.mxu0 0.0
      %5081 = vmatpush1.msra.mxu0 0.0
      %5082 = vmatprep.subr.mxu0 0.0
      %5083 = vmatpush1.msra.mxu0 0.0
      %5084 = vmatprep.subr.mxu0 0.0
      %5085 = vmatpush1.msra.mxu0 0.0
      %5086 = vmatprep.subr.mxu0 0.0
      %5087 = vmatpush1.msra.mxu0 0.0
      %5088 = vmatprep.subr.mxu0 0.0
      %5089 = vmatpush1.msra.mxu0 0.0
      %5090 = vmatprep.subr.mxu0 0.0
      %5091 = vmatpush1.msra.mxu0 0.0
      %5092 = vmatprep.subr.mxu0 0.0
      %5093 = vmatpush1.msra.mxu0 0.0
      %5094 = vmatprep.subr.mxu0 0.0
      %5095 = vmatpush1.msra.mxu0 0.0
      %5096 = vmatprep.subr.mxu0 0.0
      %5097 = vmatpush1.msra.mxu0 0.0
      %5098 = vmatprep.subr.mxu0 0.0
      %5099 = vmatpush1.msra.mxu0 0.0
      %5100 = vmatprep.subr.mxu0 0.0
      %5101 = vmatpush1.msra.mxu0 0.0
      %5102 = vmatprep.subr.mxu0 0.0
      %5103 = vmatpush1.msra.mxu0 0.0
      %5104 = vmatprep.subr.mxu0 0.0
      %5105 = vmatpush1.msra.mxu0 0.0
      %5106 = vmatprep.subr.mxu0 0.0
      %5107 = vmatpush1.msra.mxu0 0.0
      %5108 = vmatprep.subr.mxu0 0.0
      %5109 = vmatpush1.msra.mxu0 0.0
      %5110 = vmatprep.subr.mxu0 0.0
      %5111 = vmatpush1.msra.mxu0 0.0
      %5112 = vmatprep.subr.mxu0 0.0
      %5113 = vmatpush1.msra.mxu0 0.0
      %5114 = vmatprep.subr.mxu0 0.0
      %5115 = vmatpush1.msra.mxu0 0.0
      %5116 = vmatprep.subr.mxu0 0.0
      %5117 = vmatpush1.msra.mxu0 0.0
      %5118 = vmatprep.subr.mxu0 0.0
      %5119 = vmatpush1.msra.mxu0 0.0
      %5120 = vmatprep.subr.mxu0 0.0
      %5121 = vmatpush1.msra.mxu0 0.0
      %5122 = vmatprep.subr.mxu0 0.0
      %5123 = vmatpush1.msra.mxu0 0.0
      %5124 = vmatprep.subr.mxu0 0.0
      %5125 = vmatpush1.msra.mxu0 0.0
      %5126 = vmatprep.subr.mxu0 0.0
      %5127 = vmatpush1.msra.mxu0 0.0
      %5128 = vmatprep.subr.mxu0 0.0
      %5129 = vmatpush1.msra.mxu0 0.0
      %5130 = vmatprep.mubr.f32.mxu0 0.0
      %5131 = vmatmul.mubr.f32.gmra.mrb[0].mxu0 %v5064
      %v5132 = vpop.f32.mrb[0].mxu0
      %v5133 = vadd.f32 0.0, %v5132
      %v5134 = vpop.f32.mrb[0].mxu0
      %5135 = vdwg.mxu0
      %v5137 = vsel %vm843, %v5056, 0
      %5139 = vmatprep.subr.mxu0 0.0
      %5140 = vmatpush1.msra.mxu0 %v5055
      %5141 = vmatprep.subr.mxu0 0.0
      %5142 = vmatpush1.msra.mxu0 0.0
      %5143 = vmatprep.subr.mxu0 0.0
      %5144 = vmatpush1.msra.mxu0 0.0
      %5145 = vmatprep.subr.mxu0 0.0
      %5146 = vmatpush1.msra.mxu0 0.0
      %5147 = vmatprep.subr.mxu0 0.0
      %5148 = vmatpush1.msra.mxu0 0.0
      %5149 = vmatprep.subr.mxu0 0.0
      %5150 = vmatpush1.msra.mxu0 0.0
      %5151 = vmatprep.subr.mxu0 0.0
      %5152 = vmatpush1.msra.mxu0 0.0
      %5153 = vmatprep.subr.mxu0 0.0
      %5154 = vmatpush1.msra.mxu0 0.0
      %5155 = vmatprep.subr.mxu0 0.0
      %5156 = vmatpush1.msra.mxu0 0.0
      %5157 = vmatprep.subr.mxu0 0.0
      %5158 = vmatpush1.msra.mxu0 0.0
      %5159 = vmatprep.subr.mxu0 0.0
      %5160 = vmatpush1.msra.mxu0 0.0
      %5161 = vmatprep.subr.mxu0 0.0
      %5162 = vmatpush1.msra.mxu0 0.0
      %5163 = vmatprep.subr.mxu0 0.0
      %5164 = vmatpush1.msra.mxu0 0.0
      %5165 = vmatprep.subr.mxu0 0.0
      %5166 = vmatpush1.msra.mxu0 0.0
      %5167 = vmatprep.subr.mxu0 0.0
      %5168 = vmatpush1.msra.mxu0 0.0
      %5169 = vmatprep.subr.mxu0 0.0
      %5170 = vmatpush1.msra.mxu0 0.0
      %5171 = vmatprep.subr.mxu0 0.0
      %5172 = vmatpush1.msra.mxu0 0.0
      %5173 = vmatprep.subr.mxu0 0.0
      %5174 = vmatpush1.msra.mxu0 0.0
      %5175 = vmatprep.subr.mxu0 0.0
      %5176 = vmatpush1.msra.mxu0 0.0
      %5177 = vmatprep.subr.mxu0 0.0
      %5178 = vmatpush1.msra.mxu0 0.0
      %5179 = vmatprep.subr.mxu0 0.0
      %5180 = vmatpush1.msra.mxu0 0.0
      %5181 = vmatprep.subr.mxu0 0.0
      %5182 = vmatpush1.msra.mxu0 0.0
      %5183 = vmatprep.subr.mxu0 0.0
      %5184 = vmatpush1.msra.mxu0 0.0
      %5185 = vmatprep.subr.mxu0 0.0
      %5186 = vmatpush1.msra.mxu0 0.0
      %5187 = vmatprep.subr.mxu0 0.0
      %5188 = vmatpush1.msra.mxu0 0.0
      %5189 = vmatprep.subr.mxu0 0.0
      %5190 = vmatpush1.msra.mxu0 0.0
      %5191 = vmatprep.subr.mxu0 0.0
      %5192 = vmatpush1.msra.mxu0 0.0
      %5193 = vmatprep.subr.mxu0 0.0
      %5194 = vmatpush1.msra.mxu0 0.0
      %5195 = vmatprep.subr.mxu0 0.0
      %5196 = vmatpush1.msra.mxu0 0.0
      %5197 = vmatprep.subr.mxu0 0.0
      %5198 = vmatpush1.msra.mxu0 0.0
      %5199 = vmatprep.subr.mxu0 0.0
      %5200 = vmatpush1.msra.mxu0 0.0
      %5201 = vmatprep.subr.mxu0 0.0
      %5202 = vmatpush1.msra.mxu0 0.0
      %5203 = vmatprep.mubr.f32.mxu0 0.0
      %5204 = vmatmul.mubr.f32.gmra.mrb[0].mxu0 %v5137
      %v5205 = vpop.f32.mrb[0].mxu0
      %v5206 = vadd.f32 %v5133, %v5205
      %v5207 = vpop.f32.mrb[0].mxu0
      %5208 = vdwg.mxu0
      %s5209 = scalar_lea.vmem %s7, 16
      %v5210 = vld [vmem:[%s5209] sm:$0xff]
      %5211 = vrot.lane.b32.xlu0 %v5055, 126
      %v5212 = vpop.permute.xlu0 %5211
      %v5215 = vsel %vm843, %v5210, 0
      %5217 = vmatprep.subr.mxu0 0.0
      %5218 = vmatpush1.msra.mxu0 %v5212
      %5219 = vmatprep.subr.mxu0 0.0
      %5220 = vmatpush1.msra.mxu0 0.0
      %5221 = vmatprep.subr.mxu0 0.0
      %5222 = vmatpush1.msra.mxu0 0.0
      %5223 = vmatprep.subr.mxu0 0.0
      %5224 = vmatpush1.msra.mxu0 0.0
      %5225 = vmatprep.subr.mxu0 0.0
      %5226 = vmatpush1.msra.mxu0 0.0
      %5227 = vmatprep.subr.mxu0 0.0
      %5228 = vmatpush1.msra.mxu0 0.0
      %5229 = vmatprep.subr.mxu0 0.0
      %5230 = vmatpush1.msra.mxu0 0.0
      %5231 = vmatprep.subr.mxu0 0.0
      %5232 = vmatpush1.msra.mxu0 0.0
      %5233 = vmatprep.subr.mxu0 0.0
      %5234 = vmatpush1.msra.mxu0 0.0
      %5235 = vmatprep.subr.mxu0 0.0
      %5236 = vmatpush1.msra.mxu0 0.0
      %5237 = vmatprep.subr.mxu0 0.0
      %5238 = vmatpush1.msra.mxu0 0.0
      %5239 = vmatprep.subr.mxu0 0.0
      %5240 = vmatpush1.msra.mxu0 0.0
      %5241 = vmatprep.subr.mxu0 0.0
      %5242 = vmatpush1.msra.mxu0 0.0
      %5243 = vmatprep.subr.mxu0 0.0
      %5244 = vmatpush1.msra.mxu0 0.0
      %5245 = vmatprep.subr.mxu0 0.0
      %5246 = vmatpush1.msra.mxu0 0.0
      %5247 = vmatprep.subr.mxu0 0.0
      %5248 = vmatpush1.msra.mxu0 0.0
      %5249 = vmatprep.subr.mxu0 0.0
      %5250 = vmatpush1.msra.mxu0 0.0
      %5251 = vmatprep.subr.mxu0 0.0
      %5252 = vmatpush1.msra.mxu0 0.0
      %5253 = vmatprep.subr.mxu0 0.0
      %5254 = vmatpush1.msra.mxu0 0.0
      %5255 = vmatprep.subr.mxu0 0.0
      %5256 = vmatpush1.msra.mxu0 0.0
      %5257 = vmatprep.subr.mxu0 0.0
      %5258 = vmatpush1.msra.mxu0 0.0
      %5259 = vmatprep.subr.mxu0 0.0
      %5260 = vmatpush1.msra.mxu0 0.0
      %5261 = vmatprep.subr.mxu0 0.0
      %5262 = vmatpush1.msra.mxu0 0.0
      %5263 = vmatprep.subr.mxu0 0.0
      %5264 = vmatpush1.msra.mxu0 0.0
      %5265 = vmatprep.subr.mxu0 0.0
      %5266 = vmatpush1.msra.mxu0 0.0
      %5267 = vmatprep.subr.mxu0 0.0
      %5268 = vmatpush1.msra.mxu0 0.0
      %5269 = vmatprep.subr.mxu0 0.0
      %5270 = vmatpush1.msra.mxu0 0.0
      %5271 = vmatprep.subr.mxu0 0.0
      %5272 = vmatpush1.msra.mxu0 0.0
      %5273 = vmatprep.subr.mxu0 0.0
      %5274 = vmatpush1.msra.mxu0 0.0
      %5275 = vmatprep.subr.mxu0 0.0
      %5276 = vmatpush1.msra.mxu0 0.0
      %5277 = vmatprep.subr.mxu0 0.0
      %5278 = vmatpush1.msra.mxu0 0.0
      %5279 = vmatprep.subr.mxu0 0.0
      %5280 = vmatpush1.msra.mxu0 0.0
      %5281 = vmatprep.mubr.f32.mxu0 0.0
      %5282 = vmatmul.mubr.f32.gmra.mrb[0].mxu0 %v5215
      %v5283 = vpop.f32.mrb[0].mxu0
      %v5284 = vadd.f32 0.0, %v5283
      %v5285 = vpop.f32.mrb[0].mxu0
      %5286 = vdwg.mxu0
      %v5287 = vadd.f32 %v5206, %v5284
      %s5288 = scalar_lea.vmem %s7, 24
      %v5289 = vld [vmem:[%s5288] sm:$0xff]
      %5290 = vrot.lane.b32.xlu0 %v5055, 118
      %v5291 = vpop.permute.xlu0 %5290
      %v5294 = vsel %vm843, %v5289, 0
      %5296 = vmatprep.subr.mxu0 0.0
      %5297 = vmatpush1.msra.mxu0 %v5291
      %5298 = vmatprep.subr.mxu0 0.0
      %5299 = vmatpush1.msra.mxu0 0.0
      %5300 = vmatprep.subr.mxu0 0.0
      %5301 = vmatpush1.msra.mxu0 0.0
      %5302 = vmatprep.subr.mxu0 0.0
      %5303 = vmatpush1.msra.mxu0 0.0
      %5304 = vmatprep.subr.mxu0 0.0
      %5305 = vmatpush1.msra.mxu0 0.0
      %5306 = vmatprep.subr.mxu0 0.0
      %5307 = vmatpush1.msra.mxu0 0.0
      %5308 = vmatprep.subr.mxu0 0.0
      %5309 = vmatpush1.msra.mxu0 0.0
      %5310 = vmatprep.subr.mxu0 0.0
      %5311 = vmatpush1.msra.mxu0 0.0
      %5312 = vmatprep.subr.mxu0 0.0
      %5313 = vmatpush1.msra.mxu0 0.0
      %5314 = vmatprep.subr.mxu0 0.0
      %5315 = vmatpush1.msra.mxu0 0.0
      %5316 = vmatprep.subr.mxu0 0.0
      %5317 = vmatpush1.msra.mxu0 0.0
      %5318 = vmatprep.subr.mxu0 0.0
      %5319 = vmatpush1.msra.mxu0 0.0
      %5320 = vmatprep.subr.mxu0 0.0
      %5321 = vmatpush1.msra.mxu0 0.0
      %5322 = vmatprep.subr.mxu0 0.0
      %5323 = vmatpush1.msra.mxu0 0.0
      %5324 = vmatprep.subr.mxu0 0.0
      %5325 = vmatpush1.msra.mxu0 0.0
      %5326 = vmatprep.subr.mxu0 0.0
      %5327 = vmatpush1.msra.mxu0 0.0
      %5328 = vmatprep.subr.mxu0 0.0
      %5329 = vmatpush1.msra.mxu0 0.0
      %5330 = vmatprep.subr.mxu0 0.0
      %5331 = vmatpush1.msra.mxu0 0.0
      %5332 = vmatprep.subr.mxu0 0.0
      %5333 = vmatpush1.msra.mxu0 0.0
      %5334 = vmatprep.subr.mxu0 0.0
      %5335 = vmatpush1.msra.mxu0 0.0
      %5336 = vmatprep.subr.mxu0 0.0
      %5337 = vmatpush1.msra.mxu0 0.0
      %5338 = vmatprep.subr.mxu0 0.0
      %5339 = vmatpush1.msra.mxu0 0.0
      %5340 = vmatprep.subr.mxu0 0.0
      %5341 = vmatpush1.msra.mxu0 0.0
      %5342 = vmatprep.subr.mxu0 0.0
      %5343 = vmatpush1.msra.mxu0 0.0
      %5344 = vmatprep.subr.mxu0 0.0
      %5345 = vmatpush1.msra.mxu0 0.0
      %5346 = vmatprep.subr.mxu0 0.0
      %5347 = vmatpush1.msra.mxu0 0.0
      %5348 = vmatprep.subr.mxu0 0.0
      %5349 = vmatpush1.msra.mxu0 0.0
      %5350 = vmatprep.subr.mxu0 0.0
      %5351 = vmatpush1.msra.mxu0 0.0
      %5352 = vmatprep.subr.mxu0 0.0
      %5353 = vmatpush1.msra.mxu0 0.0
      %5354 = vmatprep.subr.mxu0 0.0
      %5355 = vmatpush1.msra.mxu0 0.0
      %5356 = vmatprep.subr.mxu0 0.0
      %5357 = vmatpush1.msra.mxu0 0.0
      %5358 = vmatprep.subr.mxu0 0.0
      %5359 = vmatpush1.msra.mxu0 0.0
      %5360 = vmatprep.mubr.f32.mxu0 0.0
      %5361 = vmatmul.mubr.f32.gmra.mrb[0].mxu0 %v5294
      %v5362 = vpop.f32.mrb[0].mxu0
      %v5363 = vadd.f32 0.0, %v5362
      %v5364 = vpop.f32.mrb[0].mxu0
      %5365 = vdwg.mxu0
      %v5366 = vadd.f32 %v5287, %v5363
      %s5367 = scalar_lea.vmem %s7, 32
      %v5368 = vld [vmem:[%s5367] sm:$0xff]
      %5369 = vrot.lane.b32.xlu0 %v5055, 117
      %v5370 = vpop.permute.xlu0 %5369
      %v5373 = vsel %vm843, %v5368, 0
      %5375 = vmatprep.subr.mxu0 0.0
      %5376 = vmatpush1.msra.mxu0 %v5370
      %5377 = vmatprep.subr.mxu0 0.0
      %5378 = vmatpush1.msra.mxu0 0.0
      %5379 = vmatprep.subr.mxu0 0.0
      %5380 = vmatpush1.msra.mxu0 0.0
      %5381 = vmatprep.subr.mxu0 0.0
      %5382 = vmatpush1.msra.mxu0 0.0
      %5383 = vmatprep.subr.mxu0 0.0
      %5384 = vmatpush1.msra.mxu0 0.0
      %5385 = vmatprep.subr.mxu0 0.0
      %5386 = vmatpush1.msra.mxu0 0.0
      %5387 = vmatprep.subr.mxu0 0.0
      %5388 = vmatpush1.msra.mxu0 0.0
      %5389 = vmatprep.subr.mxu0 0.0
      %5390 = vmatpush1.msra.mxu0 0.0
      %5391 = vmatprep.subr.mxu0 0.0
      %5392 = vmatpush1.msra.mxu0 0.0
      %5393 = vmatprep.subr.mxu0 0.0
      %5394 = vmatpush1.msra.mxu0 0.0
      %5395 = vmatprep.subr.mxu0 0.0
      %5396 = vmatpush1.msra.mxu0 0.0
      %5397 = vmatprep.subr.mxu0 0.0
      %5398 = vmatpush1.msra.mxu0 0.0
      %5399 = vmatprep.subr.mxu0 0.0
      %5400 = vmatpush1.msra.mxu0 0.0
      %5401 = vmatprep.subr.mxu0 0.0
      %5402 = vmatpush1.msra.mxu0 0.0
      %5403 = vmatprep.subr.mxu0 0.0
      %5404 = vmatpush1.msra.mxu0 0.0
      %5405 = vmatprep.subr.mxu0 0.0
      %5406 = vmatpush1.msra.mxu0 0.0
      %5407 = vmatprep.subr.mxu0 0.0
      %5408 = vmatpush1.msra.mxu0 0.0
      %5409 = vmatprep.subr.mxu0 0.0
      %5410 = vmatpush1.msra.mxu0 0.0
      %5411 = vmatprep.subr.mxu0 0.0
      %5412 = vmatpush1.msra.mxu0 0.0
      %5413 = vmatprep.subr.mxu0 0.0
      %5414 = vmatpush1.msra.mxu0 0.0
      %5415 = vmatprep.subr.mxu0 0.0
      %5416 = vmatpush1.msra.mxu0 0.0
      %5417 = vmatprep.subr.mxu0 0.0
      %5418 = vmatpush1.msra.mxu0 0.0
      %5419 = vmatprep.subr.mxu0 0.0
      %5420 = vmatpush1.msra.mxu0 0.0
      %5421 = vmatprep.subr.mxu0 0.0
      %5422 = vmatpush1.msra.mxu0 0.0
      %5423 = vmatprep.subr.mxu0 0.0
      %5424 = vmatpush1.msra.mxu0 0.0
      %5425 = vmatprep.subr.mxu0 0.0
      %5426 = vmatpush1.msra.mxu0 0.0
      %5427 = vmatprep.subr.mxu0 0.0
      %5428 = vmatpush1.msra.mxu0 0.0
      %5429 = vmatprep.subr.mxu0 0.0
      %5430 = vmatpush1.msra.mxu0 0.0
      %5431 = vmatprep.subr.mxu0 0.0
      %5432 = vmatpush1.msra.mxu0 0.0
      %5433 = vmatprep.subr.mxu0 0.0
      %5434 = vmatpush1.msra.mxu0 0.0
      %5435 = vmatprep.subr.mxu0 0.0
      %5436 = vmatpush1.msra.mxu0 0.0
      %5437 = vmatprep.subr.mxu0 0.0
      %5438 = vmatpush1.msra.mxu0 0.0
      %5439 = vmatprep.mubr.f32.mxu0 0.0
      %5440 = vmatmul.mubr.f32.gmra.mrb[0].mxu0 %v5373
      %v5441 = vpop.f32.mrb[0].mxu0
      %v5442 = vadd.f32 0.0, %v5441
      %v5443 = vpop.f32.mrb[0].mxu0
      %5444 = vdwg.mxu0
      %v5445 = vadd.f32 %v5366, %v5442
      %s5446 = scalar_lea.vmem %s7, 40
      %v5447 = vld [vmem:[%s5446] sm:$0xff]
      %5448 = vrot.lane.b32.xlu0 %v5055, 116
      %v5449 = vpop.permute.xlu0 %5448
      %v5452 = vsel %vm843, %v5447, 0
      %5454 = vmatprep.subr.mxu0 0.0
      %5455 = vmatpush1.msra.mxu0 %v5449
      %5456 = vmatprep.subr.mxu0 0.0
      %5457 = vmatpush1.msra.mxu0 0.0
      %5458 = vmatprep.subr.mxu0 0.0
      %5459 = vmatpush1.msra.mxu0 0.0
      %5460 = vmatprep.subr.mxu0 0.0
      %5461 = vmatpush1.msra.mxu0 0.0
      %5462 = vmatprep.subr.mxu0 0.0
      %5463 = vmatpush1.msra.mxu0 0.0
      %5464 = vmatprep.subr.mxu0 0.0
      %5465 = vmatpush1.msra.mxu0 0.0
      %5466 = vmatprep.subr.mxu0 0.0
      %5467 = vmatpush1.msra.mxu0 0.0
      %5468 = vmatprep.subr.mxu0 0.0
      %5469 = vmatpush1.msra.mxu0 0.0
      %5470 = vmatprep.subr.mxu0 0.0
      %5471 = vmatpush1.msra.mxu0 0.0
      %5472 = vmatprep.subr.mxu0 0.0
      %5473 = vmatpush1.msra.mxu0 0.0
      %5474 = vmatprep.subr.mxu0 0.0
      %5475 = vmatpush1.msra.mxu0 0.0
      %5476 = vmatprep.subr.mxu0 0.0
      %5477 = vmatpush1.msra.mxu0 0.0
      %5478 = vmatprep.subr.mxu0 0.0
      %5479 = vmatpush1.msra.mxu0 0.0
      %5480 = vmatprep.subr.mxu0 0.0
      %5481 = vmatpush1.msra.mxu0 0.0
      %5482 = vmatprep.subr.mxu0 0.0
      %5483 = vmatpush1.msra.mxu0 0.0
      %5484 = vmatprep.subr.mxu0 0.0
      %5485 = vmatpush1.msra.mxu0 0.0
      %5486 = vmatprep.subr.mxu0 0.0
      %5487 = vmatpush1.msra.mxu0 0.0
      %5488 = vmatprep.subr.mxu0 0.0
      %5489 = vmatpush1.msra.mxu0 0.0
      %5490 = vmatprep.subr.mxu0 0.0
      %5491 = vmatpush1.msra.mxu0 0.0
      %5492 = vmatprep.subr.mxu0 0.0
      %5493 = vmatpush1.msra.mxu0 0.0
      %5494 = vmatprep.subr.mxu0 0.0
      %5495 = vmatpush1.msra.mxu0 0.0
      %5496 = vmatprep.subr.mxu0 0.0
      %5497 = vmatpush1.msra.mxu0 0.0
      %5498 = vmatprep.subr.mxu0 0.0
      %5499 = vmatpush1.msra.mxu0 0.0
      %5500 = vmatprep.subr.mxu0 0.0
      %5501 = vmatpush1.msra.mxu0 0.0
      %5502 = vmatprep.subr.mxu0 0.0
      %5503 = vmatpush1.msra.mxu0 0.0
      %5504 = vmatprep.subr.mxu0 0.0
      %5505 = vmatpush1.msra.mxu0 0.0
      %5506 = vmatprep.subr.mxu0 0.0
      %5507 = vmatpush1.msra.mxu0 0.0
      %5508 = vmatprep.subr.mxu0 0.0
      %5509 = vmatpush1.msra.mxu0 0.0
      %5510 = vmatprep.subr.mxu0 0.0
      %5511 = vmatpush1.msra.mxu0 0.0
      %5512 = vmatprep.subr.mxu0 0.0
      %5513 = vmatpush1.msra.mxu0 0.0
      %5514 = vmatprep.subr.mxu0 0.0
      %5515 = vmatpush1.msra.mxu0 0.0
      %5516 = vmatprep.subr.mxu0 0.0
      %5517 = vmatpush1.msra.mxu0 0.0
      %5518 = vmatprep.mubr.f32.mxu0 0.0
      %5519 = vmatmul.mubr.f32.gmra.mrb[0].mxu0 %v5452
      %v5520 = vpop.f32.mrb[0].mxu0
      %v5521 = vadd.f32 0.0, %v5520
      %v5522 = vpop.f32.mrb[0].mxu0
      %5523 = vdwg.mxu0
      %v5524 = vadd.f32 %v5445, %v5521
      %s5525 = scalar_lea.vmem %s7, 48
      %v5526 = vld [vmem:[%s5525] sm:$0xff]
      %5527 = vrot.lane.b32.xlu0 %v5055, 108
      %v5528 = vpop.permute.xlu0 %5527
      %v5531 = vsel %vm843, %v5526, 0
      %5533 = vmatprep.subr.mxu0 0.0
      %5534 = vmatpush1.msra.mxu0 %v5528
      %5535 = vmatprep.subr.mxu0 0.0
      %5536 = vmatpush1.msra.mxu0 0.0
      %5537 = vmatprep.subr.mxu0 0.0
      %5538 = vmatpush1.msra.mxu0 0.0
      %5539 = vmatprep.subr.mxu0 0.0
      %5540 = vmatpush1.msra.mxu0 0.0
      %5541 = vmatprep.subr.mxu0 0.0
      %5542 = vmatpush1.msra.mxu0 0.0
      %5543 = vmatprep.subr.mxu0 0.0
      %5544 = vmatpush1.msra.mxu0 0.0
      %5545 = vmatprep.subr.mxu0 0.0
      %5546 = vmatpush1.msra.mxu0 0.0
      %5547 = vmatprep.subr.mxu0 0.0
      %5548 = vmatpush1.msra.mxu0 0.0
      %5549 = vmatprep.subr.mxu0 0.0
      %5550 = vmatpush1.msra.mxu0 0.0
      %5551 = vmatprep.subr.mxu0 0.0
      %5552 = vmatpush1.msra.mxu0 0.0
      %5553 = vmatprep.subr.mxu0 0.0
      %5554 = vmatpush1.msra.mxu0 0.0
      %5555 = vmatprep.subr.mxu0 0.0
      %5556 = vmatpush1.msra.mxu0 0.0
      %5557 = vmatprep.subr.mxu0 0.0
      %5558 = vmatpush1.msra.mxu0 0.0
      %5559 = vmatprep.subr.mxu0 0.0
      %5560 = vmatpush1.msra.mxu0 0.0
      %5561 = vmatprep.subr.mxu0 0.0
      %5562 = vmatpush1.msra.mxu0 0.0
      %5563 = vmatprep.subr.mxu0 0.0
      %5564 = vmatpush1.msra.mxu0 0.0
      %5565 = vmatprep.subr.mxu0 0.0
      %5566 = vmatpush1.msra.mxu0 0.0
      %5567 = vmatprep.subr.mxu0 0.0
      %5568 = vmatpush1.msra.mxu0 0.0
      %5569 = vmatprep.subr.mxu0 0.0
      %5570 = vmatpush1.msra.mxu0 0.0
      %5571 = vmatprep.subr.mxu0 0.0
      %5572 = vmatpush1.msra.mxu0 0.0
      %5573 = vmatprep.subr.mxu0 0.0
      %5574 = vmatpush1.msra.mxu0 0.0
      %5575 = vmatprep.subr.mxu0 0.0
      %5576 = vmatpush1.msra.mxu0 0.0
      %5577 = vmatprep.subr.mxu0 0.0
      %5578 = vmatpush1.msra.mxu0 0.0
      %5579 = vmatprep.subr.mxu0 0.0
      %5580 = vmatpush1.msra.mxu0 0.0
      %5581 = vmatprep.subr.mxu0 0.0
      %5582 = vmatpush1.msra.mxu0 0.0
      %5583 = vmatprep.subr.mxu0 0.0
      %5584 = vmatpush1.msra.mxu0 0.0
      %5585 = vmatprep.subr.mxu0 0.0
      %5586 = vmatpush1.msra.mxu0 0.0
      %5587 = vmatprep.subr.mxu0 0.0
      %5588 = vmatpush1.msra.mxu0 0.0
      %5589 = vmatprep.subr.mxu0 0.0
      %5590 = vmatpush1.msra.mxu0 0.0
      %5591 = vmatprep.subr.mxu0 0.0
      %5592 = vmatpush1.msra.mxu0 0.0
      %5593 = vmatprep.subr.mxu0 0.0
      %5594 = vmatpush1.msra.mxu0 0.0
      %5595 = vmatprep.subr.mxu0 0.0
      %5596 = vmatpush1.msra.mxu0 0.0
      %5597 = vmatprep.mubr.f32.mxu0 0.0
      %5598 = vmatmul.mubr.f32.gmra.mrb[0].mxu0 %v5531
      %v5599 = vpop.f32.mrb[0].mxu0
      %v5600 = vadd.f32 0.0, %v5599
      %v5601 = vpop.f32.mrb[0].mxu0
      %5602 = vdwg.mxu0
      %v5603 = vadd.f32 %v5524, %v5600
      %s5604 = scalar_lea.vmem %s7, 56
      %v5605 = vld [vmem:[%s5604] sm:$0xff]
      %5606 = vrot.lane.b32.xlu0 %v5055, 107
      %v5607 = vpop.permute.xlu0 %5606
      %v5610 = vsel %vm843, %v5605, 0
      %5612 = vmatprep.subr.mxu0 0.0
      %5613 = vmatpush1.msra.mxu0 %v5607
      %5614 = vmatprep.subr.mxu0 0.0
      %5615 = vmatpush1.msra.mxu0 0.0
      %5616 = vmatprep.subr.mxu0 0.0
      %5617 = vmatpush1.msra.mxu0 0.0
      %5618 = vmatprep.subr.mxu0 0.0
      %5619 = vmatpush1.msra.mxu0 0.0
      %5620 = vmatprep.subr.mxu0 0.0
      %5621 = vmatpush1.msra.mxu0 0.0
      %5622 = vmatprep.subr.mxu0 0.0
      %5623 = vmatpush1.msra.mxu0 0.0
      %5624 = vmatprep.subr.mxu0 0.0
      %5625 = vmatpush1.msra.mxu0 0.0
      %5626 = vmatprep.subr.mxu0 0.0
      %5627 = vmatpush1.msra.mxu0 0.0
      %5628 = vmatprep.subr.mxu0 0.0
      %5629 = vmatpush1.msra.mxu0 0.0
      %5630 = vmatprep.subr.mxu0 0.0
      %5631 = vmatpush1.msra.mxu0 0.0
      %5632 = vmatprep.subr.mxu0 0.0
      %5633 = vmatpush1.msra.mxu0 0.0
      %5634 = vmatprep.subr.mxu0 0.0
      %5635 = vmatpush1.msra.mxu0 0.0
      %5636 = vmatprep.subr.mxu0 0.0
      %5637 = vmatpush1.msra.mxu0 0.0
      %5638 = vmatprep.subr.mxu0 0.0
      %5639 = vmatpush1.msra.mxu0 0.0
      %5640 = vmatprep.subr.mxu0 0.0
      %5641 = vmatpush1.msra.mxu0 0.0
      %5642 = vmatprep.subr.mxu0 0.0
      %5643 = vmatpush1.msra.mxu0 0.0
      %5644 = vmatprep.subr.mxu0 0.0
      %5645 = vmatpush1.msra.mxu0 0.0
      %5646 = vmatprep.subr.mxu0 0.0
      %5647 = vmatpush1.msra.mxu0 0.0
      %5648 = vmatprep.subr.mxu0 0.0
      %5649 = vmatpush1.msra.mxu0 0.0
      %5650 = vmatprep.subr.mxu0 0.0
      %5651 = vmatpush1.msra.mxu0 0.0
      %5652 = vmatprep.subr.mxu0 0.0
      %5653 = vmatpush1.msra.mxu0 0.0
      %5654 = vmatprep.subr.mxu0 0.0
      %5655 = vmatpush1.msra.mxu0 0.0
      %5656 = vmatprep.subr.mxu0 0.0
      %5657 = vmatpush1.msra.mxu0 0.0
      %5658 = vmatprep.subr.mxu0 0.0
      %5659 = vmatpush1.msra.mxu0 0.0
      %5660 = vmatprep.subr.mxu0 0.0
      %5661 = vmatpush1.msra.mxu0 0.0
      %5662 = vmatprep.subr.mxu0 0.0
      %5663 = vmatpush1.msra.mxu0 0.0
      %5664 = vmatprep.subr.mxu0 0.0
      %5665 = vmatpush1.msra.mxu0 0.0
      %5666 = vmatprep.subr.mxu0 0.0
      %5667 = vmatpush1.msra.mxu0 0.0
      %5668 = vmatprep.subr.mxu0 0.0
      %5669 = vmatpush1.msra.mxu0 0.0
      %5670 = vmatprep.subr.mxu0 0.0
      %5671 = vmatpush1.msra.mxu0 0.0
      %5672 = vmatprep.subr.mxu0 0.0
      %5673 = vmatpush1.msra.mxu0 0.0
      %5674 = vmatprep.subr.mxu0 0.0
      %5675 = vmatpush1.msra.mxu0 0.0
      %5676 = vmatprep.mubr.f32.mxu0 0.0
      %5677 = vmatmul.mubr.f32.gmra.mrb[0].mxu0 %v5610
      %v5678 = vpop.f32.mrb[0].mxu0
      %v5679 = vadd.f32 0.0, %v5678
      %v5680 = vpop.f32.mrb[0].mxu0
      %5681 = vdwg.mxu0
      %v5682 = vadd.f32 %v5603, %v5679
      %s5683 = scalar_lea.vmem %s7, 64
      %v5684 = vld [vmem:[%s5683] sm:$0xff]
      %5685 = vrot.lane.b32.xlu0 %v5055, 106
      %v5686 = vpop.permute.xlu0 %5685
      %v5689 = vsel %vm843, %v5684, 0
      %5691 = vmatprep.subr.mxu0 0.0
      %5692 = vmatpush1.msra.mxu0 %v5686
      %5693 = vmatprep.subr.mxu0 0.0
      %5694 = vmatpush1.msra.mxu0 0.0
      %5695 = vmatprep.subr.mxu0 0.0
      %5696 = vmatpush1.msra.mxu0 0.0
      %5697 = vmatprep.subr.mxu0 0.0
      %5698 = vmatpush1.msra.mxu0 0.0
      %5699 = vmatprep.subr.mxu0 0.0
      %5700 = vmatpush1.msra.mxu0 0.0
      %5701 = vmatprep.subr.mxu0 0.0
      %5702 = vmatpush1.msra.mxu0 0.0
      %5703 = vmatprep.subr.mxu0 0.0
      %5704 = vmatpush1.msra.mxu0 0.0
      %5705 = vmatprep.subr.mxu0 0.0
      %5706 = vmatpush1.msra.mxu0 0.0
      %5707 = vmatprep.subr.mxu0 0.0
      %5708 = vmatpush1.msra.mxu0 0.0
      %5709 = vmatprep.subr.mxu0 0.0
      %5710 = vmatpush1.msra.mxu0 0.0
      %5711 = vmatprep.subr.mxu0 0.0
      %5712 = vmatpush1.msra.mxu0 0.0
      %5713 = vmatprep.subr.mxu0 0.0
      %5714 = vmatpush1.msra.mxu0 0.0
      %5715 = vmatprep.subr.mxu0 0.0
      %5716 = vmatpush1.msra.mxu0 0.0
      %5717 = vmatprep.subr.mxu0 0.0
      %5718 = vmatpush1.msra.mxu0 0.0
      %5719 = vmatprep.subr.mxu0 0.0
      %5720 = vmatpush1.msra.mxu0 0.0
      %5721 = vmatprep.subr.mxu0 0.0
      %5722 = vmatpush1.msra.mxu0 0.0
      %5723 = vmatprep.subr.mxu0 0.0
      %5724 = vmatpush1.msra.mxu0 0.0
      %5725 = vmatprep.subr.mxu0 0.0
      %5726 = vmatpush1.msra.mxu0 0.0
      %5727 = vmatprep.subr.mxu0 0.0
      %5728 = vmatpush1.msra.mxu0 0.0
      %5729 = vmatprep.subr.mxu0 0.0
      %5730 = vmatpush1.msra.mxu0 0.0
      %5731 = vmatprep.subr.mxu0 0.0
      %5732 = vmatpush1.msra.mxu0 0.0
      %5733 = vmatprep.subr.mxu0 0.0
      %5734 = vmatpush1.msra.mxu0 0.0
      %5735 = vmatprep.subr.mxu0 0.0
      %5736 = vmatpush1.msra.mxu0 0.0
      %5737 = vmatprep.subr.mxu0 0.0
      %5738 = vmatpush1.msra.mxu0 0.0
      %5739 = vmatprep.subr.mxu0 0.0
      %5740 = vmatpush1.msra.mxu0 0.0
      %5741 = vmatprep.subr.mxu0 0.0
      %5742 = vmatpush1.msra.mxu0 0.0
      %5743 = vmatprep.subr.mxu0 0.0
      %5744 = vmatpush1.msra.mxu0 0.0
      %5745 = vmatprep.subr.mxu0 0.0
      %5746 = vmatpush1.msra.mxu0 0.0
      %5747 = vmatprep.subr.mxu0 0.0
      %5748 = vmatpush1.msra.mxu0 0.0
      %5749 = vmatprep.subr.mxu0 0.0
      %5750 = vmatpush1.msra.mxu0 0.0
      %5751 = vmatprep.subr.mxu0 0.0
      %5752 = vmatpush1.msra.mxu0 0.0
      %5753 = vmatprep.subr.mxu0 0.0
      %5754 = vmatpush1.msra.mxu0 0.0
      %5755 = vmatprep.mubr.f32.mxu0 0.0
      %5756 = vmatmul.mubr.f32.gmra.mrb[0].mxu0 %v5689
      %v5757 = vpop.f32.mrb[0].mxu0
      %v5758 = vadd.f32 0.0, %v5757
      %v5759 = vpop.f32.mrb[0].mxu0
      %5760 = vdwg.mxu0
      %v5761 = vadd.f32 %v5682, %v5758
      %v5762 = vld [vmem:[%s8] sm:$0xff]
      %5764 = vset.pattern.permute.xlu0 0
      %5765 = vperm.xlu0 %5764, %v5762
      %v5766 = vpop.permute.xlu0 %5765
      %v5768 = vadd.f32 %v5761, %v5766
      %v5769 = vmax.f32 %v5768, 0.0
      %v5770 = vld [vmem:[%s15] sm:$0xff]
      %v5771 = vld [vmem:[%s15 + $0x8] sm:$0xff]
      %v5772 = vld [vmem:[%s15 + $0x10] sm:$0xff]
      %v5773 = vld [vmem:[%s15 + $0x18] sm:$0xff]
      %v5774 = vld [vmem:[%s15 + $0x20] sm:$0xff]
      %v5775 = vld [vmem:[%s15 + $0x28] sm:$0xff]
      %v5776 = vld [vmem:[%s15 + $0x30] sm:$0xff]
      %v5777 = vld [vmem:[%s15 + $0x38] sm:$0xff]
      %v5778 = vld [vmem:[%s15 + $0x40] sm:$0xff]
      %v5779 = vld [vmem:[%s15 + $0x48] sm:$0xff]
      %v5780 = vld [vmem:[%s15 + $0x50] sm:$0xff]
      %v5781 = vld [vmem:[%s15 + $0x58] sm:$0xff]
      %v5782 = vld [vmem:[%s15 + $0x60] sm:$0xff]
      %v5783 = vld [vmem:[%s15 + $0x68] sm:$0xff]
      %v5784 = vld [vmem:[%s15 + $0x70] sm:$0xff]
      %v5785 = vld [vmem:[%s15 + $0x78] sm:$0xff]
      %v5786 = vld [vmem:[%s15 + $0x80] sm:$0xff]
      %v5787 = vld [vmem:[%s15 + $0x88] sm:$0xff]
      %v5788 = vld [vmem:[%s15 + $0x90] sm:$0xff]
      %v5789 = vld [vmem:[%s15 + $0x98] sm:$0xff]
      %v5790 = vld [vmem:[%s15 + $0xa0] sm:$0xff]
      %v5791 = vld [vmem:[%s15 + $0xa8] sm:$0xff]
      %v5792 = vld [vmem:[%s15 + $0xb0] sm:$0xff]
      %v5793 = vld [vmem:[%s15 + $0xb8] sm:$0xff]
      %v5794 = vld [vmem:[%s15 + $0xc0] sm:$0xff]
      %v5795 = vld [vmem:[%s15 + $0xc8] sm:$0xff]
      %v5796 = vld [vmem:[%s15 + $0xd0] sm:$0xff]
      %v5797 = vld [vmem:[%s15 + $0xd8] sm:$0xff]
      %v5798 = vld [vmem:[%s15 + $0xe0] sm:$0xff]
      %v5799 = vld [vmem:[%s15 + $0xe8] sm:$0xff]
      %v5800 = vld [vmem:[%s15 + $0xf0] sm:$0xff]
      %v5801 = vld [vmem:[%s15 + $0xf8] sm:$0xff]
      %v5802 = vld [vmem:[%s15 + $0x100] sm:$0xff]
      %v5803 = vld [vmem:[%s15 + $0x108] sm:$0xff]
      %v5804 = vld [vmem:[%s15 + $0x110] sm:$0xff]
      %v5805 = vld [vmem:[%s15 + $0x118] sm:$0xff]
      %v5806 = vld [vmem:[%s15 + $0x120] sm:$0xf]
      %v5807 = vld [vmem:[%s15 + $0x128] sm:$0xf]
      %v5808 = vld [vmem:[%s15 + $0x130] sm:$0xf]
      %v5810 = vsel %vm3848, %v5769, 0
      %v5813 = vsel %vm2316, %v5806, 0
      %v5816 = vsel %vm2316, %v5807, 0
      %v5819 = vsel %vm2316, %v5808, 0
      %5821 = vmatprep.subr.mxu0 %v5771
      %5822 = vmatpush1.msra.mxu0 %v5770
      %5823 = vmatprep.subr.mxu0 %v5774
      %5824 = vmatpush1.msra.mxu0 %v5773
      %5825 = vmatprep.subr.mxu0 %v5777
      %5826 = vmatpush1.msra.mxu0 %v5776
      %5827 = vmatprep.subr.mxu0 %v5780
      %5828 = vmatpush1.msra.mxu0 %v5779
      %5829 = vmatprep.subr.mxu0 %v5783
      %5830 = vmatpush1.msra.mxu0 %v5782
      %5831 = vmatprep.subr.mxu0 %v5786
      %5832 = vmatpush1.msra.mxu0 %v5785
      %5833 = vmatprep.subr.mxu0 %v5789
      %5834 = vmatpush1.msra.mxu0 %v5788
      %5835 = vmatprep.subr.mxu0 %v5792
      %5836 = vmatpush1.msra.mxu0 %v5791
      %5837 = vmatprep.subr.mxu0 %v5795
      %5838 = vmatpush1.msra.mxu0 %v5794
      %5839 = vmatprep.subr.mxu0 %v5798
      %5840 = vmatpush1.msra.mxu0 %v5797
      %5841 = vmatprep.subr.mxu0 %v5801
      %5842 = vmatpush1.msra.mxu0 %v5800
      %5843 = vmatprep.subr.mxu0 %v5804
      %5844 = vmatpush1.msra.mxu0 %v5803
      %5845 = vmatprep.subr.mxu0 %v5816
      %5846 = vmatpush1.msra.mxu0 %v5813
      %5847 = vmatprep.subr.mxu0 0.0
      %5848 = vmatpush1.msra.mxu0 0.0
      %5849 = vmatprep.subr.mxu0 0.0
      %5850 = vmatpush1.msra.mxu0 0.0
      %5851 = vmatprep.subr.mxu0 0.0
      %5852 = vmatpush1.msra.mxu0 0.0
      %5853 = vmatprep.subr.mxu0 0.0
      %5854 = vmatpush1.msra.mxu0 0.0
      %5855 = vmatprep.subr.mxu0 0.0
      %5856 = vmatpush1.msra.mxu0 0.0
      %5857 = vmatprep.subr.mxu0 0.0
      %5858 = vmatpush1.msra.mxu0 0.0
      %5859 = vmatprep.subr.mxu0 0.0
      %5860 = vmatpush1.msra.mxu0 0.0
      %5861 = vmatprep.subr.mxu0 0.0
      %5862 = vmatpush1.msra.mxu0 0.0
      %5863 = vmatprep.subr.mxu0 0.0
      %5864 = vmatpush1.msra.mxu0 0.0
      %5865 = vmatprep.subr.mxu0 0.0
      %5866 = vmatpush1.msra.mxu0 0.0
      %5867 = vmatprep.subr.mxu0 0.0
      %5868 = vmatpush1.msra.mxu0 0.0
      %5869 = vmatprep.subr.mxu0 0.0
      %5870 = vmatpush1.msra.mxu0 0.0
      %5871 = vmatprep.subr.mxu0 0.0
      %5872 = vmatpush1.msra.mxu0 0.0
      %5873 = vmatprep.subr.mxu0 0.0
      %5874 = vmatpush1.msra.mxu0 0.0
      %5875 = vmatprep.subr.mxu0 0.0
      %5876 = vmatpush1.msra.mxu0 0.0
      %5877 = vmatprep.subr.mxu0 0.0
      %5878 = vmatpush1.msra.mxu0 0.0
      %5879 = vmatprep.subr.mxu0 0.0
      %5880 = vmatpush1.msra.mxu0 0.0
      %5881 = vmatprep.subr.mxu0 0.0
      %5882 = vmatpush1.msra.mxu0 0.0
      %5883 = vmatprep.subr.mxu0 0.0
      %5884 = vmatpush1.msra.mxu0 0.0
      %5885 = vmatprep.mubr.f32.mxu0 0.0
      %5886 = vmatmul.mubr.f32.gmra.mrb[0].mxu0 %v5810
      %v5887 = vpop.f32.mrb[0].mxu0
      %v5888 = vadd.f32 0.0, %v5887
      %v5889 = vpop.f32.mrb[0].mxu0
      %v5890 = vadd.f32 0.0, %v5889
      %5891 = vdwg.mxu0
      %5892 = vmatprep.subr.mxu0 0.0
      %5893 = vmatpush1.msra.mxu0 %v5772
      %5894 = vmatprep.subr.mxu0 0.0
      %5895 = vmatpush1.msra.mxu0 %v5775
      %5896 = vmatprep.subr.mxu0 0.0
      %5897 = vmatpush1.msra.mxu0 %v5778
      %5898 = vmatprep.subr.mxu0 0.0
      %5899 = vmatpush1.msra.mxu0 %v5781
      %5900 = vmatprep.subr.mxu0 0.0
      %5901 = vmatpush1.msra.mxu0 %v5784
      %5902 = vmatprep.subr.mxu0 0.0
      %5903 = vmatpush1.msra.mxu0 %v5787
      %5904 = vmatprep.subr.mxu0 0.0
      %5905 = vmatpush1.msra.mxu0 %v5790
      %5906 = vmatprep.subr.mxu0 0.0
      %5907 = vmatpush1.msra.mxu0 %v5793
      %5908 = vmatprep.subr.mxu0 0.0
      %5909 = vmatpush1.msra.mxu0 %v5796
      %5910 = vmatprep.subr.mxu0 0.0
      %5911 = vmatpush1.msra.mxu0 %v5799
      %5912 = vmatprep.subr.mxu0 0.0
      %5913 = vmatpush1.msra.mxu0 %v5802
      %5914 = vmatprep.subr.mxu0 0.0
      %5915 = vmatpush1.msra.mxu0 %v5805
      %5916 = vmatprep.subr.mxu0 0.0
      %5917 = vmatpush1.msra.mxu0 %v5819
      %5918 = vmatprep.subr.mxu0 0.0
      %5919 = vmatpush1.msra.mxu0 0.0
      %5920 = vmatprep.subr.mxu0 0.0
      %5921 = vmatpush1.msra.mxu0 0.0
      %5922 = vmatprep.subr.mxu0 0.0
      %5923 = vmatpush1.msra.mxu0 0.0
      %5924 = vmatprep.subr.mxu0 0.0
      %5925 = vmatpush1.msra.mxu0 0.0
      %5926 = vmatprep.subr.mxu0 0.0
      %5927 = vmatpush1.msra.mxu0 0.0
      %5928 = vmatprep.subr.mxu0 0.0
      %5929 = vmatpush1.msra.mxu0 0.0
      %5930 = vmatprep.subr.mxu0 0.0
      %5931 = vmatpush1.msra.mxu0 0.0
      %5932 = vmatprep.subr.mxu0 0.0
      %5933 = vmatpush1.msra.mxu0 0.0
      %5934 = vmatprep.subr.mxu0 0.0
      %5935 = vmatpush1.msra.mxu0 0.0
      %5936 = vmatprep.subr.mxu0 0.0
      %5937 = vmatpush1.msra.mxu0 0.0
      %5938 = vmatprep.subr.mxu0 0.0
      %5939 = vmatpush1.msra.mxu0 0.0
      %5940 = vmatprep.subr.mxu0 0.0
      %5941 = vmatpush1.msra.mxu0 0.0
      %5942 = vmatprep.subr.mxu0 0.0
      %5943 = vmatpush1.msra.mxu0 0.0
      %5944 = vmatprep.subr.mxu0 0.0
      %5945 = vmatpush1.msra.mxu0 0.0
      %5946 = vmatprep.subr.mxu0 0.0
      %5947 = vmatpush1.msra.mxu0 0.0
      %5948 = vmatprep.subr.mxu0 0.0
      %5949 = vmatpush1.msra.mxu0 0.0
      %5950 = vmatprep.subr.mxu0 0.0
      %5951 = vmatpush1.msra.mxu0 0.0
      %5952 = vmatprep.subr.mxu0 0.0
      %5953 = vmatpush1.msra.mxu0 0.0
      %5954 = vmatprep.subr.mxu0 0.0
      %5955 = vmatpush1.msra.mxu0 0.0
      %5956 = vmatprep.mubr.f32.mxu0 0.0
      %5957 = vmatmul.mubr.f32.gmra.mrb[0].mxu0 %v5810
      %v5958 = vpop.f32.mrb[0].mxu0
      %v5959 = vadd.f32 0.0, %v5958
      %v5960 = vpop.f32.mrb[0].mxu0
      %5961 = vdwg.mxu0
      %5965 = vrot.lane.b32.xlu0 %v5888, 19
      %v5966 = vpop.permute.xlu0 %5965
      %5967 = vrot.lane.b32.xlu0 %v5890, 19
      %v5968 = vpop.permute.xlu0 %5967
      %5969 = vrot.lane.b32.xlu0 %v5959, 19
      %v5970 = vpop.permute.xlu0 %5969
      %v5971 = vsel %vm811, %v5966, %v5968
      %v5972 = vsel %vm811, %v5968, %v5970
      %5976 = vst.msk [vmem:[#allocation2] sm:$0xff] %vm817, %v5966
      %5977 = vst [vmem:[#allocation2 + $0x8] sm:$0xff] %v5971
      %5978 = vst.msk [vmem:[#allocation2 + $0x10] sm:$0xff] %vm820, %v5972
      %v5979 = vld [vmem:[#allocation2] sm:$0xff]
      %v5980 = vld [vmem:[#allocation2 + $0x8] sm:$0xff]
      %v5981 = vld [vmem:[#allocation2 + $0x10] sm:$0xff]
      %v5982 = vld [vmem:[%s9] sm:$0xff]
      %s5983 = scalar_lea.vmem %s9, 8
      %v5984 = vld [vmem:[%s5983] sm:$0xff]
      %5988 = vrot.lane.b32.xlu0 %v5979, 127
      %v5989 = vpop.permute.xlu0 %5988
      %5990 = vrot.lane.b32.xlu0 %v5980, 127
      %v5991 = vpop.permute.xlu0 %5990
      %5992 = vrot.lane.b32.xlu0 %v5981, 127
      %v5993 = vpop.permute.xlu0 %5992
      %v5994 = vsel %vm837, %v5989, %v5991
      %v5995 = vsel %vm837, %v5991, %v5993
      %v6000 = vsel %vm843, %v5984, 0
      %6002 = vmatprep.subr.mxu0 %v5995
      %6003 = vmatpush1.msra.mxu0 %v5994
      %6004 = vmatprep.subr.mxu0 0.0
      %6005 = vmatpush1.msra.mxu0 0.0
      %6006 = vmatprep.subr.mxu0 0.0
      %6007 = vmatpush1.msra.mxu0 0.0
      %6008 = vmatprep.subr.mxu0 0.0
      %6009 = vmatpush1.msra.mxu0 0.0
      %6010 = vmatprep.subr.mxu0 0.0
      %6011 = vmatpush1.msra.mxu0 0.0
      %6012 = vmatprep.subr.mxu0 0.0
      %6013 = vmatpush1.msra.mxu0 0.0
      %6014 = vmatprep.subr.mxu0 0.0
      %6015 = vmatpush1.msra.mxu0 0.0
      %6016 = vmatprep.subr.mxu0 0.0
      %6017 = vmatpush1.msra.mxu0 0.0
      %6018 = vmatprep.subr.mxu0 0.0
      %6019 = vmatpush1.msra.mxu0 0.0
      %6020 = vmatprep.subr.mxu0 0.0
      %6021 = vmatpush1.msra.mxu0 0.0
      %6022 = vmatprep.subr.mxu0 0.0
      %6023 = vmatpush1.msra.mxu0 0.0
      %6024 = vmatprep.subr.mxu0 0.0
      %6025 = vmatpush1.msra.mxu0 0.0
      %6026 = vmatprep.subr.mxu0 0.0
      %6027 = vmatpush1.msra.mxu0 0.0
      %6028 = vmatprep.subr.mxu0 0.0
      %6029 = vmatpush1.msra.mxu0 0.0
      %6030 = vmatprep.subr.mxu0 0.0
      %6031 = vmatpush1.msra.mxu0 0.0
      %6032 = vmatprep.subr.mxu0 0.0
      %6033 = vmatpush1.msra.mxu0 0.0
      %6034 = vmatprep.subr.mxu0 0.0
      %6035 = vmatpush1.msra.mxu0 0.0
      %6036 = vmatprep.subr.mxu0 0.0
      %6037 = vmatpush1.msra.mxu0 0.0
      %6038 = vmatprep.subr.mxu0 0.0
      %6039 = vmatpush1.msra.mxu0 0.0
      %6040 = vmatprep.subr.mxu0 0.0
      %6041 = vmatpush1.msra.mxu0 0.0
      %6042 = vmatprep.subr.mxu0 0.0
      %6043 = vmatpush1.msra.mxu0 0.0
      %6044 = vmatprep.subr.mxu0 0.0
      %6045 = vmatpush1.msra.mxu0 0.0
      %6046 = vmatprep.subr.mxu0 0.0
      %6047 = vmatpush1.msra.mxu0 0.0
      %6048 = vmatprep.subr.mxu0 0.0
      %6049 = vmatpush1.msra.mxu0 0.0
      %6050 = vmatprep.subr.mxu0 0.0
      %6051 = vmatpush1.msra.mxu0 0.0
      %6052 = vmatprep.subr.mxu0 0.0
      %6053 = vmatpush1.msra.mxu0 0.0
      %6054 = vmatprep.subr.mxu0 0.0
      %6055 = vmatpush1.msra.mxu0 0.0
      %6056 = vmatprep.subr.mxu0 0.0
      %6057 = vmatpush1.msra.mxu0 0.0
      %6058 = vmatprep.subr.mxu0 0.0
      %6059 = vmatpush1.msra.mxu0 0.0
      %6060 = vmatprep.subr.mxu0 0.0
      %6061 = vmatpush1.msra.mxu0 0.0
      %6062 = vmatprep.subr.mxu0 0.0
      %6063 = vmatpush1.msra.mxu0 0.0
      %6064 = vmatprep.subr.mxu0 0.0
      %6065 = vmatpush1.msra.mxu0 0.0
      %6066 = vmatprep.mubr.f32.mxu0 0.0
      %6067 = vmatmul.mubr.f32.gmra.mrb[0].mxu0 %v6000
      %v6068 = vpop.f32.mrb[0].mxu0
      %v6069 = vadd.f32 0.0, %v6068
      %v6070 = vpop.f32.mrb[0].mxu0
      %v6071 = vadd.f32 0.0, %v6070
      %6072 = vdwg.mxu0
      %6073 = vmatprep.subr.mxu0 0.0
      %6074 = vmatpush1.msra.mxu0 %v5993
      %6075 = vmatprep.subr.mxu0 0.0
      %6076 = vmatpush1.msra.mxu0 0.0
      %6077 = vmatprep.subr.mxu0 0.0
      %6078 = vmatpush1.msra.mxu0 0.0
      %6079 = vmatprep.subr.mxu0 0.0
      %6080 = vmatpush1.msra.mxu0 0.0
      %6081 = vmatprep.subr.mxu0 0.0
      %6082 = vmatpush1.msra.mxu0 0.0
      %6083 = vmatprep.subr.mxu0 0.0
      %6084 = vmatpush1.msra.mxu0 0.0
      %6085 = vmatprep.subr.mxu0 0.0
      %6086 = vmatpush1.msra.mxu0 0.0
      %6087 = vmatprep.subr.mxu0 0.0
      %6088 = vmatpush1.msra.mxu0 0.0
      %6089 = vmatprep.subr.mxu0 0.0
      %6090 = vmatpush1.msra.mxu0 0.0
      %6091 = vmatprep.subr.mxu0 0.0
      %6092 = vmatpush1.msra.mxu0 0.0
      %6093 = vmatprep.subr.mxu0 0.0
      %6094 = vmatpush1.msra.mxu0 0.0
      %6095 = vmatprep.subr.mxu0 0.0
      %6096 = vmatpush1.msra.mxu0 0.0
      %6097 = vmatprep.subr.mxu0 0.0
      %6098 = vmatpush1.msra.mxu0 0.0
      %6099 = vmatprep.subr.mxu0 0.0
      %6100 = vmatpush1.msra.mxu0 0.0
      %6101 = vmatprep.subr.mxu0 0.0
      %6102 = vmatpush1.msra.mxu0 0.0
      %6103 = vmatprep.subr.mxu0 0.0
      %6104 = vmatpush1.msra.mxu0 0.0
      %6105 = vmatprep.subr.mxu0 0.0
      %6106 = vmatpush1.msra.mxu0 0.0
      %6107 = vmatprep.subr.mxu0 0.0
      %6108 = vmatpush1.msra.mxu0 0.0
      %6109 = vmatprep.subr.mxu0 0.0
      %6110 = vmatpush1.msra.mxu0 0.0
      %6111 = vmatprep.subr.mxu0 0.0
      %6112 = vmatpush1.msra.mxu0 0.0
      %6113 = vmatprep.subr.mxu0 0.0
      %6114 = vmatpush1.msra.mxu0 0.0
      %6115 = vmatprep.subr.mxu0 0.0
      %6116 = vmatpush1.msra.mxu0 0.0
      %6117 = vmatprep.subr.mxu0 0.0
      %6118 = vmatpush1.msra.mxu0 0.0
      %6119 = vmatprep.subr.mxu0 0.0
      %6120 = vmatpush1.msra.mxu0 0.0
      %6121 = vmatprep.subr.mxu0 0.0
      %6122 = vmatpush1.msra.mxu0 0.0
      %6123 = vmatprep.subr.mxu0 0.0
      %6124 = vmatpush1.msra.mxu0 0.0
      %6125 = vmatprep.subr.mxu0 0.0
      %6126 = vmatpush1.msra.mxu0 0.0
      %6127 = vmatprep.subr.mxu0 0.0
      %6128 = vmatpush1.msra.mxu0 0.0
      %6129 = vmatprep.subr.mxu0 0.0
      %6130 = vmatpush1.msra.mxu0 0.0
      %6131 = vmatprep.subr.mxu0 0.0
      %6132 = vmatpush1.msra.mxu0 0.0
      %6133 = vmatprep.subr.mxu0 0.0
      %6134 = vmatpush1.msra.mxu0 0.0
      %6135 = vmatprep.subr.mxu0 0.0
      %6136 = vmatpush1.msra.mxu0 0.0
      %6137 = vmatprep.mubr.f32.mxu0 0.0
      %6138 = vmatmul.mubr.f32.gmra.mrb[0].mxu0 %v6000
      %v6139 = vpop.f32.mrb[0].mxu0
      %v6140 = vadd.f32 0.0, %v6139
      %v6141 = vpop.f32.mrb[0].mxu0
      %6142 = vdwg.mxu0
      %v6144 = vsel %vm843, %v5982, 0
      %6146 = vmatprep.subr.mxu0 %v5980
      %6147 = vmatpush1.msra.mxu0 %v5979
      %6148 = vmatprep.subr.mxu0 0.0
      %6149 = vmatpush1.msra.mxu0 0.0
      %6150 = vmatprep.subr.mxu0 0.0
      %6151 = vmatpush1.msra.mxu0 0.0
      %6152 = vmatprep.subr.mxu0 0.0
      %6153 = vmatpush1.msra.mxu0 0.0
      %6154 = vmatprep.subr.mxu0 0.0
      %6155 = vmatpush1.msra.mxu0 0.0
      %6156 = vmatprep.subr.mxu0 0.0
      %6157 = vmatpush1.msra.mxu0 0.0
      %6158 = vmatprep.subr.mxu0 0.0
      %6159 = vmatpush1.msra.mxu0 0.0
      %6160 = vmatprep.subr.mxu0 0.0
      %6161 = vmatpush1.msra.mxu0 0.0
      %6162 = vmatprep.subr.mxu0 0.0
      %6163 = vmatpush1.msra.mxu0 0.0
      %6164 = vmatprep.subr.mxu0 0.0
      %6165 = vmatpush1.msra.mxu0 0.0
      %6166 = vmatprep.subr.mxu0 0.0
      %6167 = vmatpush1.msra.mxu0 0.0
      %6168 = vmatprep.subr.mxu0 0.0
      %6169 = vmatpush1.msra.mxu0 0.0
      %6170 = vmatprep.subr.mxu0 0.0
      %6171 = vmatpush1.msra.mxu0 0.0
      %6172 = vmatprep.subr.mxu0 0.0
      %6173 = vmatpush1.msra.mxu0 0.0
      %6174 = vmatprep.subr.mxu0 0.0
      %6175 = vmatpush1.msra.mxu0 0.0
      %6176 = vmatprep.subr.mxu0 0.0
      %6177 = vmatpush1.msra.mxu0 0.0
      %6178 = vmatprep.subr.mxu0 0.0
      %6179 = vmatpush1.msra.mxu0 0.0
      %6180 = vmatprep.subr.mxu0 0.0
      %6181 = vmatpush1.msra.mxu0 0.0
      %6182 = vmatprep.subr.mxu0 0.0
      %6183 = vmatpush1.msra.mxu0 0.0
      %6184 = vmatprep.subr.mxu0 0.0
      %6185 = vmatpush1.msra.mxu0 0.0
      %6186 = vmatprep.subr.mxu0 0.0
      %6187 = vmatpush1.msra.mxu0 0.0
      %6188 = vmatprep.subr.mxu0 0.0
      %6189 = vmatpush1.msra.mxu0 0.0
      %6190 = vmatprep.subr.mxu0 0.0
      %6191 = vmatpush1.msra.mxu0 0.0
      %6192 = vmatprep.subr.mxu0 0.0
      %6193 = vmatpush1.msra.mxu0 0.0
      %6194 = vmatprep.subr.mxu0 0.0
      %6195 = vmatpush1.msra.mxu0 0.0
      %6196 = vmatprep.subr.mxu0 0.0
      %6197 = vmatpush1.msra.mxu0 0.0
      %6198 = vmatprep.subr.mxu0 0.0
      %6199 = vmatpush1.msra.mxu0 0.0
      %6200 = vmatprep.subr.mxu0 0.0
      %6201 = vmatpush1.msra.mxu0 0.0
      %6202 = vmatprep.subr.mxu0 0.0
      %6203 = vmatpush1.msra.mxu0 0.0
      %6204 = vmatprep.subr.mxu0 0.0
      %6205 = vmatpush1.msra.mxu0 0.0
      %6206 = vmatprep.subr.mxu0 0.0
      %6207 = vmatpush1.msra.mxu0 0.0
      %6208 = vmatprep.subr.mxu0 0.0
      %6209 = vmatpush1.msra.mxu0 0.0
      %6210 = vmatprep.mubr.f32.mxu0 0.0
      %6211 = vmatmul.mubr.f32.gmra.mrb[0].mxu0 %v6144
      %v6212 = vpop.f32.mrb[0].mxu0
      %v6213 = vadd.f32 %v6069, %v6212
      %v6214 = vpop.f32.mrb[0].mxu0
      %v6215 = vadd.f32 %v6071, %v6214
      %6216 = vdwg.mxu0
      %6217 = vmatprep.subr.mxu0 0.0
      %6218 = vmatpush1.msra.mxu0 %v5981
      %6219 = vmatprep.subr.mxu0 0.0
      %6220 = vmatpush1.msra.mxu0 0.0
      %6221 = vmatprep.subr.mxu0 0.0
      %6222 = vmatpush1.msra.mxu0 0.0
      %6223 = vmatprep.subr.mxu0 0.0
      %6224 = vmatpush1.msra.mxu0 0.0
      %6225 = vmatprep.subr.mxu0 0.0
      %6226 = vmatpush1.msra.mxu0 0.0
      %6227 = vmatprep.subr.mxu0 0.0
      %6228 = vmatpush1.msra.mxu0 0.0
      %6229 = vmatprep.subr.mxu0 0.0
      %6230 = vmatpush1.msra.mxu0 0.0
      %6231 = vmatprep.subr.mxu0 0.0
      %6232 = vmatpush1.msra.mxu0 0.0
      %6233 = vmatprep.subr.mxu0 0.0
      %6234 = vmatpush1.msra.mxu0 0.0
      %6235 = vmatprep.subr.mxu0 0.0
      %6236 = vmatpush1.msra.mxu0 0.0
      %6237 = vmatprep.subr.mxu0 0.0
      %6238 = vmatpush1.msra.mxu0 0.0
      %6239 = vmatprep.subr.mxu0 0.0
      %6240 = vmatpush1.msra.mxu0 0.0
      %6241 = vmatprep.subr.mxu0 0.0
      %6242 = vmatpush1.msra.mxu0 0.0
      %6243 = vmatprep.subr.mxu0 0.0
      %6244 = vmatpush1.msra.mxu0 0.0
      %6245 = vmatprep.subr.mxu0 0.0
      %6246 = vmatpush1.msra.mxu0 0.0
      %6247 = vmatprep.subr.mxu0 0.0
      %6248 = vmatpush1.msra.mxu0 0.0
      %6249 = vmatprep.subr.mxu0 0.0
      %6250 = vmatpush1.msra.mxu0 0.0
      %6251 = vmatprep.subr.mxu0 0.0
      %6252 = vmatpush1.msra.mxu0 0.0
      %6253 = vmatprep.subr.mxu0 0.0
      %6254 = vmatpush1.msra.mxu0 0.0
      %6255 = vmatprep.subr.mxu0 0.0
      %6256 = vmatpush1.msra.mxu0 0.0
      %6257 = vmatprep.subr.mxu0 0.0
      %6258 = vmatpush1.msra.mxu0 0.0
      %6259 = vmatprep.subr.mxu0 0.0
      %6260 = vmatpush1.msra.mxu0 0.0
      %6261 = vmatprep.subr.mxu0 0.0
      %6262 = vmatpush1.msra.mxu0 0.0
      %6263 = vmatprep.subr.mxu0 0.0
      %6264 = vmatpush1.msra.mxu0 0.0
      %6265 = vmatprep.subr.mxu0 0.0
      %6266 = vmatpush1.msra.mxu0 0.0
      %6267 = vmatprep.subr.mxu0 0.0
      %6268 = vmatpush1.msra.mxu0 0.0
      %6269 = vmatprep.subr.mxu0 0.0
      %6270 = vmatpush1.msra.mxu0 0.0
      %6271 = vmatprep.subr.mxu0 0.0
      %6272 = vmatpush1.msra.mxu0 0.0
      %6273 = vmatprep.subr.mxu0 0.0
      %6274 = vmatpush1.msra.mxu0 0.0
      %6275 = vmatprep.subr.mxu0 0.0
      %6276 = vmatpush1.msra.mxu0 0.0
      %6277 = vmatprep.subr.mxu0 0.0
      %6278 = vmatpush1.msra.mxu0 0.0
      %6279 = vmatprep.subr.mxu0 0.0
      %6280 = vmatpush1.msra.mxu0 0.0
      %6281 = vmatprep.mubr.f32.mxu0 0.0
      %6282 = vmatmul.mubr.f32.gmra.mrb[0].mxu0 %v6144
      %v6283 = vpop.f32.mrb[0].mxu0
      %v6284 = vadd.f32 %v6140, %v6283
      %v6285 = vpop.f32.mrb[0].mxu0
      %6286 = vdwg.mxu0
      %s6287 = scalar_lea.vmem %s9, 16
      %v6288 = vld [vmem:[%s6287] sm:$0xff]
      %6289 = vrot.lane.b32.xlu0 %v5979, 126
      %v6290 = vpop.permute.xlu0 %6289
      %6291 = vrot.lane.b32.xlu0 %v5980, 126
      %v6292 = vpop.permute.xlu0 %6291
      %6293 = vrot.lane.b32.xlu0 %v5981, 126
      %v6294 = vpop.permute.xlu0 %6293
      %v6295 = vsel %vm1140, %v6290, %v6292
      %v6296 = vsel %vm1140, %v6292, %v6294
      %v6301 = vsel %vm843, %v6288, 0
      %6303 = vmatprep.subr.mxu0 %v6296
      %6304 = vmatpush1.msra.mxu0 %v6295
      %6305 = vmatprep.subr.mxu0 0.0
      %6306 = vmatpush1.msra.mxu0 0.0
      %6307 = vmatprep.subr.mxu0 0.0
      %6308 = vmatpush1.msra.mxu0 0.0
      %6309 = vmatprep.subr.mxu0 0.0
      %6310 = vmatpush1.msra.mxu0 0.0
      %6311 = vmatprep.subr.mxu0 0.0
      %6312 = vmatpush1.msra.mxu0 0.0
      %6313 = vmatprep.subr.mxu0 0.0
      %6314 = vmatpush1.msra.mxu0 0.0
      %6315 = vmatprep.subr.mxu0 0.0
      %6316 = vmatpush1.msra.mxu0 0.0
      %6317 = vmatprep.subr.mxu0 0.0
      %6318 = vmatpush1.msra.mxu0 0.0
      %6319 = vmatprep.subr.mxu0 0.0
      %6320 = vmatpush1.msra.mxu0 0.0
      %6321 = vmatprep.subr.mxu0 0.0
      %6322 = vmatpush1.msra.mxu0 0.0
      %6323 = vmatprep.subr.mxu0 0.0
      %6324 = vmatpush1.msra.mxu0 0.0
      %6325 = vmatprep.subr.mxu0 0.0
      %6326 = vmatpush1.msra.mxu0 0.0
      %6327 = vmatprep.subr.mxu0 0.0
      %6328 = vmatpush1.msra.mxu0 0.0
      %6329 = vmatprep.subr.mxu0 0.0
      %6330 = vmatpush1.msra.mxu0 0.0
      %6331 = vmatprep.subr.mxu0 0.0
      %6332 = vmatpush1.msra.mxu0 0.0
      %6333 = vmatprep.subr.mxu0 0.0
      %6334 = vmatpush1.msra.mxu0 0.0
      %6335 = vmatprep.subr.mxu0 0.0
      %6336 = vmatpush1.msra.mxu0 0.0
      %6337 = vmatprep.subr.mxu0 0.0
      %6338 = vmatpush1.msra.mxu0 0.0
      %6339 = vmatprep.subr.mxu0 0.0
      %6340 = vmatpush1.msra.mxu0 0.0
      %6341 = vmatprep.subr.mxu0 0.0
      %6342 = vmatpush1.msra.mxu0 0.0
      %6343 = vmatprep.subr.mxu0 0.0
      %6344 = vmatpush1.msra.mxu0 0.0
      %6345 = vmatprep.subr.mxu0 0.0
      %6346 = vmatpush1.msra.mxu0 0.0
      %6347 = vmatprep.subr.mxu0 0.0
      %6348 = vmatpush1.msra.mxu0 0.0
      %6349 = vmatprep.subr.mxu0 0.0
      %6350 = vmatpush1.msra.mxu0 0.0
      %6351 = vmatprep.subr.mxu0 0.0
      %6352 = vmatpush1.msra.mxu0 0.0
      %6353 = vmatprep.subr.mxu0 0.0
      %6354 = vmatpush1.msra.mxu0 0.0
      %6355 = vmatprep.subr.mxu0 0.0
      %6356 = vmatpush1.msra.mxu0 0.0
      %6357 = vmatprep.subr.mxu0 0.0
      %6358 = vmatpush1.msra.mxu0 0.0
      %6359 = vmatprep.subr.mxu0 0.0
      %6360 = vmatpush1.msra.mxu0 0.0
      %6361 = vmatprep.subr.mxu0 0.0
      %6362 = vmatpush1.msra.mxu0 0.0
      %6363 = vmatprep.subr.mxu0 0.0
      %6364 = vmatpush1.msra.mxu0 0.0
      %6365 = vmatprep.subr.mxu0 0.0
      %6366 = vmatpush1.msra.mxu0 0.0
      %6367 = vmatprep.mubr.f32.mxu0 0.0
      %6368 = vmatmul.mubr.f32.gmra.mrb[0].mxu0 %v6301
      %v6369 = vpop.f32.mrb[0].mxu0
      %v6370 = vadd.f32 0.0, %v6369
      %v6371 = vpop.f32.mrb[0].mxu0
      %v6372 = vadd.f32 0.0, %v6371
      %6373 = vdwg.mxu0
      %6374 = vmatprep.subr.mxu0 0.0
      %6375 = vmatpush1.msra.mxu0 %v6294
      %6376 = vmatprep.subr.mxu0 0.0
      %6377 = vmatpush1.msra.mxu0 0.0
      %6378 = vmatprep.subr.mxu0 0.0
      %6379 = vmatpush1.msra.mxu0 0.0
      %6380 = vmatprep.subr.mxu0 0.0
      %6381 = vmatpush1.msra.mxu0 0.0
      %6382 = vmatprep.subr.mxu0 0.0
      %6383 = vmatpush1.msra.mxu0 0.0
      %6384 = vmatprep.subr.mxu0 0.0
      %6385 = vmatpush1.msra.mxu0 0.0
      %6386 = vmatprep.subr.mxu0 0.0
      %6387 = vmatpush1.msra.mxu0 0.0
      %6388 = vmatprep.subr.mxu0 0.0
      %6389 = vmatpush1.msra.mxu0 0.0
      %6390 = vmatprep.subr.mxu0 0.0
      %6391 = vmatpush1.msra.mxu0 0.0
      %6392 = vmatprep.subr.mxu0 0.0
      %6393 = vmatpush1.msra.mxu0 0.0
      %6394 = vmatprep.subr.mxu0 0.0
      %6395 = vmatpush1.msra.mxu0 0.0
      %6396 = vmatprep.subr.mxu0 0.0
      %6397 = vmatpush1.msra.mxu0 0.0
      %6398 = vmatprep.subr.mxu0 0.0
      %6399 = vmatpush1.msra.mxu0 0.0
      %6400 = vmatprep.subr.mxu0 0.0
      %6401 = vmatpush1.msra.mxu0 0.0
      %6402 = vmatprep.subr.mxu0 0.0
      %6403 = vmatpush1.msra.mxu0 0.0
      %6404 = vmatprep.subr.mxu0 0.0
      %6405 = vmatpush1.msra.mxu0 0.0
      %6406 = vmatprep.subr.mxu0 0.0
      %6407 = vmatpush1.msra.mxu0 0.0
      %6408 = vmatprep.subr.mxu0 0.0
      %6409 = vmatpush1.msra.mxu0 0.0
      %6410 = vmatprep.subr.mxu0 0.0
      %6411 = vmatpush1.msra.mxu0 0.0
      %6412 = vmatprep.subr.mxu0 0.0
      %6413 = vmatpush1.msra.mxu0 0.0
      %6414 = vmatprep.subr.mxu0 0.0
      %6415 = vmatpush1.msra.mxu0 0.0
      %6416 = vmatprep.subr.mxu0 0.0
      %6417 = vmatpush1.msra.mxu0 0.0
      %6418 = vmatprep.subr.mxu0 0.0
      %6419 = vmatpush1.msra.mxu0 0.0
      %6420 = vmatprep.subr.mxu0 0.0
      %6421 = vmatpush1.msra.mxu0 0.0
      %6422 = vmatprep.subr.mxu0 0.0
      %6423 = vmatpush1.msra.mxu0 0.0
      %6424 = vmatprep.subr.mxu0 0.0
      %6425 = vmatpush1.msra.mxu0 0.0
      %6426 = vmatprep.subr.mxu0 0.0
      %6427 = vmatpush1.msra.mxu0 0.0
      %6428 = vmatprep.subr.mxu0 0.0
      %6429 = vmatpush1.msra.mxu0 0.0
      %6430 = vmatprep.subr.mxu0 0.0
      %6431 = vmatpush1.msra.mxu0 0.0
      %6432 = vmatprep.subr.mxu0 0.0
      %6433 = vmatpush1.msra.mxu0 0.0
      %6434 = vmatprep.subr.mxu0 0.0
      %6435 = vmatpush1.msra.mxu0 0.0
      %6436 = vmatprep.subr.mxu0 0.0
      %6437 = vmatpush1.msra.mxu0 0.0
      %6438 = vmatprep.mubr.f32.mxu0 0.0
      %6439 = vmatmul.mubr.f32.gmra.mrb[0].mxu0 %v6301
      %v6440 = vpop.f32.mrb[0].mxu0
      %v6441 = vadd.f32 0.0, %v6440
      %v6442 = vpop.f32.mrb[0].mxu0
      %6443 = vdwg.mxu0
      %v6444 = vadd.f32 %v6213, %v6370
      %v6445 = vadd.f32 %v6215, %v6372
      %v6446 = vadd.f32 %v6284, %v6441
      %s6447 = scalar_lea.vmem %s9, 24
      %v6448 = vld [vmem:[%s6447] sm:$0xff]
      %6449 = vrot.lane.b32.xlu0 %v5979, 110
      %v6450 = vpop.permute.xlu0 %6449
      %6451 = vrot.lane.b32.xlu0 %v5980, 110
      %v6452 = vpop.permute.xlu0 %6451
      %6453 = vrot.lane.b32.xlu0 %v5981, 110
      %v6454 = vpop.permute.xlu0 %6453
      %v6455 = vsel %vm1301, %v6450, %v6452
      %v6456 = vsel %vm1301, %v6452, %v6454
      %v6461 = vsel %vm843, %v6448, 0
      %6463 = vmatprep.subr.mxu0 %v6456
      %6464 = vmatpush1.msra.mxu0 %v6455
      %6465 = vmatprep.subr.mxu0 0.0
      %6466 = vmatpush1.msra.mxu0 0.0
      %6467 = vmatprep.subr.mxu0 0.0
      %6468 = vmatpush1.msra.mxu0 0.0
      %6469 = vmatprep.subr.mxu0 0.0
      %6470 = vmatpush1.msra.mxu0 0.0
      %6471 = vmatprep.subr.mxu0 0.0
      %6472 = vmatpush1.msra.mxu0 0.0
      %6473 = vmatprep.subr.mxu0 0.0
      %6474 = vmatpush1.msra.mxu0 0.0
      %6475 = vmatprep.subr.mxu0 0.0
      %6476 = vmatpush1.msra.mxu0 0.0
      %6477 = vmatprep.subr.mxu0 0.0
      %6478 = vmatpush1.msra.mxu0 0.0
      %6479 = vmatprep.subr.mxu0 0.0
      %6480 = vmatpush1.msra.mxu0 0.0
      %6481 = vmatprep.subr.mxu0 0.0
      %6482 = vmatpush1.msra.mxu0 0.0
      %6483 = vmatprep.subr.mxu0 0.0
      %6484 = vmatpush1.msra.mxu0 0.0
      %6485 = vmatprep.subr.mxu0 0.0
      %6486 = vmatpush1.msra.mxu0 0.0
      %6487 = vmatprep.subr.mxu0 0.0
      %6488 = vmatpush1.msra.mxu0 0.0
      %6489 = vmatprep.subr.mxu0 0.0
      %6490 = vmatpush1.msra.mxu0 0.0
      %6491 = vmatprep.subr.mxu0 0.0
      %6492 = vmatpush1.msra.mxu0 0.0
      %6493 = vmatprep.subr.mxu0 0.0
      %6494 = vmatpush1.msra.mxu0 0.0
      %6495 = vmatprep.subr.mxu0 0.0
      %6496 = vmatpush1.msra.mxu0 0.0
      %6497 = vmatprep.subr.mxu0 0.0
      %6498 = vmatpush1.msra.mxu0 0.0
      %6499 = vmatprep.subr.mxu0 0.0
      %6500 = vmatpush1.msra.mxu0 0.0
      %6501 = vmatprep.subr.mxu0 0.0
      %6502 = vmatpush1.msra.mxu0 0.0
      %6503 = vmatprep.subr.mxu0 0.0
      %6504 = vmatpush1.msra.mxu0 0.0
      %6505 = vmatprep.subr.mxu0 0.0
      %6506 = vmatpush1.msra.mxu0 0.0
      %6507 = vmatprep.subr.mxu0 0.0
      %6508 = vmatpush1.msra.mxu0 0.0
      %6509 = vmatprep.subr.mxu0 0.0
      %6510 = vmatpush1.msra.mxu0 0.0
      %6511 = vmatprep.subr.mxu0 0.0
      %6512 = vmatpush1.msra.mxu0 0.0
      %6513 = vmatprep.subr.mxu0 0.0
      %6514 = vmatpush1.msra.mxu0 0.0
      %6515 = vmatprep.subr.mxu0 0.0
      %6516 = vmatpush1.msra.mxu0 0.0
      %6517 = vmatprep.subr.mxu0 0.0
      %6518 = vmatpush1.msra.mxu0 0.0
      %6519 = vmatprep.subr.mxu0 0.0
      %6520 = vmatpush1.msra.mxu0 0.0
      %6521 = vmatprep.subr.mxu0 0.0
      %6522 = vmatpush1.msra.mxu0 0.0
      %6523 = vmatprep.subr.mxu0 0.0
      %6524 = vmatpush1.msra.mxu0 0.0
      %6525 = vmatprep.subr.mxu0 0.0
      %6526 = vmatpush1.msra.mxu0 0.0
      %6527 = vmatprep.mubr.f32.mxu0 0.0
      %6528 = vmatmul.mubr.f32.gmra.mrb[0].mxu0 %v6461
      %v6529 = vpop.f32.mrb[0].mxu0
      %v6530 = vadd.f32 0.0, %v6529
      %v6531 = vpop.f32.mrb[0].mxu0
      %v6532 = vadd.f32 0.0, %v6531
      %6533 = vdwg.mxu0
      %6534 = vmatprep.subr.mxu0 0.0
      %6535 = vmatpush1.msra.mxu0 %v6454
      %6536 = vmatprep.subr.mxu0 0.0
      %6537 = vmatpush1.msra.mxu0 0.0
      %6538 = vmatprep.subr.mxu0 0.0
      %6539 = vmatpush1.msra.mxu0 0.0
      %6540 = vmatprep.subr.mxu0 0.0
      %6541 = vmatpush1.msra.mxu0 0.0
      %6542 = vmatprep.subr.mxu0 0.0
      %6543 = vmatpush1.msra.mxu0 0.0
      %6544 = vmatprep.subr.mxu0 0.0
      %6545 = vmatpush1.msra.mxu0 0.0
      %6546 = vmatprep.subr.mxu0 0.0
      %6547 = vmatpush1.msra.mxu0 0.0
      %6548 = vmatprep.subr.mxu0 0.0
      %6549 = vmatpush1.msra.mxu0 0.0
      %6550 = vmatprep.subr.mxu0 0.0
      %6551 = vmatpush1.msra.mxu0 0.0
      %6552 = vmatprep.subr.mxu0 0.0
      %6553 = vmatpush1.msra.mxu0 0.0
      %6554 = vmatprep.subr.mxu0 0.0
      %6555 = vmatpush1.msra.mxu0 0.0
      %6556 = vmatprep.subr.mxu0 0.0
      %6557 = vmatpush1.msra.mxu0 0.0
      %6558 = vmatprep.subr.mxu0 0.0
      %6559 = vmatpush1.msra.mxu0 0.0
      %6560 = vmatprep.subr.mxu0 0.0
      %6561 = vmatpush1.msra.mxu0 0.0
      %6562 = vmatprep.subr.mxu0 0.0
      %6563 = vmatpush1.msra.mxu0 0.0
      %6564 = vmatprep.subr.mxu0 0.0
      %6565 = vmatpush1.msra.mxu0 0.0
      %6566 = vmatprep.subr.mxu0 0.0
      %6567 = vmatpush1.msra.mxu0 0.0
      %6568 = vmatprep.subr.mxu0 0.0
      %6569 = vmatpush1.msra.mxu0 0.0
      %6570 = vmatprep.subr.mxu0 0.0
      %6571 = vmatpush1.msra.mxu0 0.0
      %6572 = vmatprep.subr.mxu0 0.0
      %6573 = vmatpush1.msra.mxu0 0.0
      %6574 = vmatprep.subr.mxu0 0.0
      %6575 = vmatpush1.msra.mxu0 0.0
      %6576 = vmatprep.subr.mxu0 0.0
      %6577 = vmatpush1.msra.mxu0 0.0
      %6578 = vmatprep.subr.mxu0 0.0
      %6579 = vmatpush1.msra.mxu0 0.0
      %6580 = vmatprep.subr.mxu0 0.0
      %6581 = vmatpush1.msra.mxu0 0.0
      %6582 = vmatprep.subr.mxu0 0.0
      %6583 = vmatpush1.msra.mxu0 0.0
      %6584 = vmatprep.subr.mxu0 0.0
      %6585 = vmatpush1.msra.mxu0 0.0
      %6586 = vmatprep.subr.mxu0 0.0
      %6587 = vmatpush1.msra.mxu0 0.0
      %6588 = vmatprep.subr.mxu0 0.0
      %6589 = vmatpush1.msra.mxu0 0.0
      %6590 = vmatprep.subr.mxu0 0.0
      %6591 = vmatpush1.msra.mxu0 0.0
      %6592 = vmatprep.subr.mxu0 0.0
      %6593 = vmatpush1.msra.mxu0 0.0
      %6594 = vmatprep.subr.mxu0 0.0
      %6595 = vmatpush1.msra.mxu0 0.0
      %6596 = vmatprep.subr.mxu0 0.0
      %6597 = vmatpush1.msra.mxu0 0.0
      %6598 = vmatprep.mubr.f32.mxu0 0.0
      %6599 = vmatmul.mubr.f32.gmra.mrb[0].mxu0 %v6461
      %v6600 = vpop.f32.mrb[0].mxu0
      %v6601 = vadd.f32 0.0, %v6600
      %v6602 = vpop.f32.mrb[0].mxu0
      %6603 = vdwg.mxu0
      %v6604 = vadd.f32 %v6444, %v6530
      %v6605 = vadd.f32 %v6445, %v6532
      %v6606 = vadd.f32 %v6446, %v6601
      %s6607 = scalar_lea.vmem %s9, 32
      %v6608 = vld [vmem:[%s6607] sm:$0xff]
      %6609 = vrot.lane.b32.xlu0 %v5979, 109
      %v6610 = vpop.permute.xlu0 %6609
      %6611 = vrot.lane.b32.xlu0 %v5980, 109
      %v6612 = vpop.permute.xlu0 %6611
      %6613 = vrot.lane.b32.xlu0 %v5981, 109
      %v6614 = vpop.permute.xlu0 %6613
      %v6615 = vsel %vm1462, %v6610, %v6612
      %v6616 = vsel %vm1462, %v6612, %v6614
      %v6621 = vsel %vm843, %v6608, 0
      %6623 = vmatprep.subr.mxu0 %v6616
      %6624 = vmatpush1.msra.mxu0 %v6615
      %6625 = vmatprep.subr.mxu0 0.0
      %6626 = vmatpush1.msra.mxu0 0.0
      %6627 = vmatprep.subr.mxu0 0.0
      %6628 = vmatpush1.msra.mxu0 0.0
      %6629 = vmatprep.subr.mxu0 0.0
      %6630 = vmatpush1.msra.mxu0 0.0
      %6631 = vmatprep.subr.mxu0 0.0
      %6632 = vmatpush1.msra.mxu0 0.0
      %6633 = vmatprep.subr.mxu0 0.0
      %6634 = vmatpush1.msra.mxu0 0.0
      %6635 = vmatprep.subr.mxu0 0.0
      %6636 = vmatpush1.msra.mxu0 0.0
      %6637 = vmatprep.subr.mxu0 0.0
      %6638 = vmatpush1.msra.mxu0 0.0
      %6639 = vmatprep.subr.mxu0 0.0
      %6640 = vmatpush1.msra.mxu0 0.0
      %6641 = vmatprep.subr.mxu0 0.0
      %6642 = vmatpush1.msra.mxu0 0.0
      %6643 = vmatprep.subr.mxu0 0.0
      %6644 = vmatpush1.msra.mxu0 0.0
      %6645 = vmatprep.subr.mxu0 0.0
      %6646 = vmatpush1.msra.mxu0 0.0
      %6647 = vmatprep.subr.mxu0 0.0
      %6648 = vmatpush1.msra.mxu0 0.0
      %6649 = vmatprep.subr.mxu0 0.0
      %6650 = vmatpush1.msra.mxu0 0.0
      %6651 = vmatprep.subr.mxu0 0.0
      %6652 = vmatpush1.msra.mxu0 0.0
      %6653 = vmatprep.subr.mxu0 0.0
      %6654 = vmatpush1.msra.mxu0 0.0
      %6655 = vmatprep.subr.mxu0 0.0
      %6656 = vmatpush1.msra.mxu0 0.0
      %6657 = vmatprep.subr.mxu0 0.0
      %6658 = vmatpush1.msra.mxu0 0.0
      %6659 = vmatprep.subr.mxu0 0.0
      %6660 = vmatpush1.msra.mxu0 0.0
      %6661 = vmatprep.subr.mxu0 0.0
      %6662 = vmatpush1.msra.mxu0 0.0
      %6663 = vmatprep.subr.mxu0 0.0
      %6664 = vmatpush1.msra.mxu0 0.0
      %6665 = vmatprep.subr.mxu0 0.0
      %6666 = vmatpush1.msra.mxu0 0.0
      %6667 = vmatprep.subr.mxu0 0.0
      %6668 = vmatpush1.msra.mxu0 0.0
      %6669 = vmatprep.subr.mxu0 0.0
      %6670 = vmatpush1.msra.mxu0 0.0
      %6671 = vmatprep.subr.mxu0 0.0
      %6672 = vmatpush1.msra.mxu0 0.0
      %6673 = vmatprep.subr.mxu0 0.0
      %6674 = vmatpush1.msra.mxu0 0.0
      %6675 = vmatprep.subr.mxu0 0.0
      %6676 = vmatpush1.msra.mxu0 0.0
      %6677 = vmatprep.subr.mxu0 0.0
      %6678 = vmatpush1.msra.mxu0 0.0
      %6679 = vmatprep.subr.mxu0 0.0
      %6680 = vmatpush1.msra.mxu0 0.0
      %6681 = vmatprep.subr.mxu0 0.0
      %6682 = vmatpush1.msra.mxu0 0.0
      %6683 = vmatprep.subr.mxu0 0.0
      %6684 = vmatpush1.msra.mxu0 0.0
      %6685 = vmatprep.subr.mxu0 0.0
      %6686 = vmatpush1.msra.mxu0 0.0
      %6687 = vmatprep.mubr.f32.mxu0 0.0
      %6688 = vmatmul.mubr.f32.gmra.mrb[0].mxu0 %v6621
      %v6689 = vpop.f32.mrb[0].mxu0
      %v6690 = vadd.f32 0.0, %v6689
      %v6691 = vpop.f32.mrb[0].mxu0
      %v6692 = vadd.f32 0.0, %v6691
      %6693 = vdwg.mxu0
      %6694 = vmatprep.subr.mxu0 0.0
      %6695 = vmatpush1.msra.mxu0 %v6614
      %6696 = vmatprep.subr.mxu0 0.0
      %6697 = vmatpush1.msra.mxu0 0.0
      %6698 = vmatprep.subr.mxu0 0.0
      %6699 = vmatpush1.msra.mxu0 0.0
      %6700 = vmatprep.subr.mxu0 0.0
      %6701 = vmatpush1.msra.mxu0 0.0
      %6702 = vmatprep.subr.mxu0 0.0
      %6703 = vmatpush1.msra.mxu0 0.0
      %6704 = vmatprep.subr.mxu0 0.0
      %6705 = vmatpush1.msra.mxu0 0.0
      %6706 = vmatprep.subr.mxu0 0.0
      %6707 = vmatpush1.msra.mxu0 0.0
      %6708 = vmatprep.subr.mxu0 0.0
      %6709 = vmatpush1.msra.mxu0 0.0
      %6710 = vmatprep.subr.mxu0 0.0
      %6711 = vmatpush1.msra.mxu0 0.0
      %6712 = vmatprep.subr.mxu0 0.0
      %6713 = vmatpush1.msra.mxu0 0.0
      %6714 = vmatprep.subr.mxu0 0.0
      %6715 = vmatpush1.msra.mxu0 0.0
      %6716 = vmatprep.subr.mxu0 0.0
      %6717 = vmatpush1.msra.mxu0 0.0
      %6718 = vmatprep.subr.mxu0 0.0
      %6719 = vmatpush1.msra.mxu0 0.0
      %6720 = vmatprep.subr.mxu0 0.0
      %6721 = vmatpush1.msra.mxu0 0.0
      %6722 = vmatprep.subr.mxu0 0.0
      %6723 = vmatpush1.msra.mxu0 0.0
      %6724 = vmatprep.subr.mxu0 0.0
      %6725 = vmatpush1.msra.mxu0 0.0
      %6726 = vmatprep.subr.mxu0 0.0
      %6727 = vmatpush1.msra.mxu0 0.0
      %6728 = vmatprep.subr.mxu0 0.0
      %6729 = vmatpush1.msra.mxu0 0.0
      %6730 = vmatprep.subr.mxu0 0.0
      %6731 = vmatpush1.msra.mxu0 0.0
      %6732 = vmatprep.subr.mxu0 0.0
      %6733 = vmatpush1.msra.mxu0 0.0
      %6734 = vmatprep.subr.mxu0 0.0
      %6735 = vmatpush1.msra.mxu0 0.0
      %6736 = vmatprep.subr.mxu0 0.0
      %6737 = vmatpush1.msra.mxu0 0.0
      %6738 = vmatprep.subr.mxu0 0.0
      %6739 = vmatpush1.msra.mxu0 0.0
      %6740 = vmatprep.subr.mxu0 0.0
      %6741 = vmatpush1.msra.mxu0 0.0
      %6742 = vmatprep.subr.mxu0 0.0
      %6743 = vmatpush1.msra.mxu0 0.0
      %6744 = vmatprep.subr.mxu0 0.0
      %6745 = vmatpush1.msra.mxu0 0.0
      %6746 = vmatprep.subr.mxu0 0.0
      %6747 = vmatpush1.msra.mxu0 0.0
      %6748 = vmatprep.subr.mxu0 0.0
      %6749 = vmatpush1.msra.mxu0 0.0
      %6750 = vmatprep.subr.mxu0 0.0
      %6751 = vmatpush1.msra.mxu0 0.0
      %6752 = vmatprep.subr.mxu0 0.0
      %6753 = vmatpush1.msra.mxu0 0.0
      %6754 = vmatprep.subr.mxu0 0.0
      %6755 = vmatpush1.msra.mxu0 0.0
      %6756 = vmatprep.subr.mxu0 0.0
      %6757 = vmatpush1.msra.mxu0 0.0
      %6758 = vmatprep.mubr.f32.mxu0 0.0
      %6759 = vmatmul.mubr.f32.gmra.mrb[0].mxu0 %v6621
      %v6760 = vpop.f32.mrb[0].mxu0
      %v6761 = vadd.f32 0.0, %v6760
      %v6762 = vpop.f32.mrb[0].mxu0
      %6763 = vdwg.mxu0
      %v6764 = vadd.f32 %v6604, %v6690
      %v6765 = vadd.f32 %v6605, %v6692
      %v6766 = vadd.f32 %v6606, %v6761
      %s6767 = scalar_lea.vmem %s9, 40
      %v6768 = vld [vmem:[%s6767] sm:$0xff]
      %6769 = vrot.lane.b32.xlu0 %v5979, 108
      %v6770 = vpop.permute.xlu0 %6769
      %6771 = vrot.lane.b32.xlu0 %v5980, 108
      %v6772 = vpop.permute.xlu0 %6771
      %6773 = vrot.lane.b32.xlu0 %v5981, 108
      %v6774 = vpop.permute.xlu0 %6773
      %v6775 = vsel %vm1623, %v6770, %v6772
      %v6776 = vsel %vm1623, %v6772, %v6774
      %v6781 = vsel %vm843, %v6768, 0
      %6783 = vmatprep.subr.mxu0 %v6776
      %6784 = vmatpush1.msra.mxu0 %v6775
      %6785 = vmatprep.subr.mxu0 0.0
      %6786 = vmatpush1.msra.mxu0 0.0
      %6787 = vmatprep.subr.mxu0 0.0
      %6788 = vmatpush1.msra.mxu0 0.0
      %6789 = vmatprep.subr.mxu0 0.0
      %6790 = vmatpush1.msra.mxu0 0.0
      %6791 = vmatprep.subr.mxu0 0.0
      %6792 = vmatpush1.msra.mxu0 0.0
      %6793 = vmatprep.subr.mxu0 0.0
      %6794 = vmatpush1.msra.mxu0 0.0
      %6795 = vmatprep.subr.mxu0 0.0
      %6796 = vmatpush1.msra.mxu0 0.0
      %6797 = vmatprep.subr.mxu0 0.0
      %6798 = vmatpush1.msra.mxu0 0.0
      %6799 = vmatprep.subr.mxu0 0.0
      %6800 = vmatpush1.msra.mxu0 0.0
      %6801 = vmatprep.subr.mxu0 0.0
      %6802 = vmatpush1.msra.mxu0 0.0
      %6803 = vmatprep.subr.mxu0 0.0
      %6804 = vmatpush1.msra.mxu0 0.0
      %6805 = vmatprep.subr.mxu0 0.0
      %6806 = vmatpush1.msra.mxu0 0.0
      %6807 = vmatprep.subr.mxu0 0.0
      %6808 = vmatpush1.msra.mxu0 0.0
      %6809 = vmatprep.subr.mxu0 0.0
      %6810 = vmatpush1.msra.mxu0 0.0
      %6811 = vmatprep.subr.mxu0 0.0
      %6812 = vmatpush1.msra.mxu0 0.0
      %6813 = vmatprep.subr.mxu0 0.0
      %6814 = vmatpush1.msra.mxu0 0.0
      %6815 = vmatprep.subr.mxu0 0.0
      %6816 = vmatpush1.msra.mxu0 0.0
      %6817 = vmatprep.subr.mxu0 0.0
      %6818 = vmatpush1.msra.mxu0 0.0
      %6819 = vmatprep.subr.mxu0 0.0
      %6820 = vmatpush1.msra.mxu0 0.0
      %6821 = vmatprep.subr.mxu0 0.0
      %6822 = vmatpush1.msra.mxu0 0.0
      %6823 = vmatprep.subr.mxu0 0.0
      %6824 = vmatpush1.msra.mxu0 0.0
      %6825 = vmatprep.subr.mxu0 0.0
      %6826 = vmatpush1.msra.mxu0 0.0
      %6827 = vmatprep.subr.mxu0 0.0
      %6828 = vmatpush1.msra.mxu0 0.0
      %6829 = vmatprep.subr.mxu0 0.0
      %6830 = vmatpush1.msra.mxu0 0.0
      %6831 = vmatprep.subr.mxu0 0.0
      %6832 = vmatpush1.msra.mxu0 0.0
      %6833 = vmatprep.subr.mxu0 0.0
      %6834 = vmatpush1.msra.mxu0 0.0
      %6835 = vmatprep.subr.mxu0 0.0
      %6836 = vmatpush1.msra.mxu0 0.0
      %6837 = vmatprep.subr.mxu0 0.0
      %6838 = vmatpush1.msra.mxu0 0.0
      %6839 = vmatprep.subr.mxu0 0.0
      %6840 = vmatpush1.msra.mxu0 0.0
      %6841 = vmatprep.subr.mxu0 0.0
      %6842 = vmatpush1.msra.mxu0 0.0
      %6843 = vmatprep.subr.mxu0 0.0
      %6844 = vmatpush1.msra.mxu0 0.0
      %6845 = vmatprep.subr.mxu0 0.0
      %6846 = vmatpush1.msra.mxu0 0.0
      %6847 = vmatprep.mubr.f32.mxu0 0.0
      %6848 = vmatmul.mubr.f32.gmra.mrb[0].mxu0 %v6781
      %v6849 = vpop.f32.mrb[0].mxu0
      %v6850 = vadd.f32 0.0, %v6849
      %v6851 = vpop.f32.mrb[0].mxu0
      %v6852 = vadd.f32 0.0, %v6851
      %6853 = vdwg.mxu0
      %6854 = vmatprep.subr.mxu0 0.0
      %6855 = vmatpush1.msra.mxu0 %v6774
      %6856 = vmatprep.subr.mxu0 0.0
      %6857 = vmatpush1.msra.mxu0 0.0
      %6858 = vmatprep.subr.mxu0 0.0
      %6859 = vmatpush1.msra.mxu0 0.0
      %6860 = vmatprep.subr.mxu0 0.0
      %6861 = vmatpush1.msra.mxu0 0.0
      %6862 = vmatprep.subr.mxu0 0.0
      %6863 = vmatpush1.msra.mxu0 0.0
      %6864 = vmatprep.subr.mxu0 0.0
      %6865 = vmatpush1.msra.mxu0 0.0
      %6866 = vmatprep.subr.mxu0 0.0
      %6867 = vmatpush1.msra.mxu0 0.0
      %6868 = vmatprep.subr.mxu0 0.0
      %6869 = vmatpush1.msra.mxu0 0.0
      %6870 = vmatprep.subr.mxu0 0.0
      %6871 = vmatpush1.msra.mxu0 0.0
      %6872 = vmatprep.subr.mxu0 0.0
      %6873 = vmatpush1.msra.mxu0 0.0
      %6874 = vmatprep.subr.mxu0 0.0
      %6875 = vmatpush1.msra.mxu0 0.0
      %6876 = vmatprep.subr.mxu0 0.0
      %6877 = vmatpush1.msra.mxu0 0.0
      %6878 = vmatprep.subr.mxu0 0.0
      %6879 = vmatpush1.msra.mxu0 0.0
      %6880 = vmatprep.subr.mxu0 0.0
      %6881 = vmatpush1.msra.mxu0 0.0
      %6882 = vmatprep.subr.mxu0 0.0
      %6883 = vmatpush1.msra.mxu0 0.0
      %6884 = vmatprep.subr.mxu0 0.0
      %6885 = vmatpush1.msra.mxu0 0.0
      %6886 = vmatprep.subr.mxu0 0.0
      %6887 = vmatpush1.msra.mxu0 0.0
      %6888 = vmatprep.subr.mxu0 0.0
      %6889 = vmatpush1.msra.mxu0 0.0
      %6890 = vmatprep.subr.mxu0 0.0
      %6891 = vmatpush1.msra.mxu0 0.0
      %6892 = vmatprep.subr.mxu0 0.0
      %6893 = vmatpush1.msra.mxu0 0.0
      %6894 = vmatprep.subr.mxu0 0.0
      %6895 = vmatpush1.msra.mxu0 0.0
      %6896 = vmatprep.subr.mxu0 0.0
      %6897 = vmatpush1.msra.mxu0 0.0
      %6898 = vmatprep.subr.mxu0 0.0
      %6899 = vmatpush1.msra.mxu0 0.0
      %6900 = vmatprep.subr.mxu0 0.0
      %6901 = vmatpush1.msra.mxu0 0.0
      %6902 = vmatprep.subr.mxu0 0.0
      %6903 = vmatpush1.msra.mxu0 0.0
      %6904 = vmatprep.subr.mxu0 0.0
      %6905 = vmatpush1.msra.mxu0 0.0
      %6906 = vmatprep.subr.mxu0 0.0
      %6907 = vmatpush1.msra.mxu0 0.0
      %6908 = vmatprep.subr.mxu0 0.0
      %6909 = vmatpush1.msra.mxu0 0.0
      %6910 = vmatprep.subr.mxu0 0.0
      %6911 = vmatpush1.msra.mxu0 0.0
      %6912 = vmatprep.subr.mxu0 0.0
      %6913 = vmatpush1.msra.mxu0 0.0
      %6914 = vmatprep.subr.mxu0 0.0
      %6915 = vmatpush1.msra.mxu0 0.0
      %6916 = vmatprep.subr.mxu0 0.0
      %6917 = vmatpush1.msra.mxu0 0.0
      %6918 = vmatprep.mubr.f32.mxu0 0.0
      %6919 = vmatmul.mubr.f32.gmra.mrb[0].mxu0 %v6781
      %v6920 = vpop.f32.mrb[0].mxu0
      %v6921 = vadd.f32 0.0, %v6920
      %v6922 = vpop.f32.mrb[0].mxu0
      %6923 = vdwg.mxu0
      %v6924 = vadd.f32 %v6764, %v6850
      %v6925 = vadd.f32 %v6765, %v6852
      %v6926 = vadd.f32 %v6766, %v6921
      %s6927 = scalar_lea.vmem %s9, 48
      %v6928 = vld [vmem:[%s6927] sm:$0xff]
      %6929 = vrot.lane.b32.xlu0 %v5979, 92
      %v6930 = vpop.permute.xlu0 %6929
      %6931 = vrot.lane.b32.xlu0 %v5980, 92
      %v6932 = vpop.permute.xlu0 %6931
      %6933 = vrot.lane.b32.xlu0 %v5981, 92
      %v6934 = vpop.permute.xlu0 %6933
      %v6935 = vsel %vm1784, %v6930, %v6932
      %v6936 = vsel %vm1784, %v6932, %v6934
      %v6941 = vsel %vm843, %v6928, 0
      %6943 = vmatprep.subr.mxu0 %v6936
      %6944 = vmatpush1.msra.mxu0 %v6935
      %6945 = vmatprep.subr.mxu0 0.0
      %6946 = vmatpush1.msra.mxu0 0.0
      %6947 = vmatprep.subr.mxu0 0.0
      %6948 = vmatpush1.msra.mxu0 0.0
      %6949 = vmatprep.subr.mxu0 0.0
      %6950 = vmatpush1.msra.mxu0 0.0
      %6951 = vmatprep.subr.mxu0 0.0
      %6952 = vmatpush1.msra.mxu0 0.0
      %6953 = vmatprep.subr.mxu0 0.0
      %6954 = vmatpush1.msra.mxu0 0.0
      %6955 = vmatprep.subr.mxu0 0.0
      %6956 = vmatpush1.msra.mxu0 0.0
      %6957 = vmatprep.subr.mxu0 0.0
      %6958 = vmatpush1.msra.mxu0 0.0
      %6959 = vmatprep.subr.mxu0 0.0
      %6960 = vmatpush1.msra.mxu0 0.0
      %6961 = vmatprep.subr.mxu0 0.0
      %6962 = vmatpush1.msra.mxu0 0.0
      %6963 = vmatprep.subr.mxu0 0.0
      %6964 = vmatpush1.msra.mxu0 0.0
      %6965 = vmatprep.subr.mxu0 0.0
      %6966 = vmatpush1.msra.mxu0 0.0
      %6967 = vmatprep.subr.mxu0 0.0
      %6968 = vmatpush1.msra.mxu0 0.0
      %6969 = vmatprep.subr.mxu0 0.0
      %6970 = vmatpush1.msra.mxu0 0.0
      %6971 = vmatprep.subr.mxu0 0.0
      %6972 = vmatpush1.msra.mxu0 0.0
      %6973 = vmatprep.subr.mxu0 0.0
      %6974 = vmatpush1.msra.mxu0 0.0
      %6975 = vmatprep.subr.mxu0 0.0
      %6976 = vmatpush1.msra.mxu0 0.0
      %6977 = vmatprep.subr.mxu0 0.0
      %6978 = vmatpush1.msra.mxu0 0.0
      %6979 = vmatprep.subr.mxu0 0.0
      %6980 = vmatpush1.msra.mxu0 0.0
      %6981 = vmatprep.subr.mxu0 0.0
      %6982 = vmatpush1.msra.mxu0 0.0
      %6983 = vmatprep.subr.mxu0 0.0
      %6984 = vmatpush1.msra.mxu0 0.0
      %6985 = vmatprep.subr.mxu0 0.0
      %6986 = vmatpush1.msra.mxu0 0.0
      %6987 = vmatprep.subr.mxu0 0.0
      %6988 = vmatpush1.msra.mxu0 0.0
      %6989 = vmatprep.subr.mxu0 0.0
      %6990 = vmatpush1.msra.mxu0 0.0
      %6991 = vmatprep.subr.mxu0 0.0
      %6992 = vmatpush1.msra.mxu0 0.0
      %6993 = vmatprep.subr.mxu0 0.0
      %6994 = vmatpush1.msra.mxu0 0.0
      %6995 = vmatprep.subr.mxu0 0.0
      %6996 = vmatpush1.msra.mxu0 0.0
      %6997 = vmatprep.subr.mxu0 0.0
      %6998 = vmatpush1.msra.mxu0 0.0
      %6999 = vmatprep.subr.mxu0 0.0
      %7000 = vmatpush1.msra.mxu0 0.0
      %7001 = vmatprep.subr.mxu0 0.0
      %7002 = vmatpush1.msra.mxu0 0.0
      %7003 = vmatprep.subr.mxu0 0.0
      %7004 = vmatpush1.msra.mxu0 0.0
      %7005 = vmatprep.subr.mxu0 0.0
      %7006 = vmatpush1.msra.mxu0 0.0
      %7007 = vmatprep.mubr.f32.mxu0 0.0
      %7008 = vmatmul.mubr.f32.gmra.mrb[0].mxu0 %v6941
      %v7009 = vpop.f32.mrb[0].mxu0
      %v7010 = vadd.f32 0.0, %v7009
      %v7011 = vpop.f32.mrb[0].mxu0
      %v7012 = vadd.f32 0.0, %v7011
      %7013 = vdwg.mxu0
      %7014 = vmatprep.subr.mxu0 0.0
      %7015 = vmatpush1.msra.mxu0 %v6934
      %7016 = vmatprep.subr.mxu0 0.0
      %7017 = vmatpush1.msra.mxu0 0.0
      %7018 = vmatprep.subr.mxu0 0.0
      %7019 = vmatpush1.msra.mxu0 0.0
      %7020 = vmatprep.subr.mxu0 0.0
      %7021 = vmatpush1.msra.mxu0 0.0
      %7022 = vmatprep.subr.mxu0 0.0
      %7023 = vmatpush1.msra.mxu0 0.0
      %7024 = vmatprep.subr.mxu0 0.0
      %7025 = vmatpush1.msra.mxu0 0.0
      %7026 = vmatprep.subr.mxu0 0.0
      %7027 = vmatpush1.msra.mxu0 0.0
      %7028 = vmatprep.subr.mxu0 0.0
      %7029 = vmatpush1.msra.mxu0 0.0
      %7030 = vmatprep.subr.mxu0 0.0
      %7031 = vmatpush1.msra.mxu0 0.0
      %7032 = vmatprep.subr.mxu0 0.0
      %7033 = vmatpush1.msra.mxu0 0.0
      %7034 = vmatprep.subr.mxu0 0.0
      %7035 = vmatpush1.msra.mxu0 0.0
      %7036 = vmatprep.subr.mxu0 0.0
      %7037 = vmatpush1.msra.mxu0 0.0
      %7038 = vmatprep.subr.mxu0 0.0
      %7039 = vmatpush1.msra.mxu0 0.0
      %7040 = vmatprep.subr.mxu0 0.0
      %7041 = vmatpush1.msra.mxu0 0.0
      %7042 = vmatprep.subr.mxu0 0.0
      %7043 = vmatpush1.msra.mxu0 0.0
      %7044 = vmatprep.subr.mxu0 0.0
      %7045 = vmatpush1.msra.mxu0 0.0
      %7046 = vmatprep.subr.mxu0 0.0
      %7047 = vmatpush1.msra.mxu0 0.0
      %7048 = vmatprep.subr.mxu0 0.0
      %7049 = vmatpush1.msra.mxu0 0.0
      %7050 = vmatprep.subr.mxu0 0.0
      %7051 = vmatpush1.msra.mxu0 0.0
      %7052 = vmatprep.subr.mxu0 0.0
      %7053 = vmatpush1.msra.mxu0 0.0
      %7054 = vmatprep.subr.mxu0 0.0
      %7055 = vmatpush1.msra.mxu0 0.0
      %7056 = vmatprep.subr.mxu0 0.0
      %7057 = vmatpush1.msra.mxu0 0.0
      %7058 = vmatprep.subr.mxu0 0.0
      %7059 = vmatpush1.msra.mxu0 0.0
      %7060 = vmatprep.subr.mxu0 0.0
      %7061 = vmatpush1.msra.mxu0 0.0
      %7062 = vmatprep.subr.mxu0 0.0
      %7063 = vmatpush1.msra.mxu0 0.0
      %7064 = vmatprep.subr.mxu0 0.0
      %7065 = vmatpush1.msra.mxu0 0.0
      %7066 = vmatprep.subr.mxu0 0.0
      %7067 = vmatpush1.msra.mxu0 0.0
      %7068 = vmatprep.subr.mxu0 0.0
      %7069 = vmatpush1.msra.mxu0 0.0
      %7070 = vmatprep.subr.mxu0 0.0
      %7071 = vmatpush1.msra.mxu0 0.0
      %7072 = vmatprep.subr.mxu0 0.0
      %7073 = vmatpush1.msra.mxu0 0.0
      %7074 = vmatprep.subr.mxu0 0.0
      %7075 = vmatpush1.msra.mxu0 0.0
      %7076 = vmatprep.subr.mxu0 0.0
      %7077 = vmatpush1.msra.mxu0 0.0
      %7078 = vmatprep.mubr.f32.mxu0 0.0
      %7079 = vmatmul.mubr.f32.gmra.mrb[0].mxu0 %v6941
      %v7080 = vpop.f32.mrb[0].mxu0
      %v7081 = vadd.f32 0.0, %v7080
      %v7082 = vpop.f32.mrb[0].mxu0
      %7083 = vdwg.mxu0
      %v7084 = vadd.f32 %v6924, %v7010
      %v7085 = vadd.f32 %v6925, %v7012
      %v7086 = vadd.f32 %v6926, %v7081
      %s7087 = scalar_lea.vmem %s9, 56
      %v7088 = vld [vmem:[%s7087] sm:$0xff]
      %7089 = vrot.lane.b32.xlu0 %v5979, 91
      %v7090 = vpop.permute.xlu0 %7089
      %7091 = vrot.lane.b32.xlu0 %v5980, 91
      %v7092 = vpop.permute.xlu0 %7091
      %7093 = vrot.lane.b32.xlu0 %v5981, 91
      %v7094 = vpop.permute.xlu0 %7093
      %v7095 = vsel %vm1945, %v7090, %v7092
      %v7096 = vsel %vm1945, %v7092, %v7094
      %v7101 = vsel %vm843, %v7088, 0
      %7103 = vmatprep.subr.mxu0 %v7096
      %7104 = vmatpush1.msra.mxu0 %v7095
      %7105 = vmatprep.subr.mxu0 0.0
      %7106 = vmatpush1.msra.mxu0 0.0
      %7107 = vmatprep.subr.mxu0 0.0
      %7108 = vmatpush1.msra.mxu0 0.0
      %7109 = vmatprep.subr.mxu0 0.0
      %7110 = vmatpush1.msra.mxu0 0.0
      %7111 = vmatprep.subr.mxu0 0.0
      %7112 = vmatpush1.msra.mxu0 0.0
      %7113 = vmatprep.subr.mxu0 0.0
      %7114 = vmatpush1.msra.mxu0 0.0
      %7115 = vmatprep.subr.mxu0 0.0
      %7116 = vmatpush1.msra.mxu0 0.0
      %7117 = vmatprep.subr.mxu0 0.0
      %7118 = vmatpush1.msra.mxu0 0.0
      %7119 = vmatprep.subr.mxu0 0.0
      %7120 = vmatpush1.msra.mxu0 0.0
      %7121 = vmatprep.subr.mxu0 0.0
      %7122 = vmatpush1.msra.mxu0 0.0
      %7123 = vmatprep.subr.mxu0 0.0
      %7124 = vmatpush1.msra.mxu0 0.0
      %7125 = vmatprep.subr.mxu0 0.0
      %7126 = vmatpush1.msra.mxu0 0.0
      %7127 = vmatprep.subr.mxu0 0.0
      %7128 = vmatpush1.msra.mxu0 0.0
      %7129 = vmatprep.subr.mxu0 0.0
      %7130 = vmatpush1.msra.mxu0 0.0
      %7131 = vmatprep.subr.mxu0 0.0
      %7132 = vmatpush1.msra.mxu0 0.0
      %7133 = vmatprep.subr.mxu0 0.0
      %7134 = vmatpush1.msra.mxu0 0.0
      %7135 = vmatprep.subr.mxu0 0.0
      %7136 = vmatpush1.msra.mxu0 0.0
      %7137 = vmatprep.subr.mxu0 0.0
      %7138 = vmatpush1.msra.mxu0 0.0
      %7139 = vmatprep.subr.mxu0 0.0
      %7140 = vmatpush1.msra.mxu0 0.0
      %7141 = vmatprep.subr.mxu0 0.0
      %7142 = vmatpush1.msra.mxu0 0.0
      %7143 = vmatprep.subr.mxu0 0.0
      %7144 = vmatpush1.msra.mxu0 0.0
      %7145 = vmatprep.subr.mxu0 0.0
      %7146 = vmatpush1.msra.mxu0 0.0
      %7147 = vmatprep.subr.mxu0 0.0
      %7148 = vmatpush1.msra.mxu0 0.0
      %7149 = vmatprep.subr.mxu0 0.0
      %7150 = vmatpush1.msra.mxu0 0.0
      %7151 = vmatprep.subr.mxu0 0.0
      %7152 = vmatpush1.msra.mxu0 0.0
      %7153 = vmatprep.subr.mxu0 0.0
      %7154 = vmatpush1.msra.mxu0 0.0
      %7155 = vmatprep.subr.mxu0 0.0
      %7156 = vmatpush1.msra.mxu0 0.0
      %7157 = vmatprep.subr.mxu0 0.0
      %7158 = vmatpush1.msra.mxu0 0.0
      %7159 = vmatprep.subr.mxu0 0.0
      %7160 = vmatpush1.msra.mxu0 0.0
      %7161 = vmatprep.subr.mxu0 0.0
      %7162 = vmatpush1.msra.mxu0 0.0
      %7163 = vmatprep.subr.mxu0 0.0
      %7164 = vmatpush1.msra.mxu0 0.0
      %7165 = vmatprep.subr.mxu0 0.0
      %7166 = vmatpush1.msra.mxu0 0.0
      %7167 = vmatprep.mubr.f32.mxu0 0.0
      %7168 = vmatmul.mubr.f32.gmra.mrb[0].mxu0 %v7101
      %v7169 = vpop.f32.mrb[0].mxu0
      %v7170 = vadd.f32 0.0, %v7169
      %v7171 = vpop.f32.mrb[0].mxu0
      %v7172 = vadd.f32 0.0, %v7171
      %7173 = vdwg.mxu0
      %7174 = vmatprep.subr.mxu0 0.0
      %7175 = vmatpush1.msra.mxu0 %v7094
      %7176 = vmatprep.subr.mxu0 0.0
      %7177 = vmatpush1.msra.mxu0 0.0
      %7178 = vmatprep.subr.mxu0 0.0
      %7179 = vmatpush1.msra.mxu0 0.0
      %7180 = vmatprep.subr.mxu0 0.0
      %7181 = vmatpush1.msra.mxu0 0.0
      %7182 = vmatprep.subr.mxu0 0.0
      %7183 = vmatpush1.msra.mxu0 0.0
      %7184 = vmatprep.subr.mxu0 0.0
      %7185 = vmatpush1.msra.mxu0 0.0
      %7186 = vmatprep.subr.mxu0 0.0
      %7187 = vmatpush1.msra.mxu0 0.0
      %7188 = vmatprep.subr.mxu0 0.0
      %7189 = vmatpush1.msra.mxu0 0.0
      %7190 = vmatprep.subr.mxu0 0.0
      %7191 = vmatpush1.msra.mxu0 0.0
      %7192 = vmatprep.subr.mxu0 0.0
      %7193 = vmatpush1.msra.mxu0 0.0
      %7194 = vmatprep.subr.mxu0 0.0
      %7195 = vmatpush1.msra.mxu0 0.0
      %7196 = vmatprep.subr.mxu0 0.0
      %7197 = vmatpush1.msra.mxu0 0.0
      %7198 = vmatprep.subr.mxu0 0.0
      %7199 = vmatpush1.msra.mxu0 0.0
      %7200 = vmatprep.subr.mxu0 0.0
      %7201 = vmatpush1.msra.mxu0 0.0
      %7202 = vmatprep.subr.mxu0 0.0
      %7203 = vmatpush1.msra.mxu0 0.0
      %7204 = vmatprep.subr.mxu0 0.0
      %7205 = vmatpush1.msra.mxu0 0.0
      %7206 = vmatprep.subr.mxu0 0.0
      %7207 = vmatpush1.msra.mxu0 0.0
      %7208 = vmatprep.subr.mxu0 0.0
      %7209 = vmatpush1.msra.mxu0 0.0
      %7210 = vmatprep.subr.mxu0 0.0
      %7211 = vmatpush1.msra.mxu0 0.0
      %7212 = vmatprep.subr.mxu0 0.0
      %7213 = vmatpush1.msra.mxu0 0.0
      %7214 = vmatprep.subr.mxu0 0.0
      %7215 = vmatpush1.msra.mxu0 0.0
      %7216 = vmatprep.subr.mxu0 0.0
      %7217 = vmatpush1.msra.mxu0 0.0
      %7218 = vmatprep.subr.mxu0 0.0
      %7219 = vmatpush1.msra.mxu0 0.0
      %7220 = vmatprep.subr.mxu0 0.0
      %7221 = vmatpush1.msra.mxu0 0.0
      %7222 = vmatprep.subr.mxu0 0.0
      %7223 = vmatpush1.msra.mxu0 0.0
      %7224 = vmatprep.subr.mxu0 0.0
      %7225 = vmatpush1.msra.mxu0 0.0
      %7226 = vmatprep.subr.mxu0 0.0
      %7227 = vmatpush1.msra.mxu0 0.0
      %7228 = vmatprep.subr.mxu0 0.0
      %7229 = vmatpush1.msra.mxu0 0.0
      %7230 = vmatprep.subr.mxu0 0.0
      %7231 = vmatpush1.msra.mxu0 0.0
      %7232 = vmatprep.subr.mxu0 0.0
      %7233 = vmatpush1.msra.mxu0 0.0
      %7234 = vmatprep.subr.mxu0 0.0
      %7235 = vmatpush1.msra.mxu0 0.0
      %7236 = vmatprep.subr.mxu0 0.0
      %7237 = vmatpush1.msra.mxu0 0.0
      %7238 = vmatprep.mubr.f32.mxu0 0.0
      %7239 = vmatmul.mubr.f32.gmra.mrb[0].mxu0 %v7101
      %v7240 = vpop.f32.mrb[0].mxu0
      %v7241 = vadd.f32 0.0, %v7240
      %v7242 = vpop.f32.mrb[0].mxu0
      %7243 = vdwg.mxu0
      %v7244 = vadd.f32 %v7084, %v7170
      %v7245 = vadd.f32 %v7085, %v7172
      %v7246 = vadd.f32 %v7086, %v7241
      %s7247 = scalar_lea.vmem %s9, 64
      %v7248 = vld [vmem:[%s7247] sm:$0xff]
      %7249 = vrot.lane.b32.xlu0 %v5979, 90
      %v7250 = vpop.permute.xlu0 %7249
      %7251 = vrot.lane.b32.xlu0 %v5980, 90
      %v7252 = vpop.permute.xlu0 %7251
      %7253 = vrot.lane.b32.xlu0 %v5981, 90
      %v7254 = vpop.permute.xlu0 %7253
      %v7255 = vsel %vm2106, %v7250, %v7252
      %v7256 = vsel %vm2106, %v7252, %v7254
      %v7261 = vsel %vm843, %v7248, 0
      %7263 = vmatprep.subr.mxu0 %v7256
      %7264 = vmatpush1.msra.mxu0 %v7255
      %7265 = vmatprep.subr.mxu0 0.0
      %7266 = vmatpush1.msra.mxu0 0.0
      %7267 = vmatprep.subr.mxu0 0.0
      %7268 = vmatpush1.msra.mxu0 0.0
      %7269 = vmatprep.subr.mxu0 0.0
      %7270 = vmatpush1.msra.mxu0 0.0
      %7271 = vmatprep.subr.mxu0 0.0
      %7272 = vmatpush1.msra.mxu0 0.0
      %7273 = vmatprep.subr.mxu0 0.0
      %7274 = vmatpush1.msra.mxu0 0.0
      %7275 = vmatprep.subr.mxu0 0.0
      %7276 = vmatpush1.msra.mxu0 0.0
      %7277 = vmatprep.subr.mxu0 0.0
      %7278 = vmatpush1.msra.mxu0 0.0
      %7279 = vmatprep.subr.mxu0 0.0
      %7280 = vmatpush1.msra.mxu0 0.0
      %7281 = vmatprep.subr.mxu0 0.0
      %7282 = vmatpush1.msra.mxu0 0.0
      %7283 = vmatprep.subr.mxu0 0.0
      %7284 = vmatpush1.msra.mxu0 0.0
      %7285 = vmatprep.subr.mxu0 0.0
      %7286 = vmatpush1.msra.mxu0 0.0
      %7287 = vmatprep.subr.mxu0 0.0
      %7288 = vmatpush1.msra.mxu0 0.0
      %7289 = vmatprep.subr.mxu0 0.0
      %7290 = vmatpush1.msra.mxu0 0.0
      %7291 = vmatprep.subr.mxu0 0.0
      %7292 = vmatpush1.msra.mxu0 0.0
      %7293 = vmatprep.subr.mxu0 0.0
      %7294 = vmatpush1.msra.mxu0 0.0
      %7295 = vmatprep.subr.mxu0 0.0
      %7296 = vmatpush1.msra.mxu0 0.0
      %7297 = vmatprep.subr.mxu0 0.0
      %7298 = vmatpush1.msra.mxu0 0.0
      %7299 = vmatprep.subr.mxu0 0.0
      %7300 = vmatpush1.msra.mxu0 0.0
      %7301 = vmatprep.subr.mxu0 0.0
      %7302 = vmatpush1.msra.mxu0 0.0
      %7303 = vmatprep.subr.mxu0 0.0
      %7304 = vmatpush1.msra.mxu0 0.0
      %7305 = vmatprep.subr.mxu0 0.0
      %7306 = vmatpush1.msra.mxu0 0.0
      %7307 = vmatprep.subr.mxu0 0.0
      %7308 = vmatpush1.msra.mxu0 0.0
      %7309 = vmatprep.subr.mxu0 0.0
      %7310 = vmatpush1.msra.mxu0 0.0
      %7311 = vmatprep.subr.mxu0 0.0
      %7312 = vmatpush1.msra.mxu0 0.0
      %7313 = vmatprep.subr.mxu0 0.0
      %7314 = vmatpush1.msra.mxu0 0.0
      %7315 = vmatprep.subr.mxu0 0.0
      %7316 = vmatpush1.msra.mxu0 0.0
      %7317 = vmatprep.subr.mxu0 0.0
      %7318 = vmatpush1.msra.mxu0 0.0
      %7319 = vmatprep.subr.mxu0 0.0
      %7320 = vmatpush1.msra.mxu0 0.0
      %7321 = vmatprep.subr.mxu0 0.0
      %7322 = vmatpush1.msra.mxu0 0.0
      %7323 = vmatprep.subr.mxu0 0.0
      %7324 = vmatpush1.msra.mxu0 0.0
      %7325 = vmatprep.subr.mxu0 0.0
      %7326 = vmatpush1.msra.mxu0 0.0
      %7327 = vmatprep.mubr.f32.mxu0 0.0
      %7328 = vmatmul.mubr.f32.gmra.mrb[0].mxu0 %v7261
      %v7329 = vpop.f32.mrb[0].mxu0
      %v7330 = vadd.f32 0.0, %v7329
      %v7331 = vpop.f32.mrb[0].mxu0
      %v7332 = vadd.f32 0.0, %v7331
      %7333 = vdwg.mxu0
      %7334 = vmatprep.subr.mxu0 0.0
      %7335 = vmatpush1.msra.mxu0 %v7254
      %7336 = vmatprep.subr.mxu0 0.0
      %7337 = vmatpush1.msra.mxu0 0.0
      %7338 = vmatprep.subr.mxu0 0.0
      %7339 = vmatpush1.msra.mxu0 0.0
      %7340 = vmatprep.subr.mxu0 0.0
      %7341 = vmatpush1.msra.mxu0 0.0
      %7342 = vmatprep.subr.mxu0 0.0
      %7343 = vmatpush1.msra.mxu0 0.0
      %7344 = vmatprep.subr.mxu0 0.0
      %7345 = vmatpush1.msra.mxu0 0.0
      %7346 = vmatprep.subr.mxu0 0.0
      %7347 = vmatpush1.msra.mxu0 0.0
      %7348 = vmatprep.subr.mxu0 0.0
      %7349 = vmatpush1.msra.mxu0 0.0
      %7350 = vmatprep.subr.mxu0 0.0
      %7351 = vmatpush1.msra.mxu0 0.0
      %7352 = vmatprep.subr.mxu0 0.0
      %7353 = vmatpush1.msra.mxu0 0.0
      %7354 = vmatprep.subr.mxu0 0.0
      %7355 = vmatpush1.msra.mxu0 0.0
      %7356 = vmatprep.subr.mxu0 0.0
      %7357 = vmatpush1.msra.mxu0 0.0
      %7358 = vmatprep.subr.mxu0 0.0
      %7359 = vmatpush1.msra.mxu0 0.0
      %7360 = vmatprep.subr.mxu0 0.0
      %7361 = vmatpush1.msra.mxu0 0.0
      %7362 = vmatprep.subr.mxu0 0.0
      %7363 = vmatpush1.msra.mxu0 0.0
      %7364 = vmatprep.subr.mxu0 0.0
      %7365 = vmatpush1.msra.mxu0 0.0
      %7366 = vmatprep.subr.mxu0 0.0
      %7367 = vmatpush1.msra.mxu0 0.0
      %7368 = vmatprep.subr.mxu0 0.0
      %7369 = vmatpush1.msra.mxu0 0.0
      %7370 = vmatprep.subr.mxu0 0.0
      %7371 = vmatpush1.msra.mxu0 0.0
      %7372 = vmatprep.subr.mxu0 0.0
      %7373 = vmatpush1.msra.mxu0 0.0
      %7374 = vmatprep.subr.mxu0 0.0
      %7375 = vmatpush1.msra.mxu0 0.0
      %7376 = vmatprep.subr.mxu0 0.0
      %7377 = vmatpush1.msra.mxu0 0.0
      %7378 = vmatprep.subr.mxu0 0.0
      %7379 = vmatpush1.msra.mxu0 0.0
      %7380 = vmatprep.subr.mxu0 0.0
      %7381 = vmatpush1.msra.mxu0 0.0
      %7382 = vmatprep.subr.mxu0 0.0
      %7383 = vmatpush1.msra.mxu0 0.0
      %7384 = vmatprep.subr.mxu0 0.0
      %7385 = vmatpush1.msra.mxu0 0.0
      %7386 = vmatprep.subr.mxu0 0.0
      %7387 = vmatpush1.msra.mxu0 0.0
      %7388 = vmatprep.subr.mxu0 0.0
      %7389 = vmatpush1.msra.mxu0 0.0
      %7390 = vmatprep.subr.mxu0 0.0
      %7391 = vmatpush1.msra.mxu0 0.0
      %7392 = vmatprep.subr.mxu0 0.0
      %7393 = vmatpush1.msra.mxu0 0.0
      %7394 = vmatprep.subr.mxu0 0.0
      %7395 = vmatpush1.msra.mxu0 0.0
      %7396 = vmatprep.subr.mxu0 0.0
      %7397 = vmatpush1.msra.mxu0 0.0
      %7398 = vmatprep.mubr.f32.mxu0 0.0
      %7399 = vmatmul.mubr.f32.gmra.mrb[0].mxu0 %v7261
      %v7400 = vpop.f32.mrb[0].mxu0
      %v7401 = vadd.f32 0.0, %v7400
      %v7402 = vpop.f32.mrb[0].mxu0
      %7403 = vdwg.mxu0
      %v7404 = vadd.f32 %v7244, %v7330
      %v7405 = vadd.f32 %v7245, %v7332
      %v7406 = vadd.f32 %v7246, %v7401
      %v7407 = vld [vmem:[%s10] sm:$0xff]
      %7409 = vset.pattern.permute.xlu0 0
      %7410 = vperm.xlu0 %7409, %v7407
      %v7411 = vpop.permute.xlu0 %7410
      %v7413 = vadd.f32 %v7404, %v7411
      %v7414 = vadd.f32 %v7405, %v7411
      %v7415 = vadd.f32 %v7406, %v7411
      %v7416 = vsub.f32 0.0, %v7413
      %v7417 = vsub.f32 0.0, %v7414
      %v7418 = vsub.f32 0.0, %v7415
      %v7419 = vmul.f32 %v7416, 1.442695
      %v7420 = vpow.pop %v7419
      %v7421 = vmul.f32 %v7417, 1.442695
      %v7422 = vpow.pop %v7421
      %v7423 = vmul.f32 %v7418, 1.442695
      %v7424 = vpow.pop %v7423
      %v7425 = vadd.f32 %v7420, 1.0
      %v7426 = vadd.f32 %v7422, 1.0
      %v7427 = vadd.f32 %v7424, 1.0
      %v7428 = vrcp.pop %v7425
      %v7429 = vrcp.pop %v7426
      %v7430 = vrcp.pop %v7427
      %v7431 = vld [vmem:[%s16] sm:$0xff]
      %v7432 = vld [vmem:[%s16 + $0x8] sm:$0xff]
      %v7433 = vld [vmem:[%s16 + $0x10] sm:$0xff]
      %v7434 = vld [vmem:[%s16 + $0x18] sm:$0xff]
      %v7435 = vld [vmem:[%s16 + $0x20] sm:$0xff]
      %v7436 = vld [vmem:[%s16 + $0x28] sm:$0xff]
      %v7437 = vld [vmem:[%s16 + $0x30] sm:$0xff]
      %v7438 = vld [vmem:[%s16 + $0x38] sm:$0xff]
      %v7439 = vld [vmem:[%s16 + $0x40] sm:$0xff]
      %v7440 = vld [vmem:[%s16 + $0x48] sm:$0xff]
      %v7441 = vld [vmem:[%s16 + $0x50] sm:$0xff]
      %v7442 = vld [vmem:[%s16 + $0x58] sm:$0xff]
      %v7443 = vld [vmem:[%s16 + $0x60] sm:$0xff]
      %v7444 = vld [vmem:[%s16 + $0x68] sm:$0xff]
      %v7445 = vld [vmem:[%s16 + $0x70] sm:$0xff]
      %v7446 = vld [vmem:[%s16 + $0x78] sm:$0xff]
      %v7447 = vld [vmem:[%s16 + $0x80] sm:$0xff]
      %v7448 = vld [vmem:[%s16 + $0x88] sm:$0xff]
      %v7449 = vld [vmem:[%s16 + $0x90] sm:$0xff]
      %v7450 = vld [vmem:[%s16 + $0x98] sm:$0xff]
      %v7451 = vld [vmem:[%s16 + $0xa0] sm:$0xff]
      %v7452 = vld [vmem:[%s16 + $0xa8] sm:$0xff]
      %v7453 = vld [vmem:[%s16 + $0xb0] sm:$0xff]
      %v7454 = vld [vmem:[%s16 + $0xb8] sm:$0xff]
      %v7455 = vld [vmem:[%s16 + $0xc0] sm:$0xff]
      %v7456 = vld [vmem:[%s16 + $0xc8] sm:$0xff]
      %v7457 = vld [vmem:[%s16 + $0xd0] sm:$0xff]
      %v7458 = vld [vmem:[%s16 + $0xd8] sm:$0xff]
      %v7459 = vld [vmem:[%s16 + $0xe0] sm:$0xff]
      %v7460 = vld [vmem:[%s16 + $0xe8] sm:$0xff]
      %v7461 = vld [vmem:[%s16 + $0xf0] sm:$0xff]
      %v7462 = vld [vmem:[%s16 + $0xf8] sm:$0xff]
      %v7463 = vld [vmem:[%s16 + $0x100] sm:$0xff]
      %v7464 = vld [vmem:[%s16 + $0x108] sm:$0xff]
      %v7465 = vld [vmem:[%s16 + $0x110] sm:$0xff]
      %v7466 = vld [vmem:[%s16 + $0x118] sm:$0xff]
      %v7467 = vld [vmem:[%s16 + $0x120] sm:$0xff]
      %v7468 = vld [vmem:[%s16 + $0x128] sm:$0xff]
      %v7469 = vld [vmem:[%s16 + $0x130] sm:$0xff]
      %v7470 = vld [vmem:[%s16 + $0x138] sm:$0xff]
      %v7471 = vld [vmem:[%s16 + $0x140] sm:$0xff]
      %v7472 = vld [vmem:[%s16 + $0x148] sm:$0xff]
      %v7473 = vld [vmem:[%s16 + $0x150] sm:$0xff]
      %v7474 = vld [vmem:[%s16 + $0x158] sm:$0xff]
      %v7475 = vld [vmem:[%s16 + $0x160] sm:$0xff]
      %v7476 = vld [vmem:[%s16 + $0x168] sm:$0xff]
      %v7477 = vld [vmem:[%s16 + $0x170] sm:$0xff]
      %v7478 = vld [vmem:[%s16 + $0x178] sm:$0xff]
      %v7479 = vld [vmem:[%s16 + $0x180] sm:$0xff]
      %v7480 = vld [vmem:[%s16 + $0x188] sm:$0xff]
      %v7481 = vld [vmem:[%s16 + $0x190] sm:$0xff]
      %v7482 = vld [vmem:[%s16 + $0x198] sm:$0xff]
      %v7483 = vld [vmem:[%s16 + $0x1a0] sm:$0xff]
      %v7484 = vld [vmem:[%s16 + $0x1a8] sm:$0xff]
      %v7485 = vld [vmem:[%s16 + $0x1b0] sm:$0xff]
      %v7486 = vld [vmem:[%s16 + $0x1b8] sm:$0xff]
      %v7487 = vld [vmem:[%s16 + $0x1c0] sm:$0xff]
      %v7488 = vld [vmem:[%s16 + $0x1c8] sm:$0xff]
      %v7489 = vld [vmem:[%s16 + $0x1d0] sm:$0xff]
      %v7490 = vld [vmem:[%s16 + $0x1d8] sm:$0xff]
      %v7491 = vld [vmem:[%s16 + $0x1e0] sm:$0xff]
      %v7492 = vld [vmem:[%s16 + $0x1e8] sm:$0xff]
      %v7493 = vld [vmem:[%s16 + $0x1f0] sm:$0xff]
      %v7494 = vld [vmem:[%s16 + $0x1f8] sm:$0xff]
      %v7495 = vld [vmem:[%s16 + $0x200] sm:$0xff]
      %v7496 = vld [vmem:[%s16 + $0x208] sm:$0xff]
      %v7497 = vld [vmem:[%s16 + $0x210] sm:$0xff]
      %v7498 = vld [vmem:[%s16 + $0x218] sm:$0xff]
      %v7499 = vld [vmem:[%s16 + $0x220] sm:$0xff]
      %v7500 = vld [vmem:[%s16 + $0x228] sm:$0xff]
      %v7501 = vld [vmem:[%s16 + $0x230] sm:$0xff]
      %v7502 = vld [vmem:[%s16 + $0x238] sm:$0xff]
      %v7503 = vld [vmem:[%s16 + $0x240] sm:$0xff]
      %v7504 = vld [vmem:[%s16 + $0x248] sm:$0xff]
      %v7505 = vld [vmem:[%s16 + $0x250] sm:$0xff]
      %v7506 = vld [vmem:[%s16 + $0x258] sm:$0xff]
      %v7507 = vld [vmem:[%s16 + $0x260] sm:$0xff]
      %v7508 = vld [vmem:[%s16 + $0x268] sm:$0xff]
      %v7509 = vld [vmem:[%s16 + $0x270] sm:$0xff]
      %v7510 = vld [vmem:[%s16 + $0x278] sm:$0xff]
      %v7511 = vld [vmem:[%s16 + $0x280] sm:$0xf]
      %v7512 = vld [vmem:[%s16 + $0x288] sm:$0xf]
      %v7514 = vsel %vm2312, %v7430, 0
      %v7517 = vsel %vm2316, %v7511, 0
      %v7520 = vsel %vm2316, %v7512, 0
      %7522 = vmatprep.subr.mxu0 %v7432
      %7523 = vmatpush1.msra.mxu0 %v7431
      %7524 = vmatprep.subr.mxu0 %v7434
      %7525 = vmatpush1.msra.mxu0 %v7433
      %7526 = vmatprep.subr.mxu0 %v7436
      %7527 = vmatpush1.msra.mxu0 %v7435
      %7528 = vmatprep.subr.mxu0 %v7438
      %7529 = vmatpush1.msra.mxu0 %v7437
      %7530 = vmatprep.subr.mxu0 %v7440
      %7531 = vmatpush1.msra.mxu0 %v7439
      %7532 = vmatprep.subr.mxu0 %v7442
      %7533 = vmatpush1.msra.mxu0 %v7441
      %7534 = vmatprep.subr.mxu0 %v7444
      %7535 = vmatpush1.msra.mxu0 %v7443
      %7536 = vmatprep.subr.mxu0 %v7446
      %7537 = vmatpush1.msra.mxu0 %v7445
      %7538 = vmatprep.subr.mxu0 %v7448
      %7539 = vmatpush1.msra.mxu0 %v7447
      %7540 = vmatprep.subr.mxu0 %v7450
      %7541 = vmatpush1.msra.mxu0 %v7449
      %7542 = vmatprep.subr.mxu0 %v7452
      %7543 = vmatpush1.msra.mxu0 %v7451
      %7544 = vmatprep.subr.mxu0 %v7454
      %7545 = vmatpush1.msra.mxu0 %v7453
      %7546 = vmatprep.subr.mxu0 %v7456
      %7547 = vmatpush1.msra.mxu0 %v7455
      %7548 = vmatprep.subr.mxu0 %v7458
      %7549 = vmatpush1.msra.mxu0 %v7457
      %7550 = vmatprep.subr.mxu0 %v7460
      %7551 = vmatpush1.msra.mxu0 %v7459
      %7552 = vmatprep.subr.mxu0 %v7462
      %7553 = vmatpush1.msra.mxu0 %v7461
      %7554 = vmatprep.subr.mxu0 %v7464
      %7555 = vmatpush1.msra.mxu0 %v7463
      %7556 = vmatprep.subr.mxu0 %v7466
      %7557 = vmatpush1.msra.mxu0 %v7465
      %7558 = vmatprep.subr.mxu0 %v7468
      %7559 = vmatpush1.msra.mxu0 %v7467
      %7560 = vmatprep.subr.mxu0 %v7470
      %7561 = vmatpush1.msra.mxu0 %v7469
      %7562 = vmatprep.subr.mxu0 %v7472
      %7563 = vmatpush1.msra.mxu0 %v7471
      %7564 = vmatprep.subr.mxu0 %v7474
      %7565 = vmatpush1.msra.mxu0 %v7473
      %7566 = vmatprep.subr.mxu0 %v7476
      %7567 = vmatpush1.msra.mxu0 %v7475
      %7568 = vmatprep.subr.mxu0 %v7478
      %7569 = vmatpush1.msra.mxu0 %v7477
      %7570 = vmatprep.subr.mxu0 %v7480
      %7571 = vmatpush1.msra.mxu0 %v7479
      %7572 = vmatprep.subr.mxu0 %v7482
      %7573 = vmatpush1.msra.mxu0 %v7481
      %7574 = vmatprep.subr.mxu0 %v7484
      %7575 = vmatpush1.msra.mxu0 %v7483
      %7576 = vmatprep.subr.mxu0 %v7486
      %7577 = vmatpush1.msra.mxu0 %v7485
      %7578 = vmatprep.subr.mxu0 %v7488
      %7579 = vmatpush1.msra.mxu0 %v7487
      %7580 = vmatprep.subr.mxu0 %v7490
      %7581 = vmatpush1.msra.mxu0 %v7489
      %7582 = vmatprep.subr.mxu0 %v7492
      %7583 = vmatpush1.msra.mxu0 %v7491
      %7584 = vmatprep.subr.mxu0 %v7494
      %7585 = vmatpush1.msra.mxu0 %v7493
      %7586 = vmatprep.mubr.f32.mxu0 %v7429
      %7587 = vmatmul.mubr.f32.gmra.mrb[0].mxu0 %v7428
      %v7588 = vpop.f32.mrb[0].mxu0
      %v7589 = vadd.f32 0.0, %v7588
      %v7590 = vpop.f32.mrb[0].mxu0
      %v7591 = vadd.f32 0.0, %v7590
      %7592 = vdwg.mxu0
      %7593 = vmatprep.subr.mxu0 %v7496
      %7594 = vmatpush1.msra.mxu0 %v7495
      %7595 = vmatprep.subr.mxu0 %v7498
      %7596 = vmatpush1.msra.mxu0 %v7497
      %7597 = vmatprep.subr.mxu0 %v7500
      %7598 = vmatpush1.msra.mxu0 %v7499
      %7599 = vmatprep.subr.mxu0 %v7502
      %7600 = vmatpush1.msra.mxu0 %v7501
      %7601 = vmatprep.subr.mxu0 %v7504
      %7602 = vmatpush1.msra.mxu0 %v7503
      %7603 = vmatprep.subr.mxu0 %v7506
      %7604 = vmatpush1.msra.mxu0 %v7505
      %7605 = vmatprep.subr.mxu0 %v7508
      %7606 = vmatpush1.msra.mxu0 %v7507
      %7607 = vmatprep.subr.mxu0 %v7510
      %7608 = vmatpush1.msra.mxu0 %v7509
      %7609 = vmatprep.subr.mxu0 %v7520
      %7610 = vmatpush1.msra.mxu0 %v7517
      %7611 = vmatprep.subr.mxu0 0.0
      %7612 = vmatpush1.msra.mxu0 0.0
      %7613 = vmatprep.subr.mxu0 0.0
      %7614 = vmatpush1.msra.mxu0 0.0
      %7615 = vmatprep.subr.mxu0 0.0
      %7616 = vmatpush1.msra.mxu0 0.0
      %7617 = vmatprep.subr.mxu0 0.0
      %7618 = vmatpush1.msra.mxu0 0.0
      %7619 = vmatprep.subr.mxu0 0.0
      %7620 = vmatpush1.msra.mxu0 0.0
      %7621 = vmatprep.subr.mxu0 0.0
      %7622 = vmatpush1.msra.mxu0 0.0
      %7623 = vmatprep.subr.mxu0 0.0
      %7624 = vmatpush1.msra.mxu0 0.0
      %7625 = vmatprep.subr.mxu0 0.0
      %7626 = vmatpush1.msra.mxu0 0.0
      %7627 = vmatprep.subr.mxu0 0.0
      %7628 = vmatpush1.msra.mxu0 0.0
      %7629 = vmatprep.subr.mxu0 0.0
      %7630 = vmatpush1.msra.mxu0 0.0
      %7631 = vmatprep.subr.mxu0 0.0
      %7632 = vmatpush1.msra.mxu0 0.0
      %7633 = vmatprep.subr.mxu0 0.0
      %7634 = vmatpush1.msra.mxu0 0.0
      %7635 = vmatprep.subr.mxu0 0.0
      %7636 = vmatpush1.msra.mxu0 0.0
      %7637 = vmatprep.subr.mxu0 0.0
      %7638 = vmatpush1.msra.mxu0 0.0
      %7639 = vmatprep.subr.mxu0 0.0
      %7640 = vmatpush1.msra.mxu0 0.0
      %7641 = vmatprep.subr.mxu0 0.0
      %7642 = vmatpush1.msra.mxu0 0.0
      %7643 = vmatprep.subr.mxu0 0.0
      %7644 = vmatpush1.msra.mxu0 0.0
      %7645 = vmatprep.subr.mxu0 0.0
      %7646 = vmatpush1.msra.mxu0 0.0
      %7647 = vmatprep.subr.mxu0 0.0
      %7648 = vmatpush1.msra.mxu0 0.0
      %7649 = vmatprep.subr.mxu0 0.0
      %7650 = vmatpush1.msra.mxu0 0.0
      %7651 = vmatprep.subr.mxu0 0.0
      %7652 = vmatpush1.msra.mxu0 0.0
      %7653 = vmatprep.subr.mxu0 0.0
      %7654 = vmatpush1.msra.mxu0 0.0
      %7655 = vmatprep.subr.mxu0 0.0
      %7656 = vmatpush1.msra.mxu0 0.0
      %7657 = vmatprep.mubr.f32.mxu0 0.0
      %7658 = vmatmul.mubr.f32.gmra.mrb[0].mxu0 %v7514
      %v7659 = vpop.f32.mrb[0].mxu0
      %v7660 = vadd.f32 %v7589, %v7659
      %v7661 = vpop.f32.mrb[0].mxu0
      %v7662 = vadd.f32 %v7591, %v7661
      %7663 = vdwg.mxu0
      %v7666 = vcombine.low %v7660, %v7662
      %v7668 = vunpack.c.l.s4 1966171168
      %v7669 = vunpack.c.0.s8 %v7668
      %v7670 = vlaneseq
      %v7671 = vshrl.u32 %v7670, 7
      %v7672 = vsub.s32 %v7669, %v7671
      %v7673 = vrot.slane %v7666, %v7672
      %v7675 = vunpack.c.l.s4 1966171168
      %v7676 = vunpack.c.0.s8 %v7675
      %v7677 = vlaneseq
      %v7678 = vshrl.u32 %v7677, 7
      %v7679 = vsub.s32 %v7676, %v7678
      %v7680 = vrot.slane %v7673, %v7679
      %v7682 = vlaneseq
      %vm7683 = vcmp.ge.s32.totalorder %v7682, 0
      %vm7684 = vcmp.lt.s32.totalorder %v7682, 256
      %vm7685 = vmand %vm7683, %vm7684
      %7686 = vst.msk [vmem:[%s543] sm:$0x3] %vm7685, %v7680
      %p7687 = scmp.lt.s32.totalorder %s28, 1
      %s7688 = scalar_select %p7687, %s28, 1
      %s7689 = smul.addr %s7688, 2
      %s7690 = scalar_lea.vmem %s17, %s7689
      // Predicated region
      $region89: #{conv_autoencoder_forward.1} parent=87 // pred_check
        %p7691 = pneg %p408
      $region90: #{conv_autoencoder_forward.1} parent=87 // pred_check_branch
        %7693 = sbr.rel (%p7691) target = $region92
      $region91: #{conv_autoencoder_forward.1} parent=87 // pred_region
        _
      $region92: #{conv_autoencoder_forward.1} parent=87 // pred_fallthru
        _
    $region88: #{conv_autoencoder_forward.1} parent=5 // pred_fallthru
      _
    %p7694 = scmp.le.s32.totalorder 2, %s23
    // Predicated region
    $region93: #{conv_autoencoder_forward.1} parent=5 // pred_check
      %p7695 = pneg %p7694
    $region94: #{conv_autoencoder_forward.1} parent=5 // pred_check_branch
      %7697 = sbr.rel (%p7695) target = $region96
    $region95: #{conv_autoencoder_forward.1} parent=5 // pred_region
      %s7698 = ssub.s32 %s23, 2
      // Predicated region
      $region97: #{conv_autoencoder_forward.1} parent=95 // pred_check
        %p7699 = pneg %p414
      $region98: #{conv_autoencoder_forward.1} parent=95 // pred_check_branch
        %7701 = sbr.rel (%p7699) target = $region100
      $region99: #{conv_autoencoder_forward.1} parent=95 // pred_region
        %p7702 = scmp.lt.s32.totalorder %s29, 1
        %s7703 = scalar_select %p7702, %s29, 1
        %s7704 = smul.addr %s7703, 2
        %s7705 = scalar_lea.vmem %s17, %s7704
      $region100: #{conv_autoencoder_forward.1} parent=95 // pred_fallthru
        _
    $region96: #{conv_autoencoder_forward.1} parent=5 // pred_fallthru
      _
  $region6: #{conv_autoencoder_forward.1} parent=0 // loop_footer
    %s27 = sadd.s32 1, %s23
  $region7: #{conv_autoencoder_forward.1} parent=0 // loop_footer_branch
    %22 = sbr.rel target = $region3
  $region8: #{conv_autoencoder_forward.1} parent=0 // loop_exit
    _

</llo_original>
